<compile_context>
chip_gen: v5e
topology: v5e:2x2
jax: 0.10.0
libtpu: 0.0.40
codegen_flags: <defaults>
</compile_context>

<pallas_src>
import functools

import jax
import jax.numpy as jnp
from jax.experimental import pallas as pl
from jax.experimental.pallas import tpu as pltpu

EPS = 1e-5      # torch.nn.InstanceNorm2d default eps
H_IN = 8        # latent height after input.permute(0, 2, 1, 3)
W_IN = 32       # spatial width; constant through the whole stack (kw=3, pw=1, sw=1)

# (outC, (kh,kw), (sh,sw), (ph,pw), H_in) for the four Conv2d_GLU layers, in order.
_GLU_CFG = (
    (8,  (4, 3), (2, 1), (1, 1), 8),
    (16, (4, 3), (2, 1), (1, 1), 4),
    (32, (3, 3), (1, 1), (1, 1), 2),
    (16, (3, 3), (1, 1), (1, 1), 2),
)
_OUT_K, _OUT_S, _OUT_P, _OUT_H = (2, 1), (2, 1), (0, 0), 2   # final conv_out


# ----------------------------- in-kernel helpers -----------------------------

def _row(x, h):
    """x: (BB, H*W, C) channel-last activation -> spatial row h as (BB, W, C)."""
    return x[:, h * W_IN:(h + 1) * W_IN, :]


def _shift_w(row, d):
    """row: (BB, W, C). out[:, w, :] = row[:, w + d, :], zero outside [0, W)."""
    if d == 0:
        return row
    BB, W, C = row.shape
    z = jnp.zeros((BB, abs(d), C), row.dtype)
    if d > 0:
        return jnp.concatenate([row[:, d:, :], z], axis=1)
    return jnp.concatenate([z, row[:, :W + d, :]], axis=1)


def _instance_norm_glu(h, outC):
    """h: (BB, S, 2*outC) f32 pre-norm conv output with fused [cnn | gate] channels.
    InstanceNorm2d (affine=False, biased var) reduces ONLY over the spatial axis=1 of each
    batch element (per-channel), then GLU gating.  Returns bf16 (BB, S, outC)."""
    mean = jnp.mean(h, axis=1, keepdims=True)
    var = jnp.mean((h - mean) ** 2, axis=1, keepdims=True)
    hn = (h - mean) * jax.lax.rsqrt(var + EPS)
    return (hn[..., :outC] * jax.nn.sigmoid(hn[..., outC:])).astype(jnp.bfloat16)


def _conv_im2col(x, w, H, k, s, p):
    """Tiny im2col conv, used for layer 1 only (inC=1, K=12 -> single matmul).
    x: (BB, H*W, Cin) bf16; w: (kh*kw*Cin, Cout2) bf16.  Returns (BB, OH*W, Cout2) f32."""
    (kh, kw), (sh, _), (ph, pw) = k, s, p
    BB, _, Cin = x.shape
    OH = (H + 2 * ph - kh) // sh + 1
    rows = []
    for oh in range(OH):
        blocks = []
        for i in range(kh):
            h_in = oh * sh - ph + i
            if 0 <= h_in < H:
                row = _row(x, h_in)
                for j in range(kw):
                    blocks.append(_shift_w(row, j - pw))
            else:                                        # fully padded input row
                blocks.append(jnp.zeros((BB, W_IN, kw * Cin), x.dtype))
        rows.append(jnp.concatenate(blocks, axis=-1))    # (BB, W, kh*kw*Cin)
    patches = jnp.concatenate(rows, axis=1) if OH > 1 else rows[0]
    K = kh * kw * Cin
    out = jnp.dot(patches.reshape(BB * OH * W_IN, K), w,
                  preferred_element_type=jnp.float32)
    return out.reshape(BB, OH * W_IN, -1)


def _conv_taps(x, w, H, Cin, k, s, p):
    """Tap-decomposed conv: one (BB*W, Cin)@(Cin, Cout2) matmul per valid kernel tap,
    accumulated in f32.  W-shifts are cheap sublane rolls; no wide lane concatenation.
    x: (BB, H*W, Cin) bf16; w: (kh*kw*Cin, Cout2) bf16, row index = (i*kw + j)*Cin + c.
    Returns (BB, OH*W, Cout2) f32."""
    (kh, kw), (sh, _), (ph, pw) = k, s, p
    BB = x.shape[0]
    Cout2 = w.shape[-1]
    OH = (H + 2 * ph - kh) // sh + 1
    out_rows = []
    for oh in range(OH):
        acc = jnp.zeros((BB * W_IN, Cout2), jnp.float32)
        for i in range(kh):
            h_in = oh * sh - ph + i
            if not (0 <= h_in < H):
                continue                                  # zero-padded input row
            row = _row(x, h_in)                           # (BB, W, Cin)
            for j in range(kw):
                tap = w[(i * kw + j) * Cin:(i * kw + j + 1) * Cin, :]   # (Cin, Cout2)
                xs = _shift_w(row, j - pw).reshape(BB * W_IN, Cin)
                acc = acc + jnp.dot(xs, tap, preferred_element_type=jnp.float32)
        out_rows.append(acc.reshape(BB, W_IN, Cout2))
    return jnp.concatenate(out_rows, axis=1) if OH > 1 else out_rows[0]


def _lang_classifier_kernel(x_ref, w1, w2, w3, w4, wo, bo, o_ref):
    BB = x_ref.shape[0]
    x = x_ref[...]                                        # (BB, 8*32, 1) bf16

    # layer 1 (GLU): inC=1 -> one tiny im2col matmul; GLU biases dropped (norm cancels them)
    outC1, k1, s1, p1, H1 = _GLU_CFG[0]
    h = _conv_im2col(x, w1[...], H1, k1, s1, p1)          # (BB, 4*32, 16) f32
    x = _instance_norm_glu(h, outC1)                      # (BB, 4*32, 8) bf16

    # layers 2-4 (GLU): tap-decomposed convs, f32 accumulation
    for (outC, k, s, p, H), w, cin in zip(_GLU_CFG[1:], (w2, w3, w4), (8, 16, 32)):
        h = _conv_taps(x, w[...], H, cin, k, s, p)
        x = _instance_norm_glu(h, outC)                   # bf16

    # conv_out: k=(2,1), s=(2,1), p=0 -> OH=1; two taps (h_in = 0, 1), no W shift.
    wof = wo[...]                                         # (32, labels) bf16
    BBW = BB * W_IN
    x0 = _row(x, 0).reshape(BBW, 16)
    x1 = _row(x, 1).reshape(BBW, 16)
    logits = (jnp.dot(x0, wof[:16, :], preferred_element_type=jnp.float32)
              + jnp.dot(x1, wof[16:, :], preferred_element_type=jnp.float32)
              + bo[...])                                  # (BB*W, labels) f32
    m = jnp.max(logits, axis=-1, keepdims=True)
    lse = m + jnp.log(jnp.sum(jnp.exp(logits - m), axis=-1, keepdims=True))
    o_ref[...] = (logits - lse).reshape(BB, W_IN, logits.shape[-1])


# ----------------------------- host wrapper -----------------------------

def _flatten_w(w):
    """(outC, inC, kh, kw) -> (kh*kw*inC, outC); row index = (i*kw + j)*inC + c."""
    outC, inC, kh, kw = w.shape
    return jnp.transpose(w, (2, 3, 1, 0)).reshape(kh * kw * inC, outC)


def _prep_params(params):
    """Fuse [cnn | gate] weights per GLU layer (bf16 MXU operands).  GLU conv biases are
    dropped entirely: InstanceNorm's mean subtraction cancels a per-channel constant exactly."""
    flat = []
    for idx in range(4):
        wc, _, wg, _ = params[f"conv{idx + 1}"]
        flat.append(jnp.concatenate([_flatten_w(wc), _flatten_w(wg)], axis=1)
                    .astype(jnp.bfloat16))
    wo, bo = params["conv_out"]
    flat.append(_flatten_w(wo).astype(jnp.bfloat16))
    flat.append(bo.reshape(1, -1).astype(jnp.float32))
    return flat


@functools.partial(jax.jit, static_argnames=("block_batch",))
def lang_classifier_forward(inp, params, block_batch=8):
    """inp: (B, 8, 1, 32) -> (B, 32, label_num) log-probs (== torch forward output)."""
    B = inp.shape[0]
    labels = params["conv_out"][0].shape[0]

    # torch: input.permute(0, 2, 1, 3) -> NCHW (B, 1, 8, 32); its channel-last flat view
    # (B, H*W, C=1) is just a reshape of the original input.  Cast to bf16 once here.
    x = inp.reshape(B, H_IN * W_IN, 1).astype(jnp.bfloat16)

    # Batch-block the grid (BB elements per step); pad B up to a multiple of BB.
    # VMEM is nowhere near the limit even at BB=64+, so size purely for overhead amortization.
    BB = min(block_batch, B)
    Bp = -(-B // BB) * BB
    if Bp != B:
        x = jnp.concatenate([x, jnp.zeros((Bp - B, H_IN * W_IN, 1), x.dtype)], axis=0)

    flat = _prep_params(params)

    def _const_spec(a):
        return pl.BlockSpec(a.shape, lambda b: (0,) * a.ndim)   # weights stay resident

    in_specs = [pl.BlockSpec((BB, H_IN * W_IN, 1), lambda b: (b, 0, 0))]
    in_specs += [_const_spec(a) for a in flat]

    matmul_flops = 2 * Bp * (128 * 12 * 16 + 64 * 96 * 32 + 64 * 144 * 64
                             + 64 * 288 * 32 + 32 * 32 * labels)
    transcendentals = Bp * (128 * 8 + 64 * 16 + 64 * 32 + 64 * 16 + 32 * labels + 32)
    bytes_accessed = int(x.size * x.dtype.itemsize
                         + sum(a.size * a.dtype.itemsize for a in flat)
                         + Bp * W_IN * labels * 4)

    out = pl.pallas_call(
        _lang_classifier_kernel,
        out_shape=jax.ShapeDtypeStruct((Bp, W_IN, labels), jnp.float32),
        grid=(Bp // BB,),
        in_specs=in_specs,
        out_specs=pl.BlockSpec((BB, W_IN, labels), lambda b: (b, 0, 0)),
        # TODO(synk): on v7x, if the profile shows the batch axis staying on one TensorCore,
        # switch this axis to pltpu.CORE_PARALLEL (needs >= 2 grid steps).
        compiler_params=pltpu.CompilerParams(dimension_semantics=("parallel",)),
        cost_estimate=pl.CostEstimate(flops=matmul_flops,
                                      transcendentals=transcendentals,
                                      bytes_accessed=bytes_accessed),
    )(x, *flat)
    return out[:B]


# ----------------------------- params -----------------------------

def init_params(key, label_num=4):
    def conv_wb(k, outC, inC, kh, kw):
        fan_in = inC * kh * kw
        bound = 1.0 / (fan_in ** 0.5)
        k1, k2 = jax.random.split(k)
        w = jax.random.uniform(k1, (outC, inC, kh, kw), jnp.float32, -bound, bound)
        b = jax.random.uniform(k2, (outC,), jnp.float32, -bound, bound)
        return w, b

    keys = jax.random.split(key, 9)
    params = {}
    cfgs = [("conv1", 1, 8, 4, 3), ("conv2", 8, 16, 4, 3),
            ("conv3", 16, 32, 3, 3), ("conv4", 32, 16, 3, 3)]
    for i, (name, inC, outC, kh, kw) in enumerate(cfgs):
        wc, bc = conv_wb(keys[2 * i], outC, inC, kh, kw)
        wg, bg = conv_wb(keys[2 * i + 1], outC, inC, kh, kw)
        params[name] = (wc, bc, wg, bg)
    params["conv_out"] = conv_wb(keys[8], label_num, 16, 2, 1)
    return params


# ----------------------------- plain-JAX reference (f32, HIGHEST) -----------------------------

def ref_forward(inp, params):
    def conv(x, w, b, s, p):
        return jax.lax.conv_general_dilated(
            x, w, window_strides=s, padding=[(p[0], p[0]), (p[1], p[1])],
            dimension_numbers=("NCHW", "OIHW", "NCHW"),
            precision=jax.lax.Precision.HIGHEST) + b[None, :, None, None]

    def inorm(h):
        mean = jnp.mean(h, axis=(2, 3), keepdims=True)
        var = jnp.mean((h - mean) ** 2, axis=(2, 3), keepdims=True)
        return (h - mean) * jax.lax.rsqrt(var + EPS)

    def glu(x, prm, s, p):
        wc, bc, wg, bg = prm
        return inorm(conv(x, wc, bc, s, p)) * jax.nn.sigmoid(inorm(conv(x, wg, bg, s, p)))

    x = jnp.transpose(inp, (0, 2, 1, 3))
    h = glu(x, params["conv1"], (2, 1), (1, 1))
    h = glu(h, params["conv2"], (2, 1), (1, 1))
    h = glu(h, params["conv3"], (1, 1), (1, 1))
    h = glu(h, params["conv4"], (1, 1), (1, 1))
    w, b = params["conv_out"]
    o = conv(h, w, b, (2, 1), (0, 0))
    o = jax.nn.log_softmax(o, axis=1)
    return jnp.transpose(o, (0, 3, 1, 2))[..., 0]   # permute(0,3,1,2).squeeze(3)


# ----------------------------- main -----------------------------

if __name__ == "__main__":
    key = jax.random.PRNGKey(0)
    k_in, k_par = jax.random.split(key)
    LABELS = 4
    params = init_params(k_par, label_num=LABELS)

    # Small deterministic check: B=2 (single grid step, BB=2).
    B = 2
    inp = jax.random.normal(k_in, (B, H_IN, 1, W_IN), dtype=jnp.float32)
    out = jax.block_until_ready(lang_classifier_forward(inp, params))
    assert out.shape == (B, W_IN, LABELS), out.shape
    ref = jax.block_until_ready(ref_forward(inp, params))
    assert jnp.all(jnp.isfinite(out))
    # bf16 MXU operands vs. the f32 HIGHEST reference across the 5-layer stack.
    assert jnp.allclose(out, ref, atol=3e-2, rtol=3e-2), float(jnp.max(jnp.abs(out - ref)))

    # Exercise the batch-blocked multi-step grid + padding path (B=12 -> BB=8, 2 steps, pad 4).
    B2 = 12
    inp2 = jax.random.normal(jax.random.PRNGKey(1), (B2, H_IN, 1, W_IN), dtype=jnp.float32)
    out2 = jax.block_until_ready(lang_classifier_forward(inp2, params))
    ref2 = jax.block_until_ready(ref_forward(inp2, params))
    assert out2.shape == (B2, W_IN, LABELS), out2.shape
    assert jnp.all(jnp.isfinite(out2))
    assert jnp.allclose(out2, ref2, atol=5e-2, rtol=5e-2), float(jnp.max(jnp.abs(out2 - ref2)))

    print("KERNEL_OK")
</pallas_src>

<mosaic_0001>
module attributes {stable_mosaic.version = 11 : i64} {
  func.func @_lang_classifier_kernel(%arg0: i32, %arg1: memref<2x256x1xbf16, #tpu.memory_space<vmem>>, %arg2: memref<12x16xbf16, #tpu.memory_space<vmem>>, %arg3: memref<96x32xbf16, #tpu.memory_space<vmem>>, %arg4: memref<144x64xbf16, #tpu.memory_space<vmem>>, %arg5: memref<288x32xbf16, #tpu.memory_space<vmem>>, %arg6: memref<32x4xbf16, #tpu.memory_space<vmem>>, %arg7: memref<1x4xf32, #tpu.memory_space<vmem>>, %arg8: memref<2x32x4xf32, #tpu.memory_space<vmem>>) attributes {dimension_semantics = [#tpu.dimension_semantics<parallel>], iteration_bounds = array<i64: 1>, scalar_prefetch = 0 : i64, scratch_operands = 0 : i64, tpu.core_type = #tpu.core_type<tc>, window_params = [{transform_indices = @transform_0, window_bounds = array<i64: 2, 256, 1>}, {pipeline_mode = #tpu.pipeline_mode<synchronous>, transform_indices = @transform_1, window_bounds = array<i64: 12, 16>}, {pipeline_mode = #tpu.pipeline_mode<synchronous>, transform_indices = @transform_2, window_bounds = array<i64: 96, 32>}, {pipeline_mode = #tpu.pipeline_mode<synchronous>, transform_indices = @transform_3, window_bounds = array<i64: 144, 64>}, {pipeline_mode = #tpu.pipeline_mode<synchronous>, transform_indices = @transform_4, window_bounds = array<i64: 288, 32>}, {pipeline_mode = #tpu.pipeline_mode<synchronous>, transform_indices = @transform_5, window_bounds = array<i64: 32, 4>}, {pipeline_mode = #tpu.pipeline_mode<synchronous>, transform_indices = @transform_6, window_bounds = array<i64: 1, 4>}, {transform_indices = @transform_7, window_bounds = array<i64: 2, 32, 4>}]} {
    %c0 = arith.constant 0 : index
    %c0_0 = arith.constant 0 : index
    %c0_1 = arith.constant 0 : index
    %0 = vector.load %arg1[%c0, %c0_0, %c0_1] : memref<2x256x1xbf16, #tpu.memory_space<vmem>>, vector<2x256x1xbf16>
    %c0_2 = arith.constant 0 : index
    %c0_3 = arith.constant 0 : index
    %1 = vector.load %arg2[%c0_2, %c0_3] : memref<12x16xbf16, #tpu.memory_space<vmem>>, vector<12x16xbf16>
    %cst = arith.constant 0.000000e+00 : bf16
    %2 = vector.broadcast %cst : bf16 to vector<2x32x3xbf16>
    %3 = vector.extract_strided_slice %0 {offsets = [0, 0, 0], sizes = [2, 32, 1], strides = [1, 1, 1]} : vector<2x256x1xbf16> to vector<2x32x1xbf16>
    %cst_4 = arith.constant 0.000000e+00 : bf16
    %4 = vector.broadcast %cst_4 : bf16 to vector<2x1x1xbf16>
    %5 = vector.extract_strided_slice %3 {offsets = [0, 0, 0], sizes = [2, 31, 1], strides = [1, 1, 1]} : vector<2x32x1xbf16> to vector<2x31x1xbf16>
    %6 = tpu.concatenate %4, %5 in 1 : vector<2x1x1xbf16>, vector<2x31x1xbf16> -> vector<2x32x1xbf16>
    %cst_5 = arith.constant 0.000000e+00 : bf16
    %7 = vector.broadcast %cst_5 : bf16 to vector<2x1x1xbf16>
    %8 = vector.extract_strided_slice %3 {offsets = [0, 1, 0], sizes = [2, 31, 1], strides = [1, 1, 1]} : vector<2x32x1xbf16> to vector<2x31x1xbf16>
    %9 = tpu.concatenate %8, %7 in 1 : vector<2x31x1xbf16>, vector<2x1x1xbf16> -> vector<2x32x1xbf16>
    %10 = vector.extract_strided_slice %0 {offsets = [0, 32, 0], sizes = [2, 32, 1], strides = [1, 1, 1]} : vector<2x256x1xbf16> to vector<2x32x1xbf16>
    %cst_6 = arith.constant 0.000000e+00 : bf16
    %11 = vector.broadcast %cst_6 : bf16 to vector<2x1x1xbf16>
    %12 = vector.extract_strided_slice %10 {offsets = [0, 0, 0], sizes = [2, 31, 1], strides = [1, 1, 1]} : vector<2x32x1xbf16> to vector<2x31x1xbf16>
    %13 = tpu.concatenate %11, %12 in 1 : vector<2x1x1xbf16>, vector<2x31x1xbf16> -> vector<2x32x1xbf16>
    %cst_7 = arith.constant 0.000000e+00 : bf16
    %14 = vector.broadcast %cst_7 : bf16 to vector<2x1x1xbf16>
    %15 = vector.extract_strided_slice %10 {offsets = [0, 1, 0], sizes = [2, 31, 1], strides = [1, 1, 1]} : vector<2x32x1xbf16> to vector<2x31x1xbf16>
    %16 = tpu.concatenate %15, %14 in 1 : vector<2x31x1xbf16>, vector<2x1x1xbf16> -> vector<2x32x1xbf16>
    %17 = vector.extract_strided_slice %0 {offsets = [0, 64, 0], sizes = [2, 32, 1], strides = [1, 1, 1]} : vector<2x256x1xbf16> to vector<2x32x1xbf16>
    %cst_8 = arith.constant 0.000000e+00 : bf16
    %18 = vector.broadcast %cst_8 : bf16 to vector<2x1x1xbf16>
    %19 = vector.extract_strided_slice %17 {offsets = [0, 0, 0], sizes = [2, 31, 1], strides = [1, 1, 1]} : vector<2x32x1xbf16> to vector<2x31x1xbf16>
    %20 = tpu.concatenate %18, %19 in 1 : vector<2x1x1xbf16>, vector<2x31x1xbf16> -> vector<2x32x1xbf16>
    %cst_9 = arith.constant 0.000000e+00 : bf16
    %21 = vector.broadcast %cst_9 : bf16 to vector<2x1x1xbf16>
    %22 = vector.extract_strided_slice %17 {offsets = [0, 1, 0], sizes = [2, 31, 1], strides = [1, 1, 1]} : vector<2x32x1xbf16> to vector<2x31x1xbf16>
    %23 = tpu.concatenate %22, %21 in 1 : vector<2x31x1xbf16>, vector<2x1x1xbf16> -> vector<2x32x1xbf16>
    %24 = tpu.concatenate %2, %6, %3, %9, %13, %10, %16, %20, %17, %23 in 2 : vector<2x32x3xbf16>, vector<2x32x1xbf16>, vector<2x32x1xbf16>, vector<2x32x1xbf16>, vector<2x32x1xbf16>, vector<2x32x1xbf16>, vector<2x32x1xbf16>, vector<2x32x1xbf16>, vector<2x32x1xbf16>, vector<2x32x1xbf16> -> vector<2x32x12xbf16>
    %25 = vector.extract_strided_slice %0 {offsets = [0, 32, 0], sizes = [2, 32, 1], strides = [1, 1, 1]} : vector<2x256x1xbf16> to vector<2x32x1xbf16>
    %cst_10 = arith.constant 0.000000e+00 : bf16
    %26 = vector.broadcast %cst_10 : bf16 to vector<2x1x1xbf16>
    %27 = vector.extract_strided_slice %25 {offsets = [0, 0, 0], sizes = [2, 31, 1], strides = [1, 1, 1]} : vector<2x32x1xbf16> to vector<2x31x1xbf16>
    %28 = tpu.concatenate %26, %27 in 1 : vector<2x1x1xbf16>, vector<2x31x1xbf16> -> vector<2x32x1xbf16>
    %cst_11 = arith.constant 0.000000e+00 : bf16
    %29 = vector.broadcast %cst_11 : bf16 to vector<2x1x1xbf16>
    %30 = vector.extract_strided_slice %25 {offsets = [0, 1, 0], sizes = [2, 31, 1], strides = [1, 1, 1]} : vector<2x32x1xbf16> to vector<2x31x1xbf16>
    %31 = tpu.concatenate %30, %29 in 1 : vector<2x31x1xbf16>, vector<2x1x1xbf16> -> vector<2x32x1xbf16>
    %32 = vector.extract_strided_slice %0 {offsets = [0, 64, 0], sizes = [2, 32, 1], strides = [1, 1, 1]} : vector<2x256x1xbf16> to vector<2x32x1xbf16>
    %cst_12 = arith.constant 0.000000e+00 : bf16
    %33 = vector.broadcast %cst_12 : bf16 to vector<2x1x1xbf16>
    %34 = vector.extract_strided_slice %32 {offsets = [0, 0, 0], sizes = [2, 31, 1], strides = [1, 1, 1]} : vector<2x32x1xbf16> to vector<2x31x1xbf16>
    %35 = tpu.concatenate %33, %34 in 1 : vector<2x1x1xbf16>, vector<2x31x1xbf16> -> vector<2x32x1xbf16>
    %cst_13 = arith.constant 0.000000e+00 : bf16
    %36 = vector.broadcast %cst_13 : bf16 to vector<2x1x1xbf16>
    %37 = vector.extract_strided_slice %32 {offsets = [0, 1, 0], sizes = [2, 31, 1], strides = [1, 1, 1]} : vector<2x32x1xbf16> to vector<2x31x1xbf16>
    %38 = tpu.concatenate %37, %36 in 1 : vector<2x31x1xbf16>, vector<2x1x1xbf16> -> vector<2x32x1xbf16>
    %39 = vector.extract_strided_slice %0 {offsets = [0, 96, 0], sizes = [2, 32, 1], strides = [1, 1, 1]} : vector<2x256x1xbf16> to vector<2x32x1xbf16>
    %cst_14 = arith.constant 0.000000e+00 : bf16
    %40 = vector.broadcast %cst_14 : bf16 to vector<2x1x1xbf16>
    %41 = vector.extract_strided_slice %39 {offsets = [0, 0, 0], sizes = [2, 31, 1], strides = [1, 1, 1]} : vector<2x32x1xbf16> to vector<2x31x1xbf16>
    %42 = tpu.concatenate %40, %41 in 1 : vector<2x1x1xbf16>, vector<2x31x1xbf16> -> vector<2x32x1xbf16>
    %cst_15 = arith.constant 0.000000e+00 : bf16
    %43 = vector.broadcast %cst_15 : bf16 to vector<2x1x1xbf16>
    %44 = vector.extract_strided_slice %39 {offsets = [0, 1, 0], sizes = [2, 31, 1], strides = [1, 1, 1]} : vector<2x32x1xbf16> to vector<2x31x1xbf16>
    %45 = tpu.concatenate %44, %43 in 1 : vector<2x31x1xbf16>, vector<2x1x1xbf16> -> vector<2x32x1xbf16>
    %46 = vector.extract_strided_slice %0 {offsets = [0, 128, 0], sizes = [2, 32, 1], strides = [1, 1, 1]} : vector<2x256x1xbf16> to vector<2x32x1xbf16>
    %cst_16 = arith.constant 0.000000e+00 : bf16
    %47 = vector.broadcast %cst_16 : bf16 to vector<2x1x1xbf16>
    %48 = vector.extract_strided_slice %46 {offsets = [0, 0, 0], sizes = [2, 31, 1], strides = [1, 1, 1]} : vector<2x32x1xbf16> to vector<2x31x1xbf16>
    %49 = tpu.concatenate %47, %48 in 1 : vector<2x1x1xbf16>, vector<2x31x1xbf16> -> vector<2x32x1xbf16>
    %cst_17 = arith.constant 0.000000e+00 : bf16
    %50 = vector.broadcast %cst_17 : bf16 to vector<2x1x1xbf16>
    %51 = vector.extract_strided_slice %46 {offsets = [0, 1, 0], sizes = [2, 31, 1], strides = [1, 1, 1]} : vector<2x32x1xbf16> to vector<2x31x1xbf16>
    %52 = tpu.concatenate %51, %50 in 1 : vector<2x31x1xbf16>, vector<2x1x1xbf16> -> vector<2x32x1xbf16>
    %53 = tpu.concatenate %28, %25, %31, %35, %32, %38, %42, %39, %45, %49, %46, %52 in 2 : vector<2x32x1xbf16>, vector<2x32x1xbf16>, vector<2x32x1xbf16>, vector<2x32x1xbf16>, vector<2x32x1xbf16>, vector<2x32x1xbf16>, vector<2x32x1xbf16>, vector<2x32x1xbf16>, vector<2x32x1xbf16>, vector<2x32x1xbf16>, vector<2x32x1xbf16>, vector<2x32x1xbf16> -> vector<2x32x12xbf16>
    %54 = vector.extract_strided_slice %0 {offsets = [0, 96, 0], sizes = [2, 32, 1], strides = [1, 1, 1]} : vector<2x256x1xbf16> to vector<2x32x1xbf16>
    %cst_18 = arith.constant 0.000000e+00 : bf16
    %55 = vector.broadcast %cst_18 : bf16 to vector<2x1x1xbf16>
    %56 = vector.extract_strided_slice %54 {offsets = [0, 0, 0], sizes = [2, 31, 1], strides = [1, 1, 1]} : vector<2x32x1xbf16> to vector<2x31x1xbf16>
    %57 = tpu.concatenate %55, %56 in 1 : vector<2x1x1xbf16>, vector<2x31x1xbf16> -> vector<2x32x1xbf16>
    %cst_19 = arith.constant 0.000000e+00 : bf16
    %58 = vector.broadcast %cst_19 : bf16 to vector<2x1x1xbf16>
    %59 = vector.extract_strided_slice %54 {offsets = [0, 1, 0], sizes = [2, 31, 1], strides = [1, 1, 1]} : vector<2x32x1xbf16> to vector<2x31x1xbf16>
    %60 = tpu.concatenate %59, %58 in 1 : vector<2x31x1xbf16>, vector<2x1x1xbf16> -> vector<2x32x1xbf16>
    %61 = vector.extract_strided_slice %0 {offsets = [0, 128, 0], sizes = [2, 32, 1], strides = [1, 1, 1]} : vector<2x256x1xbf16> to vector<2x32x1xbf16>
    %cst_20 = arith.constant 0.000000e+00 : bf16
    %62 = vector.broadcast %cst_20 : bf16 to vector<2x1x1xbf16>
    %63 = vector.extract_strided_slice %61 {offsets = [0, 0, 0], sizes = [2, 31, 1], strides = [1, 1, 1]} : vector<2x32x1xbf16> to vector<2x31x1xbf16>
    %64 = tpu.concatenate %62, %63 in 1 : vector<2x1x1xbf16>, vector<2x31x1xbf16> -> vector<2x32x1xbf16>
    %cst_21 = arith.constant 0.000000e+00 : bf16
    %65 = vector.broadcast %cst_21 : bf16 to vector<2x1x1xbf16>
    %66 = vector.extract_strided_slice %61 {offsets = [0, 1, 0], sizes = [2, 31, 1], strides = [1, 1, 1]} : vector<2x32x1xbf16> to vector<2x31x1xbf16>
    %67 = tpu.concatenate %66, %65 in 1 : vector<2x31x1xbf16>, vector<2x1x1xbf16> -> vector<2x32x1xbf16>
    %68 = vector.extract_strided_slice %0 {offsets = [0, 160, 0], sizes = [2, 32, 1], strides = [1, 1, 1]} : vector<2x256x1xbf16> to vector<2x32x1xbf16>
    %cst_22 = arith.constant 0.000000e+00 : bf16
    %69 = vector.broadcast %cst_22 : bf16 to vector<2x1x1xbf16>
    %70 = vector.extract_strided_slice %68 {offsets = [0, 0, 0], sizes = [2, 31, 1], strides = [1, 1, 1]} : vector<2x32x1xbf16> to vector<2x31x1xbf16>
    %71 = tpu.concatenate %69, %70 in 1 : vector<2x1x1xbf16>, vector<2x31x1xbf16> -> vector<2x32x1xbf16>
    %cst_23 = arith.constant 0.000000e+00 : bf16
    %72 = vector.broadcast %cst_23 : bf16 to vector<2x1x1xbf16>
    %73 = vector.extract_strided_slice %68 {offsets = [0, 1, 0], sizes = [2, 31, 1], strides = [1, 1, 1]} : vector<2x32x1xbf16> to vector<2x31x1xbf16>
    %74 = tpu.concatenate %73, %72 in 1 : vector<2x31x1xbf16>, vector<2x1x1xbf16> -> vector<2x32x1xbf16>
    %75 = vector.extract_strided_slice %0 {offsets = [0, 192, 0], sizes = [2, 32, 1], strides = [1, 1, 1]} : vector<2x256x1xbf16> to vector<2x32x1xbf16>
    %cst_24 = arith.constant 0.000000e+00 : bf16
    %76 = vector.broadcast %cst_24 : bf16 to vector<2x1x1xbf16>
    %77 = vector.extract_strided_slice %75 {offsets = [0, 0, 0], sizes = [2, 31, 1], strides = [1, 1, 1]} : vector<2x32x1xbf16> to vector<2x31x1xbf16>
    %78 = tpu.concatenate %76, %77 in 1 : vector<2x1x1xbf16>, vector<2x31x1xbf16> -> vector<2x32x1xbf16>
    %cst_25 = arith.constant 0.000000e+00 : bf16
    %79 = vector.broadcast %cst_25 : bf16 to vector<2x1x1xbf16>
    %80 = vector.extract_strided_slice %75 {offsets = [0, 1, 0], sizes = [2, 31, 1], strides = [1, 1, 1]} : vector<2x32x1xbf16> to vector<2x31x1xbf16>
    %81 = tpu.concatenate %80, %79 in 1 : vector<2x31x1xbf16>, vector<2x1x1xbf16> -> vector<2x32x1xbf16>
    %82 = tpu.concatenate %57, %54, %60, %64, %61, %67, %71, %68, %74, %78, %75, %81 in 2 : vector<2x32x1xbf16>, vector<2x32x1xbf16>, vector<2x32x1xbf16>, vector<2x32x1xbf16>, vector<2x32x1xbf16>, vector<2x32x1xbf16>, vector<2x32x1xbf16>, vector<2x32x1xbf16>, vector<2x32x1xbf16>, vector<2x32x1xbf16>, vector<2x32x1xbf16>, vector<2x32x1xbf16> -> vector<2x32x12xbf16>
    %83 = vector.extract_strided_slice %0 {offsets = [0, 160, 0], sizes = [2, 32, 1], strides = [1, 1, 1]} : vector<2x256x1xbf16> to vector<2x32x1xbf16>
    %cst_26 = arith.constant 0.000000e+00 : bf16
    %84 = vector.broadcast %cst_26 : bf16 to vector<2x1x1xbf16>
    %85 = vector.extract_strided_slice %83 {offsets = [0, 0, 0], sizes = [2, 31, 1], strides = [1, 1, 1]} : vector<2x32x1xbf16> to vector<2x31x1xbf16>
    %86 = tpu.concatenate %84, %85 in 1 : vector<2x1x1xbf16>, vector<2x31x1xbf16> -> vector<2x32x1xbf16>
    %cst_27 = arith.constant 0.000000e+00 : bf16
    %87 = vector.broadcast %cst_27 : bf16 to vector<2x1x1xbf16>
    %88 = vector.extract_strided_slice %83 {offsets = [0, 1, 0], sizes = [2, 31, 1], strides = [1, 1, 1]} : vector<2x32x1xbf16> to vector<2x31x1xbf16>
    %89 = tpu.concatenate %88, %87 in 1 : vector<2x31x1xbf16>, vector<2x1x1xbf16> -> vector<2x32x1xbf16>
    %90 = vector.extract_strided_slice %0 {offsets = [0, 192, 0], sizes = [2, 32, 1], strides = [1, 1, 1]} : vector<2x256x1xbf16> to vector<2x32x1xbf16>
    %cst_28 = arith.constant 0.000000e+00 : bf16
    %91 = vector.broadcast %cst_28 : bf16 to vector<2x1x1xbf16>
    %92 = vector.extract_strided_slice %90 {offsets = [0, 0, 0], sizes = [2, 31, 1], strides = [1, 1, 1]} : vector<2x32x1xbf16> to vector<2x31x1xbf16>
    %93 = tpu.concatenate %91, %92 in 1 : vector<2x1x1xbf16>, vector<2x31x1xbf16> -> vector<2x32x1xbf16>
    %cst_29 = arith.constant 0.000000e+00 : bf16
    %94 = vector.broadcast %cst_29 : bf16 to vector<2x1x1xbf16>
    %95 = vector.extract_strided_slice %90 {offsets = [0, 1, 0], sizes = [2, 31, 1], strides = [1, 1, 1]} : vector<2x32x1xbf16> to vector<2x31x1xbf16>
    %96 = tpu.concatenate %95, %94 in 1 : vector<2x31x1xbf16>, vector<2x1x1xbf16> -> vector<2x32x1xbf16>
    %97 = vector.extract_strided_slice %0 {offsets = [0, 224, 0], sizes = [2, 32, 1], strides = [1, 1, 1]} : vector<2x256x1xbf16> to vector<2x32x1xbf16>
    %cst_30 = arith.constant 0.000000e+00 : bf16
    %98 = vector.broadcast %cst_30 : bf16 to vector<2x1x1xbf16>
    %99 = vector.extract_strided_slice %97 {offsets = [0, 0, 0], sizes = [2, 31, 1], strides = [1, 1, 1]} : vector<2x32x1xbf16> to vector<2x31x1xbf16>
    %100 = tpu.concatenate %98, %99 in 1 : vector<2x1x1xbf16>, vector<2x31x1xbf16> -> vector<2x32x1xbf16>
    %cst_31 = arith.constant 0.000000e+00 : bf16
    %101 = vector.broadcast %cst_31 : bf16 to vector<2x1x1xbf16>
    %102 = vector.extract_strided_slice %97 {offsets = [0, 1, 0], sizes = [2, 31, 1], strides = [1, 1, 1]} : vector<2x32x1xbf16> to vector<2x31x1xbf16>
    %103 = tpu.concatenate %102, %101 in 1 : vector<2x31x1xbf16>, vector<2x1x1xbf16> -> vector<2x32x1xbf16>
    %cst_32 = arith.constant 0.000000e+00 : bf16
    %104 = vector.broadcast %cst_32 : bf16 to vector<2x32x3xbf16>
    %105 = tpu.concatenate %86, %83, %89, %93, %90, %96, %100, %97, %103, %104 in 2 : vector<2x32x1xbf16>, vector<2x32x1xbf16>, vector<2x32x1xbf16>, vector<2x32x1xbf16>, vector<2x32x1xbf16>, vector<2x32x1xbf16>, vector<2x32x1xbf16>, vector<2x32x1xbf16>, vector<2x32x1xbf16>, vector<2x32x3xbf16> -> vector<2x32x12xbf16>
    %106 = tpu.concatenate %24, %53, %82, %105 in 1 : vector<2x32x12xbf16>, vector<2x32x12xbf16>, vector<2x32x12xbf16>, vector<2x32x12xbf16> -> vector<2x128x12xbf16>
    %107 = vector.shape_cast %106 : vector<2x128x12xbf16> to vector<256x12xbf16>
    %cst_33 = arith.constant dense<0.000000e+00> : vector<256x16xf32>
    %108 = tpu.matmul %107, %1, %cst_33 {dimension_numbers = #tpu.dot_dimension_numbers<[1], [0], [0], [1], [0, 0, 1, 1], [], []>} : vector<256x12xbf16>, vector<12x16xbf16>, vector<256x16xf32> -> vector<256x16xf32>
    %109 = vector.shape_cast %108 : vector<256x16xf32> to vector<2x128x16xf32>
    %cst_34 = arith.constant dense<0.000000e+00> : vector<2x16xf32>
    %110 = vector.multi_reduction <add>, %109, %cst_34 [1] : vector<2x128x16xf32> to vector<2x16xf32>
    %111 = vector.shape_cast %110 : vector<2x16xf32> to vector<2x1x16xf32>
    %cst_35 = arith.constant 1.280000e+02 : f32
    %112 = vector.broadcast %cst_35 : f32 to vector<2x1x16xf32>
    %113 = arith.divf %111, %112 : vector<2x1x16xf32>
    %114 = vector.broadcast %113 : vector<2x1x16xf32> to vector<2x128x16xf32>
    %115 = arith.subf %109, %114 : vector<2x128x16xf32>
    %116 = arith.mulf %115, %115 : vector<2x128x16xf32>
    %cst_36 = arith.constant dense<0.000000e+00> : vector<2x16xf32>
    %117 = vector.multi_reduction <add>, %116, %cst_36 [1] : vector<2x128x16xf32> to vector<2x16xf32>
    %118 = vector.shape_cast %117 : vector<2x16xf32> to vector<2x1x16xf32>
    %cst_37 = arith.constant 1.280000e+02 : f32
    %119 = vector.broadcast %cst_37 : f32 to vector<2x1x16xf32>
    %120 = arith.divf %118, %119 : vector<2x1x16xf32>
    %121 = vector.broadcast %113 : vector<2x1x16xf32> to vector<2x128x16xf32>
    %122 = arith.subf %109, %121 : vector<2x128x16xf32>
    %cst_38 = arith.constant 9.99999974E-6 : f32
    %123 = vector.broadcast %cst_38 : f32 to vector<2x1x16xf32>
    %124 = arith.addf %120, %123 : vector<2x1x16xf32>
    %125 = math.rsqrt %124 : vector<2x1x16xf32>
    %126 = vector.broadcast %125 : vector<2x1x16xf32> to vector<2x128x16xf32>
    %127 = arith.mulf %122, %126 : vector<2x128x16xf32>
    %128 = vector.extract_strided_slice %127 {offsets = [0, 0, 0], sizes = [2, 128, 8], strides = [1, 1, 1]} : vector<2x128x16xf32> to vector<2x128x8xf32>
    %129 = vector.extract_strided_slice %127 {offsets = [0, 0, 8], sizes = [2, 128, 8], strides = [1, 1, 1]} : vector<2x128x16xf32> to vector<2x128x8xf32>
    %130 = arith.negf %129 : vector<2x128x8xf32>
    %131 = math.exp %130 : vector<2x128x8xf32>
    %cst_39 = arith.constant 1.000000e+00 : f32
    %132 = vector.broadcast %cst_39 : f32 to vector<2x128x8xf32>
    %133 = arith.addf %132, %131 : vector<2x128x8xf32>
    %134 = arith.divf %132, %133 : vector<2x128x8xf32>
    %135 = arith.mulf %128, %134 : vector<2x128x8xf32>
    %136 = arith.truncf %135 : vector<2x128x8xf32> to vector<2x128x8xbf16>
    %c0_40 = arith.constant 0 : index
    %c0_41 = arith.constant 0 : index
    %137 = vector.load %arg3[%c0_40, %c0_41] : memref<96x32xbf16, #tpu.memory_space<vmem>>, vector<96x32xbf16>
    %cst_42 = arith.constant 0.000000e+00 : f32
    %138 = vector.broadcast %cst_42 : f32 to vector<64x32xf32>
    %139 = vector.extract_strided_slice %136 {offsets = [0, 0, 0], sizes = [2, 32, 8], strides = [1, 1, 1]} : vector<2x128x8xbf16> to vector<2x32x8xbf16>
    %140 = vector.extract_strided_slice %137 {offsets = [24, 0], sizes = [8, 32], strides = [1, 1]} : vector<96x32xbf16> to vector<8x32xbf16>
    %cst_43 = arith.constant 0.000000e+00 : bf16
    %141 = vector.broadcast %cst_43 : bf16 to vector<2x1x8xbf16>
    %142 = vector.extract_strided_slice %139 {offsets = [0, 0, 0], sizes = [2, 31, 8], strides = [1, 1, 1]} : vector<2x32x8xbf16> to vector<2x31x8xbf16>
    %143 = tpu.concatenate %141, %142 in 1 : vector<2x1x8xbf16>, vector<2x31x8xbf16> -> vector<2x32x8xbf16>
    %144 = vector.shape_cast %143 : vector<2x32x8xbf16> to vector<64x8xbf16>
    %cst_44 = arith.constant dense<0.000000e+00> : vector<64x32xf32>
    %145 = tpu.matmul %144, %140, %cst_44 {dimension_numbers = #tpu.dot_dimension_numbers<[1], [0], [0], [1], [0, 0, 1, 1], [], []>} : vector<64x8xbf16>, vector<8x32xbf16>, vector<64x32xf32> -> vector<64x32xf32>
    %146 = arith.addf %138, %145 : vector<64x32xf32>
    %147 = vector.extract_strided_slice %137 {offsets = [32, 0], sizes = [8, 32], strides = [1, 1]} : vector<96x32xbf16> to vector<8x32xbf16>
    %148 = vector.shape_cast %139 : vector<2x32x8xbf16> to vector<64x8xbf16>
    %cst_45 = arith.constant dense<0.000000e+00> : vector<64x32xf32>
    %149 = tpu.matmul %148, %147, %cst_45 {dimension_numbers = #tpu.dot_dimension_numbers<[1], [0], [0], [1], [0, 0, 1, 1], [], []>} : vector<64x8xbf16>, vector<8x32xbf16>, vector<64x32xf32> -> vector<64x32xf32>
    %150 = arith.addf %146, %149 : vector<64x32xf32>
    %151 = vector.extract_strided_slice %137 {offsets = [40, 0], sizes = [8, 32], strides = [1, 1]} : vector<96x32xbf16> to vector<8x32xbf16>
    %cst_46 = arith.constant 0.000000e+00 : bf16
    %152 = vector.broadcast %cst_46 : bf16 to vector<2x1x8xbf16>
    %153 = vector.extract_strided_slice %139 {offsets = [0, 1, 0], sizes = [2, 31, 8], strides = [1, 1, 1]} : vector<2x32x8xbf16> to vector<2x31x8xbf16>
    %154 = tpu.concatenate %153, %152 in 1 : vector<2x31x8xbf16>, vector<2x1x8xbf16> -> vector<2x32x8xbf16>
    %155 = vector.shape_cast %154 : vector<2x32x8xbf16> to vector<64x8xbf16>
    %cst_47 = arith.constant dense<0.000000e+00> : vector<64x32xf32>
    %156 = tpu.matmul %155, %151, %cst_47 {dimension_numbers = #tpu.dot_dimension_numbers<[1], [0], [0], [1], [0, 0, 1, 1], [], []>} : vector<64x8xbf16>, vector<8x32xbf16>, vector<64x32xf32> -> vector<64x32xf32>
    %157 = arith.addf %150, %156 : vector<64x32xf32>
    %158 = vector.extract_strided_slice %136 {offsets = [0, 32, 0], sizes = [2, 32, 8], strides = [1, 1, 1]} : vector<2x128x8xbf16> to vector<2x32x8xbf16>
    %159 = vector.extract_strided_slice %137 {offsets = [48, 0], sizes = [8, 32], strides = [1, 1]} : vector<96x32xbf16> to vector<8x32xbf16>
    %cst_48 = arith.constant 0.000000e+00 : bf16
    %160 = vector.broadcast %cst_48 : bf16 to vector<2x1x8xbf16>
    %161 = vector.extract_strided_slice %158 {offsets = [0, 0, 0], sizes = [2, 31, 8], strides = [1, 1, 1]} : vector<2x32x8xbf16> to vector<2x31x8xbf16>
    %162 = tpu.concatenate %160, %161 in 1 : vector<2x1x8xbf16>, vector<2x31x8xbf16> -> vector<2x32x8xbf16>
    %163 = vector.shape_cast %162 : vector<2x32x8xbf16> to vector<64x8xbf16>
    %cst_49 = arith.constant dense<0.000000e+00> : vector<64x32xf32>
    %164 = tpu.matmul %163, %159, %cst_49 {dimension_numbers = #tpu.dot_dimension_numbers<[1], [0], [0], [1], [0, 0, 1, 1], [], []>} : vector<64x8xbf16>, vector<8x32xbf16>, vector<64x32xf32> -> vector<64x32xf32>
    %165 = arith.addf %157, %164 : vector<64x32xf32>
    %166 = vector.extract_strided_slice %137 {offsets = [56, 0], sizes = [8, 32], strides = [1, 1]} : vector<96x32xbf16> to vector<8x32xbf16>
    %167 = vector.shape_cast %158 : vector<2x32x8xbf16> to vector<64x8xbf16>
    %cst_50 = arith.constant dense<0.000000e+00> : vector<64x32xf32>
    %168 = tpu.matmul %167, %166, %cst_50 {dimension_numbers = #tpu.dot_dimension_numbers<[1], [0], [0], [1], [0, 0, 1, 1], [], []>} : vector<64x8xbf16>, vector<8x32xbf16>, vector<64x32xf32> -> vector<64x32xf32>
    %169 = arith.addf %165, %168 : vector<64x32xf32>
    %170 = vector.extract_strided_slice %137 {offsets = [64, 0], sizes = [8, 32], strides = [1, 1]} : vector<96x32xbf16> to vector<8x32xbf16>
    %cst_51 = arith.constant 0.000000e+00 : bf16
    %171 = vector.broadcast %cst_51 : bf16 to vector<2x1x8xbf16>
    %172 = vector.extract_strided_slice %158 {offsets = [0, 1, 0], sizes = [2, 31, 8], strides = [1, 1, 1]} : vector<2x32x8xbf16> to vector<2x31x8xbf16>
    %173 = tpu.concatenate %172, %171 in 1 : vector<2x31x8xbf16>, vector<2x1x8xbf16> -> vector<2x32x8xbf16>
    %174 = vector.shape_cast %173 : vector<2x32x8xbf16> to vector<64x8xbf16>
    %cst_52 = arith.constant dense<0.000000e+00> : vector<64x32xf32>
    %175 = tpu.matmul %174, %170, %cst_52 {dimension_numbers = #tpu.dot_dimension_numbers<[1], [0], [0], [1], [0, 0, 1, 1], [], []>} : vector<64x8xbf16>, vector<8x32xbf16>, vector<64x32xf32> -> vector<64x32xf32>
    %176 = arith.addf %169, %175 : vector<64x32xf32>
    %177 = vector.extract_strided_slice %136 {offsets = [0, 64, 0], sizes = [2, 32, 8], strides = [1, 1, 1]} : vector<2x128x8xbf16> to vector<2x32x8xbf16>
    %178 = vector.extract_strided_slice %137 {offsets = [72, 0], sizes = [8, 32], strides = [1, 1]} : vector<96x32xbf16> to vector<8x32xbf16>
    %cst_53 = arith.constant 0.000000e+00 : bf16
    %179 = vector.broadcast %cst_53 : bf16 to vector<2x1x8xbf16>
    %180 = vector.extract_strided_slice %177 {offsets = [0, 0, 0], sizes = [2, 31, 8], strides = [1, 1, 1]} : vector<2x32x8xbf16> to vector<2x31x8xbf16>
    %181 = tpu.concatenate %179, %180 in 1 : vector<2x1x8xbf16>, vector<2x31x8xbf16> -> vector<2x32x8xbf16>
    %182 = vector.shape_cast %181 : vector<2x32x8xbf16> to vector<64x8xbf16>
    %cst_54 = arith.constant dense<0.000000e+00> : vector<64x32xf32>
    %183 = tpu.matmul %182, %178, %cst_54 {dimension_numbers = #tpu.dot_dimension_numbers<[1], [0], [0], [1], [0, 0, 1, 1], [], []>} : vector<64x8xbf16>, vector<8x32xbf16>, vector<64x32xf32> -> vector<64x32xf32>
    %184 = arith.addf %176, %183 : vector<64x32xf32>
    %185 = vector.extract_strided_slice %137 {offsets = [80, 0], sizes = [8, 32], strides = [1, 1]} : vector<96x32xbf16> to vector<8x32xbf16>
    %186 = vector.shape_cast %177 : vector<2x32x8xbf16> to vector<64x8xbf16>
    %cst_55 = arith.constant dense<0.000000e+00> : vector<64x32xf32>
    %187 = tpu.matmul %186, %185, %cst_55 {dimension_numbers = #tpu.dot_dimension_numbers<[1], [0], [0], [1], [0, 0, 1, 1], [], []>} : vector<64x8xbf16>, vector<8x32xbf16>, vector<64x32xf32> -> vector<64x32xf32>
    %188 = arith.addf %184, %187 : vector<64x32xf32>
    %189 = vector.extract_strided_slice %137 {offsets = [88, 0], sizes = [8, 32], strides = [1, 1]} : vector<96x32xbf16> to vector<8x32xbf16>
    %cst_56 = arith.constant 0.000000e+00 : bf16
    %190 = vector.broadcast %cst_56 : bf16 to vector<2x1x8xbf16>
    %191 = vector.extract_strided_slice %177 {offsets = [0, 1, 0], sizes = [2, 31, 8], strides = [1, 1, 1]} : vector<2x32x8xbf16> to vector<2x31x8xbf16>
    %192 = tpu.concatenate %191, %190 in 1 : vector<2x31x8xbf16>, vector<2x1x8xbf16> -> vector<2x32x8xbf16>
    %193 = vector.shape_cast %192 : vector<2x32x8xbf16> to vector<64x8xbf16>
    %cst_57 = arith.constant dense<0.000000e+00> : vector<64x32xf32>
    %194 = tpu.matmul %193, %189, %cst_57 {dimension_numbers = #tpu.dot_dimension_numbers<[1], [0], [0], [1], [0, 0, 1, 1], [], []>} : vector<64x8xbf16>, vector<8x32xbf16>, vector<64x32xf32> -> vector<64x32xf32>
    %195 = arith.addf %188, %194 : vector<64x32xf32>
    %196 = vector.shape_cast %195 : vector<64x32xf32> to vector<2x32x32xf32>
    %cst_58 = arith.constant 0.000000e+00 : f32
    %197 = vector.broadcast %cst_58 : f32 to vector<64x32xf32>
    %198 = vector.extract_strided_slice %136 {offsets = [0, 32, 0], sizes = [2, 32, 8], strides = [1, 1, 1]} : vector<2x128x8xbf16> to vector<2x32x8xbf16>
    %199 = vector.extract_strided_slice %137 {offsets = [0, 0], sizes = [8, 32], strides = [1, 1]} : vector<96x32xbf16> to vector<8x32xbf16>
    %cst_59 = arith.constant 0.000000e+00 : bf16
    %200 = vector.broadcast %cst_59 : bf16 to vector<2x1x8xbf16>
    %201 = vector.extract_strided_slice %198 {offsets = [0, 0, 0], sizes = [2, 31, 8], strides = [1, 1, 1]} : vector<2x32x8xbf16> to vector<2x31x8xbf16>
    %202 = tpu.concatenate %200, %201 in 1 : vector<2x1x8xbf16>, vector<2x31x8xbf16> -> vector<2x32x8xbf16>
    %203 = vector.shape_cast %202 : vector<2x32x8xbf16> to vector<64x8xbf16>
    %cst_60 = arith.constant dense<0.000000e+00> : vector<64x32xf32>
    %204 = tpu.matmul %203, %199, %cst_60 {dimension_numbers = #tpu.dot_dimension_numbers<[1], [0], [0], [1], [0, 0, 1, 1], [], []>} : vector<64x8xbf16>, vector<8x32xbf16>, vector<64x32xf32> -> vector<64x32xf32>
    %205 = arith.addf %197, %204 : vector<64x32xf32>
    %206 = vector.extract_strided_slice %137 {offsets = [8, 0], sizes = [8, 32], strides = [1, 1]} : vector<96x32xbf16> to vector<8x32xbf16>
    %207 = vector.shape_cast %198 : vector<2x32x8xbf16> to vector<64x8xbf16>
    %cst_61 = arith.constant dense<0.000000e+00> : vector<64x32xf32>
    %208 = tpu.matmul %207, %206, %cst_61 {dimension_numbers = #tpu.dot_dimension_numbers<[1], [0], [0], [1], [0, 0, 1, 1], [], []>} : vector<64x8xbf16>, vector<8x32xbf16>, vector<64x32xf32> -> vector<64x32xf32>
    %209 = arith.addf %205, %208 : vector<64x32xf32>
    %210 = vector.extract_strided_slice %137 {offsets = [16, 0], sizes = [8, 32], strides = [1, 1]} : vector<96x32xbf16> to vector<8x32xbf16>
    %cst_62 = arith.constant 0.000000e+00 : bf16
    %211 = vector.broadcast %cst_62 : bf16 to vector<2x1x8xbf16>
    %212 = vector.extract_strided_slice %198 {offsets = [0, 1, 0], sizes = [2, 31, 8], strides = [1, 1, 1]} : vector<2x32x8xbf16> to vector<2x31x8xbf16>
    %213 = tpu.concatenate %212, %211 in 1 : vector<2x31x8xbf16>, vector<2x1x8xbf16> -> vector<2x32x8xbf16>
    %214 = vector.shape_cast %213 : vector<2x32x8xbf16> to vector<64x8xbf16>
    %cst_63 = arith.constant dense<0.000000e+00> : vector<64x32xf32>
    %215 = tpu.matmul %214, %210, %cst_63 {dimension_numbers = #tpu.dot_dimension_numbers<[1], [0], [0], [1], [0, 0, 1, 1], [], []>} : vector<64x8xbf16>, vector<8x32xbf16>, vector<64x32xf32> -> vector<64x32xf32>
    %216 = arith.addf %209, %215 : vector<64x32xf32>
    %217 = vector.extract_strided_slice %136 {offsets = [0, 64, 0], sizes = [2, 32, 8], strides = [1, 1, 1]} : vector<2x128x8xbf16> to vector<2x32x8xbf16>
    %218 = vector.extract_strided_slice %137 {offsets = [24, 0], sizes = [8, 32], strides = [1, 1]} : vector<96x32xbf16> to vector<8x32xbf16>
    %cst_64 = arith.constant 0.000000e+00 : bf16
    %219 = vector.broadcast %cst_64 : bf16 to vector<2x1x8xbf16>
    %220 = vector.extract_strided_slice %217 {offsets = [0, 0, 0], sizes = [2, 31, 8], strides = [1, 1, 1]} : vector<2x32x8xbf16> to vector<2x31x8xbf16>
    %221 = tpu.concatenate %219, %220 in 1 : vector<2x1x8xbf16>, vector<2x31x8xbf16> -> vector<2x32x8xbf16>
    %222 = vector.shape_cast %221 : vector<2x32x8xbf16> to vector<64x8xbf16>
    %cst_65 = arith.constant dense<0.000000e+00> : vector<64x32xf32>
    %223 = tpu.matmul %222, %218, %cst_65 {dimension_numbers = #tpu.dot_dimension_numbers<[1], [0], [0], [1], [0, 0, 1, 1], [], []>} : vector<64x8xbf16>, vector<8x32xbf16>, vector<64x32xf32> -> vector<64x32xf32>
    %224 = arith.addf %216, %223 : vector<64x32xf32>
    %225 = vector.extract_strided_slice %137 {offsets = [32, 0], sizes = [8, 32], strides = [1, 1]} : vector<96x32xbf16> to vector<8x32xbf16>
    %226 = vector.shape_cast %217 : vector<2x32x8xbf16> to vector<64x8xbf16>
    %cst_66 = arith.constant dense<0.000000e+00> : vector<64x32xf32>
    %227 = tpu.matmul %226, %225, %cst_66 {dimension_numbers = #tpu.dot_dimension_numbers<[1], [0], [0], [1], [0, 0, 1, 1], [], []>} : vector<64x8xbf16>, vector<8x32xbf16>, vector<64x32xf32> -> vector<64x32xf32>
    %228 = arith.addf %224, %227 : vector<64x32xf32>
    %229 = vector.extract_strided_slice %137 {offsets = [40, 0], sizes = [8, 32], strides = [1, 1]} : vector<96x32xbf16> to vector<8x32xbf16>
    %cst_67 = arith.constant 0.000000e+00 : bf16
    %230 = vector.broadcast %cst_67 : bf16 to vector<2x1x8xbf16>
    %231 = vector.extract_strided_slice %217 {offsets = [0, 1, 0], sizes = [2, 31, 8], strides = [1, 1, 1]} : vector<2x32x8xbf16> to vector<2x31x8xbf16>
    %232 = tpu.concatenate %231, %230 in 1 : vector<2x31x8xbf16>, vector<2x1x8xbf16> -> vector<2x32x8xbf16>
    %233 = vector.shape_cast %232 : vector<2x32x8xbf16> to vector<64x8xbf16>
    %cst_68 = arith.constant dense<0.000000e+00> : vector<64x32xf32>
    %234 = tpu.matmul %233, %229, %cst_68 {dimension_numbers = #tpu.dot_dimension_numbers<[1], [0], [0], [1], [0, 0, 1, 1], [], []>} : vector<64x8xbf16>, vector<8x32xbf16>, vector<64x32xf32> -> vector<64x32xf32>
    %235 = arith.addf %228, %234 : vector<64x32xf32>
    %236 = vector.extract_strided_slice %136 {offsets = [0, 96, 0], sizes = [2, 32, 8], strides = [1, 1, 1]} : vector<2x128x8xbf16> to vector<2x32x8xbf16>
    %237 = vector.extract_strided_slice %137 {offsets = [48, 0], sizes = [8, 32], strides = [1, 1]} : vector<96x32xbf16> to vector<8x32xbf16>
    %cst_69 = arith.constant 0.000000e+00 : bf16
    %238 = vector.broadcast %cst_69 : bf16 to vector<2x1x8xbf16>
    %239 = vector.extract_strided_slice %236 {offsets = [0, 0, 0], sizes = [2, 31, 8], strides = [1, 1, 1]} : vector<2x32x8xbf16> to vector<2x31x8xbf16>
    %240 = tpu.concatenate %238, %239 in 1 : vector<2x1x8xbf16>, vector<2x31x8xbf16> -> vector<2x32x8xbf16>
    %241 = vector.shape_cast %240 : vector<2x32x8xbf16> to vector<64x8xbf16>
    %cst_70 = arith.constant dense<0.000000e+00> : vector<64x32xf32>
    %242 = tpu.matmul %241, %237, %cst_70 {dimension_numbers = #tpu.dot_dimension_numbers<[1], [0], [0], [1], [0, 0, 1, 1], [], []>} : vector<64x8xbf16>, vector<8x32xbf16>, vector<64x32xf32> -> vector<64x32xf32>
    %243 = arith.addf %235, %242 : vector<64x32xf32>
    %244 = vector.extract_strided_slice %137 {offsets = [56, 0], sizes = [8, 32], strides = [1, 1]} : vector<96x32xbf16> to vector<8x32xbf16>
    %245 = vector.shape_cast %236 : vector<2x32x8xbf16> to vector<64x8xbf16>
    %cst_71 = arith.constant dense<0.000000e+00> : vector<64x32xf32>
    %246 = tpu.matmul %245, %244, %cst_71 {dimension_numbers = #tpu.dot_dimension_numbers<[1], [0], [0], [1], [0, 0, 1, 1], [], []>} : vector<64x8xbf16>, vector<8x32xbf16>, vector<64x32xf32> -> vector<64x32xf32>
    %247 = arith.addf %243, %246 : vector<64x32xf32>
    %248 = vector.extract_strided_slice %137 {offsets = [64, 0], sizes = [8, 32], strides = [1, 1]} : vector<96x32xbf16> to vector<8x32xbf16>
    %cst_72 = arith.constant 0.000000e+00 : bf16
    %249 = vector.broadcast %cst_72 : bf16 to vector<2x1x8xbf16>
    %250 = vector.extract_strided_slice %236 {offsets = [0, 1, 0], sizes = [2, 31, 8], strides = [1, 1, 1]} : vector<2x32x8xbf16> to vector<2x31x8xbf16>
    %251 = tpu.concatenate %250, %249 in 1 : vector<2x31x8xbf16>, vector<2x1x8xbf16> -> vector<2x32x8xbf16>
    %252 = vector.shape_cast %251 : vector<2x32x8xbf16> to vector<64x8xbf16>
    %cst_73 = arith.constant dense<0.000000e+00> : vector<64x32xf32>
    %253 = tpu.matmul %252, %248, %cst_73 {dimension_numbers = #tpu.dot_dimension_numbers<[1], [0], [0], [1], [0, 0, 1, 1], [], []>} : vector<64x8xbf16>, vector<8x32xbf16>, vector<64x32xf32> -> vector<64x32xf32>
    %254 = arith.addf %247, %253 : vector<64x32xf32>
    %255 = vector.shape_cast %254 : vector<64x32xf32> to vector<2x32x32xf32>
    %256 = tpu.concatenate %196, %255 in 1 : vector<2x32x32xf32>, vector<2x32x32xf32> -> vector<2x64x32xf32>
    %cst_74 = arith.constant dense<0.000000e+00> : vector<2x32xf32>
    %257 = vector.multi_reduction <add>, %256, %cst_74 [1] : vector<2x64x32xf32> to vector<2x32xf32>
    %258 = vector.shape_cast %257 : vector<2x32xf32> to vector<2x1x32xf32>
    %cst_75 = arith.constant 6.400000e+01 : f32
    %259 = vector.broadcast %cst_75 : f32 to vector<2x1x32xf32>
    %260 = arith.divf %258, %259 : vector<2x1x32xf32>
    %261 = vector.broadcast %260 : vector<2x1x32xf32> to vector<2x64x32xf32>
    %262 = arith.subf %256, %261 : vector<2x64x32xf32>
    %263 = arith.mulf %262, %262 : vector<2x64x32xf32>
    %cst_76 = arith.constant dense<0.000000e+00> : vector<2x32xf32>
    %264 = vector.multi_reduction <add>, %263, %cst_76 [1] : vector<2x64x32xf32> to vector<2x32xf32>
    %265 = vector.shape_cast %264 : vector<2x32xf32> to vector<2x1x32xf32>
    %cst_77 = arith.constant 6.400000e+01 : f32
    %266 = vector.broadcast %cst_77 : f32 to vector<2x1x32xf32>
    %267 = arith.divf %265, %266 : vector<2x1x32xf32>
    %268 = vector.broadcast %260 : vector<2x1x32xf32> to vector<2x64x32xf32>
    %269 = arith.subf %256, %268 : vector<2x64x32xf32>
    %cst_78 = arith.constant 9.99999974E-6 : f32
    %270 = vector.broadcast %cst_78 : f32 to vector<2x1x32xf32>
    %271 = arith.addf %267, %270 : vector<2x1x32xf32>
    %272 = math.rsqrt %271 : vector<2x1x32xf32>
    %273 = vector.broadcast %272 : vector<2x1x32xf32> to vector<2x64x32xf32>
    %274 = arith.mulf %269, %273 : vector<2x64x32xf32>
    %275 = vector.extract_strided_slice %274 {offsets = [0, 0, 0], sizes = [2, 64, 16], strides = [1, 1, 1]} : vector<2x64x32xf32> to vector<2x64x16xf32>
    %276 = vector.extract_strided_slice %274 {offsets = [0, 0, 16], sizes = [2, 64, 16], strides = [1, 1, 1]} : vector<2x64x32xf32> to vector<2x64x16xf32>
    %277 = arith.negf %276 : vector<2x64x16xf32>
    %278 = math.exp %277 : vector<2x64x16xf32>
    %cst_79 = arith.constant 1.000000e+00 : f32
    %279 = vector.broadcast %cst_79 : f32 to vector<2x64x16xf32>
    %280 = arith.addf %279, %278 : vector<2x64x16xf32>
    %281 = arith.divf %279, %280 : vector<2x64x16xf32>
    %282 = arith.mulf %275, %281 : vector<2x64x16xf32>
    %283 = arith.truncf %282 : vector<2x64x16xf32> to vector<2x64x16xbf16>
    %c0_80 = arith.constant 0 : index
    %c0_81 = arith.constant 0 : index
    %284 = vector.load %arg4[%c0_80, %c0_81] : memref<144x64xbf16, #tpu.memory_space<vmem>>, vector<144x64xbf16>
    %cst_82 = arith.constant 0.000000e+00 : f32
    %285 = vector.broadcast %cst_82 : f32 to vector<64x64xf32>
    %286 = vector.extract_strided_slice %283 {offsets = [0, 0, 0], sizes = [2, 32, 16], strides = [1, 1, 1]} : vector<2x64x16xbf16> to vector<2x32x16xbf16>
    %287 = vector.extract_strided_slice %284 {offsets = [48, 0], sizes = [16, 64], strides = [1, 1]} : vector<144x64xbf16> to vector<16x64xbf16>
    %cst_83 = arith.constant 0.000000e+00 : bf16
    %288 = vector.broadcast %cst_83 : bf16 to vector<2x1x16xbf16>
    %289 = vector.extract_strided_slice %286 {offsets = [0, 0, 0], sizes = [2, 31, 16], strides = [1, 1, 1]} : vector<2x32x16xbf16> to vector<2x31x16xbf16>
    %290 = tpu.concatenate %288, %289 in 1 : vector<2x1x16xbf16>, vector<2x31x16xbf16> -> vector<2x32x16xbf16>
    %291 = vector.shape_cast %290 : vector<2x32x16xbf16> to vector<64x16xbf16>
    %cst_84 = arith.constant dense<0.000000e+00> : vector<64x64xf32>
    %292 = tpu.matmul %291, %287, %cst_84 {dimension_numbers = #tpu.dot_dimension_numbers<[1], [0], [0], [1], [0, 0, 1, 1], [], []>} : vector<64x16xbf16>, vector<16x64xbf16>, vector<64x64xf32> -> vector<64x64xf32>
    %293 = arith.addf %285, %292 : vector<64x64xf32>
    %294 = vector.extract_strided_slice %284 {offsets = [64, 0], sizes = [16, 64], strides = [1, 1]} : vector<144x64xbf16> to vector<16x64xbf16>
    %295 = vector.shape_cast %286 : vector<2x32x16xbf16> to vector<64x16xbf16>
    %cst_85 = arith.constant dense<0.000000e+00> : vector<64x64xf32>
    %296 = tpu.matmul %295, %294, %cst_85 {dimension_numbers = #tpu.dot_dimension_numbers<[1], [0], [0], [1], [0, 0, 1, 1], [], []>} : vector<64x16xbf16>, vector<16x64xbf16>, vector<64x64xf32> -> vector<64x64xf32>
    %297 = arith.addf %293, %296 : vector<64x64xf32>
    %298 = vector.extract_strided_slice %284 {offsets = [80, 0], sizes = [16, 64], strides = [1, 1]} : vector<144x64xbf16> to vector<16x64xbf16>
    %cst_86 = arith.constant 0.000000e+00 : bf16
    %299 = vector.broadcast %cst_86 : bf16 to vector<2x1x16xbf16>
    %300 = vector.extract_strided_slice %286 {offsets = [0, 1, 0], sizes = [2, 31, 16], strides = [1, 1, 1]} : vector<2x32x16xbf16> to vector<2x31x16xbf16>
    %301 = tpu.concatenate %300, %299 in 1 : vector<2x31x16xbf16>, vector<2x1x16xbf16> -> vector<2x32x16xbf16>
    %302 = vector.shape_cast %301 : vector<2x32x16xbf16> to vector<64x16xbf16>
    %cst_87 = arith.constant dense<0.000000e+00> : vector<64x64xf32>
    %303 = tpu.matmul %302, %298, %cst_87 {dimension_numbers = #tpu.dot_dimension_numbers<[1], [0], [0], [1], [0, 0, 1, 1], [], []>} : vector<64x16xbf16>, vector<16x64xbf16>, vector<64x64xf32> -> vector<64x64xf32>
    %304 = arith.addf %297, %303 : vector<64x64xf32>
    %305 = vector.extract_strided_slice %283 {offsets = [0, 32, 0], sizes = [2, 32, 16], strides = [1, 1, 1]} : vector<2x64x16xbf16> to vector<2x32x16xbf16>
    %306 = vector.extract_strided_slice %284 {offsets = [96, 0], sizes = [16, 64], strides = [1, 1]} : vector<144x64xbf16> to vector<16x64xbf16>
    %cst_88 = arith.constant 0.000000e+00 : bf16
    %307 = vector.broadcast %cst_88 : bf16 to vector<2x1x16xbf16>
    %308 = vector.extract_strided_slice %305 {offsets = [0, 0, 0], sizes = [2, 31, 16], strides = [1, 1, 1]} : vector<2x32x16xbf16> to vector<2x31x16xbf16>
    %309 = tpu.concatenate %307, %308 in 1 : vector<2x1x16xbf16>, vector<2x31x16xbf16> -> vector<2x32x16xbf16>
    %310 = vector.shape_cast %309 : vector<2x32x16xbf16> to vector<64x16xbf16>
    %cst_89 = arith.constant dense<0.000000e+00> : vector<64x64xf32>
    %311 = tpu.matmul %310, %306, %cst_89 {dimension_numbers = #tpu.dot_dimension_numbers<[1], [0], [0], [1], [0, 0, 1, 1], [], []>} : vector<64x16xbf16>, vector<16x64xbf16>, vector<64x64xf32> -> vector<64x64xf32>
    %312 = arith.addf %304, %311 : vector<64x64xf32>
    %313 = vector.extract_strided_slice %284 {offsets = [112, 0], sizes = [16, 64], strides = [1, 1]} : vector<144x64xbf16> to vector<16x64xbf16>
    %314 = vector.shape_cast %305 : vector<2x32x16xbf16> to vector<64x16xbf16>
    %cst_90 = arith.constant dense<0.000000e+00> : vector<64x64xf32>
    %315 = tpu.matmul %314, %313, %cst_90 {dimension_numbers = #tpu.dot_dimension_numbers<[1], [0], [0], [1], [0, 0, 1, 1], [], []>} : vector<64x16xbf16>, vector<16x64xbf16>, vector<64x64xf32> -> vector<64x64xf32>
    %316 = arith.addf %312, %315 : vector<64x64xf32>
    %317 = vector.extract_strided_slice %284 {offsets = [128, 0], sizes = [16, 64], strides = [1, 1]} : vector<144x64xbf16> to vector<16x64xbf16>
    %cst_91 = arith.constant 0.000000e+00 : bf16
    %318 = vector.broadcast %cst_91 : bf16 to vector<2x1x16xbf16>
    %319 = vector.extract_strided_slice %305 {offsets = [0, 1, 0], sizes = [2, 31, 16], strides = [1, 1, 1]} : vector<2x32x16xbf16> to vector<2x31x16xbf16>
    %320 = tpu.concatenate %319, %318 in 1 : vector<2x31x16xbf16>, vector<2x1x16xbf16> -> vector<2x32x16xbf16>
    %321 = vector.shape_cast %320 : vector<2x32x16xbf16> to vector<64x16xbf16>
    %cst_92 = arith.constant dense<0.000000e+00> : vector<64x64xf32>
    %322 = tpu.matmul %321, %317, %cst_92 {dimension_numbers = #tpu.dot_dimension_numbers<[1], [0], [0], [1], [0, 0, 1, 1], [], []>} : vector<64x16xbf16>, vector<16x64xbf16>, vector<64x64xf32> -> vector<64x64xf32>
    %323 = arith.addf %316, %322 : vector<64x64xf32>
    %324 = vector.shape_cast %323 : vector<64x64xf32> to vector<2x32x64xf32>
    %cst_93 = arith.constant 0.000000e+00 : f32
    %325 = vector.broadcast %cst_93 : f32 to vector<64x64xf32>
    %326 = vector.extract_strided_slice %283 {offsets = [0, 0, 0], sizes = [2, 32, 16], strides = [1, 1, 1]} : vector<2x64x16xbf16> to vector<2x32x16xbf16>
    %327 = vector.extract_strided_slice %284 {offsets = [0, 0], sizes = [16, 64], strides = [1, 1]} : vector<144x64xbf16> to vector<16x64xbf16>
    %cst_94 = arith.constant 0.000000e+00 : bf16
    %328 = vector.broadcast %cst_94 : bf16 to vector<2x1x16xbf16>
    %329 = vector.extract_strided_slice %326 {offsets = [0, 0, 0], sizes = [2, 31, 16], strides = [1, 1, 1]} : vector<2x32x16xbf16> to vector<2x31x16xbf16>
    %330 = tpu.concatenate %328, %329 in 1 : vector<2x1x16xbf16>, vector<2x31x16xbf16> -> vector<2x32x16xbf16>
    %331 = vector.shape_cast %330 : vector<2x32x16xbf16> to vector<64x16xbf16>
    %cst_95 = arith.constant dense<0.000000e+00> : vector<64x64xf32>
    %332 = tpu.matmul %331, %327, %cst_95 {dimension_numbers = #tpu.dot_dimension_numbers<[1], [0], [0], [1], [0, 0, 1, 1], [], []>} : vector<64x16xbf16>, vector<16x64xbf16>, vector<64x64xf32> -> vector<64x64xf32>
    %333 = arith.addf %325, %332 : vector<64x64xf32>
    %334 = vector.extract_strided_slice %284 {offsets = [16, 0], sizes = [16, 64], strides = [1, 1]} : vector<144x64xbf16> to vector<16x64xbf16>
    %335 = vector.shape_cast %326 : vector<2x32x16xbf16> to vector<64x16xbf16>
    %cst_96 = arith.constant dense<0.000000e+00> : vector<64x64xf32>
    %336 = tpu.matmul %335, %334, %cst_96 {dimension_numbers = #tpu.dot_dimension_numbers<[1], [0], [0], [1], [0, 0, 1, 1], [], []>} : vector<64x16xbf16>, vector<16x64xbf16>, vector<64x64xf32> -> vector<64x64xf32>
    %337 = arith.addf %333, %336 : vector<64x64xf32>
    %338 = vector.extract_strided_slice %284 {offsets = [32, 0], sizes = [16, 64], strides = [1, 1]} : vector<144x64xbf16> to vector<16x64xbf16>
    %cst_97 = arith.constant 0.000000e+00 : bf16
    %339 = vector.broadcast %cst_97 : bf16 to vector<2x1x16xbf16>
    %340 = vector.extract_strided_slice %326 {offsets = [0, 1, 0], sizes = [2, 31, 16], strides = [1, 1, 1]} : vector<2x32x16xbf16> to vector<2x31x16xbf16>
    %341 = tpu.concatenate %340, %339 in 1 : vector<2x31x16xbf16>, vector<2x1x16xbf16> -> vector<2x32x16xbf16>
    %342 = vector.shape_cast %341 : vector<2x32x16xbf16> to vector<64x16xbf16>
    %cst_98 = arith.constant dense<0.000000e+00> : vector<64x64xf32>
    %343 = tpu.matmul %342, %338, %cst_98 {dimension_numbers = #tpu.dot_dimension_numbers<[1], [0], [0], [1], [0, 0, 1, 1], [], []>} : vector<64x16xbf16>, vector<16x64xbf16>, vector<64x64xf32> -> vector<64x64xf32>
    %344 = arith.addf %337, %343 : vector<64x64xf32>
    %345 = vector.extract_strided_slice %283 {offsets = [0, 32, 0], sizes = [2, 32, 16], strides = [1, 1, 1]} : vector<2x64x16xbf16> to vector<2x32x16xbf16>
    %346 = vector.extract_strided_slice %284 {offsets = [48, 0], sizes = [16, 64], strides = [1, 1]} : vector<144x64xbf16> to vector<16x64xbf16>
    %cst_99 = arith.constant 0.000000e+00 : bf16
    %347 = vector.broadcast %cst_99 : bf16 to vector<2x1x16xbf16>
    %348 = vector.extract_strided_slice %345 {offsets = [0, 0, 0], sizes = [2, 31, 16], strides = [1, 1, 1]} : vector<2x32x16xbf16> to vector<2x31x16xbf16>
    %349 = tpu.concatenate %347, %348 in 1 : vector<2x1x16xbf16>, vector<2x31x16xbf16> -> vector<2x32x16xbf16>
    %350 = vector.shape_cast %349 : vector<2x32x16xbf16> to vector<64x16xbf16>
    %cst_100 = arith.constant dense<0.000000e+00> : vector<64x64xf32>
    %351 = tpu.matmul %350, %346, %cst_100 {dimension_numbers = #tpu.dot_dimension_numbers<[1], [0], [0], [1], [0, 0, 1, 1], [], []>} : vector<64x16xbf16>, vector<16x64xbf16>, vector<64x64xf32> -> vector<64x64xf32>
    %352 = arith.addf %344, %351 : vector<64x64xf32>
    %353 = vector.extract_strided_slice %284 {offsets = [64, 0], sizes = [16, 64], strides = [1, 1]} : vector<144x64xbf16> to vector<16x64xbf16>
    %354 = vector.shape_cast %345 : vector<2x32x16xbf16> to vector<64x16xbf16>
    %cst_101 = arith.constant dense<0.000000e+00> : vector<64x64xf32>
    %355 = tpu.matmul %354, %353, %cst_101 {dimension_numbers = #tpu.dot_dimension_numbers<[1], [0], [0], [1], [0, 0, 1, 1], [], []>} : vector<64x16xbf16>, vector<16x64xbf16>, vector<64x64xf32> -> vector<64x64xf32>
    %356 = arith.addf %352, %355 : vector<64x64xf32>
    %357 = vector.extract_strided_slice %284 {offsets = [80, 0], sizes = [16, 64], strides = [1, 1]} : vector<144x64xbf16> to vector<16x64xbf16>
    %cst_102 = arith.constant 0.000000e+00 : bf16
    %358 = vector.broadcast %cst_102 : bf16 to vector<2x1x16xbf16>
    %359 = vector.extract_strided_slice %345 {offsets = [0, 1, 0], sizes = [2, 31, 16], strides = [1, 1, 1]} : vector<2x32x16xbf16> to vector<2x31x16xbf16>
    %360 = tpu.concatenate %359, %358 in 1 : vector<2x31x16xbf16>, vector<2x1x16xbf16> -> vector<2x32x16xbf16>
    %361 = vector.shape_cast %360 : vector<2x32x16xbf16> to vector<64x16xbf16>
    %cst_103 = arith.constant dense<0.000000e+00> : vector<64x64xf32>
    %362 = tpu.matmul %361, %357, %cst_103 {dimension_numbers = #tpu.dot_dimension_numbers<[1], [0], [0], [1], [0, 0, 1, 1], [], []>} : vector<64x16xbf16>, vector<16x64xbf16>, vector<64x64xf32> -> vector<64x64xf32>
    %363 = arith.addf %356, %362 : vector<64x64xf32>
    %364 = vector.shape_cast %363 : vector<64x64xf32> to vector<2x32x64xf32>
    %365 = tpu.concatenate %324, %364 in 1 : vector<2x32x64xf32>, vector<2x32x64xf32> -> vector<2x64x64xf32>
    %cst_104 = arith.constant dense<0.000000e+00> : vector<2x64xf32>
    %366 = vector.multi_reduction <add>, %365, %cst_104 [1] : vector<2x64x64xf32> to vector<2x64xf32>
    %367 = vector.shape_cast %366 : vector<2x64xf32> to vector<2x1x64xf32>
    %cst_105 = arith.constant 6.400000e+01 : f32
    %368 = vector.broadcast %cst_105 : f32 to vector<2x1x64xf32>
    %369 = arith.divf %367, %368 : vector<2x1x64xf32>
    %370 = vector.broadcast %369 : vector<2x1x64xf32> to vector<2x64x64xf32>
    %371 = arith.subf %365, %370 : vector<2x64x64xf32>
    %372 = arith.mulf %371, %371 : vector<2x64x64xf32>
    %cst_106 = arith.constant dense<0.000000e+00> : vector<2x64xf32>
    %373 = vector.multi_reduction <add>, %372, %cst_106 [1] : vector<2x64x64xf32> to vector<2x64xf32>
    %374 = vector.shape_cast %373 : vector<2x64xf32> to vector<2x1x64xf32>
    %cst_107 = arith.constant 6.400000e+01 : f32
    %375 = vector.broadcast %cst_107 : f32 to vector<2x1x64xf32>
    %376 = arith.divf %374, %375 : vector<2x1x64xf32>
    %377 = vector.broadcast %369 : vector<2x1x64xf32> to vector<2x64x64xf32>
    %378 = arith.subf %365, %377 : vector<2x64x64xf32>
    %cst_108 = arith.constant 9.99999974E-6 : f32
    %379 = vector.broadcast %cst_108 : f32 to vector<2x1x64xf32>
    %380 = arith.addf %376, %379 : vector<2x1x64xf32>
    %381 = math.rsqrt %380 : vector<2x1x64xf32>
    %382 = vector.broadcast %381 : vector<2x1x64xf32> to vector<2x64x64xf32>
    %383 = arith.mulf %378, %382 : vector<2x64x64xf32>
    %384 = vector.extract_strided_slice %383 {offsets = [0, 0, 0], sizes = [2, 64, 32], strides = [1, 1, 1]} : vector<2x64x64xf32> to vector<2x64x32xf32>
    %385 = vector.extract_strided_slice %383 {offsets = [0, 0, 32], sizes = [2, 64, 32], strides = [1, 1, 1]} : vector<2x64x64xf32> to vector<2x64x32xf32>
    %386 = arith.negf %385 : vector<2x64x32xf32>
    %387 = math.exp %386 : vector<2x64x32xf32>
    %cst_109 = arith.constant 1.000000e+00 : f32
    %388 = vector.broadcast %cst_109 : f32 to vector<2x64x32xf32>
    %389 = arith.addf %388, %387 : vector<2x64x32xf32>
    %390 = arith.divf %388, %389 : vector<2x64x32xf32>
    %391 = arith.mulf %384, %390 : vector<2x64x32xf32>
    %392 = arith.truncf %391 : vector<2x64x32xf32> to vector<2x64x32xbf16>
    %c0_110 = arith.constant 0 : index
    %c0_111 = arith.constant 0 : index
    %393 = vector.load %arg5[%c0_110, %c0_111] : memref<288x32xbf16, #tpu.memory_space<vmem>>, vector<288x32xbf16>
    %cst_112 = arith.constant 0.000000e+00 : f32
    %394 = vector.broadcast %cst_112 : f32 to vector<64x32xf32>
    %395 = vector.extract_strided_slice %392 {offsets = [0, 0, 0], sizes = [2, 32, 32], strides = [1, 1, 1]} : vector<2x64x32xbf16> to vector<2x32x32xbf16>
    %396 = vector.extract_strided_slice %393 {offsets = [96, 0], sizes = [32, 32], strides = [1, 1]} : vector<288x32xbf16> to vector<32x32xbf16>
    %cst_113 = arith.constant 0.000000e+00 : bf16
    %397 = vector.broadcast %cst_113 : bf16 to vector<2x1x32xbf16>
    %398 = vector.extract_strided_slice %395 {offsets = [0, 0, 0], sizes = [2, 31, 32], strides = [1, 1, 1]} : vector<2x32x32xbf16> to vector<2x31x32xbf16>
    %399 = tpu.concatenate %397, %398 in 1 : vector<2x1x32xbf16>, vector<2x31x32xbf16> -> vector<2x32x32xbf16>
    %400 = vector.shape_cast %399 : vector<2x32x32xbf16> to vector<64x32xbf16>
    %cst_114 = arith.constant dense<0.000000e+00> : vector<64x32xf32>
    %401 = tpu.matmul %400, %396, %cst_114 {dimension_numbers = #tpu.dot_dimension_numbers<[1], [0], [0], [1], [0, 0, 1, 1], [], []>} : vector<64x32xbf16>, vector<32x32xbf16>, vector<64x32xf32> -> vector<64x32xf32>
    %402 = arith.addf %394, %401 : vector<64x32xf32>
    %403 = vector.extract_strided_slice %393 {offsets = [128, 0], sizes = [32, 32], strides = [1, 1]} : vector<288x32xbf16> to vector<32x32xbf16>
    %404 = vector.shape_cast %395 : vector<2x32x32xbf16> to vector<64x32xbf16>
    %cst_115 = arith.constant dense<0.000000e+00> : vector<64x32xf32>
    %405 = tpu.matmul %404, %403, %cst_115 {dimension_numbers = #tpu.dot_dimension_numbers<[1], [0], [0], [1], [0, 0, 1, 1], [], []>} : vector<64x32xbf16>, vector<32x32xbf16>, vector<64x32xf32> -> vector<64x32xf32>
    %406 = arith.addf %402, %405 : vector<64x32xf32>
    %407 = vector.extract_strided_slice %393 {offsets = [160, 0], sizes = [32, 32], strides = [1, 1]} : vector<288x32xbf16> to vector<32x32xbf16>
    %cst_116 = arith.constant 0.000000e+00 : bf16
    %408 = vector.broadcast %cst_116 : bf16 to vector<2x1x32xbf16>
    %409 = vector.extract_strided_slice %395 {offsets = [0, 1, 0], sizes = [2, 31, 32], strides = [1, 1, 1]} : vector<2x32x32xbf16> to vector<2x31x32xbf16>
    %410 = tpu.concatenate %409, %408 in 1 : vector<2x31x32xbf16>, vector<2x1x32xbf16> -> vector<2x32x32xbf16>
    %411 = vector.shape_cast %410 : vector<2x32x32xbf16> to vector<64x32xbf16>
    %cst_117 = arith.constant dense<0.000000e+00> : vector<64x32xf32>
    %412 = tpu.matmul %411, %407, %cst_117 {dimension_numbers = #tpu.dot_dimension_numbers<[1], [0], [0], [1], [0, 0, 1, 1], [], []>} : vector<64x32xbf16>, vector<32x32xbf16>, vector<64x32xf32> -> vector<64x32xf32>
    %413 = arith.addf %406, %412 : vector<64x32xf32>
    %414 = vector.extract_strided_slice %392 {offsets = [0, 32, 0], sizes = [2, 32, 32], strides = [1, 1, 1]} : vector<2x64x32xbf16> to vector<2x32x32xbf16>
    %415 = vector.extract_strided_slice %393 {offsets = [192, 0], sizes = [32, 32], strides = [1, 1]} : vector<288x32xbf16> to vector<32x32xbf16>
    %cst_118 = arith.constant 0.000000e+00 : bf16
    %416 = vector.broadcast %cst_118 : bf16 to vector<2x1x32xbf16>
    %417 = vector.extract_strided_slice %414 {offsets = [0, 0, 0], sizes = [2, 31, 32], strides = [1, 1, 1]} : vector<2x32x32xbf16> to vector<2x31x32xbf16>
    %418 = tpu.concatenate %416, %417 in 1 : vector<2x1x32xbf16>, vector<2x31x32xbf16> -> vector<2x32x32xbf16>
    %419 = vector.shape_cast %418 : vector<2x32x32xbf16> to vector<64x32xbf16>
    %cst_119 = arith.constant dense<0.000000e+00> : vector<64x32xf32>
    %420 = tpu.matmul %419, %415, %cst_119 {dimension_numbers = #tpu.dot_dimension_numbers<[1], [0], [0], [1], [0, 0, 1, 1], [], []>} : vector<64x32xbf16>, vector<32x32xbf16>, vector<64x32xf32> -> vector<64x32xf32>
    %421 = arith.addf %413, %420 : vector<64x32xf32>
    %422 = vector.extract_strided_slice %393 {offsets = [224, 0], sizes = [32, 32], strides = [1, 1]} : vector<288x32xbf16> to vector<32x32xbf16>
    %423 = vector.shape_cast %414 : vector<2x32x32xbf16> to vector<64x32xbf16>
    %cst_120 = arith.constant dense<0.000000e+00> : vector<64x32xf32>
    %424 = tpu.matmul %423, %422, %cst_120 {dimension_numbers = #tpu.dot_dimension_numbers<[1], [0], [0], [1], [0, 0, 1, 1], [], []>} : vector<64x32xbf16>, vector<32x32xbf16>, vector<64x32xf32> -> vector<64x32xf32>
    %425 = arith.addf %421, %424 : vector<64x32xf32>
    %426 = vector.extract_strided_slice %393 {offsets = [256, 0], sizes = [32, 32], strides = [1, 1]} : vector<288x32xbf16> to vector<32x32xbf16>
    %cst_121 = arith.constant 0.000000e+00 : bf16
    %427 = vector.broadcast %cst_121 : bf16 to vector<2x1x32xbf16>
    %428 = vector.extract_strided_slice %414 {offsets = [0, 1, 0], sizes = [2, 31, 32], strides = [1, 1, 1]} : vector<2x32x32xbf16> to vector<2x31x32xbf16>
    %429 = tpu.concatenate %428, %427 in 1 : vector<2x31x32xbf16>, vector<2x1x32xbf16> -> vector<2x32x32xbf16>
    %430 = vector.shape_cast %429 : vector<2x32x32xbf16> to vector<64x32xbf16>
    %cst_122 = arith.constant dense<0.000000e+00> : vector<64x32xf32>
    %431 = tpu.matmul %430, %426, %cst_122 {dimension_numbers = #tpu.dot_dimension_numbers<[1], [0], [0], [1], [0, 0, 1, 1], [], []>} : vector<64x32xbf16>, vector<32x32xbf16>, vector<64x32xf32> -> vector<64x32xf32>
    %432 = arith.addf %425, %431 : vector<64x32xf32>
    %433 = vector.shape_cast %432 : vector<64x32xf32> to vector<2x32x32xf32>
    %cst_123 = arith.constant 0.000000e+00 : f32
    %434 = vector.broadcast %cst_123 : f32 to vector<64x32xf32>
    %435 = vector.extract_strided_slice %392 {offsets = [0, 0, 0], sizes = [2, 32, 32], strides = [1, 1, 1]} : vector<2x64x32xbf16> to vector<2x32x32xbf16>
    %436 = vector.extract_strided_slice %393 {offsets = [0, 0], sizes = [32, 32], strides = [1, 1]} : vector<288x32xbf16> to vector<32x32xbf16>
    %cst_124 = arith.constant 0.000000e+00 : bf16
    %437 = vector.broadcast %cst_124 : bf16 to vector<2x1x32xbf16>
    %438 = vector.extract_strided_slice %435 {offsets = [0, 0, 0], sizes = [2, 31, 32], strides = [1, 1, 1]} : vector<2x32x32xbf16> to vector<2x31x32xbf16>
    %439 = tpu.concatenate %437, %438 in 1 : vector<2x1x32xbf16>, vector<2x31x32xbf16> -> vector<2x32x32xbf16>
    %440 = vector.shape_cast %439 : vector<2x32x32xbf16> to vector<64x32xbf16>
    %cst_125 = arith.constant dense<0.000000e+00> : vector<64x32xf32>
    %441 = tpu.matmul %440, %436, %cst_125 {dimension_numbers = #tpu.dot_dimension_numbers<[1], [0], [0], [1], [0, 0, 1, 1], [], []>} : vector<64x32xbf16>, vector<32x32xbf16>, vector<64x32xf32> -> vector<64x32xf32>
    %442 = arith.addf %434, %441 : vector<64x32xf32>
    %443 = vector.extract_strided_slice %393 {offsets = [32, 0], sizes = [32, 32], strides = [1, 1]} : vector<288x32xbf16> to vector<32x32xbf16>
    %444 = vector.shape_cast %435 : vector<2x32x32xbf16> to vector<64x32xbf16>
    %cst_126 = arith.constant dense<0.000000e+00> : vector<64x32xf32>
    %445 = tpu.matmul %444, %443, %cst_126 {dimension_numbers = #tpu.dot_dimension_numbers<[1], [0], [0], [1], [0, 0, 1, 1], [], []>} : vector<64x32xbf16>, vector<32x32xbf16>, vector<64x32xf32> -> vector<64x32xf32>
    %446 = arith.addf %442, %445 : vector<64x32xf32>
    %447 = vector.extract_strided_slice %393 {offsets = [64, 0], sizes = [32, 32], strides = [1, 1]} : vector<288x32xbf16> to vector<32x32xbf16>
    %cst_127 = arith.constant 0.000000e+00 : bf16
    %448 = vector.broadcast %cst_127 : bf16 to vector<2x1x32xbf16>
    %449 = vector.extract_strided_slice %435 {offsets = [0, 1, 0], sizes = [2, 31, 32], strides = [1, 1, 1]} : vector<2x32x32xbf16> to vector<2x31x32xbf16>
    %450 = tpu.concatenate %449, %448 in 1 : vector<2x31x32xbf16>, vector<2x1x32xbf16> -> vector<2x32x32xbf16>
    %451 = vector.shape_cast %450 : vector<2x32x32xbf16> to vector<64x32xbf16>
    %cst_128 = arith.constant dense<0.000000e+00> : vector<64x32xf32>
    %452 = tpu.matmul %451, %447, %cst_128 {dimension_numbers = #tpu.dot_dimension_numbers<[1], [0], [0], [1], [0, 0, 1, 1], [], []>} : vector<64x32xbf16>, vector<32x32xbf16>, vector<64x32xf32> -> vector<64x32xf32>
    %453 = arith.addf %446, %452 : vector<64x32xf32>
    %454 = vector.extract_strided_slice %392 {offsets = [0, 32, 0], sizes = [2, 32, 32], strides = [1, 1, 1]} : vector<2x64x32xbf16> to vector<2x32x32xbf16>
    %455 = vector.extract_strided_slice %393 {offsets = [96, 0], sizes = [32, 32], strides = [1, 1]} : vector<288x32xbf16> to vector<32x32xbf16>
    %cst_129 = arith.constant 0.000000e+00 : bf16
    %456 = vector.broadcast %cst_129 : bf16 to vector<2x1x32xbf16>
    %457 = vector.extract_strided_slice %454 {offsets = [0, 0, 0], sizes = [2, 31, 32], strides = [1, 1, 1]} : vector<2x32x32xbf16> to vector<2x31x32xbf16>
    %458 = tpu.concatenate %456, %457 in 1 : vector<2x1x32xbf16>, vector<2x31x32xbf16> -> vector<2x32x32xbf16>
    %459 = vector.shape_cast %458 : vector<2x32x32xbf16> to vector<64x32xbf16>
    %cst_130 = arith.constant dense<0.000000e+00> : vector<64x32xf32>
    %460 = tpu.matmul %459, %455, %cst_130 {dimension_numbers = #tpu.dot_dimension_numbers<[1], [0], [0], [1], [0, 0, 1, 1], [], []>} : vector<64x32xbf16>, vector<32x32xbf16>, vector<64x32xf32> -> vector<64x32xf32>
    %461 = arith.addf %453, %460 : vector<64x32xf32>
    %462 = vector.extract_strided_slice %393 {offsets = [128, 0], sizes = [32, 32], strides = [1, 1]} : vector<288x32xbf16> to vector<32x32xbf16>
    %463 = vector.shape_cast %454 : vector<2x32x32xbf16> to vector<64x32xbf16>
    %cst_131 = arith.constant dense<0.000000e+00> : vector<64x32xf32>
    %464 = tpu.matmul %463, %462, %cst_131 {dimension_numbers = #tpu.dot_dimension_numbers<[1], [0], [0], [1], [0, 0, 1, 1], [], []>} : vector<64x32xbf16>, vector<32x32xbf16>, vector<64x32xf32> -> vector<64x32xf32>
    %465 = arith.addf %461, %464 : vector<64x32xf32>
    %466 = vector.extract_strided_slice %393 {offsets = [160, 0], sizes = [32, 32], strides = [1, 1]} : vector<288x32xbf16> to vector<32x32xbf16>
    %cst_132 = arith.constant 0.000000e+00 : bf16
    %467 = vector.broadcast %cst_132 : bf16 to vector<2x1x32xbf16>
    %468 = vector.extract_strided_slice %454 {offsets = [0, 1, 0], sizes = [2, 31, 32], strides = [1, 1, 1]} : vector<2x32x32xbf16> to vector<2x31x32xbf16>
    %469 = tpu.concatenate %468, %467 in 1 : vector<2x31x32xbf16>, vector<2x1x32xbf16> -> vector<2x32x32xbf16>
    %470 = vector.shape_cast %469 : vector<2x32x32xbf16> to vector<64x32xbf16>
    %cst_133 = arith.constant dense<0.000000e+00> : vector<64x32xf32>
    %471 = tpu.matmul %470, %466, %cst_133 {dimension_numbers = #tpu.dot_dimension_numbers<[1], [0], [0], [1], [0, 0, 1, 1], [], []>} : vector<64x32xbf16>, vector<32x32xbf16>, vector<64x32xf32> -> vector<64x32xf32>
    %472 = arith.addf %465, %471 : vector<64x32xf32>
    %473 = vector.shape_cast %472 : vector<64x32xf32> to vector<2x32x32xf32>
    %474 = tpu.concatenate %433, %473 in 1 : vector<2x32x32xf32>, vector<2x32x32xf32> -> vector<2x64x32xf32>
    %cst_134 = arith.constant dense<0.000000e+00> : vector<2x32xf32>
    %475 = vector.multi_reduction <add>, %474, %cst_134 [1] : vector<2x64x32xf32> to vector<2x32xf32>
    %476 = vector.shape_cast %475 : vector<2x32xf32> to vector<2x1x32xf32>
    %cst_135 = arith.constant 6.400000e+01 : f32
    %477 = vector.broadcast %cst_135 : f32 to vector<2x1x32xf32>
    %478 = arith.divf %476, %477 : vector<2x1x32xf32>
    %479 = vector.broadcast %478 : vector<2x1x32xf32> to vector<2x64x32xf32>
    %480 = arith.subf %474, %479 : vector<2x64x32xf32>
    %481 = arith.mulf %480, %480 : vector<2x64x32xf32>
    %cst_136 = arith.constant dense<0.000000e+00> : vector<2x32xf32>
    %482 = vector.multi_reduction <add>, %481, %cst_136 [1] : vector<2x64x32xf32> to vector<2x32xf32>
    %483 = vector.shape_cast %482 : vector<2x32xf32> to vector<2x1x32xf32>
    %cst_137 = arith.constant 6.400000e+01 : f32
    %484 = vector.broadcast %cst_137 : f32 to vector<2x1x32xf32>
    %485 = arith.divf %483, %484 : vector<2x1x32xf32>
    %486 = vector.broadcast %478 : vector<2x1x32xf32> to vector<2x64x32xf32>
    %487 = arith.subf %474, %486 : vector<2x64x32xf32>
    %cst_138 = arith.constant 9.99999974E-6 : f32
    %488 = vector.broadcast %cst_138 : f32 to vector<2x1x32xf32>
    %489 = arith.addf %485, %488 : vector<2x1x32xf32>
    %490 = math.rsqrt %489 : vector<2x1x32xf32>
    %491 = vector.broadcast %490 : vector<2x1x32xf32> to vector<2x64x32xf32>
    %492 = arith.mulf %487, %491 : vector<2x64x32xf32>
    %493 = vector.extract_strided_slice %492 {offsets = [0, 0, 0], sizes = [2, 64, 16], strides = [1, 1, 1]} : vector<2x64x32xf32> to vector<2x64x16xf32>
    %494 = vector.extract_strided_slice %492 {offsets = [0, 0, 16], sizes = [2, 64, 16], strides = [1, 1, 1]} : vector<2x64x32xf32> to vector<2x64x16xf32>
    %495 = arith.negf %494 : vector<2x64x16xf32>
    %496 = math.exp %495 : vector<2x64x16xf32>
    %cst_139 = arith.constant 1.000000e+00 : f32
    %497 = vector.broadcast %cst_139 : f32 to vector<2x64x16xf32>
    %498 = arith.addf %497, %496 : vector<2x64x16xf32>
    %499 = arith.divf %497, %498 : vector<2x64x16xf32>
    %500 = arith.mulf %493, %499 : vector<2x64x16xf32>
    %501 = arith.truncf %500 : vector<2x64x16xf32> to vector<2x64x16xbf16>
    %c0_140 = arith.constant 0 : index
    %c0_141 = arith.constant 0 : index
    %502 = vector.load %arg6[%c0_140, %c0_141] : memref<32x4xbf16, #tpu.memory_space<vmem>>, vector<32x4xbf16>
    %503 = vector.extract_strided_slice %501 {offsets = [0, 0, 0], sizes = [2, 32, 16], strides = [1, 1, 1]} : vector<2x64x16xbf16> to vector<2x32x16xbf16>
    %504 = vector.shape_cast %503 : vector<2x32x16xbf16> to vector<64x16xbf16>
    %505 = vector.extract_strided_slice %501 {offsets = [0, 32, 0], sizes = [2, 32, 16], strides = [1, 1, 1]} : vector<2x64x16xbf16> to vector<2x32x16xbf16>
    %506 = vector.shape_cast %505 : vector<2x32x16xbf16> to vector<64x16xbf16>
    %507 = vector.extract_strided_slice %502 {offsets = [0, 0], sizes = [16, 4], strides = [1, 1]} : vector<32x4xbf16> to vector<16x4xbf16>
    %cst_142 = arith.constant dense<0.000000e+00> : vector<64x4xf32>
    %508 = tpu.matmul %504, %507, %cst_142 {dimension_numbers = #tpu.dot_dimension_numbers<[1], [0], [0], [1], [0, 0, 1, 1], [], []>} : vector<64x16xbf16>, vector<16x4xbf16>, vector<64x4xf32> -> vector<64x4xf32>
    %509 = vector.extract_strided_slice %502 {offsets = [16, 0], sizes = [16, 4], strides = [1, 1]} : vector<32x4xbf16> to vector<16x4xbf16>
    %cst_143 = arith.constant dense<0.000000e+00> : vector<64x4xf32>
    %510 = tpu.matmul %506, %509, %cst_143 {dimension_numbers = #tpu.dot_dimension_numbers<[1], [0], [0], [1], [0, 0, 1, 1], [], []>} : vector<64x16xbf16>, vector<16x4xbf16>, vector<64x4xf32> -> vector<64x4xf32>
    %511 = arith.addf %508, %510 : vector<64x4xf32>
    %c0_144 = arith.constant 0 : index
    %c0_145 = arith.constant 0 : index
    %512 = vector.load %arg7[%c0_144, %c0_145] : memref<1x4xf32, #tpu.memory_space<vmem>>, vector<1x4xf32>
    %513 = vector.broadcast %512 : vector<1x4xf32> to vector<64x4xf32>
    %514 = arith.addf %511, %513 : vector<64x4xf32>
    %cst_146 = arith.constant dense<0xFF800000> : vector<64xf32>
    %515 = vector.multi_reduction <maximumf>, %514, %cst_146 [1] : vector<64x4xf32> to vector<64xf32>
    %516 = vector.shape_cast %515 : vector<64xf32> to vector<64x1xf32>
    %517 = vector.broadcast %516 : vector<64x1xf32> to vector<64x4xf32>
    %518 = arith.subf %514, %517 : vector<64x4xf32>
    %519 = math.exp %518 : vector<64x4xf32>
    %cst_147 = arith.constant dense<0.000000e+00> : vector<64xf32>
    %520 = vector.multi_reduction <add>, %519, %cst_147 [1] : vector<64x4xf32> to vector<64xf32>
    %521 = vector.shape_cast %520 : vector<64xf32> to vector<64x1xf32>
    %522 = math.log %521 : vector<64x1xf32>
    %523 = arith.addf %516, %522 : vector<64x1xf32>
    %524 = vector.broadcast %523 : vector<64x1xf32> to vector<64x4xf32>
    %525 = arith.subf %514, %524 : vector<64x4xf32>
    %526 = vector.shape_cast %525 : vector<64x4xf32> to vector<2x32x4xf32>
    %c0_148 = arith.constant 0 : index
    %c0_149 = arith.constant 0 : index
    %c0_150 = arith.constant 0 : index
    %527 = vector.load %arg8[%c0_148, %c0_149, %c0_150] : memref<2x32x4xf32, #tpu.memory_space<vmem>>, vector<2x32x4xf32>
    tpu.vector_store %arg8[%c0_148, %c0_149, %c0_150], %526 {strides = array<i32>} : memref<2x32x4xf32, #tpu.memory_space<vmem>>, vector<2x32x4xf32>,
    return
  }
  func.func @transform_0(%arg0: i32) -> (i32, i32, i32) {
    %c0_i32 = arith.constant 0 : i32
    %c0_i32_0 = arith.constant 0 : i32
    %c0_i32_1 = arith.constant 0 : i32
    return %arg0, %c0_i32, %c0_i32_0 : i32, i32, i32
  }
  func.func @transform_1(%arg0: i32) -> (i32, i32) {
    %c0_i32 = arith.constant 0 : i32
    %c0_i32_0 = arith.constant 0 : i32
    %c0_i32_1 = arith.constant 0 : i32
    return %c0_i32, %c0_i32_0 : i32, i32
  }
  func.func @transform_2(%arg0: i32) -> (i32, i32) {
    %c0_i32 = arith.constant 0 : i32
    %c0_i32_0 = arith.constant 0 : i32
    %c0_i32_1 = arith.constant 0 : i32
    return %c0_i32, %c0_i32_0 : i32, i32
  }
  func.func @transform_3(%arg0: i32) -> (i32, i32) {
    %c0_i32 = arith.constant 0 : i32
    %c0_i32_0 = arith.constant 0 : i32
    %c0_i32_1 = arith.constant 0 : i32
    return %c0_i32, %c0_i32_0 : i32, i32
  }
  func.func @transform_4(%arg0: i32) -> (i32, i32) {
    %c0_i32 = arith.constant 0 : i32
    %c0_i32_0 = arith.constant 0 : i32
    %c0_i32_1 = arith.constant 0 : i32
    return %c0_i32, %c0_i32_0 : i32, i32
  }
  func.func @transform_5(%arg0: i32) -> (i32, i32) {
    %c0_i32 = arith.constant 0 : i32
    %c0_i32_0 = arith.constant 0 : i32
    %c0_i32_1 = arith.constant 0 : i32
    return %c0_i32, %c0_i32_0 : i32, i32
  }
  func.func @transform_6(%arg0: i32) -> (i32, i32) {
    %c0_i32 = arith.constant 0 : i32
    %c0_i32_0 = arith.constant 0 : i32
    %c0_i32_1 = arith.constant 0 : i32
    return %c0_i32, %c0_i32_0 : i32, i32
  }
  func.func @transform_7(%arg0: i32) -> (i32, i32, i32) {
    %c0_i32 = arith.constant 0 : i32
    %c0_i32_0 = arith.constant 0 : i32
    %c0_i32_1 = arith.constant 0 : i32
    return %arg0, %c0_i32, %c0_i32_0 : i32, i32, i32
  }
}

</mosaic_0001>

<llo_original>
// kernel: lang_classifier_forward.1
$region0: #{lang_classifier_forward.1}
  #allocation0 [shape = 'u32[]', space=smem, size = 0x4, offset = 0x4, fixed_abs, tag = 'smem constant byte address 0x4 - core index']
  #allocation1 [shape = 'u32[72,128]{1,0:T(1,128)}', space=vmem, size = 0x9000, scoped, tag = 'internal scratch']
  %s0 = inlined_call_operand.vmem [shape: bf16[2,256,1], index: 0, kind: input, shape index: {}]
  %s1 = inlined_call_operand.vmem [shape: bf16[12,16], index: 1, kind: input, shape index: {}]
  %s2 = inlined_call_operand.vmem [shape: bf16[96,32], index: 2, kind: input, shape index: {}]
  %s3 = inlined_call_operand.vmem [shape: bf16[144,64], index: 3, kind: input, shape index: {}]
  %s4 = inlined_call_operand.vmem [shape: bf16[288,32], index: 4, kind: input, shape index: {}]
  %s5 = inlined_call_operand.vmem [shape: bf16[32,4], index: 5, kind: input, shape index: {}]
  %s6 = inlined_call_operand.vmem [shape: f32[1,4], index: 6, kind: input, shape index: {}]
  %s7 = inlined_call_operand.vmem [shape: f32[2,32,4], index: 7, kind: output, shape index: {}]
  %s8 = sld [smem:[#allocation0]]
  $region38: #{lang_classifier_forward.1} parent=0
    _
  %s10 = ssub.s32 1, %s8
  %s11 = scalar_select 0, %s10, %s8
  // Predicated region
  $region2: #{lang_classifier_forward.1} parent=0 // pred_check
    _
  $region3: #{lang_classifier_forward.1} parent=0 // pred_check_branch
    %13 = sbr.rel (0) target = $region5
  $region4: #{lang_classifier_forward.1} parent=0 // pred_region
    _
  $region5: #{lang_classifier_forward.1} parent=0 // pred_fallthru
    _
  // Predicated region
  $region6: #{lang_classifier_forward.1} parent=0 // pred_check
    _
  $region7: #{lang_classifier_forward.1} parent=0 // pred_check_branch
    %15 = sbr.rel (0) target = $region9
  $region8: #{lang_classifier_forward.1} parent=0 // pred_region
    _
  $region9: #{lang_classifier_forward.1} parent=0 // pred_fallthru
    _
  // Predicated region
  $region10: #{lang_classifier_forward.1} parent=0 // pred_check
    _
  $region11: #{lang_classifier_forward.1} parent=0 // pred_check_branch
    %17 = sbr.rel (0) target = $region13
  $region12: #{lang_classifier_forward.1} parent=0 // pred_region
    _
  $region13: #{lang_classifier_forward.1} parent=0 // pred_fallthru
    _
  // Predicated region
  $region14: #{lang_classifier_forward.1} parent=0 // pred_check
    _
  $region15: #{lang_classifier_forward.1} parent=0 // pred_check_branch
    %19 = sbr.rel (0) target = $region17
  $region16: #{lang_classifier_forward.1} parent=0 // pred_region
    _
  $region17: #{lang_classifier_forward.1} parent=0 // pred_fallthru
    _
  // Predicated region
  $region18: #{lang_classifier_forward.1} parent=0 // pred_check
    _
  $region19: #{lang_classifier_forward.1} parent=0 // pred_check_branch
    %21 = sbr.rel (0) target = $region21
  $region20: #{lang_classifier_forward.1} parent=0 // pred_region
    _
  $region21: #{lang_classifier_forward.1} parent=0 // pred_fallthru
    _
  // Predicated region
  $region22: #{lang_classifier_forward.1} parent=0 // pred_check
    _
  $region23: #{lang_classifier_forward.1} parent=0 // pred_check_branch
    %23 = sbr.rel (0) target = $region25
  $region24: #{lang_classifier_forward.1} parent=0 // pred_region
    _
  $region25: #{lang_classifier_forward.1} parent=0 // pred_fallthru
    _
  // Predicated region
  $region26: #{lang_classifier_forward.1} parent=0 // pred_check
    _
  $region27: #{lang_classifier_forward.1} parent=0 // pred_check_branch
    %25 = sbr.rel (0) target = $region29
  $region28: #{lang_classifier_forward.1} parent=0 // pred_region
    _
  $region29: #{lang_classifier_forward.1} parent=0 // pred_fallthru
    _
  %v27 = vld [vmem:[%s0] sm:$0xf]
  %v28 = vld [vmem:[%s0 + $0x4] sm:$0xf]
  %v29 = vld [vmem:[%s0 + $0x8] sm:$0xf]
  %v30 = vld [vmem:[%s0 + $0xc] sm:$0xf]
  %v31 = vld [vmem:[%s0 + $0x10] sm:$0xf]
  %v32 = vld [vmem:[%s0 + $0x14] sm:$0xf]
  %v33 = vld [vmem:[%s0 + $0x18] sm:$0xf]
  %v34 = vld [vmem:[%s0 + $0x1c] sm:$0xf]
  %v35 = vld [vmem:[%s0 + $0x20] sm:$0xf]
  %v36 = vld [vmem:[%s0 + $0x24] sm:$0xf]
  %v37 = vld [vmem:[%s0 + $0x28] sm:$0xf]
  %v38 = vld [vmem:[%s0 + $0x2c] sm:$0xf]
  %v39 = vld [vmem:[%s0 + $0x30] sm:$0xf]
  %v40 = vld [vmem:[%s0 + $0x34] sm:$0xf]
  %v41 = vld [vmem:[%s0 + $0x38] sm:$0xf]
  %v42 = vld [vmem:[%s0 + $0x3c] sm:$0xf]
  %v43 = vld [vmem:[%s0 + $0x40] sm:$0xf]
  %v44 = vld [vmem:[%s0 + $0x44] sm:$0xf]
  %v45 = vld [vmem:[%s0 + $0x48] sm:$0xf]
  %v46 = vld [vmem:[%s0 + $0x4c] sm:$0xf]
  %v47 = vld [vmem:[%s0 + $0x50] sm:$0xf]
  %v48 = vld [vmem:[%s0 + $0x54] sm:$0xf]
  %v49 = vld [vmem:[%s0 + $0x58] sm:$0xf]
  %v50 = vld [vmem:[%s0 + $0x5c] sm:$0xf]
  %v51 = vld [vmem:[%s0 + $0x60] sm:$0xf]
  %v52 = vld [vmem:[%s0 + $0x64] sm:$0xf]
  %v53 = vld [vmem:[%s0 + $0x68] sm:$0xf]
  %v54 = vld [vmem:[%s0 + $0x6c] sm:$0xf]
  %v55 = vld [vmem:[%s0 + $0x70] sm:$0xf]
  %v56 = vld [vmem:[%s0 + $0x74] sm:$0xf]
  %v57 = vld [vmem:[%s0 + $0x78] sm:$0xf]
  %v58 = vld [vmem:[%s0 + $0x7c] sm:$0xf]
  %v59 = vld [vmem:[%s0 + $0x80] sm:$0xf]
  %v60 = vld [vmem:[%s0 + $0x84] sm:$0xf]
  %v61 = vld [vmem:[%s0 + $0x88] sm:$0xf]
  %v62 = vld [vmem:[%s0 + $0x8c] sm:$0xf]
  %v63 = vld [vmem:[%s0 + $0x90] sm:$0xf]
  %v64 = vld [vmem:[%s0 + $0x94] sm:$0xf]
  %v65 = vld [vmem:[%s0 + $0x98] sm:$0xf]
  %v66 = vld [vmem:[%s0 + $0x9c] sm:$0xf]
  %v67 = vld [vmem:[%s0 + $0xa0] sm:$0xf]
  %v68 = vld [vmem:[%s0 + $0xa4] sm:$0xf]
  %v69 = vld [vmem:[%s0 + $0xa8] sm:$0xf]
  %v70 = vld [vmem:[%s0 + $0xac] sm:$0xf]
  %v71 = vld [vmem:[%s0 + $0xb0] sm:$0xf]
  %v72 = vld [vmem:[%s0 + $0xb4] sm:$0xf]
  %v73 = vld [vmem:[%s0 + $0xb8] sm:$0xf]
  %v74 = vld [vmem:[%s0 + $0xbc] sm:$0xf]
  %v75 = vld [vmem:[%s0 + $0xc0] sm:$0xf]
  %v76 = vld [vmem:[%s0 + $0xc4] sm:$0xf]
  %v77 = vld [vmem:[%s0 + $0xc8] sm:$0xf]
  %v78 = vld [vmem:[%s0 + $0xcc] sm:$0xf]
  %v79 = vld [vmem:[%s0 + $0xd0] sm:$0xf]
  %v80 = vld [vmem:[%s0 + $0xd4] sm:$0xf]
  %v81 = vld [vmem:[%s0 + $0xd8] sm:$0xf]
  %v82 = vld [vmem:[%s0 + $0xdc] sm:$0xf]
  %v83 = vld [vmem:[%s0 + $0xe0] sm:$0xf]
  %v84 = vld [vmem:[%s0 + $0xe4] sm:$0xf]
  %v85 = vld [vmem:[%s0 + $0xe8] sm:$0xf]
  %v86 = vld [vmem:[%s0 + $0xec] sm:$0xf]
  %v87 = vld [vmem:[%s0 + $0xf0] sm:$0xf]
  %v88 = vld [vmem:[%s0 + $0xf4] sm:$0xf]
  %v89 = vld [vmem:[%s0 + $0xf8] sm:$0xf]
  %v90 = vld [vmem:[%s0 + $0xfc] sm:$0xf]
  %v91 = vld [vmem:[%s1] sm:$0xf]
  %v92 = vld [vmem:[%s1 + $0x4] sm:$0x3]
  %v101 = vunpack.c.l.b16 %v27
  %v102 = vunpack.c.l.b16 %v28
  %v103 = vunpack.c.l.b16 %v29
  %v104 = vunpack.c.l.b16 %v30
  %v105 = vunpack.c.l.b16 %v59
  %v106 = vunpack.c.l.b16 %v60
  %v107 = vunpack.c.l.b16 %v61
  %v108 = vunpack.c.l.b16 %v62
  %v109 = vpack.c.b16 %v102, %v101
  %v110 = vpack.c.b16 %v104, %v103
  %v111 = vpack.c.b16 %v106, %v105
  %v112 = vpack.c.b16 %v108, %v107
  %vm113 = vsmask.f32 256
  %v115 = vshrl.u32 %v109, 16
  %v117 = vrot.slane %v115, 7
  %v118 = vshll.u32 %v109, 16
  %v120 = vor.u32 %v117, %v118
  %v122 = vshrl.u32 %v110, 16
  %v124 = vrot.slane %v122, 7
  %v125 = vshll.u32 %v110, 16
  %v127 = vor.u32 %v124, %v125
  %v128 = vsel %vm113, %v117, %v127
  %v130 = vshrl.u32 %v111, 16
  %v132 = vrot.slane %v130, 7
  %v133 = vshll.u32 %v111, 16
  %v135 = vor.u32 %v132, %v133
  %v137 = vshrl.u32 %v112, 16
  %v139 = vrot.slane %v137, 7
  %v140 = vshll.u32 %v112, 16
  %v142 = vor.u32 %v139, %v140
  %v143 = vsel %vm113, %v132, %v142
  %vm146 = vcmask 1040384
  %vm147 = vmand %vm146, %vm113
  %v148 = vsel %vm147, 0, %v120
  %v149 = vsel %vm147, 0, %v135
  %vm150 = vsmask.f32 7424
  %v151 = vrot.slane %v118, 1
  %v152 = vor.u32 %v115, %v151
  %v153 = vrot.slane %v125, 1
  %v154 = vsel %vm150, %v152, %v153
  %v155 = vor.u32 %v122, %v153
  %v156 = vrot.slane %v133, 1
  %v157 = vor.u32 %v130, %v156
  %v158 = vrot.slane %v140, 1
  %v159 = vsel %vm150, %v157, %v158
  %v160 = vor.u32 %v137, %v158
  %vm163 = vcmask 1047552
  %vm164 = vmand %vm163, %vm150
  %v165 = vsel %vm164, %v155, 0
  %v166 = vsel %vm164, %v160, 0
  %v175 = vunpack.c.l.b16 %v31
  %v176 = vunpack.c.l.b16 %v32
  %v177 = vunpack.c.l.b16 %v33
  %v178 = vunpack.c.l.b16 %v34
  %v179 = vunpack.c.l.b16 %v63
  %v180 = vunpack.c.l.b16 %v64
  %v181 = vunpack.c.l.b16 %v65
  %v182 = vunpack.c.l.b16 %v66
  %v183 = vpack.c.b16 %v176, %v175
  %v184 = vpack.c.b16 %v178, %v177
  %v185 = vpack.c.b16 %v180, %v179
  %v186 = vpack.c.b16 %v182, %v181
  %v188 = vshrl.u32 %v183, 16
  %v190 = vrot.slane %v188, 7
  %v191 = vshll.u32 %v183, 16
  %v193 = vor.u32 %v190, %v191
  %v195 = vshrl.u32 %v184, 16
  %v197 = vrot.slane %v195, 7
  %v198 = vshll.u32 %v184, 16
  %v200 = vor.u32 %v197, %v198
  %v201 = vsel %vm113, %v190, %v200
  %v203 = vshrl.u32 %v185, 16
  %v205 = vrot.slane %v203, 7
  %v206 = vshll.u32 %v185, 16
  %v208 = vor.u32 %v205, %v206
  %v210 = vshrl.u32 %v186, 16
  %v212 = vrot.slane %v210, 7
  %v213 = vshll.u32 %v186, 16
  %v215 = vor.u32 %v212, %v213
  %v216 = vsel %vm113, %v205, %v215
  %v219 = vsel %vm147, 0, %v193
  %v220 = vsel %vm147, 0, %v208
  %v221 = vrot.slane %v191, 1
  %v222 = vor.u32 %v188, %v221
  %v223 = vrot.slane %v198, 1
  %v224 = vsel %vm150, %v222, %v223
  %v225 = vor.u32 %v195, %v223
  %v226 = vrot.slane %v206, 1
  %v227 = vor.u32 %v203, %v226
  %v228 = vrot.slane %v213, 1
  %v229 = vsel %vm150, %v227, %v228
  %v230 = vor.u32 %v210, %v228
  %v233 = vsel %vm164, %v225, 0
  %v234 = vsel %vm164, %v230, 0
  %v243 = vunpack.c.l.b16 %v35
  %v244 = vunpack.c.l.b16 %v36
  %v245 = vunpack.c.l.b16 %v37
  %v246 = vunpack.c.l.b16 %v38
  %v247 = vunpack.c.l.b16 %v67
  %v248 = vunpack.c.l.b16 %v68
  %v249 = vunpack.c.l.b16 %v69
  %v250 = vunpack.c.l.b16 %v70
  %v251 = vpack.c.b16 %v244, %v243
  %v252 = vpack.c.b16 %v246, %v245
  %v253 = vpack.c.b16 %v248, %v247
  %v254 = vpack.c.b16 %v250, %v249
  %v256 = vshrl.u32 %v251, 16
  %v258 = vrot.slane %v256, 7
  %v259 = vshll.u32 %v251, 16
  %v261 = vor.u32 %v258, %v259
  %v263 = vshrl.u32 %v252, 16
  %v265 = vrot.slane %v263, 7
  %v266 = vshll.u32 %v252, 16
  %v268 = vor.u32 %v265, %v266
  %v269 = vsel %vm113, %v258, %v268
  %v271 = vshrl.u32 %v253, 16
  %v273 = vrot.slane %v271, 7
  %v274 = vshll.u32 %v253, 16
  %v276 = vor.u32 %v273, %v274
  %v278 = vshrl.u32 %v254, 16
  %v280 = vrot.slane %v278, 7
  %v281 = vshll.u32 %v254, 16
  %v283 = vor.u32 %v280, %v281
  %v284 = vsel %vm113, %v273, %v283
  %v287 = vsel %vm147, 0, %v261
  %v288 = vsel %vm147, 0, %v276
  %v289 = vrot.slane %v259, 1
  %v290 = vor.u32 %v256, %v289
  %v291 = vrot.slane %v266, 1
  %v292 = vsel %vm150, %v290, %v291
  %v293 = vor.u32 %v263, %v291
  %v294 = vrot.slane %v274, 1
  %v295 = vor.u32 %v271, %v294
  %v296 = vrot.slane %v281, 1
  %v297 = vsel %vm150, %v295, %v296
  %v298 = vor.u32 %v278, %v296
  %v301 = vsel %vm164, %v293, 0
  %v302 = vsel %vm164, %v298, 0
  %305 = vrot.lane.b32.xlu0 %v148, 3
  %v306 = vpop.permute.xlu0 %305
  %307 = vrot.lane.b32.xlu0 %v128, 3
  %v308 = vpop.permute.xlu0 %307
  %309 = vrot.lane.b32.xlu0 %v149, 3
  %v310 = vpop.permute.xlu0 %309
  %311 = vrot.lane.b32.xlu0 %v143, 3
  %v312 = vpop.permute.xlu0 %311
  %313 = vrot.lane.b32.xlu0 %v109, 4
  %v314 = vpop.permute.xlu0 %313
  %315 = vrot.lane.b32.xlu0 %v110, 4
  %v316 = vpop.permute.xlu0 %315
  %317 = vrot.lane.b32.xlu0 %v111, 4
  %v318 = vpop.permute.xlu0 %317
  %319 = vrot.lane.b32.xlu0 %v112, 4
  %v320 = vpop.permute.xlu0 %319
  %323 = vrot.lane.b32.xlu0 %v154, 5
  %v324 = vpop.permute.xlu0 %323
  %325 = vrot.lane.b32.xlu0 %v165, 5
  %v326 = vpop.permute.xlu0 %325
  %327 = vrot.lane.b32.xlu0 %v159, 5
  %v328 = vpop.permute.xlu0 %327
  %329 = vrot.lane.b32.xlu0 %v166, 5
  %v330 = vpop.permute.xlu0 %329
  %333 = vrot.lane.b32.xlu0 %v219, 6
  %v334 = vpop.permute.xlu0 %333
  %335 = vrot.lane.b32.xlu0 %v201, 6
  %v336 = vpop.permute.xlu0 %335
  %337 = vrot.lane.b32.xlu0 %v220, 6
  %v338 = vpop.permute.xlu0 %337
  %339 = vrot.lane.b32.xlu0 %v216, 6
  %v340 = vpop.permute.xlu0 %339
  %341 = vrot.lane.b32.xlu0 %v183, 7
  %v342 = vpop.permute.xlu0 %341
  %343 = vrot.lane.b32.xlu0 %v184, 7
  %v344 = vpop.permute.xlu0 %343
  %345 = vrot.lane.b32.xlu0 %v185, 7
  %v346 = vpop.permute.xlu0 %345
  %347 = vrot.lane.b32.xlu0 %v186, 7
  %v348 = vpop.permute.xlu0 %347
  %351 = vrot.lane.b32.xlu0 %v224, 8
  %v352 = vpop.permute.xlu0 %351
  %353 = vrot.lane.b32.xlu0 %v233, 8
  %v354 = vpop.permute.xlu0 %353
  %355 = vrot.lane.b32.xlu0 %v229, 8
  %v356 = vpop.permute.xlu0 %355
  %357 = vrot.lane.b32.xlu0 %v234, 8
  %v358 = vpop.permute.xlu0 %357
  %361 = vrot.lane.b32.xlu0 %v287, 9
  %v362 = vpop.permute.xlu0 %361
  %363 = vrot.lane.b32.xlu0 %v269, 9
  %v364 = vpop.permute.xlu0 %363
  %365 = vrot.lane.b32.xlu0 %v288, 9
  %v366 = vpop.permute.xlu0 %365
  %367 = vrot.lane.b32.xlu0 %v284, 9
  %v368 = vpop.permute.xlu0 %367
  %369 = vrot.lane.b32.xlu0 %v251, 10
  %v370 = vpop.permute.xlu0 %369
  %371 = vrot.lane.b32.xlu0 %v252, 10
  %v372 = vpop.permute.xlu0 %371
  %373 = vrot.lane.b32.xlu0 %v253, 10
  %v374 = vpop.permute.xlu0 %373
  %375 = vrot.lane.b32.xlu0 %v254, 10
  %v376 = vpop.permute.xlu0 %375
  %379 = vrot.lane.b32.xlu0 %v292, 11
  %v380 = vpop.permute.xlu0 %379
  %381 = vrot.lane.b32.xlu0 %v301, 11
  %v382 = vpop.permute.xlu0 %381
  %383 = vrot.lane.b32.xlu0 %v297, 11
  %v384 = vpop.permute.xlu0 %383
  %385 = vrot.lane.b32.xlu0 %v302, 11
  %v386 = vpop.permute.xlu0 %385
  %vm387 = vcmask 23552
  %v390 = vsel %vm387, 0, %v306
  %v392 = vsel %vm387, 0, %v308
  %v394 = vsel %vm387, 0, %v310
  %v396 = vsel %vm387, 0, %v312
  %vm397 = vcmask 31744
  %v399 = vsel %vm397, %v390, %v314
  %v401 = vsel %vm397, %v392, %v316
  %v403 = vsel %vm397, %v394, %v318
  %v405 = vsel %vm397, %v396, %v320
  %vm406 = vcmask 39936
  %v408 = vsel %vm406, %v399, %v324
  %v410 = vsel %vm406, %v401, %v326
  %v412 = vsel %vm406, %v403, %v328
  %v414 = vsel %vm406, %v405, %v330
  %vm415 = vcmask 48128
  %v417 = vsel %vm415, %v408, %v334
  %v419 = vsel %vm415, %v410, %v336
  %v421 = vsel %vm415, %v412, %v338
  %v423 = vsel %vm415, %v414, %v340
  %vm424 = vcmask 56320
  %v426 = vsel %vm424, %v417, %v342
  %v428 = vsel %vm424, %v419, %v344
  %v430 = vsel %vm424, %v421, %v346
  %v432 = vsel %vm424, %v423, %v348
  %vm433 = vcmask 64512
  %v435 = vsel %vm433, %v426, %v352
  %v437 = vsel %vm433, %v428, %v354
  %v439 = vsel %vm433, %v430, %v356
  %v441 = vsel %vm433, %v432, %v358
  %vm442 = vcmask 72704
  %v444 = vsel %vm442, %v435, %v362
  %v446 = vsel %vm442, %v437, %v364
  %v448 = vsel %vm442, %v439, %v366
  %v450 = vsel %vm442, %v441, %v368
  %vm451 = vcmask 80896
  %v453 = vsel %vm451, %v444, %v370
  %v455 = vsel %vm451, %v446, %v372
  %v457 = vsel %vm451, %v448, %v374
  %v459 = vsel %vm451, %v450, %v376
  %vm460 = vcmask 89088
  %v462 = vsel %vm460, %v453, %v380
  %v464 = vsel %vm460, %v455, %v382
  %v466 = vsel %vm460, %v457, %v384
  %v468 = vsel %vm460, %v459, %v386
  %v477 = vunpack.c.l.b16 %v39
  %v478 = vunpack.c.l.b16 %v40
  %v479 = vunpack.c.l.b16 %v41
  %v480 = vunpack.c.l.b16 %v42
  %v481 = vunpack.c.l.b16 %v71
  %v482 = vunpack.c.l.b16 %v72
  %v483 = vunpack.c.l.b16 %v73
  %v484 = vunpack.c.l.b16 %v74
  %v485 = vpack.c.b16 %v478, %v477
  %v486 = vpack.c.b16 %v480, %v479
  %v487 = vpack.c.b16 %v482, %v481
  %v488 = vpack.c.b16 %v484, %v483
  %v490 = vshrl.u32 %v485, 16
  %v492 = vrot.slane %v490, 7
  %v493 = vshll.u32 %v485, 16
  %v495 = vor.u32 %v492, %v493
  %v497 = vshrl.u32 %v486, 16
  %v499 = vrot.slane %v497, 7
  %v500 = vshll.u32 %v486, 16
  %v502 = vor.u32 %v499, %v500
  %v503 = vsel %vm113, %v492, %v502
  %v505 = vshrl.u32 %v487, 16
  %v507 = vrot.slane %v505, 7
  %v508 = vshll.u32 %v487, 16
  %v510 = vor.u32 %v507, %v508
  %v512 = vshrl.u32 %v488, 16
  %v514 = vrot.slane %v512, 7
  %v515 = vshll.u32 %v488, 16
  %v517 = vor.u32 %v514, %v515
  %v518 = vsel %vm113, %v507, %v517
  %v521 = vsel %vm147, 0, %v495
  %v522 = vsel %vm147, 0, %v510
  %v523 = vrot.slane %v493, 1
  %v524 = vor.u32 %v490, %v523
  %v525 = vrot.slane %v500, 1
  %v526 = vsel %vm150, %v524, %v525
  %v527 = vor.u32 %v497, %v525
  %v528 = vrot.slane %v508, 1
  %v529 = vor.u32 %v505, %v528
  %v530 = vrot.slane %v515, 1
  %v531 = vsel %vm150, %v529, %v530
  %v532 = vor.u32 %v512, %v530
  %v535 = vsel %vm164, %v527, 0
  %v536 = vsel %vm164, %v532, 0
  %v545 = vunpack.c.l.b16 %v43
  %v546 = vunpack.c.l.b16 %v44
  %v547 = vunpack.c.l.b16 %v45
  %v548 = vunpack.c.l.b16 %v46
  %v549 = vunpack.c.l.b16 %v75
  %v550 = vunpack.c.l.b16 %v76
  %v551 = vunpack.c.l.b16 %v77
  %v552 = vunpack.c.l.b16 %v78
  %v553 = vpack.c.b16 %v546, %v545
  %v554 = vpack.c.b16 %v548, %v547
  %v555 = vpack.c.b16 %v550, %v549
  %v556 = vpack.c.b16 %v552, %v551
  %v558 = vshrl.u32 %v553, 16
  %v560 = vrot.slane %v558, 7
  %v561 = vshll.u32 %v553, 16
  %v563 = vor.u32 %v560, %v561
  %v565 = vshrl.u32 %v554, 16
  %v567 = vrot.slane %v565, 7
  %v568 = vshll.u32 %v554, 16
  %v570 = vor.u32 %v567, %v568
  %v571 = vsel %vm113, %v560, %v570
  %v573 = vshrl.u32 %v555, 16
  %v575 = vrot.slane %v573, 7
  %v576 = vshll.u32 %v555, 16
  %v578 = vor.u32 %v575, %v576
  %v580 = vshrl.u32 %v556, 16
  %v582 = vrot.slane %v580, 7
  %v583 = vshll.u32 %v556, 16
  %v585 = vor.u32 %v582, %v583
  %v586 = vsel %vm113, %v575, %v585
  %v589 = vsel %vm147, 0, %v563
  %v590 = vsel %vm147, 0, %v578
  %v591 = vrot.slane %v561, 1
  %v592 = vor.u32 %v558, %v591
  %v593 = vrot.slane %v568, 1
  %v594 = vsel %vm150, %v592, %v593
  %v595 = vor.u32 %v565, %v593
  %v596 = vrot.slane %v576, 1
  %v597 = vor.u32 %v573, %v596
  %v598 = vrot.slane %v583, 1
  %v599 = vsel %vm150, %v597, %v598
  %v600 = vor.u32 %v580, %v598
  %v603 = vsel %vm164, %v595, 0
  %v604 = vsel %vm164, %v600, 0
  %605 = vrot.lane.b32.xlu0 %v183, 1
  %v606 = vpop.permute.xlu0 %605
  %607 = vrot.lane.b32.xlu0 %v184, 1
  %v608 = vpop.permute.xlu0 %607
  %609 = vrot.lane.b32.xlu0 %v185, 1
  %v610 = vpop.permute.xlu0 %609
  %611 = vrot.lane.b32.xlu0 %v186, 1
  %v612 = vpop.permute.xlu0 %611
  %613 = vrot.lane.b32.xlu0 %v224, 2
  %v614 = vpop.permute.xlu0 %613
  %615 = vrot.lane.b32.xlu0 %v233, 2
  %v616 = vpop.permute.xlu0 %615
  %617 = vrot.lane.b32.xlu0 %v229, 2
  %v618 = vpop.permute.xlu0 %617
  %619 = vrot.lane.b32.xlu0 %v234, 2
  %v620 = vpop.permute.xlu0 %619
  %621 = vrot.lane.b32.xlu0 %v287, 3
  %v622 = vpop.permute.xlu0 %621
  %623 = vrot.lane.b32.xlu0 %v269, 3
  %v624 = vpop.permute.xlu0 %623
  %625 = vrot.lane.b32.xlu0 %v288, 3
  %v626 = vpop.permute.xlu0 %625
  %627 = vrot.lane.b32.xlu0 %v284, 3
  %v628 = vpop.permute.xlu0 %627
  %629 = vrot.lane.b32.xlu0 %v251, 4
  %v630 = vpop.permute.xlu0 %629
  %631 = vrot.lane.b32.xlu0 %v252, 4
  %v632 = vpop.permute.xlu0 %631
  %633 = vrot.lane.b32.xlu0 %v253, 4
  %v634 = vpop.permute.xlu0 %633
  %635 = vrot.lane.b32.xlu0 %v254, 4
  %v636 = vpop.permute.xlu0 %635
  %637 = vrot.lane.b32.xlu0 %v292, 5
  %v638 = vpop.permute.xlu0 %637
  %639 = vrot.lane.b32.xlu0 %v301, 5
  %v640 = vpop.permute.xlu0 %639
  %641 = vrot.lane.b32.xlu0 %v297, 5
  %v642 = vpop.permute.xlu0 %641
  %643 = vrot.lane.b32.xlu0 %v302, 5
  %v644 = vpop.permute.xlu0 %643
  %647 = vrot.lane.b32.xlu0 %v521, 6
  %v648 = vpop.permute.xlu0 %647
  %649 = vrot.lane.b32.xlu0 %v503, 6
  %v650 = vpop.permute.xlu0 %649
  %651 = vrot.lane.b32.xlu0 %v522, 6
  %v652 = vpop.permute.xlu0 %651
  %653 = vrot.lane.b32.xlu0 %v518, 6
  %v654 = vpop.permute.xlu0 %653
  %655 = vrot.lane.b32.xlu0 %v485, 7
  %v656 = vpop.permute.xlu0 %655
  %657 = vrot.lane.b32.xlu0 %v486, 7
  %v658 = vpop.permute.xlu0 %657
  %659 = vrot.lane.b32.xlu0 %v487, 7
  %v660 = vpop.permute.xlu0 %659
  %661 = vrot.lane.b32.xlu0 %v488, 7
  %v662 = vpop.permute.xlu0 %661
  %665 = vrot.lane.b32.xlu0 %v526, 8
  %v666 = vpop.permute.xlu0 %665
  %667 = vrot.lane.b32.xlu0 %v535, 8
  %v668 = vpop.permute.xlu0 %667
  %669 = vrot.lane.b32.xlu0 %v531, 8
  %v670 = vpop.permute.xlu0 %669
  %671 = vrot.lane.b32.xlu0 %v536, 8
  %v672 = vpop.permute.xlu0 %671
  %675 = vrot.lane.b32.xlu0 %v589, 9
  %v676 = vpop.permute.xlu0 %675
  %677 = vrot.lane.b32.xlu0 %v571, 9
  %v678 = vpop.permute.xlu0 %677
  %679 = vrot.lane.b32.xlu0 %v590, 9
  %v680 = vpop.permute.xlu0 %679
  %681 = vrot.lane.b32.xlu0 %v586, 9
  %v682 = vpop.permute.xlu0 %681
  %683 = vrot.lane.b32.xlu0 %v553, 10
  %v684 = vpop.permute.xlu0 %683
  %685 = vrot.lane.b32.xlu0 %v554, 10
  %v686 = vpop.permute.xlu0 %685
  %687 = vrot.lane.b32.xlu0 %v555, 10
  %v688 = vpop.permute.xlu0 %687
  %689 = vrot.lane.b32.xlu0 %v556, 10
  %v690 = vpop.permute.xlu0 %689
  %693 = vrot.lane.b32.xlu0 %v594, 11
  %v694 = vpop.permute.xlu0 %693
  %695 = vrot.lane.b32.xlu0 %v603, 11
  %v696 = vpop.permute.xlu0 %695
  %697 = vrot.lane.b32.xlu0 %v599, 11
  %v698 = vpop.permute.xlu0 %697
  %699 = vrot.lane.b32.xlu0 %v604, 11
  %v700 = vpop.permute.xlu0 %699
  %vm701 = vcmask 7168
  %v704 = vsel %vm701, %v219, %v606
  %v707 = vsel %vm701, %v201, %v608
  %v710 = vsel %vm701, %v220, %v610
  %v713 = vsel %vm701, %v216, %v612
  %vm714 = vcmask 15360
  %v716 = vsel %vm714, %v704, %v614
  %v718 = vsel %vm714, %v707, %v616
  %v720 = vsel %vm714, %v710, %v618
  %v722 = vsel %vm714, %v713, %v620
  %v724 = vsel %vm387, %v716, %v622
  %v726 = vsel %vm387, %v718, %v624
  %v728 = vsel %vm387, %v720, %v626
  %v730 = vsel %vm387, %v722, %v628
  %v732 = vsel %vm397, %v724, %v630
  %v734 = vsel %vm397, %v726, %v632
  %v736 = vsel %vm397, %v728, %v634
  %v738 = vsel %vm397, %v730, %v636
  %v740 = vsel %vm406, %v732, %v638
  %v742 = vsel %vm406, %v734, %v640
  %v744 = vsel %vm406, %v736, %v642
  %v746 = vsel %vm406, %v738, %v644
  %v748 = vsel %vm415, %v740, %v648
  %v750 = vsel %vm415, %v742, %v650
  %v752 = vsel %vm415, %v744, %v652
  %v754 = vsel %vm415, %v746, %v654
  %v756 = vsel %vm424, %v748, %v656
  %v758 = vsel %vm424, %v750, %v658
  %v760 = vsel %vm424, %v752, %v660
  %v762 = vsel %vm424, %v754, %v662
  %v764 = vsel %vm433, %v756, %v666
  %v766 = vsel %vm433, %v758, %v668
  %v768 = vsel %vm433, %v760, %v670
  %v770 = vsel %vm433, %v762, %v672
  %v772 = vsel %vm442, %v764, %v676
  %v774 = vsel %vm442, %v766, %v678
  %v776 = vsel %vm442, %v768, %v680
  %v778 = vsel %vm442, %v770, %v682
  %v780 = vsel %vm451, %v772, %v684
  %v782 = vsel %vm451, %v774, %v686
  %v784 = vsel %vm451, %v776, %v688
  %v786 = vsel %vm451, %v778, %v690
  %v788 = vsel %vm460, %v780, %v694
  %v790 = vsel %vm460, %v782, %v696
  %v792 = vsel %vm460, %v784, %v698
  %v794 = vsel %vm460, %v786, %v700
  %v803 = vunpack.c.l.b16 %v47
  %v804 = vunpack.c.l.b16 %v48
  %v805 = vunpack.c.l.b16 %v49
  %v806 = vunpack.c.l.b16 %v50
  %v807 = vunpack.c.l.b16 %v79
  %v808 = vunpack.c.l.b16 %v80
  %v809 = vunpack.c.l.b16 %v81
  %v810 = vunpack.c.l.b16 %v82
  %v811 = vpack.c.b16 %v804, %v803
  %v812 = vpack.c.b16 %v806, %v805
  %v813 = vpack.c.b16 %v808, %v807
  %v814 = vpack.c.b16 %v810, %v809
  %v816 = vshrl.u32 %v811, 16
  %v818 = vrot.slane %v816, 7
  %v819 = vshll.u32 %v811, 16
  %v821 = vor.u32 %v818, %v819
  %v823 = vshrl.u32 %v812, 16
  %v825 = vrot.slane %v823, 7
  %v826 = vshll.u32 %v812, 16
  %v828 = vor.u32 %v825, %v826
  %v829 = vsel %vm113, %v818, %v828
  %v831 = vshrl.u32 %v813, 16
  %v833 = vrot.slane %v831, 7
  %v834 = vshll.u32 %v813, 16
  %v836 = vor.u32 %v833, %v834
  %v838 = vshrl.u32 %v814, 16
  %v840 = vrot.slane %v838, 7
  %v841 = vshll.u32 %v814, 16
  %v843 = vor.u32 %v840, %v841
  %v844 = vsel %vm113, %v833, %v843
  %v847 = vsel %vm147, 0, %v821
  %v848 = vsel %vm147, 0, %v836
  %v849 = vrot.slane %v819, 1
  %v850 = vor.u32 %v816, %v849
  %v851 = vrot.slane %v826, 1
  %v852 = vsel %vm150, %v850, %v851
  %v853 = vor.u32 %v823, %v851
  %v854 = vrot.slane %v834, 1
  %v855 = vor.u32 %v831, %v854
  %v856 = vrot.slane %v841, 1
  %v857 = vsel %vm150, %v855, %v856
  %v858 = vor.u32 %v838, %v856
  %v861 = vsel %vm164, %v853, 0
  %v862 = vsel %vm164, %v858, 0
  %v871 = vunpack.c.l.b16 %v51
  %v872 = vunpack.c.l.b16 %v52
  %v873 = vunpack.c.l.b16 %v53
  %v874 = vunpack.c.l.b16 %v54
  %v875 = vunpack.c.l.b16 %v83
  %v876 = vunpack.c.l.b16 %v84
  %v877 = vunpack.c.l.b16 %v85
  %v878 = vunpack.c.l.b16 %v86
  %v879 = vpack.c.b16 %v872, %v871
  %v880 = vpack.c.b16 %v874, %v873
  %v881 = vpack.c.b16 %v876, %v875
  %v882 = vpack.c.b16 %v878, %v877
  %v884 = vshrl.u32 %v879, 16
  %v886 = vrot.slane %v884, 7
  %v887 = vshll.u32 %v879, 16
  %v889 = vor.u32 %v886, %v887
  %v891 = vshrl.u32 %v880, 16
  %v893 = vrot.slane %v891, 7
  %v894 = vshll.u32 %v880, 16
  %v896 = vor.u32 %v893, %v894
  %v897 = vsel %vm113, %v886, %v896
  %v899 = vshrl.u32 %v881, 16
  %v901 = vrot.slane %v899, 7
  %v902 = vshll.u32 %v881, 16
  %v904 = vor.u32 %v901, %v902
  %v906 = vshrl.u32 %v882, 16
  %v908 = vrot.slane %v906, 7
  %v909 = vshll.u32 %v882, 16
  %v911 = vor.u32 %v908, %v909
  %v912 = vsel %vm113, %v901, %v911
  %v915 = vsel %vm147, 0, %v889
  %v916 = vsel %vm147, 0, %v904
  %v917 = vrot.slane %v887, 1
  %v918 = vor.u32 %v884, %v917
  %v919 = vrot.slane %v894, 1
  %v920 = vsel %vm150, %v918, %v919
  %v921 = vor.u32 %v891, %v919
  %v922 = vrot.slane %v902, 1
  %v923 = vor.u32 %v899, %v922
  %v924 = vrot.slane %v909, 1
  %v925 = vsel %vm150, %v923, %v924
  %v926 = vor.u32 %v906, %v924
  %v929 = vsel %vm164, %v921, 0
  %v930 = vsel %vm164, %v926, 0
  %931 = vrot.lane.b32.xlu0 %v485, 1
  %v932 = vpop.permute.xlu0 %931
  %933 = vrot.lane.b32.xlu0 %v486, 1
  %v934 = vpop.permute.xlu0 %933
  %935 = vrot.lane.b32.xlu0 %v487, 1
  %v936 = vpop.permute.xlu0 %935
  %937 = vrot.lane.b32.xlu0 %v488, 1
  %v938 = vpop.permute.xlu0 %937
  %939 = vrot.lane.b32.xlu0 %v526, 2
  %v940 = vpop.permute.xlu0 %939
  %941 = vrot.lane.b32.xlu0 %v535, 2
  %v942 = vpop.permute.xlu0 %941
  %943 = vrot.lane.b32.xlu0 %v531, 2
  %v944 = vpop.permute.xlu0 %943
  %945 = vrot.lane.b32.xlu0 %v536, 2
  %v946 = vpop.permute.xlu0 %945
  %947 = vrot.lane.b32.xlu0 %v589, 3
  %v948 = vpop.permute.xlu0 %947
  %949 = vrot.lane.b32.xlu0 %v571, 3
  %v950 = vpop.permute.xlu0 %949
  %951 = vrot.lane.b32.xlu0 %v590, 3
  %v952 = vpop.permute.xlu0 %951
  %953 = vrot.lane.b32.xlu0 %v586, 3
  %v954 = vpop.permute.xlu0 %953
  %955 = vrot.lane.b32.xlu0 %v553, 4
  %v956 = vpop.permute.xlu0 %955
  %957 = vrot.lane.b32.xlu0 %v554, 4
  %v958 = vpop.permute.xlu0 %957
  %959 = vrot.lane.b32.xlu0 %v555, 4
  %v960 = vpop.permute.xlu0 %959
  %961 = vrot.lane.b32.xlu0 %v556, 4
  %v962 = vpop.permute.xlu0 %961
  %963 = vrot.lane.b32.xlu0 %v594, 5
  %v964 = vpop.permute.xlu0 %963
  %965 = vrot.lane.b32.xlu0 %v603, 5
  %v966 = vpop.permute.xlu0 %965
  %967 = vrot.lane.b32.xlu0 %v599, 5
  %v968 = vpop.permute.xlu0 %967
  %969 = vrot.lane.b32.xlu0 %v604, 5
  %v970 = vpop.permute.xlu0 %969
  %973 = vrot.lane.b32.xlu0 %v847, 6
  %v974 = vpop.permute.xlu0 %973
  %975 = vrot.lane.b32.xlu0 %v829, 6
  %v976 = vpop.permute.xlu0 %975
  %977 = vrot.lane.b32.xlu0 %v848, 6
  %v978 = vpop.permute.xlu0 %977
  %979 = vrot.lane.b32.xlu0 %v844, 6
  %v980 = vpop.permute.xlu0 %979
  %981 = vrot.lane.b32.xlu0 %v811, 7
  %v982 = vpop.permute.xlu0 %981
  %983 = vrot.lane.b32.xlu0 %v812, 7
  %v984 = vpop.permute.xlu0 %983
  %985 = vrot.lane.b32.xlu0 %v813, 7
  %v986 = vpop.permute.xlu0 %985
  %987 = vrot.lane.b32.xlu0 %v814, 7
  %v988 = vpop.permute.xlu0 %987
  %991 = vrot.lane.b32.xlu0 %v852, 8
  %v992 = vpop.permute.xlu0 %991
  %993 = vrot.lane.b32.xlu0 %v861, 8
  %v994 = vpop.permute.xlu0 %993
  %995 = vrot.lane.b32.xlu0 %v857, 8
  %v996 = vpop.permute.xlu0 %995
  %997 = vrot.lane.b32.xlu0 %v862, 8
  %v998 = vpop.permute.xlu0 %997
  %1001 = vrot.lane.b32.xlu0 %v915, 9
  %v1002 = vpop.permute.xlu0 %1001
  %1003 = vrot.lane.b32.xlu0 %v897, 9
  %v1004 = vpop.permute.xlu0 %1003
  %1005 = vrot.lane.b32.xlu0 %v916, 9
  %v1006 = vpop.permute.xlu0 %1005
  %1007 = vrot.lane.b32.xlu0 %v912, 9
  %v1008 = vpop.permute.xlu0 %1007
  %1009 = vrot.lane.b32.xlu0 %v879, 10
  %v1010 = vpop.permute.xlu0 %1009
  %1011 = vrot.lane.b32.xlu0 %v880, 10
  %v1012 = vpop.permute.xlu0 %1011
  %1013 = vrot.lane.b32.xlu0 %v881, 10
  %v1014 = vpop.permute.xlu0 %1013
  %1015 = vrot.lane.b32.xlu0 %v882, 10
  %v1016 = vpop.permute.xlu0 %1015
  %1019 = vrot.lane.b32.xlu0 %v920, 11
  %v1020 = vpop.permute.xlu0 %1019
  %1021 = vrot.lane.b32.xlu0 %v929, 11
  %v1022 = vpop.permute.xlu0 %1021
  %1023 = vrot.lane.b32.xlu0 %v925, 11
  %v1024 = vpop.permute.xlu0 %1023
  %1025 = vrot.lane.b32.xlu0 %v930, 11
  %v1026 = vpop.permute.xlu0 %1025
  %v1029 = vsel %vm701, %v521, %v932
  %v1032 = vsel %vm701, %v503, %v934
  %v1035 = vsel %vm701, %v522, %v936
  %v1038 = vsel %vm701, %v518, %v938
  %v1040 = vsel %vm714, %v1029, %v940
  %v1042 = vsel %vm714, %v1032, %v942
  %v1044 = vsel %vm714, %v1035, %v944
  %v1046 = vsel %vm714, %v1038, %v946
  %v1048 = vsel %vm387, %v1040, %v948
  %v1050 = vsel %vm387, %v1042, %v950
  %v1052 = vsel %vm387, %v1044, %v952
  %v1054 = vsel %vm387, %v1046, %v954
  %v1056 = vsel %vm397, %v1048, %v956
  %v1058 = vsel %vm397, %v1050, %v958
  %v1060 = vsel %vm397, %v1052, %v960
  %v1062 = vsel %vm397, %v1054, %v962
  %v1064 = vsel %vm406, %v1056, %v964
  %v1066 = vsel %vm406, %v1058, %v966
  %v1068 = vsel %vm406, %v1060, %v968
  %v1070 = vsel %vm406, %v1062, %v970
  %v1072 = vsel %vm415, %v1064, %v974
  %v1074 = vsel %vm415, %v1066, %v976
  %v1076 = vsel %vm415, %v1068, %v978
  %v1078 = vsel %vm415, %v1070, %v980
  %v1080 = vsel %vm424, %v1072, %v982
  %v1082 = vsel %vm424, %v1074, %v984
  %v1084 = vsel %vm424, %v1076, %v986
  %v1086 = vsel %vm424, %v1078, %v988
  %v1088 = vsel %vm433, %v1080, %v992
  %v1090 = vsel %vm433, %v1082, %v994
  %v1092 = vsel %vm433, %v1084, %v996
  %v1094 = vsel %vm433, %v1086, %v998
  %v1096 = vsel %vm442, %v1088, %v1002
  %v1098 = vsel %vm442, %v1090, %v1004
  %v1100 = vsel %vm442, %v1092, %v1006
  %v1102 = vsel %vm442, %v1094, %v1008
  %v1104 = vsel %vm451, %v1096, %v1010
  %v1106 = vsel %vm451, %v1098, %v1012
  %v1108 = vsel %vm451, %v1100, %v1014
  %v1110 = vsel %vm451, %v1102, %v1016
  %v1112 = vsel %vm460, %v1104, %v1020
  %v1114 = vsel %vm460, %v1106, %v1022
  %v1116 = vsel %vm460, %v1108, %v1024
  %v1118 = vsel %vm460, %v1110, %v1026
  %v1127 = vunpack.c.l.b16 %v55
  %v1128 = vunpack.c.l.b16 %v56
  %v1129 = vunpack.c.l.b16 %v57
  %v1130 = vunpack.c.l.b16 %v58
  %v1131 = vunpack.c.l.b16 %v87
  %v1132 = vunpack.c.l.b16 %v88
  %v1133 = vunpack.c.l.b16 %v89
  %v1134 = vunpack.c.l.b16 %v90
  %v1135 = vpack.c.b16 %v1128, %v1127
  %v1136 = vpack.c.b16 %v1130, %v1129
  %v1137 = vpack.c.b16 %v1132, %v1131
  %v1138 = vpack.c.b16 %v1134, %v1133
  %v1140 = vshrl.u32 %v1135, 16
  %v1142 = vrot.slane %v1140, 7
  %v1143 = vshll.u32 %v1135, 16
  %v1145 = vor.u32 %v1142, %v1143
  %v1147 = vshrl.u32 %v1136, 16
  %v1149 = vrot.slane %v1147, 7
  %v1150 = vshll.u32 %v1136, 16
  %v1152 = vor.u32 %v1149, %v1150
  %v1153 = vsel %vm113, %v1142, %v1152
  %v1155 = vshrl.u32 %v1137, 16
  %v1157 = vrot.slane %v1155, 7
  %v1158 = vshll.u32 %v1137, 16
  %v1160 = vor.u32 %v1157, %v1158
  %v1162 = vshrl.u32 %v1138, 16
  %v1164 = vrot.slane %v1162, 7
  %v1165 = vshll.u32 %v1138, 16
  %v1167 = vor.u32 %v1164, %v1165
  %v1168 = vsel %vm113, %v1157, %v1167
  %v1171 = vsel %vm147, 0, %v1145
  %v1172 = vsel %vm147, 0, %v1160
  %v1173 = vrot.slane %v1143, 1
  %v1174 = vor.u32 %v1140, %v1173
  %v1175 = vrot.slane %v1150, 1
  %v1176 = vsel %vm150, %v1174, %v1175
  %v1177 = vor.u32 %v1147, %v1175
  %v1178 = vrot.slane %v1158, 1
  %v1179 = vor.u32 %v1155, %v1178
  %v1180 = vrot.slane %v1165, 1
  %v1181 = vsel %vm150, %v1179, %v1180
  %v1182 = vor.u32 %v1162, %v1180
  %v1185 = vsel %vm164, %v1177, 0
  %v1186 = vsel %vm164, %v1182, 0
  %1187 = vrot.lane.b32.xlu0 %v811, 1
  %v1188 = vpop.permute.xlu0 %1187
  %1189 = vrot.lane.b32.xlu0 %v812, 1
  %v1190 = vpop.permute.xlu0 %1189
  %1191 = vrot.lane.b32.xlu0 %v813, 1
  %v1192 = vpop.permute.xlu0 %1191
  %1193 = vrot.lane.b32.xlu0 %v814, 1
  %v1194 = vpop.permute.xlu0 %1193
  %1195 = vrot.lane.b32.xlu0 %v852, 2
  %v1196 = vpop.permute.xlu0 %1195
  %1197 = vrot.lane.b32.xlu0 %v861, 2
  %v1198 = vpop.permute.xlu0 %1197
  %1199 = vrot.lane.b32.xlu0 %v857, 2
  %v1200 = vpop.permute.xlu0 %1199
  %1201 = vrot.lane.b32.xlu0 %v862, 2
  %v1202 = vpop.permute.xlu0 %1201
  %1203 = vrot.lane.b32.xlu0 %v915, 3
  %v1204 = vpop.permute.xlu0 %1203
  %1205 = vrot.lane.b32.xlu0 %v897, 3
  %v1206 = vpop.permute.xlu0 %1205
  %1207 = vrot.lane.b32.xlu0 %v916, 3
  %v1208 = vpop.permute.xlu0 %1207
  %1209 = vrot.lane.b32.xlu0 %v912, 3
  %v1210 = vpop.permute.xlu0 %1209
  %1211 = vrot.lane.b32.xlu0 %v879, 4
  %v1212 = vpop.permute.xlu0 %1211
  %1213 = vrot.lane.b32.xlu0 %v880, 4
  %v1214 = vpop.permute.xlu0 %1213
  %1215 = vrot.lane.b32.xlu0 %v881, 4
  %v1216 = vpop.permute.xlu0 %1215
  %1217 = vrot.lane.b32.xlu0 %v882, 4
  %v1218 = vpop.permute.xlu0 %1217
  %1219 = vrot.lane.b32.xlu0 %v920, 5
  %v1220 = vpop.permute.xlu0 %1219
  %1221 = vrot.lane.b32.xlu0 %v929, 5
  %v1222 = vpop.permute.xlu0 %1221
  %1223 = vrot.lane.b32.xlu0 %v925, 5
  %v1224 = vpop.permute.xlu0 %1223
  %1225 = vrot.lane.b32.xlu0 %v930, 5
  %v1226 = vpop.permute.xlu0 %1225
  %1229 = vrot.lane.b32.xlu0 %v1171, 6
  %v1230 = vpop.permute.xlu0 %1229
  %1231 = vrot.lane.b32.xlu0 %v1153, 6
  %v1232 = vpop.permute.xlu0 %1231
  %1233 = vrot.lane.b32.xlu0 %v1172, 6
  %v1234 = vpop.permute.xlu0 %1233
  %1235 = vrot.lane.b32.xlu0 %v1168, 6
  %v1236 = vpop.permute.xlu0 %1235
  %1237 = vrot.lane.b32.xlu0 %v1135, 7
  %v1238 = vpop.permute.xlu0 %1237
  %1239 = vrot.lane.b32.xlu0 %v1136, 7
  %v1240 = vpop.permute.xlu0 %1239
  %1241 = vrot.lane.b32.xlu0 %v1137, 7
  %v1242 = vpop.permute.xlu0 %1241
  %1243 = vrot.lane.b32.xlu0 %v1138, 7
  %v1244 = vpop.permute.xlu0 %1243
  %1247 = vrot.lane.b32.xlu0 %v1176, 8
  %v1248 = vpop.permute.xlu0 %1247
  %1249 = vrot.lane.b32.xlu0 %v1185, 8
  %v1250 = vpop.permute.xlu0 %1249
  %1251 = vrot.lane.b32.xlu0 %v1181, 8
  %v1252 = vpop.permute.xlu0 %1251
  %1253 = vrot.lane.b32.xlu0 %v1186, 8
  %v1254 = vpop.permute.xlu0 %1253
  %v1257 = vsel %vm701, %v847, %v1188
  %v1260 = vsel %vm701, %v829, %v1190
  %v1263 = vsel %vm701, %v848, %v1192
  %v1266 = vsel %vm701, %v844, %v1194
  %v1268 = vsel %vm714, %v1257, %v1196
  %v1270 = vsel %vm714, %v1260, %v1198
  %v1272 = vsel %vm714, %v1263, %v1200
  %v1274 = vsel %vm714, %v1266, %v1202
  %v1276 = vsel %vm387, %v1268, %v1204
  %v1278 = vsel %vm387, %v1270, %v1206
  %v1280 = vsel %vm387, %v1272, %v1208
  %v1282 = vsel %vm387, %v1274, %v1210
  %v1284 = vsel %vm397, %v1276, %v1212
  %v1286 = vsel %vm397, %v1278, %v1214
  %v1288 = vsel %vm397, %v1280, %v1216
  %v1290 = vsel %vm397, %v1282, %v1218
  %v1292 = vsel %vm406, %v1284, %v1220
  %v1294 = vsel %vm406, %v1286, %v1222
  %v1296 = vsel %vm406, %v1288, %v1224
  %v1298 = vsel %vm406, %v1290, %v1226
  %v1300 = vsel %vm415, %v1292, %v1230
  %v1302 = vsel %vm415, %v1294, %v1232
  %v1304 = vsel %vm415, %v1296, %v1234
  %v1306 = vsel %vm415, %v1298, %v1236
  %v1308 = vsel %vm424, %v1300, %v1238
  %v1310 = vsel %vm424, %v1302, %v1240
  %v1312 = vsel %vm424, %v1304, %v1242
  %v1314 = vsel %vm424, %v1306, %v1244
  %v1316 = vsel %vm433, %v1308, %v1248
  %v1318 = vsel %vm433, %v1310, %v1250
  %v1320 = vsel %vm433, %v1312, %v1252
  %v1322 = vsel %vm433, %v1314, %v1254
  %v1323 = vsel %vm442, %v1316, 0
  %v1324 = vsel %vm442, %v1318, 0
  %v1325 = vsel %vm442, %v1320, 0
  %v1326 = vsel %vm442, %v1322, 0
  %v1329 = vunpack.c.l.b16 %v91
  %v1330 = vunpack.c.l.b16 %v92
  %v1331 = vpack.c.b16 %v1330, %v1329
  %vm1332 = vcmask 97280
  %v1333 = vsel %vm1332, %v462, 0
  %v1335 = vsel %vm1332, %v464, 0
  %v1337 = vsel %vm1332, %v788, 0
  %v1339 = vsel %vm1332, %v790, 0
  %v1341 = vsel %vm1332, %v1112, 0
  %v1343 = vsel %vm1332, %v1114, 0
  %v1345 = vsel %vm1332, %v1323, 0
  %v1347 = vsel %vm1332, %v1324, 0
  %v1349 = vsel %vm1332, %v466, 0
  %v1351 = vsel %vm1332, %v468, 0
  %v1353 = vsel %vm1332, %v792, 0
  %v1355 = vsel %vm1332, %v794, 0
  %v1357 = vsel %vm1332, %v1116, 0
  %v1359 = vsel %vm1332, %v1118, 0
  %v1361 = vsel %vm1332, %v1325, 0
  %v1363 = vsel %vm1332, %v1326, 0
  %vm1365 = vcmask 1045504
  %v1367 = vsel %vm1365, %v1331, 0
  %1369 = vmatpush.bf16.msra.mxu0 0
  %1370 = vmatpush.bf16.msra.mxu0 0
  %1371 = vmatpush.bf16.msra.mxu0 0
  %1372 = vmatpush.bf16.msra.mxu0 0
  %1373 = vmatpush.bf16.msra.mxu0 0
  %1374 = vmatpush.bf16.msra.mxu0 0
  %1375 = vmatpush.bf16.msra.mxu0 0
  %1376 = vmatpush.bf16.msra.mxu0 %v1367
  %1377 = vmatmul.bf16.gmra.mxu0 %v1333
  %v1378 = vpop.f32.mrf.mxu0
  %v1379 = vadd.f32 0.0, %v1378
  %v1380 = vpop.f32.mrf.mxu0
  %v1381 = vadd.f32 0.0, %v1380
  %1382 = vmatmul.bf16.gmra.mxu0 %v1335
  %v1383 = vpop.f32.mrf.mxu0
  %v1384 = vadd.f32 0.0, %v1383
  %v1385 = vpop.f32.mrf.mxu0
  %v1386 = vadd.f32 0.0, %v1385
  %1387 = vmatmul.bf16.gmra.mxu0 %v1337
  %v1388 = vpop.f32.mrf.mxu0
  %v1389 = vadd.f32 0.0, %v1388
  %v1390 = vpop.f32.mrf.mxu0
  %v1391 = vadd.f32 0.0, %v1390
  %1392 = vmatmul.bf16.gmra.mxu0 %v1339
  %v1393 = vpop.f32.mrf.mxu0
  %v1394 = vadd.f32 0.0, %v1393
  %v1395 = vpop.f32.mrf.mxu0
  %v1396 = vadd.f32 0.0, %v1395
  %1397 = vmatmul.bf16.gmra.mxu0 %v1341
  %v1398 = vpop.f32.mrf.mxu0
  %v1399 = vadd.f32 0.0, %v1398
  %v1400 = vpop.f32.mrf.mxu0
  %v1401 = vadd.f32 0.0, %v1400
  %1402 = vmatmul.bf16.gmra.mxu0 %v1343
  %v1403 = vpop.f32.mrf.mxu0
  %v1404 = vadd.f32 0.0, %v1403
  %v1405 = vpop.f32.mrf.mxu0
  %v1406 = vadd.f32 0.0, %v1405
  %1407 = vmatmul.bf16.gmra.mxu0 %v1345
  %v1408 = vpop.f32.mrf.mxu0
  %v1409 = vadd.f32 0.0, %v1408
  %v1410 = vpop.f32.mrf.mxu0
  %v1411 = vadd.f32 0.0, %v1410
  %1412 = vmatmul.bf16.gmra.mxu0 %v1347
  %v1413 = vpop.f32.mrf.mxu0
  %v1414 = vadd.f32 0.0, %v1413
  %v1415 = vpop.f32.mrf.mxu0
  %v1416 = vadd.f32 0.0, %v1415
  %1417 = vmatmul.bf16.gmra.mxu0 %v1349
  %v1418 = vpop.f32.mrf.mxu0
  %v1419 = vadd.f32 0.0, %v1418
  %v1420 = vpop.f32.mrf.mxu0
  %v1421 = vadd.f32 0.0, %v1420
  %1422 = vmatmul.bf16.gmra.mxu0 %v1351
  %v1423 = vpop.f32.mrf.mxu0
  %v1424 = vadd.f32 0.0, %v1423
  %v1425 = vpop.f32.mrf.mxu0
  %v1426 = vadd.f32 0.0, %v1425
  %1427 = vmatmul.bf16.gmra.mxu0 %v1353
  %v1428 = vpop.f32.mrf.mxu0
  %v1429 = vadd.f32 0.0, %v1428
  %v1430 = vpop.f32.mrf.mxu0
  %v1431 = vadd.f32 0.0, %v1430
  %1432 = vmatmul.bf16.gmra.mxu0 %v1355
  %v1433 = vpop.f32.mrf.mxu0
  %v1434 = vadd.f32 0.0, %v1433
  %v1435 = vpop.f32.mrf.mxu0
  %v1436 = vadd.f32 0.0, %v1435
  %1437 = vmatmul.bf16.gmra.mxu0 %v1357
  %v1438 = vpop.f32.mrf.mxu0
  %v1439 = vadd.f32 0.0, %v1438
  %v1440 = vpop.f32.mrf.mxu0
  %v1441 = vadd.f32 0.0, %v1440
  %1442 = vmatmul.bf16.gmra.mxu0 %v1359
  %v1443 = vpop.f32.mrf.mxu0
  %v1444 = vadd.f32 0.0, %v1443
  %v1445 = vpop.f32.mrf.mxu0
  %v1446 = vadd.f32 0.0, %v1445
  %1447 = vmatmul.bf16.gmra.mxu0 %v1361
  %v1448 = vpop.f32.mrf.mxu0
  %v1449 = vadd.f32 0.0, %v1448
  %v1450 = vpop.f32.mrf.mxu0
  %v1451 = vadd.f32 0.0, %v1450
  %1452 = vmatmul.bf16.gmra.mxu0 %v1363
  %v1453 = vpop.f32.mrf.mxu0
  %v1454 = vadd.f32 0.0, %v1453
  %v1455 = vpop.f32.mrf.mxu0
  %v1456 = vadd.f32 0.0, %v1455
  %1457 = vdwg.mxu0
  %vm1458 = vcmask 130048
  %v1459 = vsel %vm1458, %v1379, 0.0
  %v1460 = vsel %vm1458, %v1381, 0.0
  %v1461 = vadd.f32 %v1459, %v1460
  %v1462 = vsel %vm1458, %v1384, 0.0
  %v1463 = vadd.f32 %v1461, %v1462
  %v1464 = vsel %vm1458, %v1386, 0.0
  %v1465 = vadd.f32 %v1463, %v1464
  %v1466 = vsel %vm1458, %v1389, 0.0
  %v1467 = vadd.f32 %v1465, %v1466
  %v1468 = vsel %vm1458, %v1391, 0.0
  %v1469 = vadd.f32 %v1467, %v1468
  %v1470 = vsel %vm1458, %v1394, 0.0
  %v1471 = vadd.f32 %v1469, %v1470
  %v1472 = vsel %vm1458, %v1396, 0.0
  %v1473 = vadd.f32 %v1471, %v1472
  %v1474 = vsel %vm1458, %v1399, 0.0
  %v1475 = vadd.f32 %v1473, %v1474
  %v1476 = vsel %vm1458, %v1401, 0.0
  %v1477 = vadd.f32 %v1475, %v1476
  %v1478 = vsel %vm1458, %v1404, 0.0
  %v1479 = vadd.f32 %v1477, %v1478
  %v1480 = vsel %vm1458, %v1406, 0.0
  %v1481 = vadd.f32 %v1479, %v1480
  %v1482 = vsel %vm1458, %v1409, 0.0
  %v1483 = vadd.f32 %v1481, %v1482
  %v1484 = vsel %vm1458, %v1411, 0.0
  %v1485 = vadd.f32 %v1483, %v1484
  %v1486 = vsel %vm1458, %v1414, 0.0
  %v1487 = vadd.f32 %v1485, %v1486
  %v1488 = vsel %vm1458, %v1416, 0.0
  %v1489 = vadd.f32 %v1487, %v1488
  %v1490 = vrot.slane %v1489, 4
  %v1491 = vadd.f32 %v1489, %v1490
  %v1492 = vrot.slane %v1491, 2
  %v1493 = vadd.f32 %v1491, %v1492
  %v1494 = vrot.slane %v1493, 1
  %v1495 = vadd.f32 %v1493, %v1494
  %v1496 = vsel %vm1458, %v1419, 0.0
  %v1497 = vsel %vm1458, %v1421, 0.0
  %v1498 = vadd.f32 %v1496, %v1497
  %v1499 = vsel %vm1458, %v1424, 0.0
  %v1500 = vadd.f32 %v1498, %v1499
  %v1501 = vsel %vm1458, %v1426, 0.0
  %v1502 = vadd.f32 %v1500, %v1501
  %v1503 = vsel %vm1458, %v1429, 0.0
  %v1504 = vadd.f32 %v1502, %v1503
  %v1505 = vsel %vm1458, %v1431, 0.0
  %v1506 = vadd.f32 %v1504, %v1505
  %v1507 = vsel %vm1458, %v1434, 0.0
  %v1508 = vadd.f32 %v1506, %v1507
  %v1509 = vsel %vm1458, %v1436, 0.0
  %v1510 = vadd.f32 %v1508, %v1509
  %v1511 = vsel %vm1458, %v1439, 0.0
  %v1512 = vadd.f32 %v1510, %v1511
  %v1513 = vsel %vm1458, %v1441, 0.0
  %v1514 = vadd.f32 %v1512, %v1513
  %v1515 = vsel %vm1458, %v1444, 0.0
  %v1516 = vadd.f32 %v1514, %v1515
  %v1517 = vsel %vm1458, %v1446, 0.0
  %v1518 = vadd.f32 %v1516, %v1517
  %v1519 = vsel %vm1458, %v1449, 0.0
  %v1520 = vadd.f32 %v1518, %v1519
  %v1521 = vsel %vm1458, %v1451, 0.0
  %v1522 = vadd.f32 %v1520, %v1521
  %v1523 = vsel %vm1458, %v1454, 0.0
  %v1524 = vadd.f32 %v1522, %v1523
  %v1525 = vsel %vm1458, %v1456, 0.0
  %v1526 = vadd.f32 %v1524, %v1525
  %v1527 = vrot.slane %v1526, 4
  %v1528 = vadd.f32 %v1526, %v1527
  %v1529 = vrot.slane %v1528, 2
  %v1530 = vadd.f32 %v1528, %v1529
  %v1531 = vrot.slane %v1530, 1
  %v1532 = vadd.f32 %v1530, %v1531
  %v1533 = vrcp.pop 128.0
  %v1534 = vmul.f32 128.0, %v1533
  %v1535 = vsub.f32 1.0, %v1534
  %v1536 = vmul.f32 %v1533, %v1535
  %v1537 = vadd.f32 %v1533, %v1536
  %vm1538 = vweird.f32 %v1533
  %v1539 = vsel %vm1538, %v1533, %v1537
  %v1540 = vmul.f32 %v1495, %v1539
  %v1541 = vmul.f32 %v1532, %v1539
  %v1542 = vsub.f32 %v1379, %v1540
  %v1543 = vsub.f32 %v1381, %v1540
  %v1544 = vsub.f32 %v1384, %v1540
  %v1545 = vsub.f32 %v1386, %v1540
  %v1546 = vsub.f32 %v1389, %v1540
  %v1547 = vsub.f32 %v1391, %v1540
  %v1548 = vsub.f32 %v1394, %v1540
  %v1549 = vsub.f32 %v1396, %v1540
  %v1550 = vsub.f32 %v1399, %v1540
  %v1551 = vsub.f32 %v1401, %v1540
  %v1552 = vsub.f32 %v1404, %v1540
  %v1553 = vsub.f32 %v1406, %v1540
  %v1554 = vsub.f32 %v1409, %v1540
  %v1555 = vsub.f32 %v1411, %v1540
  %v1556 = vsub.f32 %v1414, %v1540
  %v1557 = vsub.f32 %v1416, %v1540
  %v1558 = vsub.f32 %v1419, %v1541
  %v1559 = vsub.f32 %v1421, %v1541
  %v1560 = vsub.f32 %v1424, %v1541
  %v1561 = vsub.f32 %v1426, %v1541
  %v1562 = vsub.f32 %v1429, %v1541
  %v1563 = vsub.f32 %v1431, %v1541
  %v1564 = vsub.f32 %v1434, %v1541
  %v1565 = vsub.f32 %v1436, %v1541
  %v1566 = vsub.f32 %v1439, %v1541
  %v1567 = vsub.f32 %v1441, %v1541
  %v1568 = vsub.f32 %v1444, %v1541
  %v1569 = vsub.f32 %v1446, %v1541
  %v1570 = vsub.f32 %v1449, %v1541
  %v1571 = vsub.f32 %v1451, %v1541
  %v1572 = vsub.f32 %v1454, %v1541
  %v1573 = vsub.f32 %v1456, %v1541
  %v1574 = vmul.f32 %v1542, %v1542
  %v1575 = vmul.f32 %v1543, %v1543
  %v1576 = vmul.f32 %v1544, %v1544
  %v1577 = vmul.f32 %v1545, %v1545
  %v1578 = vmul.f32 %v1546, %v1546
  %v1579 = vmul.f32 %v1547, %v1547
  %v1580 = vmul.f32 %v1548, %v1548
  %v1581 = vmul.f32 %v1549, %v1549
  %v1582 = vmul.f32 %v1550, %v1550
  %v1583 = vmul.f32 %v1551, %v1551
  %v1584 = vmul.f32 %v1552, %v1552
  %v1585 = vmul.f32 %v1553, %v1553
  %v1586 = vmul.f32 %v1554, %v1554
  %v1587 = vmul.f32 %v1555, %v1555
  %v1588 = vmul.f32 %v1556, %v1556
  %v1589 = vmul.f32 %v1557, %v1557
  %v1590 = vmul.f32 %v1558, %v1558
  %v1591 = vmul.f32 %v1559, %v1559
  %v1592 = vmul.f32 %v1560, %v1560
  %v1593 = vmul.f32 %v1561, %v1561
  %v1594 = vmul.f32 %v1562, %v1562
  %v1595 = vmul.f32 %v1563, %v1563
  %v1596 = vmul.f32 %v1564, %v1564
  %v1597 = vmul.f32 %v1565, %v1565
  %v1598 = vmul.f32 %v1566, %v1566
  %v1599 = vmul.f32 %v1567, %v1567
  %v1600 = vmul.f32 %v1568, %v1568
  %v1601 = vmul.f32 %v1569, %v1569
  %v1602 = vmul.f32 %v1570, %v1570
  %v1603 = vmul.f32 %v1571, %v1571
  %v1604 = vmul.f32 %v1572, %v1572
  %v1605 = vmul.f32 %v1573, %v1573
  %v1606 = vsel %vm1458, %v1574, 0.0
  %v1607 = vsel %vm1458, %v1575, 0.0
  %v1608 = vadd.f32 %v1606, %v1607
  %v1609 = vsel %vm1458, %v1576, 0.0
  %v1610 = vadd.f32 %v1608, %v1609
  %v1611 = vsel %vm1458, %v1577, 0.0
  %v1612 = vadd.f32 %v1610, %v1611
  %v1613 = vsel %vm1458, %v1578, 0.0
  %v1614 = vadd.f32 %v1612, %v1613
  %v1615 = vsel %vm1458, %v1579, 0.0
  %v1616 = vadd.f32 %v1614, %v1615
  %v1617 = vsel %vm1458, %v1580, 0.0
  %v1618 = vadd.f32 %v1616, %v1617
  %v1619 = vsel %vm1458, %v1581, 0.0
  %v1620 = vadd.f32 %v1618, %v1619
  %v1621 = vsel %vm1458, %v1582, 0.0
  %v1622 = vadd.f32 %v1620, %v1621
  %v1623 = vsel %vm1458, %v1583, 0.0
  %v1624 = vadd.f32 %v1622, %v1623
  %v1625 = vsel %vm1458, %v1584, 0.0
  %v1626 = vadd.f32 %v1624, %v1625
  %v1627 = vsel %vm1458, %v1585, 0.0
  %v1628 = vadd.f32 %v1626, %v1627
  %v1629 = vsel %vm1458, %v1586, 0.0
  %v1630 = vadd.f32 %v1628, %v1629
  %v1631 = vsel %vm1458, %v1587, 0.0
  %v1632 = vadd.f32 %v1630, %v1631
  %v1633 = vsel %vm1458, %v1588, 0.0
  %v1634 = vadd.f32 %v1632, %v1633
  %v1635 = vsel %vm1458, %v1589, 0.0
  %v1636 = vadd.f32 %v1634, %v1635
  %v1637 = vrot.slane %v1636, 4
  %v1638 = vadd.f32 %v1636, %v1637
  %v1639 = vrot.slane %v1638, 2
  %v1640 = vadd.f32 %v1638, %v1639
  %v1641 = vrot.slane %v1640, 1
  %v1642 = vadd.f32 %v1640, %v1641
  %v1643 = vsel %vm1458, %v1590, 0.0
  %v1644 = vsel %vm1458, %v1591, 0.0
  %v1645 = vadd.f32 %v1643, %v1644
  %v1646 = vsel %vm1458, %v1592, 0.0
  %v1647 = vadd.f32 %v1645, %v1646
  %v1648 = vsel %vm1458, %v1593, 0.0
  %v1649 = vadd.f32 %v1647, %v1648
  %v1650 = vsel %vm1458, %v1594, 0.0
  %v1651 = vadd.f32 %v1649, %v1650
  %v1652 = vsel %vm1458, %v1595, 0.0
  %v1653 = vadd.f32 %v1651, %v1652
  %v1654 = vsel %vm1458, %v1596, 0.0
  %v1655 = vadd.f32 %v1653, %v1654
  %v1656 = vsel %vm1458, %v1597, 0.0
  %v1657 = vadd.f32 %v1655, %v1656
  %v1658 = vsel %vm1458, %v1598, 0.0
  %v1659 = vadd.f32 %v1657, %v1658
  %v1660 = vsel %vm1458, %v1599, 0.0
  %v1661 = vadd.f32 %v1659, %v1660
  %v1662 = vsel %vm1458, %v1600, 0.0
  %v1663 = vadd.f32 %v1661, %v1662
  %v1664 = vsel %vm1458, %v1601, 0.0
  %v1665 = vadd.f32 %v1663, %v1664
  %v1666 = vsel %vm1458, %v1602, 0.0
  %v1667 = vadd.f32 %v1665, %v1666
  %v1668 = vsel %vm1458, %v1603, 0.0
  %v1669 = vadd.f32 %v1667, %v1668
  %v1670 = vsel %vm1458, %v1604, 0.0
  %v1671 = vadd.f32 %v1669, %v1670
  %v1672 = vsel %vm1458, %v1605, 0.0
  %v1673 = vadd.f32 %v1671, %v1672
  %v1674 = vrot.slane %v1673, 4
  %v1675 = vadd.f32 %v1673, %v1674
  %v1676 = vrot.slane %v1675, 2
  %v1677 = vadd.f32 %v1675, %v1676
  %v1678 = vrot.slane %v1677, 1
  %v1679 = vadd.f32 %v1677, %v1678
  %v1680 = vmul.f32 %v1642, %v1539
  %v1681 = vmul.f32 %v1679, %v1539
  %v1682 = vadd.f32 %v1680, 1e-05
  %v1683 = vadd.f32 %v1681, 1e-05
  %v1684 = vrsqrt.pop %v1682
  %v1685 = vmul.f32 %v1684, %v1682
  %v1686 = vmul.f32 %v1685, %v1684
  %v1687 = vmul.f32 0.5, %v1686
  %v1688 = vsub.f32 1.5, %v1687
  %v1689 = vmul.f32 %v1684, %v1688
  %vm1690 = vweird.f32 %v1682
  %vm1691 = vweird.f32 %v1684
  %vm1692 = vmor %vm1690, %vm1691
  %v1693 = vsel %vm1692, %v1684, %v1689
  %v1694 = vrsqrt.pop %v1683
  %v1695 = vmul.f32 %v1694, %v1683
  %v1696 = vmul.f32 %v1695, %v1694
  %v1697 = vmul.f32 0.5, %v1696
  %v1698 = vsub.f32 1.5, %v1697
  %v1699 = vmul.f32 %v1694, %v1698
  %vm1700 = vweird.f32 %v1683
  %vm1701 = vweird.f32 %v1694
  %vm1702 = vmor %vm1700, %vm1701
  %v1703 = vsel %vm1702, %v1694, %v1699
  %v1704 = vmul.f32 %v1542, %v1693
  %v1705 = vmul.f32 %v1543, %v1693
  %v1706 = vmul.f32 %v1544, %v1693
  %v1707 = vmul.f32 %v1545, %v1693
  %v1708 = vmul.f32 %v1546, %v1693
  %v1709 = vmul.f32 %v1547, %v1693
  %v1710 = vmul.f32 %v1548, %v1693
  %v1711 = vmul.f32 %v1549, %v1693
  %v1712 = vmul.f32 %v1550, %v1693
  %v1713 = vmul.f32 %v1551, %v1693
  %v1714 = vmul.f32 %v1552, %v1693
  %v1715 = vmul.f32 %v1553, %v1693
  %v1716 = vmul.f32 %v1554, %v1693
  %v1717 = vmul.f32 %v1555, %v1693
  %v1718 = vmul.f32 %v1556, %v1693
  %v1719 = vmul.f32 %v1557, %v1693
  %v1720 = vmul.f32 %v1558, %v1703
  %v1721 = vmul.f32 %v1559, %v1703
  %v1722 = vmul.f32 %v1560, %v1703
  %v1723 = vmul.f32 %v1561, %v1703
  %v1724 = vmul.f32 %v1562, %v1703
  %v1725 = vmul.f32 %v1563, %v1703
  %v1726 = vmul.f32 %v1564, %v1703
  %v1727 = vmul.f32 %v1565, %v1703
  %v1728 = vmul.f32 %v1566, %v1703
  %v1729 = vmul.f32 %v1567, %v1703
  %v1730 = vmul.f32 %v1568, %v1703
  %v1731 = vmul.f32 %v1569, %v1703
  %v1732 = vmul.f32 %v1570, %v1703
  %v1733 = vmul.f32 %v1571, %v1703
  %v1734 = vmul.f32 %v1572, %v1703
  %v1735 = vmul.f32 %v1573, %v1703
  %v1736 = vxor.u32 %v1704, 2147483648
  %v1737 = vxor.u32 %v1705, 2147483648
  %v1738 = vxor.u32 %v1706, 2147483648
  %v1739 = vxor.u32 %v1707, 2147483648
  %v1740 = vxor.u32 %v1708, 2147483648
  %v1741 = vxor.u32 %v1709, 2147483648
  %v1742 = vxor.u32 %v1710, 2147483648
  %v1743 = vxor.u32 %v1711, 2147483648
  %v1744 = vxor.u32 %v1712, 2147483648
  %v1745 = vxor.u32 %v1713, 2147483648
  %v1746 = vxor.u32 %v1714, 2147483648
  %v1747 = vxor.u32 %v1715, 2147483648
  %v1748 = vxor.u32 %v1716, 2147483648
  %v1749 = vxor.u32 %v1717, 2147483648
  %v1750 = vxor.u32 %v1718, 2147483648
  %v1751 = vxor.u32 %v1719, 2147483648
  %v1752 = vxor.u32 %v1720, 2147483648
  %v1753 = vxor.u32 %v1721, 2147483648
  %v1754 = vxor.u32 %v1722, 2147483648
  %v1755 = vxor.u32 %v1723, 2147483648
  %v1756 = vxor.u32 %v1724, 2147483648
  %v1757 = vxor.u32 %v1725, 2147483648
  %v1758 = vxor.u32 %v1726, 2147483648
  %v1759 = vxor.u32 %v1727, 2147483648
  %v1760 = vxor.u32 %v1728, 2147483648
  %v1761 = vxor.u32 %v1729, 2147483648
  %v1762 = vxor.u32 %v1730, 2147483648
  %v1763 = vxor.u32 %v1731, 2147483648
  %v1764 = vxor.u32 %v1732, 2147483648
  %v1765 = vxor.u32 %v1733, 2147483648
  %v1766 = vxor.u32 %v1734, 2147483648
  %v1767 = vxor.u32 %v1735, 2147483648
  %v1768 = vmul.f32 %v1736, 1.442695
  %v1769 = vpow.pop %v1768
  %v1770 = vmul.f32 %v1737, 1.442695
  %v1771 = vpow.pop %v1770
  %v1772 = vmul.f32 %v1738, 1.442695
  %v1773 = vpow.pop %v1772
  %v1774 = vmul.f32 %v1739, 1.442695
  %v1775 = vpow.pop %v1774
  %v1776 = vmul.f32 %v1740, 1.442695
  %v1777 = vpow.pop %v1776
  %v1778 = vmul.f32 %v1741, 1.442695
  %v1779 = vpow.pop %v1778
  %v1780 = vmul.f32 %v1742, 1.442695
  %v1781 = vpow.pop %v1780
  %v1782 = vmul.f32 %v1743, 1.442695
  %v1783 = vpow.pop %v1782
  %v1784 = vmul.f32 %v1744, 1.442695
  %v1785 = vpow.pop %v1784
  %v1786 = vmul.f32 %v1745, 1.442695
  %v1787 = vpow.pop %v1786
  %v1788 = vmul.f32 %v1746, 1.442695
  %v1789 = vpow.pop %v1788
  %v1790 = vmul.f32 %v1747, 1.442695
  %v1791 = vpow.pop %v1790
  %v1792 = vmul.f32 %v1748, 1.442695
  %v1793 = vpow.pop %v1792
  %v1794 = vmul.f32 %v1749, 1.442695
  %v1795 = vpow.pop %v1794
  %v1796 = vmul.f32 %v1750, 1.442695
  %v1797 = vpow.pop %v1796
  %v1798 = vmul.f32 %v1751, 1.442695
  %v1799 = vpow.pop %v1798
  %v1800 = vmul.f32 %v1752, 1.442695
  %v1801 = vpow.pop %v1800
  %v1802 = vmul.f32 %v1753, 1.442695
  %v1803 = vpow.pop %v1802
  %v1804 = vmul.f32 %v1754, 1.442695
  %v1805 = vpow.pop %v1804
  %v1806 = vmul.f32 %v1755, 1.442695
  %v1807 = vpow.pop %v1806
  %v1808 = vmul.f32 %v1756, 1.442695
  %v1809 = vpow.pop %v1808
  %v1810 = vmul.f32 %v1757, 1.442695
  %v1811 = vpow.pop %v1810
  %v1812 = vmul.f32 %v1758, 1.442695
  %v1813 = vpow.pop %v1812
  %v1814 = vmul.f32 %v1759, 1.442695
  %v1815 = vpow.pop %v1814
  %v1816 = vmul.f32 %v1760, 1.442695
  %v1817 = vpow.pop %v1816
  %v1818 = vmul.f32 %v1761, 1.442695
  %v1819 = vpow.pop %v1818
  %v1820 = vmul.f32 %v1762, 1.442695
  %v1821 = vpow.pop %v1820
  %v1822 = vmul.f32 %v1763, 1.442695
  %v1823 = vpow.pop %v1822
  %v1824 = vmul.f32 %v1764, 1.442695
  %v1825 = vpow.pop %v1824
  %v1826 = vmul.f32 %v1765, 1.442695
  %v1827 = vpow.pop %v1826
  %v1828 = vmul.f32 %v1766, 1.442695
  %v1829 = vpow.pop %v1828
  %v1830 = vmul.f32 %v1767, 1.442695
  %v1831 = vpow.pop %v1830
  %v1832 = vadd.f32 %v1769, 1.0
  %v1833 = vadd.f32 %v1771, 1.0
  %v1834 = vadd.f32 %v1773, 1.0
  %v1835 = vadd.f32 %v1775, 1.0
  %v1836 = vadd.f32 %v1777, 1.0
  %v1837 = vadd.f32 %v1779, 1.0
  %v1838 = vadd.f32 %v1781, 1.0
  %v1839 = vadd.f32 %v1783, 1.0
  %v1840 = vadd.f32 %v1785, 1.0
  %v1841 = vadd.f32 %v1787, 1.0
  %v1842 = vadd.f32 %v1789, 1.0
  %v1843 = vadd.f32 %v1791, 1.0
  %v1844 = vadd.f32 %v1793, 1.0
  %v1845 = vadd.f32 %v1795, 1.0
  %v1846 = vadd.f32 %v1797, 1.0
  %v1847 = vadd.f32 %v1799, 1.0
  %v1848 = vadd.f32 %v1801, 1.0
  %v1849 = vadd.f32 %v1803, 1.0
  %v1850 = vadd.f32 %v1805, 1.0
  %v1851 = vadd.f32 %v1807, 1.0
  %v1852 = vadd.f32 %v1809, 1.0
  %v1853 = vadd.f32 %v1811, 1.0
  %v1854 = vadd.f32 %v1813, 1.0
  %v1855 = vadd.f32 %v1815, 1.0
  %v1856 = vadd.f32 %v1817, 1.0
  %v1857 = vadd.f32 %v1819, 1.0
  %v1858 = vadd.f32 %v1821, 1.0
  %v1859 = vadd.f32 %v1823, 1.0
  %v1860 = vadd.f32 %v1825, 1.0
  %v1861 = vadd.f32 %v1827, 1.0
  %v1862 = vadd.f32 %v1829, 1.0
  %v1863 = vadd.f32 %v1831, 1.0
  %v1864 = vrcp.pop %v1832
  %v1865 = vmul.f32 %v1832, %v1864
  %v1866 = vsub.f32 1.0, %v1865
  %v1867 = vmul.f32 %v1864, %v1866
  %v1868 = vadd.f32 %v1864, %v1867
  %vm1869 = vweird.f32 %v1832
  %vm1870 = vweird.f32 %v1864
  %vm1871 = vmor %vm1869, %vm1870
  %v1872 = vsel %vm1871, %v1864, %v1868
  %v1873 = vand.u32 2147483647, %v1832
  %vm1874 = vcmp.eq.f32.partialorder %v1873, 8.507059e+37
  %v1875 = vand.u32 %v1832, 2147483648
  %v1876 = vor.u32 1.1754944e-38, %v1875
  %v1877 = vsel %vm1874, %v1876, %v1872
  %v1878 = vmul.f32 1.0, %v1877
  %v1879 = vrcp.pop %v1833
  %v1880 = vmul.f32 %v1833, %v1879
  %v1881 = vsub.f32 1.0, %v1880
  %v1882 = vmul.f32 %v1879, %v1881
  %v1883 = vadd.f32 %v1879, %v1882
  %vm1884 = vweird.f32 %v1833
  %vm1885 = vweird.f32 %v1879
  %vm1886 = vmor %vm1884, %vm1885
  %v1887 = vsel %vm1886, %v1879, %v1883
  %v1888 = vand.u32 2147483647, %v1833
  %vm1889 = vcmp.eq.f32.partialorder %v1888, 8.507059e+37
  %v1890 = vand.u32 %v1833, 2147483648
  %v1891 = vor.u32 1.1754944e-38, %v1890
  %v1892 = vsel %vm1889, %v1891, %v1887
  %v1893 = vmul.f32 1.0, %v1892
  %v1894 = vrcp.pop %v1834
  %v1895 = vmul.f32 %v1834, %v1894
  %v1896 = vsub.f32 1.0, %v1895
  %v1897 = vmul.f32 %v1894, %v1896
  %v1898 = vadd.f32 %v1894, %v1897
  %vm1899 = vweird.f32 %v1834
  %vm1900 = vweird.f32 %v1894
  %vm1901 = vmor %vm1899, %vm1900
  %v1902 = vsel %vm1901, %v1894, %v1898
  %v1903 = vand.u32 2147483647, %v1834
  %vm1904 = vcmp.eq.f32.partialorder %v1903, 8.507059e+37
  %v1905 = vand.u32 %v1834, 2147483648
  %v1906 = vor.u32 1.1754944e-38, %v1905
  %v1907 = vsel %vm1904, %v1906, %v1902
  %v1908 = vmul.f32 1.0, %v1907
  %v1909 = vrcp.pop %v1835
  %v1910 = vmul.f32 %v1835, %v1909
  %v1911 = vsub.f32 1.0, %v1910
  %v1912 = vmul.f32 %v1909, %v1911
  %v1913 = vadd.f32 %v1909, %v1912
  %vm1914 = vweird.f32 %v1835
  %vm1915 = vweird.f32 %v1909
  %vm1916 = vmor %vm1914, %vm1915
  %v1917 = vsel %vm1916, %v1909, %v1913
  %v1918 = vand.u32 2147483647, %v1835
  %vm1919 = vcmp.eq.f32.partialorder %v1918, 8.507059e+37
  %v1920 = vand.u32 %v1835, 2147483648
  %v1921 = vor.u32 1.1754944e-38, %v1920
  %v1922 = vsel %vm1919, %v1921, %v1917
  %v1923 = vmul.f32 1.0, %v1922
  %v1924 = vrcp.pop %v1836
  %v1925 = vmul.f32 %v1836, %v1924
  %v1926 = vsub.f32 1.0, %v1925
  %v1927 = vmul.f32 %v1924, %v1926
  %v1928 = vadd.f32 %v1924, %v1927
  %vm1929 = vweird.f32 %v1836
  %vm1930 = vweird.f32 %v1924
  %vm1931 = vmor %vm1929, %vm1930
  %v1932 = vsel %vm1931, %v1924, %v1928
  %v1933 = vand.u32 2147483647, %v1836
  %vm1934 = vcmp.eq.f32.partialorder %v1933, 8.507059e+37
  %v1935 = vand.u32 %v1836, 2147483648
  %v1936 = vor.u32 1.1754944e-38, %v1935
  %v1937 = vsel %vm1934, %v1936, %v1932
  %v1938 = vmul.f32 1.0, %v1937
  %v1939 = vrcp.pop %v1837
  %v1940 = vmul.f32 %v1837, %v1939
  %v1941 = vsub.f32 1.0, %v1940
  %v1942 = vmul.f32 %v1939, %v1941
  %v1943 = vadd.f32 %v1939, %v1942
  %vm1944 = vweird.f32 %v1837
  %vm1945 = vweird.f32 %v1939
  %vm1946 = vmor %vm1944, %vm1945
  %v1947 = vsel %vm1946, %v1939, %v1943
  %v1948 = vand.u32 2147483647, %v1837
  %vm1949 = vcmp.eq.f32.partialorder %v1948, 8.507059e+37
  %v1950 = vand.u32 %v1837, 2147483648
  %v1951 = vor.u32 1.1754944e-38, %v1950
  %v1952 = vsel %vm1949, %v1951, %v1947
  %v1953 = vmul.f32 1.0, %v1952
  %v1954 = vrcp.pop %v1838
  %v1955 = vmul.f32 %v1838, %v1954
  %v1956 = vsub.f32 1.0, %v1955
  %v1957 = vmul.f32 %v1954, %v1956
  %v1958 = vadd.f32 %v1954, %v1957
  %vm1959 = vweird.f32 %v1838
  %vm1960 = vweird.f32 %v1954
  %vm1961 = vmor %vm1959, %vm1960
  %v1962 = vsel %vm1961, %v1954, %v1958
  %v1963 = vand.u32 2147483647, %v1838
  %vm1964 = vcmp.eq.f32.partialorder %v1963, 8.507059e+37
  %v1965 = vand.u32 %v1838, 2147483648
  %v1966 = vor.u32 1.1754944e-38, %v1965
  %v1967 = vsel %vm1964, %v1966, %v1962
  %v1968 = vmul.f32 1.0, %v1967
  %v1969 = vrcp.pop %v1839
  %v1970 = vmul.f32 %v1839, %v1969
  %v1971 = vsub.f32 1.0, %v1970
  %v1972 = vmul.f32 %v1969, %v1971
  %v1973 = vadd.f32 %v1969, %v1972
  %vm1974 = vweird.f32 %v1839
  %vm1975 = vweird.f32 %v1969
  %vm1976 = vmor %vm1974, %vm1975
  %v1977 = vsel %vm1976, %v1969, %v1973
  %v1978 = vand.u32 2147483647, %v1839
  %vm1979 = vcmp.eq.f32.partialorder %v1978, 8.507059e+37
  %v1980 = vand.u32 %v1839, 2147483648
  %v1981 = vor.u32 1.1754944e-38, %v1980
  %v1982 = vsel %vm1979, %v1981, %v1977
  %v1983 = vmul.f32 1.0, %v1982
  %v1984 = vrcp.pop %v1840
  %v1985 = vmul.f32 %v1840, %v1984
  %v1986 = vsub.f32 1.0, %v1985
  %v1987 = vmul.f32 %v1984, %v1986
  %v1988 = vadd.f32 %v1984, %v1987
  %vm1989 = vweird.f32 %v1840
  %vm1990 = vweird.f32 %v1984
  %vm1991 = vmor %vm1989, %vm1990
  %v1992 = vsel %vm1991, %v1984, %v1988
  %v1993 = vand.u32 2147483647, %v1840
  %vm1994 = vcmp.eq.f32.partialorder %v1993, 8.507059e+37
  %v1995 = vand.u32 %v1840, 2147483648
  %v1996 = vor.u32 1.1754944e-38, %v1995
  %v1997 = vsel %vm1994, %v1996, %v1992
  %v1998 = vmul.f32 1.0, %v1997
  %v1999 = vrcp.pop %v1841
  %v2000 = vmul.f32 %v1841, %v1999
  %v2001 = vsub.f32 1.0, %v2000
  %v2002 = vmul.f32 %v1999, %v2001
  %v2003 = vadd.f32 %v1999, %v2002
  %vm2004 = vweird.f32 %v1841
  %vm2005 = vweird.f32 %v1999
  %vm2006 = vmor %vm2004, %vm2005
  %v2007 = vsel %vm2006, %v1999, %v2003
  %v2008 = vand.u32 2147483647, %v1841
  %vm2009 = vcmp.eq.f32.partialorder %v2008, 8.507059e+37
  %v2010 = vand.u32 %v1841, 2147483648
  %v2011 = vor.u32 1.1754944e-38, %v2010
  %v2012 = vsel %vm2009, %v2011, %v2007
  %v2013 = vmul.f32 1.0, %v2012
  %v2014 = vrcp.pop %v1842
  %v2015 = vmul.f32 %v1842, %v2014
  %v2016 = vsub.f32 1.0, %v2015
  %v2017 = vmul.f32 %v2014, %v2016
  %v2018 = vadd.f32 %v2014, %v2017
  %vm2019 = vweird.f32 %v1842
  %vm2020 = vweird.f32 %v2014
  %vm2021 = vmor %vm2019, %vm2020
  %v2022 = vsel %vm2021, %v2014, %v2018
  %v2023 = vand.u32 2147483647, %v1842
  %vm2024 = vcmp.eq.f32.partialorder %v2023, 8.507059e+37
  %v2025 = vand.u32 %v1842, 2147483648
  %v2026 = vor.u32 1.1754944e-38, %v2025
  %v2027 = vsel %vm2024, %v2026, %v2022
  %v2028 = vmul.f32 1.0, %v2027
  %v2029 = vrcp.pop %v1843
  %v2030 = vmul.f32 %v1843, %v2029
  %v2031 = vsub.f32 1.0, %v2030
  %v2032 = vmul.f32 %v2029, %v2031
  %v2033 = vadd.f32 %v2029, %v2032
  %vm2034 = vweird.f32 %v1843
  %vm2035 = vweird.f32 %v2029
  %vm2036 = vmor %vm2034, %vm2035
  %v2037 = vsel %vm2036, %v2029, %v2033
  %v2038 = vand.u32 2147483647, %v1843
  %vm2039 = vcmp.eq.f32.partialorder %v2038, 8.507059e+37
  %v2040 = vand.u32 %v1843, 2147483648
  %v2041 = vor.u32 1.1754944e-38, %v2040
  %v2042 = vsel %vm2039, %v2041, %v2037
  %v2043 = vmul.f32 1.0, %v2042
  %v2044 = vrcp.pop %v1844
  %v2045 = vmul.f32 %v1844, %v2044
  %v2046 = vsub.f32 1.0, %v2045
  %v2047 = vmul.f32 %v2044, %v2046
  %v2048 = vadd.f32 %v2044, %v2047
  %vm2049 = vweird.f32 %v1844
  %vm2050 = vweird.f32 %v2044
  %vm2051 = vmor %vm2049, %vm2050
  %v2052 = vsel %vm2051, %v2044, %v2048
  %v2053 = vand.u32 2147483647, %v1844
  %vm2054 = vcmp.eq.f32.partialorder %v2053, 8.507059e+37
  %v2055 = vand.u32 %v1844, 2147483648
  %v2056 = vor.u32 1.1754944e-38, %v2055
  %v2057 = vsel %vm2054, %v2056, %v2052
  %v2058 = vmul.f32 1.0, %v2057
  %v2059 = vrcp.pop %v1845
  %v2060 = vmul.f32 %v1845, %v2059
  %v2061 = vsub.f32 1.0, %v2060
  %v2062 = vmul.f32 %v2059, %v2061
  %v2063 = vadd.f32 %v2059, %v2062
  %vm2064 = vweird.f32 %v1845
  %vm2065 = vweird.f32 %v2059
  %vm2066 = vmor %vm2064, %vm2065
  %v2067 = vsel %vm2066, %v2059, %v2063
  %v2068 = vand.u32 2147483647, %v1845
  %vm2069 = vcmp.eq.f32.partialorder %v2068, 8.507059e+37
  %v2070 = vand.u32 %v1845, 2147483648
  %v2071 = vor.u32 1.1754944e-38, %v2070
  %v2072 = vsel %vm2069, %v2071, %v2067
  %v2073 = vmul.f32 1.0, %v2072
  %v2074 = vrcp.pop %v1846
  %v2075 = vmul.f32 %v1846, %v2074
  %v2076 = vsub.f32 1.0, %v2075
  %v2077 = vmul.f32 %v2074, %v2076
  %v2078 = vadd.f32 %v2074, %v2077
  %vm2079 = vweird.f32 %v1846
  %vm2080 = vweird.f32 %v2074
  %vm2081 = vmor %vm2079, %vm2080
  %v2082 = vsel %vm2081, %v2074, %v2078
  %v2083 = vand.u32 2147483647, %v1846
  %vm2084 = vcmp.eq.f32.partialorder %v2083, 8.507059e+37
  %v2085 = vand.u32 %v1846, 2147483648
  %v2086 = vor.u32 1.1754944e-38, %v2085
  %v2087 = vsel %vm2084, %v2086, %v2082
  %v2088 = vmul.f32 1.0, %v2087
  %v2089 = vrcp.pop %v1847
  %v2090 = vmul.f32 %v1847, %v2089
  %v2091 = vsub.f32 1.0, %v2090
  %v2092 = vmul.f32 %v2089, %v2091
  %v2093 = vadd.f32 %v2089, %v2092
  %vm2094 = vweird.f32 %v1847
  %vm2095 = vweird.f32 %v2089
  %vm2096 = vmor %vm2094, %vm2095
  %v2097 = vsel %vm2096, %v2089, %v2093
  %v2098 = vand.u32 2147483647, %v1847
  %vm2099 = vcmp.eq.f32.partialorder %v2098, 8.507059e+37
  %v2100 = vand.u32 %v1847, 2147483648
  %v2101 = vor.u32 1.1754944e-38, %v2100
  %v2102 = vsel %vm2099, %v2101, %v2097
  %v2103 = vmul.f32 1.0, %v2102
  %v2104 = vrcp.pop %v1848
  %v2105 = vmul.f32 %v1848, %v2104
  %v2106 = vsub.f32 1.0, %v2105
  %v2107 = vmul.f32 %v2104, %v2106
  %v2108 = vadd.f32 %v2104, %v2107
  %vm2109 = vweird.f32 %v1848
  %vm2110 = vweird.f32 %v2104
  %vm2111 = vmor %vm2109, %vm2110
  %v2112 = vsel %vm2111, %v2104, %v2108
  %v2113 = vand.u32 2147483647, %v1848
  %vm2114 = vcmp.eq.f32.partialorder %v2113, 8.507059e+37
  %v2115 = vand.u32 %v1848, 2147483648
  %v2116 = vor.u32 1.1754944e-38, %v2115
  %v2117 = vsel %vm2114, %v2116, %v2112
  %v2118 = vmul.f32 1.0, %v2117
  %v2119 = vrcp.pop %v1849
  %v2120 = vmul.f32 %v1849, %v2119
  %v2121 = vsub.f32 1.0, %v2120
  %v2122 = vmul.f32 %v2119, %v2121
  %v2123 = vadd.f32 %v2119, %v2122
  %vm2124 = vweird.f32 %v1849
  %vm2125 = vweird.f32 %v2119
  %vm2126 = vmor %vm2124, %vm2125
  %v2127 = vsel %vm2126, %v2119, %v2123
  %v2128 = vand.u32 2147483647, %v1849
  %vm2129 = vcmp.eq.f32.partialorder %v2128, 8.507059e+37
  %v2130 = vand.u32 %v1849, 2147483648
  %v2131 = vor.u32 1.1754944e-38, %v2130
  %v2132 = vsel %vm2129, %v2131, %v2127
  %v2133 = vmul.f32 1.0, %v2132
  %v2134 = vrcp.pop %v1850
  %v2135 = vmul.f32 %v1850, %v2134
  %v2136 = vsub.f32 1.0, %v2135
  %v2137 = vmul.f32 %v2134, %v2136
  %v2138 = vadd.f32 %v2134, %v2137
  %vm2139 = vweird.f32 %v1850
  %vm2140 = vweird.f32 %v2134
  %vm2141 = vmor %vm2139, %vm2140
  %v2142 = vsel %vm2141, %v2134, %v2138
  %v2143 = vand.u32 2147483647, %v1850
  %vm2144 = vcmp.eq.f32.partialorder %v2143, 8.507059e+37
  %v2145 = vand.u32 %v1850, 2147483648
  %v2146 = vor.u32 1.1754944e-38, %v2145
  %v2147 = vsel %vm2144, %v2146, %v2142
  %v2148 = vmul.f32 1.0, %v2147
  %v2149 = vrcp.pop %v1851
  %v2150 = vmul.f32 %v1851, %v2149
  %v2151 = vsub.f32 1.0, %v2150
  %v2152 = vmul.f32 %v2149, %v2151
  %v2153 = vadd.f32 %v2149, %v2152
  %vm2154 = vweird.f32 %v1851
  %vm2155 = vweird.f32 %v2149
  %vm2156 = vmor %vm2154, %vm2155
  %v2157 = vsel %vm2156, %v2149, %v2153
  %v2158 = vand.u32 2147483647, %v1851
  %vm2159 = vcmp.eq.f32.partialorder %v2158, 8.507059e+37
  %v2160 = vand.u32 %v1851, 2147483648
  %v2161 = vor.u32 1.1754944e-38, %v2160
  %v2162 = vsel %vm2159, %v2161, %v2157
  %v2163 = vmul.f32 1.0, %v2162
  %v2164 = vrcp.pop %v1852
  %v2165 = vmul.f32 %v1852, %v2164
  %v2166 = vsub.f32 1.0, %v2165
  %v2167 = vmul.f32 %v2164, %v2166
  %v2168 = vadd.f32 %v2164, %v2167
  %vm2169 = vweird.f32 %v1852
  %vm2170 = vweird.f32 %v2164
  %vm2171 = vmor %vm2169, %vm2170
  %v2172 = vsel %vm2171, %v2164, %v2168
  %v2173 = vand.u32 2147483647, %v1852
  %vm2174 = vcmp.eq.f32.partialorder %v2173, 8.507059e+37
  %v2175 = vand.u32 %v1852, 2147483648
  %v2176 = vor.u32 1.1754944e-38, %v2175
  %v2177 = vsel %vm2174, %v2176, %v2172
  %v2178 = vmul.f32 1.0, %v2177
  %v2179 = vrcp.pop %v1853
  %v2180 = vmul.f32 %v1853, %v2179
  %v2181 = vsub.f32 1.0, %v2180
  %v2182 = vmul.f32 %v2179, %v2181
  %v2183 = vadd.f32 %v2179, %v2182
  %vm2184 = vweird.f32 %v1853
  %vm2185 = vweird.f32 %v2179
  %vm2186 = vmor %vm2184, %vm2185
  %v2187 = vsel %vm2186, %v2179, %v2183
  %v2188 = vand.u32 2147483647, %v1853
  %vm2189 = vcmp.eq.f32.partialorder %v2188, 8.507059e+37
  %v2190 = vand.u32 %v1853, 2147483648
  %v2191 = vor.u32 1.1754944e-38, %v2190
  %v2192 = vsel %vm2189, %v2191, %v2187
  %v2193 = vmul.f32 1.0, %v2192
  %v2194 = vrcp.pop %v1854
  %v2195 = vmul.f32 %v1854, %v2194
  %v2196 = vsub.f32 1.0, %v2195
  %v2197 = vmul.f32 %v2194, %v2196
  %v2198 = vadd.f32 %v2194, %v2197
  %vm2199 = vweird.f32 %v1854
  %vm2200 = vweird.f32 %v2194
  %vm2201 = vmor %vm2199, %vm2200
  %v2202 = vsel %vm2201, %v2194, %v2198
  %v2203 = vand.u32 2147483647, %v1854
  %vm2204 = vcmp.eq.f32.partialorder %v2203, 8.507059e+37
  %v2205 = vand.u32 %v1854, 2147483648
  %v2206 = vor.u32 1.1754944e-38, %v2205
  %v2207 = vsel %vm2204, %v2206, %v2202
  %v2208 = vmul.f32 1.0, %v2207
  %v2209 = vrcp.pop %v1855
  %v2210 = vmul.f32 %v1855, %v2209
  %v2211 = vsub.f32 1.0, %v2210
  %v2212 = vmul.f32 %v2209, %v2211
  %v2213 = vadd.f32 %v2209, %v2212
  %vm2214 = vweird.f32 %v1855
  %vm2215 = vweird.f32 %v2209
  %vm2216 = vmor %vm2214, %vm2215
  %v2217 = vsel %vm2216, %v2209, %v2213
  %v2218 = vand.u32 2147483647, %v1855
  %vm2219 = vcmp.eq.f32.partialorder %v2218, 8.507059e+37
  %v2220 = vand.u32 %v1855, 2147483648
  %v2221 = vor.u32 1.1754944e-38, %v2220
  %v2222 = vsel %vm2219, %v2221, %v2217
  %v2223 = vmul.f32 1.0, %v2222
  %v2224 = vrcp.pop %v1856
  %v2225 = vmul.f32 %v1856, %v2224
  %v2226 = vsub.f32 1.0, %v2225
  %v2227 = vmul.f32 %v2224, %v2226
  %v2228 = vadd.f32 %v2224, %v2227
  %vm2229 = vweird.f32 %v1856
  %vm2230 = vweird.f32 %v2224
  %vm2231 = vmor %vm2229, %vm2230
  %v2232 = vsel %vm2231, %v2224, %v2228
  %v2233 = vand.u32 2147483647, %v1856
  %vm2234 = vcmp.eq.f32.partialorder %v2233, 8.507059e+37
  %v2235 = vand.u32 %v1856, 2147483648
  %v2236 = vor.u32 1.1754944e-38, %v2235
  %v2237 = vsel %vm2234, %v2236, %v2232
  %v2238 = vmul.f32 1.0, %v2237
  %v2239 = vrcp.pop %v1857
  %v2240 = vmul.f32 %v1857, %v2239
  %v2241 = vsub.f32 1.0, %v2240
  %v2242 = vmul.f32 %v2239, %v2241
  %v2243 = vadd.f32 %v2239, %v2242
  %vm2244 = vweird.f32 %v1857
  %vm2245 = vweird.f32 %v2239
  %vm2246 = vmor %vm2244, %vm2245
  %v2247 = vsel %vm2246, %v2239, %v2243
  %v2248 = vand.u32 2147483647, %v1857
  %vm2249 = vcmp.eq.f32.partialorder %v2248, 8.507059e+37
  %v2250 = vand.u32 %v1857, 2147483648
  %v2251 = vor.u32 1.1754944e-38, %v2250
  %v2252 = vsel %vm2249, %v2251, %v2247
  %v2253 = vmul.f32 1.0, %v2252
  %v2254 = vrcp.pop %v1858
  %v2255 = vmul.f32 %v1858, %v2254
  %v2256 = vsub.f32 1.0, %v2255
  %v2257 = vmul.f32 %v2254, %v2256
  %v2258 = vadd.f32 %v2254, %v2257
  %vm2259 = vweird.f32 %v1858
  %vm2260 = vweird.f32 %v2254
  %vm2261 = vmor %vm2259, %vm2260
  %v2262 = vsel %vm2261, %v2254, %v2258
  %v2263 = vand.u32 2147483647, %v1858
  %vm2264 = vcmp.eq.f32.partialorder %v2263, 8.507059e+37
  %v2265 = vand.u32 %v1858, 2147483648
  %v2266 = vor.u32 1.1754944e-38, %v2265
  %v2267 = vsel %vm2264, %v2266, %v2262
  %v2268 = vmul.f32 1.0, %v2267
  %v2269 = vrcp.pop %v1859
  %v2270 = vmul.f32 %v1859, %v2269
  %v2271 = vsub.f32 1.0, %v2270
  %v2272 = vmul.f32 %v2269, %v2271
  %v2273 = vadd.f32 %v2269, %v2272
  %vm2274 = vweird.f32 %v1859
  %vm2275 = vweird.f32 %v2269
  %vm2276 = vmor %vm2274, %vm2275
  %v2277 = vsel %vm2276, %v2269, %v2273
  %v2278 = vand.u32 2147483647, %v1859
  %vm2279 = vcmp.eq.f32.partialorder %v2278, 8.507059e+37
  %v2280 = vand.u32 %v1859, 2147483648
  %v2281 = vor.u32 1.1754944e-38, %v2280
  %v2282 = vsel %vm2279, %v2281, %v2277
  %v2283 = vmul.f32 1.0, %v2282
  %v2284 = vrcp.pop %v1860
  %v2285 = vmul.f32 %v1860, %v2284
  %v2286 = vsub.f32 1.0, %v2285
  %v2287 = vmul.f32 %v2284, %v2286
  %v2288 = vadd.f32 %v2284, %v2287
  %vm2289 = vweird.f32 %v1860
  %vm2290 = vweird.f32 %v2284
  %vm2291 = vmor %vm2289, %vm2290
  %v2292 = vsel %vm2291, %v2284, %v2288
  %v2293 = vand.u32 2147483647, %v1860
  %vm2294 = vcmp.eq.f32.partialorder %v2293, 8.507059e+37
  %v2295 = vand.u32 %v1860, 2147483648
  %v2296 = vor.u32 1.1754944e-38, %v2295
  %v2297 = vsel %vm2294, %v2296, %v2292
  %v2298 = vmul.f32 1.0, %v2297
  %v2299 = vrcp.pop %v1861
  %v2300 = vmul.f32 %v1861, %v2299
  %v2301 = vsub.f32 1.0, %v2300
  %v2302 = vmul.f32 %v2299, %v2301
  %v2303 = vadd.f32 %v2299, %v2302
  %vm2304 = vweird.f32 %v1861
  %vm2305 = vweird.f32 %v2299
  %vm2306 = vmor %vm2304, %vm2305
  %v2307 = vsel %vm2306, %v2299, %v2303
  %v2308 = vand.u32 2147483647, %v1861
  %vm2309 = vcmp.eq.f32.partialorder %v2308, 8.507059e+37
  %v2310 = vand.u32 %v1861, 2147483648
  %v2311 = vor.u32 1.1754944e-38, %v2310
  %v2312 = vsel %vm2309, %v2311, %v2307
  %v2313 = vmul.f32 1.0, %v2312
  %v2314 = vrcp.pop %v1862
  %v2315 = vmul.f32 %v1862, %v2314
  %v2316 = vsub.f32 1.0, %v2315
  %v2317 = vmul.f32 %v2314, %v2316
  %v2318 = vadd.f32 %v2314, %v2317
  %vm2319 = vweird.f32 %v1862
  %vm2320 = vweird.f32 %v2314
  %vm2321 = vmor %vm2319, %vm2320
  %v2322 = vsel %vm2321, %v2314, %v2318
  %v2323 = vand.u32 2147483647, %v1862
  %vm2324 = vcmp.eq.f32.partialorder %v2323, 8.507059e+37
  %v2325 = vand.u32 %v1862, 2147483648
  %v2326 = vor.u32 1.1754944e-38, %v2325
  %v2327 = vsel %vm2324, %v2326, %v2322
  %v2328 = vmul.f32 1.0, %v2327
  %v2329 = vrcp.pop %v1863
  %v2330 = vmul.f32 %v1863, %v2329
  %v2331 = vsub.f32 1.0, %v2330
  %v2332 = vmul.f32 %v2329, %v2331
  %v2333 = vadd.f32 %v2329, %v2332
  %vm2334 = vweird.f32 %v1863
  %vm2335 = vweird.f32 %v2329
  %vm2336 = vmor %vm2334, %vm2335
  %v2337 = vsel %vm2336, %v2329, %v2333
  %v2338 = vand.u32 2147483647, %v1863
  %vm2339 = vcmp.eq.f32.partialorder %v2338, 8.507059e+37
  %v2340 = vand.u32 %v1863, 2147483648
  %v2341 = vor.u32 1.1754944e-38, %v2340
  %v2342 = vsel %vm2339, %v2341, %v2337
  %v2343 = vmul.f32 1.0, %v2342
  %2376 = vrot.lane.b32.xlu0 %v1878, 120
  %v2377 = vpop.permute.xlu0 %2376
  %2378 = vrot.lane.b32.xlu0 %v1893, 120
  %v2379 = vpop.permute.xlu0 %2378
  %2380 = vrot.lane.b32.xlu0 %v1908, 120
  %v2381 = vpop.permute.xlu0 %2380
  %2382 = vrot.lane.b32.xlu0 %v1923, 120
  %v2383 = vpop.permute.xlu0 %2382
  %2384 = vrot.lane.b32.xlu0 %v1938, 120
  %v2385 = vpop.permute.xlu0 %2384
  %2386 = vrot.lane.b32.xlu0 %v1953, 120
  %v2387 = vpop.permute.xlu0 %2386
  %2388 = vrot.lane.b32.xlu0 %v1968, 120
  %v2389 = vpop.permute.xlu0 %2388
  %2390 = vrot.lane.b32.xlu0 %v1983, 120
  %v2391 = vpop.permute.xlu0 %2390
  %2392 = vrot.lane.b32.xlu0 %v1998, 120
  %v2393 = vpop.permute.xlu0 %2392
  %2394 = vrot.lane.b32.xlu0 %v2013, 120
  %v2395 = vpop.permute.xlu0 %2394
  %2396 = vrot.lane.b32.xlu0 %v2028, 120
  %v2397 = vpop.permute.xlu0 %2396
  %2398 = vrot.lane.b32.xlu0 %v2043, 120
  %v2399 = vpop.permute.xlu0 %2398
  %2400 = vrot.lane.b32.xlu0 %v2058, 120
  %v2401 = vpop.permute.xlu0 %2400
  %2402 = vrot.lane.b32.xlu0 %v2073, 120
  %v2403 = vpop.permute.xlu0 %2402
  %2404 = vrot.lane.b32.xlu0 %v2088, 120
  %v2405 = vpop.permute.xlu0 %2404
  %2406 = vrot.lane.b32.xlu0 %v2103, 120
  %v2407 = vpop.permute.xlu0 %2406
  %2408 = vrot.lane.b32.xlu0 %v2118, 120
  %v2409 = vpop.permute.xlu0 %2408
  %2410 = vrot.lane.b32.xlu0 %v2133, 120
  %v2411 = vpop.permute.xlu0 %2410
  %2412 = vrot.lane.b32.xlu0 %v2148, 120
  %v2413 = vpop.permute.xlu0 %2412
  %2414 = vrot.lane.b32.xlu0 %v2163, 120
  %v2415 = vpop.permute.xlu0 %2414
  %2416 = vrot.lane.b32.xlu0 %v2178, 120
  %v2417 = vpop.permute.xlu0 %2416
  %2418 = vrot.lane.b32.xlu0 %v2193, 120
  %v2419 = vpop.permute.xlu0 %2418
  %2420 = vrot.lane.b32.xlu0 %v2208, 120
  %v2421 = vpop.permute.xlu0 %2420
  %2422 = vrot.lane.b32.xlu0 %v2223, 120
  %v2423 = vpop.permute.xlu0 %2422
  %2424 = vrot.lane.b32.xlu0 %v2238, 120
  %v2425 = vpop.permute.xlu0 %2424
  %2426 = vrot.lane.b32.xlu0 %v2253, 120
  %v2427 = vpop.permute.xlu0 %2426
  %2428 = vrot.lane.b32.xlu0 %v2268, 120
  %v2429 = vpop.permute.xlu0 %2428
  %2430 = vrot.lane.b32.xlu0 %v2283, 120
  %v2431 = vpop.permute.xlu0 %2430
  %2432 = vrot.lane.b32.xlu0 %v2298, 120
  %v2433 = vpop.permute.xlu0 %2432
  %2434 = vrot.lane.b32.xlu0 %v2313, 120
  %v2435 = vpop.permute.xlu0 %2434
  %2436 = vrot.lane.b32.xlu0 %v2328, 120
  %v2437 = vpop.permute.xlu0 %2436
  %2438 = vrot.lane.b32.xlu0 %v2343, 120
  %v2439 = vpop.permute.xlu0 %2438
  %v2472 = vmul.f32 %v1704, %v2377
  %v2473 = vmul.f32 %v1705, %v2379
  %v2474 = vmul.f32 %v1706, %v2381
  %v2475 = vmul.f32 %v1707, %v2383
  %v2476 = vmul.f32 %v1708, %v2385
  %v2477 = vmul.f32 %v1709, %v2387
  %v2478 = vmul.f32 %v1710, %v2389
  %v2479 = vmul.f32 %v1711, %v2391
  %v2480 = vmul.f32 %v1712, %v2393
  %v2481 = vmul.f32 %v1713, %v2395
  %v2482 = vmul.f32 %v1714, %v2397
  %v2483 = vmul.f32 %v1715, %v2399
  %v2484 = vmul.f32 %v1716, %v2401
  %v2485 = vmul.f32 %v1717, %v2403
  %v2486 = vmul.f32 %v1718, %v2405
  %v2487 = vmul.f32 %v1719, %v2407
  %v2488 = vmul.f32 %v1720, %v2409
  %v2489 = vmul.f32 %v1721, %v2411
  %v2490 = vmul.f32 %v1722, %v2413
  %v2491 = vmul.f32 %v1723, %v2415
  %v2492 = vmul.f32 %v1724, %v2417
  %v2493 = vmul.f32 %v1725, %v2419
  %v2494 = vmul.f32 %v1726, %v2421
  %v2495 = vmul.f32 %v1727, %v2423
  %v2496 = vmul.f32 %v1728, %v2425
  %v2497 = vmul.f32 %v1729, %v2427
  %v2498 = vmul.f32 %v1730, %v2429
  %v2499 = vmul.f32 %v1731, %v2431
  %v2500 = vmul.f32 %v1732, %v2433
  %v2501 = vmul.f32 %v1733, %v2435
  %v2502 = vmul.f32 %v1734, %v2437
  %v2503 = vmul.f32 %v1735, %v2439
  %v2504 = vpack.c.bf16 %v2472, %v2472
  %v2505 = vpack.c.bf16 %v2473, %v2473
  %v2506 = vpack.c.bf16 %v2474, %v2474
  %v2507 = vpack.c.bf16 %v2475, %v2475
  %v2508 = vpack.c.bf16 %v2476, %v2476
  %v2509 = vpack.c.bf16 %v2477, %v2477
  %v2510 = vpack.c.bf16 %v2478, %v2478
  %v2511 = vpack.c.bf16 %v2479, %v2479
  %v2512 = vpack.c.bf16 %v2480, %v2480
  %v2513 = vpack.c.bf16 %v2481, %v2481
  %v2514 = vpack.c.bf16 %v2482, %v2482
  %v2515 = vpack.c.bf16 %v2483, %v2483
  %v2516 = vpack.c.bf16 %v2484, %v2484
  %v2517 = vpack.c.bf16 %v2485, %v2485
  %v2518 = vpack.c.bf16 %v2486, %v2486
  %v2519 = vpack.c.bf16 %v2487, %v2487
  %v2520 = vpack.c.bf16 %v2488, %v2488
  %v2521 = vpack.c.bf16 %v2489, %v2489
  %v2522 = vpack.c.bf16 %v2490, %v2490
  %v2523 = vpack.c.bf16 %v2491, %v2491
  %v2524 = vpack.c.bf16 %v2492, %v2492
  %v2525 = vpack.c.bf16 %v2493, %v2493
  %v2526 = vpack.c.bf16 %v2494, %v2494
  %v2527 = vpack.c.bf16 %v2495, %v2495
  %v2528 = vpack.c.bf16 %v2496, %v2496
  %v2529 = vpack.c.bf16 %v2497, %v2497
  %v2530 = vpack.c.bf16 %v2498, %v2498
  %v2531 = vpack.c.bf16 %v2499, %v2499
  %v2532 = vpack.c.bf16 %v2500, %v2500
  %v2533 = vpack.c.bf16 %v2501, %v2501
  %v2534 = vpack.c.bf16 %v2502, %v2502
  %v2535 = vpack.c.bf16 %v2503, %v2503
  %v2536 = vld [vmem:[%s2] sm:$0xf]
  %v2537 = vld [vmem:[%s2 + $0x4] sm:$0xf]
  %v2538 = vld [vmem:[%s2 + $0x8] sm:$0xf]
  %v2539 = vld [vmem:[%s2 + $0xc] sm:$0xf]
  %v2540 = vld [vmem:[%s2 + $0x10] sm:$0xf]
  %v2541 = vld [vmem:[%s2 + $0x14] sm:$0xf]
  %v2542 = vld [vmem:[%s2 + $0x18] sm:$0xf]
  %v2543 = vld [vmem:[%s2 + $0x1c] sm:$0xf]
  %v2544 = vld [vmem:[%s2 + $0x20] sm:$0xf]
  %v2545 = vld [vmem:[%s2 + $0x24] sm:$0xf]
  %v2546 = vld [vmem:[%s2 + $0x28] sm:$0xf]
  %v2547 = vld [vmem:[%s2 + $0x2c] sm:$0xf]
  %v2556 = vunpack.c.l.b16 %v2504
  %v2557 = vunpack.c.l.b16 %v2505
  %v2558 = vunpack.c.l.b16 %v2506
  %v2559 = vunpack.c.l.b16 %v2507
  %v2560 = vunpack.c.l.b16 %v2520
  %v2561 = vunpack.c.l.b16 %v2521
  %v2562 = vunpack.c.l.b16 %v2522
  %v2563 = vunpack.c.l.b16 %v2523
  %v2564 = vpack.c.b16 %v2557, %v2556
  %v2565 = vpack.c.b16 %v2559, %v2558
  %v2566 = vpack.c.b16 %v2561, %v2560
  %v2567 = vpack.c.b16 %v2563, %v2562
  %v2569 = vshrl.u32 %v2564, 16
  %v2571 = vrot.slane %v2569, 7
  %v2572 = vshll.u32 %v2564, 16
  %v2574 = vor.u32 %v2571, %v2572
  %v2576 = vshrl.u32 %v2565, 16
  %v2578 = vrot.slane %v2576, 7
  %v2579 = vshll.u32 %v2565, 16
  %v2581 = vor.u32 %v2578, %v2579
  %v2582 = vsel %vm113, %v2571, %v2581
  %v2584 = vshrl.u32 %v2566, 16
  %v2586 = vrot.slane %v2584, 7
  %v2587 = vshll.u32 %v2566, 16
  %v2589 = vor.u32 %v2586, %v2587
  %v2591 = vshrl.u32 %v2567, 16
  %v2593 = vrot.slane %v2591, 7
  %v2594 = vshll.u32 %v2567, 16
  %v2596 = vor.u32 %v2593, %v2594
  %v2597 = vsel %vm113, %v2586, %v2596
  %v2600 = vsel %vm147, 0, %v2574
  %v2601 = vsel %vm147, 0, %v2589
  %v2602 = vsel %vm433, %v2564, 0
  %v2604 = vsel %vm433, %v2565, 0
  %v2606 = vsel %vm433, %v2566, 0
  %v2608 = vsel %vm433, %v2567, 0
  %vm2610 = vcmask 1043456
  %v2612 = vsel %vm2610, %v2540, 0
  %2614 = vmatpush.bf16.msra.mxu0 0
  %2615 = vmatpush.bf16.msra.mxu0 0
  %2616 = vmatpush.bf16.msra.mxu0 0
  %2617 = vmatpush.bf16.msra.mxu0 0
  %2618 = vmatpush.bf16.msra.mxu0 0
  %2619 = vmatpush.bf16.msra.mxu0 0
  %2620 = vmatpush.bf16.msra.mxu0 0
  %2621 = vmatpush.bf16.msra.mxu0 %v2612
  %2622 = vmatmul.bf16.gmra.mxu0 %v2602
  %v2623 = vpop.f32.mrf.mxu0
  %v2624 = vadd.f32 0.0, %v2623
  %v2625 = vpop.f32.mrf.mxu0
  %v2626 = vadd.f32 0.0, %v2625
  %2627 = vmatmul.bf16.gmra.mxu0 %v2604
  %v2628 = vpop.f32.mrf.mxu0
  %v2629 = vadd.f32 0.0, %v2628
  %v2630 = vpop.f32.mrf.mxu0
  %v2631 = vadd.f32 0.0, %v2630
  %2632 = vmatmul.bf16.gmra.mxu0 %v2606
  %v2633 = vpop.f32.mrf.mxu0
  %v2634 = vadd.f32 0.0, %v2633
  %v2635 = vpop.f32.mrf.mxu0
  %v2636 = vadd.f32 0.0, %v2635
  %2637 = vmatmul.bf16.gmra.mxu0 %v2608
  %v2638 = vpop.f32.mrf.mxu0
  %v2639 = vadd.f32 0.0, %v2638
  %v2640 = vpop.f32.mrf.mxu0
  %v2641 = vadd.f32 0.0, %v2640
  %2642 = vdwg.mxu0
  %v2644 = vsel %vm433, %v2600, 0
  %v2647 = vsel %vm433, %v2582, 0
  %v2650 = vsel %vm433, %v2601, 0
  %v2653 = vsel %vm433, %v2597, 0
  %v2656 = vsel %vm2610, %v2539, 0
  %2658 = vmatpush.bf16.msra.mxu0 0
  %2659 = vmatpush.bf16.msra.mxu0 0
  %2660 = vmatpush.bf16.msra.mxu0 0
  %2661 = vmatpush.bf16.msra.mxu0 0
  %2662 = vmatpush.bf16.msra.mxu0 0
  %2663 = vmatpush.bf16.msra.mxu0 0
  %2664 = vmatpush.bf16.msra.mxu0 0
  %2665 = vmatpush.bf16.msra.mxu0 %v2656
  %2666 = vmatmul.bf16.gmra.mxu0 %v2644
  %v2667 = vpop.f32.mrf.mxu0
  %v2668 = vadd.f32 %v2624, %v2667
  %v2669 = vpop.f32.mrf.mxu0
  %v2670 = vadd.f32 %v2626, %v2669
  %2671 = vmatmul.bf16.gmra.mxu0 %v2647
  %v2672 = vpop.f32.mrf.mxu0
  %v2673 = vadd.f32 %v2629, %v2672
  %v2674 = vpop.f32.mrf.mxu0
  %v2675 = vadd.f32 %v2631, %v2674
  %2676 = vmatmul.bf16.gmra.mxu0 %v2650
  %v2677 = vpop.f32.mrf.mxu0
  %v2678 = vadd.f32 %v2634, %v2677
  %v2679 = vpop.f32.mrf.mxu0
  %v2680 = vadd.f32 %v2636, %v2679
  %2681 = vmatmul.bf16.gmra.mxu0 %v2653
  %v2682 = vpop.f32.mrf.mxu0
  %v2683 = vadd.f32 %v2639, %v2682
  %v2684 = vpop.f32.mrf.mxu0
  %v2685 = vadd.f32 %v2641, %v2684
  %2686 = vdwg.mxu0
  %v2687 = vrot.slane %v2572, 1
  %v2688 = vor.u32 %v2569, %v2687
  %v2689 = vrot.slane %v2579, 1
  %v2690 = vsel %vm150, %v2688, %v2689
  %v2691 = vor.u32 %v2576, %v2689
  %v2692 = vrot.slane %v2587, 1
  %v2693 = vor.u32 %v2584, %v2692
  %v2694 = vrot.slane %v2594, 1
  %v2695 = vsel %vm150, %v2693, %v2694
  %v2696 = vor.u32 %v2591, %v2694
  %v2699 = vsel %vm164, %v2691, 0
  %v2700 = vsel %vm164, %v2696, 0
  %v2702 = vsel %vm433, %v2690, 0
  %v2705 = vsel %vm433, %v2699, 0
  %v2708 = vsel %vm433, %v2695, 0
  %v2711 = vsel %vm433, %v2700, 0
  %v2714 = vsel %vm2610, %v2541, 0
  %2716 = vmatpush.bf16.msra.mxu0 0
  %2717 = vmatpush.bf16.msra.mxu0 0
  %2718 = vmatpush.bf16.msra.mxu0 0
  %2719 = vmatpush.bf16.msra.mxu0 0
  %2720 = vmatpush.bf16.msra.mxu0 0
  %2721 = vmatpush.bf16.msra.mxu0 0
  %2722 = vmatpush.bf16.msra.mxu0 0
  %2723 = vmatpush.bf16.msra.mxu0 %v2714
  %2724 = vmatmul.bf16.gmra.mxu0 %v2702
  %v2725 = vpop.f32.mrf.mxu0
  %v2726 = vadd.f32 0.0, %v2725
  %v2727 = vpop.f32.mrf.mxu0
  %v2728 = vadd.f32 0.0, %v2727
  %2729 = vmatmul.bf16.gmra.mxu0 %v2705
  %v2730 = vpop.f32.mrf.mxu0
  %v2731 = vadd.f32 0.0, %v2730
  %v2732 = vpop.f32.mrf.mxu0
  %v2733 = vadd.f32 0.0, %v2732
  %2734 = vmatmul.bf16.gmra.mxu0 %v2708
  %v2735 = vpop.f32.mrf.mxu0
  %v2736 = vadd.f32 0.0, %v2735
  %v2737 = vpop.f32.mrf.mxu0
  %v2738 = vadd.f32 0.0, %v2737
  %2739 = vmatmul.bf16.gmra.mxu0 %v2711
  %v2740 = vpop.f32.mrf.mxu0
  %v2741 = vadd.f32 0.0, %v2740
  %v2742 = vpop.f32.mrf.mxu0
  %v2743 = vadd.f32 0.0, %v2742
  %2744 = vdwg.mxu0
  %v2745 = vadd.f32 %v2668, %v2726
  %v2746 = vadd.f32 %v2670, %v2728
  %v2747 = vadd.f32 %v2673, %v2731
  %v2748 = vadd.f32 %v2675, %v2733
  %v2749 = vadd.f32 %v2678, %v2736
  %v2750 = vadd.f32 %v2680, %v2738
  %v2751 = vadd.f32 %v2683, %v2741
  %v2752 = vadd.f32 %v2685, %v2743
  %v2761 = vunpack.c.l.b16 %v2508
  %v2762 = vunpack.c.l.b16 %v2509
  %v2763 = vunpack.c.l.b16 %v2510
  %v2764 = vunpack.c.l.b16 %v2511
  %v2765 = vunpack.c.l.b16 %v2524
  %v2766 = vunpack.c.l.b16 %v2525
  %v2767 = vunpack.c.l.b16 %v2526
  %v2768 = vunpack.c.l.b16 %v2527
  %v2769 = vpack.c.b16 %v2762, %v2761
  %v2770 = vpack.c.b16 %v2764, %v2763
  %v2771 = vpack.c.b16 %v2766, %v2765
  %v2772 = vpack.c.b16 %v2768, %v2767
  %v2774 = vshrl.u32 %v2769, 16
  %v2776 = vrot.slane %v2774, 7
  %v2777 = vshll.u32 %v2769, 16
  %v2779 = vor.u32 %v2776, %v2777
  %v2781 = vshrl.u32 %v2770, 16
  %v2783 = vrot.slane %v2781, 7
  %v2784 = vshll.u32 %v2770, 16
  %v2786 = vor.u32 %v2783, %v2784
  %v2787 = vsel %vm113, %v2776, %v2786
  %v2789 = vshrl.u32 %v2771, 16
  %v2791 = vrot.slane %v2789, 7
  %v2792 = vshll.u32 %v2771, 16
  %v2794 = vor.u32 %v2791, %v2792
  %v2796 = vshrl.u32 %v2772, 16
  %v2798 = vrot.slane %v2796, 7
  %v2799 = vshll.u32 %v2772, 16
  %v2801 = vor.u32 %v2798, %v2799
  %v2802 = vsel %vm113, %v2791, %v2801
  %v2805 = vsel %vm147, 0, %v2779
  %v2806 = vsel %vm147, 0, %v2794
  %v2808 = vsel %vm433, %v2805, 0
  %v2811 = vsel %vm433, %v2787, 0
  %v2814 = vsel %vm433, %v2806, 0
  %v2817 = vsel %vm433, %v2802, 0
  %v2820 = vsel %vm2610, %v2542, 0
  %2822 = vmatpush.bf16.msra.mxu0 0
  %2823 = vmatpush.bf16.msra.mxu0 0
  %2824 = vmatpush.bf16.msra.mxu0 0
  %2825 = vmatpush.bf16.msra.mxu0 0
  %2826 = vmatpush.bf16.msra.mxu0 0
  %2827 = vmatpush.bf16.msra.mxu0 0
  %2828 = vmatpush.bf16.msra.mxu0 0
  %2829 = vmatpush.bf16.msra.mxu0 %v2820
  %2830 = vmatmul.bf16.gmra.mxu0 %v2808
  %v2831 = vpop.f32.mrf.mxu0
  %v2832 = vadd.f32 0.0, %v2831
  %v2833 = vpop.f32.mrf.mxu0
  %v2834 = vadd.f32 0.0, %v2833
  %2835 = vmatmul.bf16.gmra.mxu0 %v2811
  %v2836 = vpop.f32.mrf.mxu0
  %v2837 = vadd.f32 0.0, %v2836
  %v2838 = vpop.f32.mrf.mxu0
  %v2839 = vadd.f32 0.0, %v2838
  %2840 = vmatmul.bf16.gmra.mxu0 %v2814
  %v2841 = vpop.f32.mrf.mxu0
  %v2842 = vadd.f32 0.0, %v2841
  %v2843 = vpop.f32.mrf.mxu0
  %v2844 = vadd.f32 0.0, %v2843
  %2845 = vmatmul.bf16.gmra.mxu0 %v2817
  %v2846 = vpop.f32.mrf.mxu0
  %v2847 = vadd.f32 0.0, %v2846
  %v2848 = vpop.f32.mrf.mxu0
  %v2849 = vadd.f32 0.0, %v2848
  %2850 = vdwg.mxu0
  %v2851 = vadd.f32 %v2745, %v2832
  %v2852 = vadd.f32 %v2746, %v2834
  %v2853 = vadd.f32 %v2747, %v2837
  %v2854 = vadd.f32 %v2748, %v2839
  %v2855 = vadd.f32 %v2749, %v2842
  %v2856 = vadd.f32 %v2750, %v2844
  %v2857 = vadd.f32 %v2751, %v2847
  %v2858 = vadd.f32 %v2752, %v2849
  %v2859 = vsel %vm433, %v2769, 0
  %v2861 = vsel %vm433, %v2770, 0
  %v2863 = vsel %vm433, %v2771, 0
  %v2865 = vsel %vm433, %v2772, 0
  %v2868 = vsel %vm2610, %v2543, 0
  %2870 = vmatpush.bf16.msra.mxu0 0
  %2871 = vmatpush.bf16.msra.mxu0 0
  %2872 = vmatpush.bf16.msra.mxu0 0
  %2873 = vmatpush.bf16.msra.mxu0 0
  %2874 = vmatpush.bf16.msra.mxu0 0
  %2875 = vmatpush.bf16.msra.mxu0 0
  %2876 = vmatpush.bf16.msra.mxu0 0
  %2877 = vmatpush.bf16.msra.mxu0 %v2868
  %2878 = vmatmul.bf16.gmra.mxu0 %v2859
  %v2879 = vpop.f32.mrf.mxu0
  %v2880 = vadd.f32 0.0, %v2879
  %v2881 = vpop.f32.mrf.mxu0
  %v2882 = vadd.f32 0.0, %v2881
  %2883 = vmatmul.bf16.gmra.mxu0 %v2861
  %v2884 = vpop.f32.mrf.mxu0
  %v2885 = vadd.f32 0.0, %v2884
  %v2886 = vpop.f32.mrf.mxu0
  %v2887 = vadd.f32 0.0, %v2886
  %2888 = vmatmul.bf16.gmra.mxu0 %v2863
  %v2889 = vpop.f32.mrf.mxu0
  %v2890 = vadd.f32 0.0, %v2889
  %v2891 = vpop.f32.mrf.mxu0
  %v2892 = vadd.f32 0.0, %v2891
  %2893 = vmatmul.bf16.gmra.mxu0 %v2865
  %v2894 = vpop.f32.mrf.mxu0
  %v2895 = vadd.f32 0.0, %v2894
  %v2896 = vpop.f32.mrf.mxu0
  %v2897 = vadd.f32 0.0, %v2896
  %2898 = vdwg.mxu0
  %v2899 = vadd.f32 %v2851, %v2880
  %v2900 = vadd.f32 %v2852, %v2882
  %v2901 = vadd.f32 %v2853, %v2885
  %v2902 = vadd.f32 %v2854, %v2887
  %v2903 = vadd.f32 %v2855, %v2890
  %v2904 = vadd.f32 %v2856, %v2892
  %v2905 = vadd.f32 %v2857, %v2895
  %v2906 = vadd.f32 %v2858, %v2897
  %v2907 = vrot.slane %v2777, 1
  %v2908 = vor.u32 %v2774, %v2907
  %v2909 = vrot.slane %v2784, 1
  %v2910 = vsel %vm150, %v2908, %v2909
  %v2911 = vor.u32 %v2781, %v2909
  %v2912 = vrot.slane %v2792, 1
  %v2913 = vor.u32 %v2789, %v2912
  %v2914 = vrot.slane %v2799, 1
  %v2915 = vsel %vm150, %v2913, %v2914
  %v2916 = vor.u32 %v2796, %v2914
  %v2919 = vsel %vm164, %v2911, 0
  %v2920 = vsel %vm164, %v2916, 0
  %v2922 = vsel %vm433, %v2910, 0
  %v2925 = vsel %vm433, %v2919, 0
  %v2928 = vsel %vm433, %v2915, 0
  %v2931 = vsel %vm433, %v2920, 0
  %v2934 = vsel %vm2610, %v2544, 0
  %2936 = vmatpush.bf16.msra.mxu0 0
  %2937 = vmatpush.bf16.msra.mxu0 0
  %2938 = vmatpush.bf16.msra.mxu0 0
  %2939 = vmatpush.bf16.msra.mxu0 0
  %2940 = vmatpush.bf16.msra.mxu0 0
  %2941 = vmatpush.bf16.msra.mxu0 0
  %2942 = vmatpush.bf16.msra.mxu0 0
  %2943 = vmatpush.bf16.msra.mxu0 %v2934
  %2944 = vmatmul.bf16.gmra.mxu0 %v2922
  %v2945 = vpop.f32.mrf.mxu0
  %v2946 = vadd.f32 0.0, %v2945
  %v2947 = vpop.f32.mrf.mxu0
  %v2948 = vadd.f32 0.0, %v2947
  %2949 = vmatmul.bf16.gmra.mxu0 %v2925
  %v2950 = vpop.f32.mrf.mxu0
  %v2951 = vadd.f32 0.0, %v2950
  %v2952 = vpop.f32.mrf.mxu0
  %v2953 = vadd.f32 0.0, %v2952
  %2954 = vmatmul.bf16.gmra.mxu0 %v2928
  %v2955 = vpop.f32.mrf.mxu0
  %v2956 = vadd.f32 0.0, %v2955
  %v2957 = vpop.f32.mrf.mxu0
  %v2958 = vadd.f32 0.0, %v2957
  %2959 = vmatmul.bf16.gmra.mxu0 %v2931
  %v2960 = vpop.f32.mrf.mxu0
  %v2961 = vadd.f32 0.0, %v2960
  %v2962 = vpop.f32.mrf.mxu0
  %v2963 = vadd.f32 0.0, %v2962
  %2964 = vdwg.mxu0
  %v2965 = vadd.f32 %v2899, %v2946
  %v2966 = vadd.f32 %v2900, %v2948
  %v2967 = vadd.f32 %v2901, %v2951
  %v2968 = vadd.f32 %v2902, %v2953
  %v2969 = vadd.f32 %v2903, %v2956
  %v2970 = vadd.f32 %v2904, %v2958
  %v2971 = vadd.f32 %v2905, %v2961
  %v2972 = vadd.f32 %v2906, %v2963
  %v2981 = vunpack.c.l.b16 %v2512
  %v2982 = vunpack.c.l.b16 %v2513
  %v2983 = vunpack.c.l.b16 %v2514
  %v2984 = vunpack.c.l.b16 %v2515
  %v2985 = vunpack.c.l.b16 %v2528
  %v2986 = vunpack.c.l.b16 %v2529
  %v2987 = vunpack.c.l.b16 %v2530
  %v2988 = vunpack.c.l.b16 %v2531
  %v2989 = vpack.c.b16 %v2982, %v2981
  %v2990 = vpack.c.b16 %v2984, %v2983
  %v2991 = vpack.c.b16 %v2986, %v2985
  %v2992 = vpack.c.b16 %v2988, %v2987
  %v2994 = vshrl.u32 %v2989, 16
  %v2996 = vrot.slane %v2994, 7
  %v2997 = vshll.u32 %v2989, 16
  %v2999 = vor.u32 %v2996, %v2997
  %v3001 = vshrl.u32 %v2990, 16
  %v3003 = vrot.slane %v3001, 7
  %v3004 = vshll.u32 %v2990, 16
  %v3006 = vor.u32 %v3003, %v3004
  %v3007 = vsel %vm113, %v2996, %v3006
  %v3009 = vshrl.u32 %v2991, 16
  %v3011 = vrot.slane %v3009, 7
  %v3012 = vshll.u32 %v2991, 16
  %v3014 = vor.u32 %v3011, %v3012
  %v3016 = vshrl.u32 %v2992, 16
  %v3018 = vrot.slane %v3016, 7
  %v3019 = vshll.u32 %v2992, 16
  %v3021 = vor.u32 %v3018, %v3019
  %v3022 = vsel %vm113, %v3011, %v3021
  %v3025 = vsel %vm147, 0, %v2999
  %v3026 = vsel %vm147, 0, %v3014
  %v3028 = vsel %vm433, %v3025, 0
  %v3031 = vsel %vm433, %v3007, 0
  %v3034 = vsel %vm433, %v3026, 0
  %v3037 = vsel %vm433, %v3022, 0
  %v3040 = vsel %vm2610, %v2545, 0
  %3042 = vmatpush.bf16.msra.mxu0 0
  %3043 = vmatpush.bf16.msra.mxu0 0
  %3044 = vmatpush.bf16.msra.mxu0 0
  %3045 = vmatpush.bf16.msra.mxu0 0
  %3046 = vmatpush.bf16.msra.mxu0 0
  %3047 = vmatpush.bf16.msra.mxu0 0
  %3048 = vmatpush.bf16.msra.mxu0 0
  %3049 = vmatpush.bf16.msra.mxu0 %v3040
  %3050 = vmatmul.bf16.gmra.mxu0 %v3028
  %v3051 = vpop.f32.mrf.mxu0
  %v3052 = vadd.f32 0.0, %v3051
  %v3053 = vpop.f32.mrf.mxu0
  %v3054 = vadd.f32 0.0, %v3053
  %3055 = vmatmul.bf16.gmra.mxu0 %v3031
  %v3056 = vpop.f32.mrf.mxu0
  %v3057 = vadd.f32 0.0, %v3056
  %v3058 = vpop.f32.mrf.mxu0
  %v3059 = vadd.f32 0.0, %v3058
  %3060 = vmatmul.bf16.gmra.mxu0 %v3034
  %v3061 = vpop.f32.mrf.mxu0
  %v3062 = vadd.f32 0.0, %v3061
  %v3063 = vpop.f32.mrf.mxu0
  %v3064 = vadd.f32 0.0, %v3063
  %3065 = vmatmul.bf16.gmra.mxu0 %v3037
  %v3066 = vpop.f32.mrf.mxu0
  %v3067 = vadd.f32 0.0, %v3066
  %v3068 = vpop.f32.mrf.mxu0
  %v3069 = vadd.f32 0.0, %v3068
  %3070 = vdwg.mxu0
  %v3071 = vadd.f32 %v2965, %v3052
  %v3072 = vadd.f32 %v2966, %v3054
  %v3073 = vadd.f32 %v2967, %v3057
  %v3074 = vadd.f32 %v2968, %v3059
  %v3075 = vadd.f32 %v2969, %v3062
  %v3076 = vadd.f32 %v2970, %v3064
  %v3077 = vadd.f32 %v2971, %v3067
  %v3078 = vadd.f32 %v2972, %v3069
  %v3079 = vsel %vm433, %v2989, 0
  %v3081 = vsel %vm433, %v2990, 0
  %v3083 = vsel %vm433, %v2991, 0
  %v3085 = vsel %vm433, %v2992, 0
  %v3088 = vsel %vm2610, %v2546, 0
  %3090 = vmatpush.bf16.msra.mxu0 0
  %3091 = vmatpush.bf16.msra.mxu0 0
  %3092 = vmatpush.bf16.msra.mxu0 0
  %3093 = vmatpush.bf16.msra.mxu0 0
  %3094 = vmatpush.bf16.msra.mxu0 0
  %3095 = vmatpush.bf16.msra.mxu0 0
  %3096 = vmatpush.bf16.msra.mxu0 0
  %3097 = vmatpush.bf16.msra.mxu0 %v3088
  %3098 = vmatmul.bf16.gmra.mxu0 %v3079
  %v3099 = vpop.f32.mrf.mxu0
  %v3100 = vadd.f32 0.0, %v3099
  %v3101 = vpop.f32.mrf.mxu0
  %v3102 = vadd.f32 0.0, %v3101
  %3103 = vmatmul.bf16.gmra.mxu0 %v3081
  %v3104 = vpop.f32.mrf.mxu0
  %v3105 = vadd.f32 0.0, %v3104
  %v3106 = vpop.f32.mrf.mxu0
  %v3107 = vadd.f32 0.0, %v3106
  %3108 = vmatmul.bf16.gmra.mxu0 %v3083
  %v3109 = vpop.f32.mrf.mxu0
  %v3110 = vadd.f32 0.0, %v3109
  %v3111 = vpop.f32.mrf.mxu0
  %v3112 = vadd.f32 0.0, %v3111
  %3113 = vmatmul.bf16.gmra.mxu0 %v3085
  %v3114 = vpop.f32.mrf.mxu0
  %v3115 = vadd.f32 0.0, %v3114
  %v3116 = vpop.f32.mrf.mxu0
  %v3117 = vadd.f32 0.0, %v3116
  %3118 = vdwg.mxu0
  %v3119 = vadd.f32 %v3071, %v3100
  %v3120 = vadd.f32 %v3072, %v3102
  %v3121 = vadd.f32 %v3073, %v3105
  %v3122 = vadd.f32 %v3074, %v3107
  %v3123 = vadd.f32 %v3075, %v3110
  %v3124 = vadd.f32 %v3076, %v3112
  %v3125 = vadd.f32 %v3077, %v3115
  %v3126 = vadd.f32 %v3078, %v3117
  %v3127 = vrot.slane %v2997, 1
  %v3128 = vor.u32 %v2994, %v3127
  %v3129 = vrot.slane %v3004, 1
  %v3130 = vsel %vm150, %v3128, %v3129
  %v3131 = vor.u32 %v3001, %v3129
  %v3132 = vrot.slane %v3012, 1
  %v3133 = vor.u32 %v3009, %v3132
  %v3134 = vrot.slane %v3019, 1
  %v3135 = vsel %vm150, %v3133, %v3134
  %v3136 = vor.u32 %v3016, %v3134
  %v3139 = vsel %vm164, %v3131, 0
  %v3140 = vsel %vm164, %v3136, 0
  %v3142 = vsel %vm433, %v3130, 0
  %v3145 = vsel %vm433, %v3139, 0
  %v3148 = vsel %vm433, %v3135, 0
  %v3151 = vsel %vm433, %v3140, 0
  %v3154 = vsel %vm2610, %v2547, 0
  %3156 = vmatpush.bf16.msra.mxu0 0
  %3157 = vmatpush.bf16.msra.mxu0 0
  %3158 = vmatpush.bf16.msra.mxu0 0
  %3159 = vmatpush.bf16.msra.mxu0 0
  %3160 = vmatpush.bf16.msra.mxu0 0
  %3161 = vmatpush.bf16.msra.mxu0 0
  %3162 = vmatpush.bf16.msra.mxu0 0
  %3163 = vmatpush.bf16.msra.mxu0 %v3154
  %3164 = vmatmul.bf16.gmra.mxu0 %v3142
  %v3165 = vpop.f32.mrf.mxu0
  %v3166 = vadd.f32 0.0, %v3165
  %v3167 = vpop.f32.mrf.mxu0
  %v3168 = vadd.f32 0.0, %v3167
  %3169 = vmatmul.bf16.gmra.mxu0 %v3145
  %v3170 = vpop.f32.mrf.mxu0
  %v3171 = vadd.f32 0.0, %v3170
  %v3172 = vpop.f32.mrf.mxu0
  %v3173 = vadd.f32 0.0, %v3172
  %3174 = vmatmul.bf16.gmra.mxu0 %v3148
  %v3175 = vpop.f32.mrf.mxu0
  %v3176 = vadd.f32 0.0, %v3175
  %v3177 = vpop.f32.mrf.mxu0
  %v3178 = vadd.f32 0.0, %v3177
  %3179 = vmatmul.bf16.gmra.mxu0 %v3151
  %v3180 = vpop.f32.mrf.mxu0
  %v3181 = vadd.f32 0.0, %v3180
  %v3182 = vpop.f32.mrf.mxu0
  %v3183 = vadd.f32 0.0, %v3182
  %3184 = vdwg.mxu0
  %v3185 = vadd.f32 %v3119, %v3166
  %v3186 = vadd.f32 %v3120, %v3168
  %v3187 = vadd.f32 %v3121, %v3171
  %v3188 = vadd.f32 %v3122, %v3173
  %v3189 = vadd.f32 %v3123, %v3176
  %v3190 = vadd.f32 %v3124, %v3178
  %v3191 = vadd.f32 %v3125, %v3181
  %v3192 = vadd.f32 %v3126, %v3183
  %v3194 = vsel %vm2610, %v2537, 0
  %3196 = vmatpush.bf16.msra.mxu0 0
  %3197 = vmatpush.bf16.msra.mxu0 0
  %3198 = vmatpush.bf16.msra.mxu0 0
  %3199 = vmatpush.bf16.msra.mxu0 0
  %3200 = vmatpush.bf16.msra.mxu0 0
  %3201 = vmatpush.bf16.msra.mxu0 0
  %3202 = vmatpush.bf16.msra.mxu0 0
  %3203 = vmatpush.bf16.msra.mxu0 %v3194
  %3204 = vmatmul.bf16.gmra.mxu0 %v2859
  %v3205 = vpop.f32.mrf.mxu0
  %v3206 = vadd.f32 0.0, %v3205
  %v3207 = vpop.f32.mrf.mxu0
  %v3208 = vadd.f32 0.0, %v3207
  %3209 = vmatmul.bf16.gmra.mxu0 %v2861
  %v3210 = vpop.f32.mrf.mxu0
  %v3211 = vadd.f32 0.0, %v3210
  %v3212 = vpop.f32.mrf.mxu0
  %v3213 = vadd.f32 0.0, %v3212
  %3214 = vmatmul.bf16.gmra.mxu0 %v2863
  %v3215 = vpop.f32.mrf.mxu0
  %v3216 = vadd.f32 0.0, %v3215
  %v3217 = vpop.f32.mrf.mxu0
  %v3218 = vadd.f32 0.0, %v3217
  %3219 = vmatmul.bf16.gmra.mxu0 %v2865
  %v3220 = vpop.f32.mrf.mxu0
  %v3221 = vadd.f32 0.0, %v3220
  %v3222 = vpop.f32.mrf.mxu0
  %v3223 = vadd.f32 0.0, %v3222
  %3224 = vdwg.mxu0
  %v3226 = vsel %vm2610, %v2536, 0
  %3228 = vmatpush.bf16.msra.mxu0 0
  %3229 = vmatpush.bf16.msra.mxu0 0
  %3230 = vmatpush.bf16.msra.mxu0 0
  %3231 = vmatpush.bf16.msra.mxu0 0
  %3232 = vmatpush.bf16.msra.mxu0 0
  %3233 = vmatpush.bf16.msra.mxu0 0
  %3234 = vmatpush.bf16.msra.mxu0 0
  %3235 = vmatpush.bf16.msra.mxu0 %v3226
  %3236 = vmatmul.bf16.gmra.mxu0 %v2808
  %v3237 = vpop.f32.mrf.mxu0
  %v3238 = vadd.f32 %v3206, %v3237
  %v3239 = vpop.f32.mrf.mxu0
  %v3240 = vadd.f32 %v3208, %v3239
  %3241 = vmatmul.bf16.gmra.mxu0 %v2811
  %v3242 = vpop.f32.mrf.mxu0
  %v3243 = vadd.f32 %v3211, %v3242
  %v3244 = vpop.f32.mrf.mxu0
  %v3245 = vadd.f32 %v3213, %v3244
  %3246 = vmatmul.bf16.gmra.mxu0 %v2814
  %v3247 = vpop.f32.mrf.mxu0
  %v3248 = vadd.f32 %v3216, %v3247
  %v3249 = vpop.f32.mrf.mxu0
  %v3250 = vadd.f32 %v3218, %v3249
  %3251 = vmatmul.bf16.gmra.mxu0 %v2817
  %v3252 = vpop.f32.mrf.mxu0
  %v3253 = vadd.f32 %v3221, %v3252
  %v3254 = vpop.f32.mrf.mxu0
  %v3255 = vadd.f32 %v3223, %v3254
  %3256 = vdwg.mxu0
  %v3258 = vsel %vm2610, %v2538, 0
  %3260 = vmatpush.bf16.msra.mxu0 0
  %3261 = vmatpush.bf16.msra.mxu0 0
  %3262 = vmatpush.bf16.msra.mxu0 0
  %3263 = vmatpush.bf16.msra.mxu0 0
  %3264 = vmatpush.bf16.msra.mxu0 0
  %3265 = vmatpush.bf16.msra.mxu0 0
  %3266 = vmatpush.bf16.msra.mxu0 0
  %3267 = vmatpush.bf16.msra.mxu0 %v3258
  %3268 = vmatmul.bf16.gmra.mxu0 %v2922
  %v3269 = vpop.f32.mrf.mxu0
  %v3270 = vadd.f32 0.0, %v3269
  %v3271 = vpop.f32.mrf.mxu0
  %v3272 = vadd.f32 0.0, %v3271
  %3273 = vmatmul.bf16.gmra.mxu0 %v2925
  %v3274 = vpop.f32.mrf.mxu0
  %v3275 = vadd.f32 0.0, %v3274
  %v3276 = vpop.f32.mrf.mxu0
  %v3277 = vadd.f32 0.0, %v3276
  %3278 = vmatmul.bf16.gmra.mxu0 %v2928
  %v3279 = vpop.f32.mrf.mxu0
  %v3280 = vadd.f32 0.0, %v3279
  %v3281 = vpop.f32.mrf.mxu0
  %v3282 = vadd.f32 0.0, %v3281
  %3283 = vmatmul.bf16.gmra.mxu0 %v2931
  %v3284 = vpop.f32.mrf.mxu0
  %v3285 = vadd.f32 0.0, %v3284
  %v3286 = vpop.f32.mrf.mxu0
  %v3287 = vadd.f32 0.0, %v3286
  %3288 = vdwg.mxu0
  %v3289 = vadd.f32 %v3238, %v3270
  %v3290 = vadd.f32 %v3240, %v3272
  %v3291 = vadd.f32 %v3243, %v3275
  %v3292 = vadd.f32 %v3245, %v3277
  %v3293 = vadd.f32 %v3248, %v3280
  %v3294 = vadd.f32 %v3250, %v3282
  %v3295 = vadd.f32 %v3253, %v3285
  %v3296 = vadd.f32 %v3255, %v3287
  %3297 = vmatpush.bf16.msra.mxu0 0
  %3298 = vmatpush.bf16.msra.mxu0 0
  %3299 = vmatpush.bf16.msra.mxu0 0
  %3300 = vmatpush.bf16.msra.mxu0 0
  %3301 = vmatpush.bf16.msra.mxu0 0
  %3302 = vmatpush.bf16.msra.mxu0 0
  %3303 = vmatpush.bf16.msra.mxu0 0
  %3304 = vmatpush.bf16.msra.mxu0 %v2656
  %3305 = vmatmul.bf16.gmra.mxu0 %v3028
  %v3306 = vpop.f32.mrf.mxu0
  %v3307 = vadd.f32 0.0, %v3306
  %v3308 = vpop.f32.mrf.mxu0
  %v3309 = vadd.f32 0.0, %v3308
  %3310 = vmatmul.bf16.gmra.mxu0 %v3031
  %v3311 = vpop.f32.mrf.mxu0
  %v3312 = vadd.f32 0.0, %v3311
  %v3313 = vpop.f32.mrf.mxu0
  %v3314 = vadd.f32 0.0, %v3313
  %3315 = vmatmul.bf16.gmra.mxu0 %v3034
  %v3316 = vpop.f32.mrf.mxu0
  %v3317 = vadd.f32 0.0, %v3316
  %v3318 = vpop.f32.mrf.mxu0
  %v3319 = vadd.f32 0.0, %v3318
  %3320 = vmatmul.bf16.gmra.mxu0 %v3037
  %v3321 = vpop.f32.mrf.mxu0
  %v3322 = vadd.f32 0.0, %v3321
  %v3323 = vpop.f32.mrf.mxu0
  %v3324 = vadd.f32 0.0, %v3323
  %3325 = vdwg.mxu0
  %v3326 = vadd.f32 %v3289, %v3307
  %v3327 = vadd.f32 %v3290, %v3309
  %v3328 = vadd.f32 %v3291, %v3312
  %v3329 = vadd.f32 %v3292, %v3314
  %v3330 = vadd.f32 %v3293, %v3317
  %v3331 = vadd.f32 %v3294, %v3319
  %v3332 = vadd.f32 %v3295, %v3322
  %v3333 = vadd.f32 %v3296, %v3324
  %3334 = vmatpush.bf16.msra.mxu0 0
  %3335 = vmatpush.bf16.msra.mxu0 0
  %3336 = vmatpush.bf16.msra.mxu0 0
  %3337 = vmatpush.bf16.msra.mxu0 0
  %3338 = vmatpush.bf16.msra.mxu0 0
  %3339 = vmatpush.bf16.msra.mxu0 0
  %3340 = vmatpush.bf16.msra.mxu0 0
  %3341 = vmatpush.bf16.msra.mxu0 %v2612
  %3342 = vmatmul.bf16.gmra.mxu0 %v3079
  %v3343 = vpop.f32.mrf.mxu0
  %v3344 = vadd.f32 0.0, %v3343
  %v3345 = vpop.f32.mrf.mxu0
  %v3346 = vadd.f32 0.0, %v3345
  %3347 = vmatmul.bf16.gmra.mxu0 %v3081
  %v3348 = vpop.f32.mrf.mxu0
  %v3349 = vadd.f32 0.0, %v3348
  %v3350 = vpop.f32.mrf.mxu0
  %v3351 = vadd.f32 0.0, %v3350
  %3352 = vmatmul.bf16.gmra.mxu0 %v3083
  %v3353 = vpop.f32.mrf.mxu0
  %v3354 = vadd.f32 0.0, %v3353
  %v3355 = vpop.f32.mrf.mxu0
  %v3356 = vadd.f32 0.0, %v3355
  %3357 = vmatmul.bf16.gmra.mxu0 %v3085
  %v3358 = vpop.f32.mrf.mxu0
  %v3359 = vadd.f32 0.0, %v3358
  %v3360 = vpop.f32.mrf.mxu0
  %v3361 = vadd.f32 0.0, %v3360
  %3362 = vdwg.mxu0
  %v3363 = vadd.f32 %v3326, %v3344
  %v3364 = vadd.f32 %v3327, %v3346
  %v3365 = vadd.f32 %v3328, %v3349
  %v3366 = vadd.f32 %v3329, %v3351
  %v3367 = vadd.f32 %v3330, %v3354
  %v3368 = vadd.f32 %v3331, %v3356
  %v3369 = vadd.f32 %v3332, %v3359
  %v3370 = vadd.f32 %v3333, %v3361
  %3371 = vmatpush.bf16.msra.mxu0 0
  %3372 = vmatpush.bf16.msra.mxu0 0
  %3373 = vmatpush.bf16.msra.mxu0 0
  %3374 = vmatpush.bf16.msra.mxu0 0
  %3375 = vmatpush.bf16.msra.mxu0 0
  %3376 = vmatpush.bf16.msra.mxu0 0
  %3377 = vmatpush.bf16.msra.mxu0 0
  %3378 = vmatpush.bf16.msra.mxu0 %v2714
  %3379 = vmatmul.bf16.gmra.mxu0 %v3142
  %v3380 = vpop.f32.mrf.mxu0
  %v3381 = vadd.f32 0.0, %v3380
  %v3382 = vpop.f32.mrf.mxu0
  %v3383 = vadd.f32 0.0, %v3382
  %3384 = vmatmul.bf16.gmra.mxu0 %v3145
  %v3385 = vpop.f32.mrf.mxu0
  %v3386 = vadd.f32 0.0, %v3385
  %v3387 = vpop.f32.mrf.mxu0
  %v3388 = vadd.f32 0.0, %v3387
  %3389 = vmatmul.bf16.gmra.mxu0 %v3148
  %v3390 = vpop.f32.mrf.mxu0
  %v3391 = vadd.f32 0.0, %v3390
  %v3392 = vpop.f32.mrf.mxu0
  %v3393 = vadd.f32 0.0, %v3392
  %3394 = vmatmul.bf16.gmra.mxu0 %v3151
  %v3395 = vpop.f32.mrf.mxu0
  %v3396 = vadd.f32 0.0, %v3395
  %v3397 = vpop.f32.mrf.mxu0
  %v3398 = vadd.f32 0.0, %v3397
  %3399 = vdwg.mxu0
  %v3400 = vadd.f32 %v3363, %v3381
  %v3401 = vadd.f32 %v3364, %v3383
  %v3402 = vadd.f32 %v3365, %v3386
  %v3403 = vadd.f32 %v3366, %v3388
  %v3404 = vadd.f32 %v3367, %v3391
  %v3405 = vadd.f32 %v3368, %v3393
  %v3406 = vadd.f32 %v3369, %v3396
  %v3407 = vadd.f32 %v3370, %v3398
  %v3416 = vunpack.c.l.b16 %v2516
  %v3417 = vunpack.c.l.b16 %v2517
  %v3418 = vunpack.c.l.b16 %v2518
  %v3419 = vunpack.c.l.b16 %v2519
  %v3420 = vunpack.c.l.b16 %v2532
  %v3421 = vunpack.c.l.b16 %v2533
  %v3422 = vunpack.c.l.b16 %v2534
  %v3423 = vunpack.c.l.b16 %v2535
  %v3424 = vpack.c.b16 %v3417, %v3416
  %v3425 = vpack.c.b16 %v3419, %v3418
  %v3426 = vpack.c.b16 %v3421, %v3420
  %v3427 = vpack.c.b16 %v3423, %v3422
  %v3429 = vshrl.u32 %v3424, 16
  %v3431 = vrot.slane %v3429, 7
  %v3432 = vshll.u32 %v3424, 16
  %v3434 = vor.u32 %v3431, %v3432
  %v3436 = vshrl.u32 %v3425, 16
  %v3438 = vrot.slane %v3436, 7
  %v3439 = vshll.u32 %v3425, 16
  %v3441 = vor.u32 %v3438, %v3439
  %v3442 = vsel %vm113, %v3431, %v3441
  %v3444 = vshrl.u32 %v3426, 16
  %v3446 = vrot.slane %v3444, 7
  %v3447 = vshll.u32 %v3426, 16
  %v3449 = vor.u32 %v3446, %v3447
  %v3451 = vshrl.u32 %v3427, 16
  %v3453 = vrot.slane %v3451, 7
  %v3454 = vshll.u32 %v3427, 16
  %v3456 = vor.u32 %v3453, %v3454
  %v3457 = vsel %vm113, %v3446, %v3456
  %v3460 = vsel %vm147, 0, %v3434
  %v3461 = vsel %vm147, 0, %v3449
  %v3463 = vsel %vm433, %v3460, 0
  %v3466 = vsel %vm433, %v3442, 0
  %v3469 = vsel %vm433, %v3461, 0
  %v3472 = vsel %vm433, %v3457, 0
  %3474 = vmatpush.bf16.msra.mxu0 0
  %3475 = vmatpush.bf16.msra.mxu0 0
  %3476 = vmatpush.bf16.msra.mxu0 0
  %3477 = vmatpush.bf16.msra.mxu0 0
  %3478 = vmatpush.bf16.msra.mxu0 0
  %3479 = vmatpush.bf16.msra.mxu0 0
  %3480 = vmatpush.bf16.msra.mxu0 0
  %3481 = vmatpush.bf16.msra.mxu0 %v2820
  %3482 = vmatmul.bf16.gmra.mxu0 %v3463
  %v3483 = vpop.f32.mrf.mxu0
  %v3484 = vadd.f32 0.0, %v3483
  %v3485 = vpop.f32.mrf.mxu0
  %v3486 = vadd.f32 0.0, %v3485
  %3487 = vmatmul.bf16.gmra.mxu0 %v3466
  %v3488 = vpop.f32.mrf.mxu0
  %v3489 = vadd.f32 0.0, %v3488
  %v3490 = vpop.f32.mrf.mxu0
  %v3491 = vadd.f32 0.0, %v3490
  %3492 = vmatmul.bf16.gmra.mxu0 %v3469
  %v3493 = vpop.f32.mrf.mxu0
  %v3494 = vadd.f32 0.0, %v3493
  %v3495 = vpop.f32.mrf.mxu0
  %v3496 = vadd.f32 0.0, %v3495
  %3497 = vmatmul.bf16.gmra.mxu0 %v3472
  %v3498 = vpop.f32.mrf.mxu0
  %v3499 = vadd.f32 0.0, %v3498
  %v3500 = vpop.f32.mrf.mxu0
  %v3501 = vadd.f32 0.0, %v3500
  %3502 = vdwg.mxu0
  %v3503 = vadd.f32 %v3400, %v3484
  %v3504 = vadd.f32 %v3401, %v3486
  %v3505 = vadd.f32 %v3402, %v3489
  %v3506 = vadd.f32 %v3403, %v3491
  %v3507 = vadd.f32 %v3404, %v3494
  %v3508 = vadd.f32 %v3405, %v3496
  %v3509 = vadd.f32 %v3406, %v3499
  %v3510 = vadd.f32 %v3407, %v3501
  %v3511 = vsel %vm433, %v3424, 0
  %v3513 = vsel %vm433, %v3425, 0
  %v3515 = vsel %vm433, %v3426, 0
  %v3517 = vsel %vm433, %v3427, 0
  %3519 = vmatpush.bf16.msra.mxu0 0
  %3520 = vmatpush.bf16.msra.mxu0 0
  %3521 = vmatpush.bf16.msra.mxu0 0
  %3522 = vmatpush.bf16.msra.mxu0 0
  %3523 = vmatpush.bf16.msra.mxu0 0
  %3524 = vmatpush.bf16.msra.mxu0 0
  %3525 = vmatpush.bf16.msra.mxu0 0
  %3526 = vmatpush.bf16.msra.mxu0 %v2868
  %3527 = vmatmul.bf16.gmra.mxu0 %v3511
  %v3528 = vpop.f32.mrf.mxu0
  %v3529 = vadd.f32 0.0, %v3528
  %v3530 = vpop.f32.mrf.mxu0
  %v3531 = vadd.f32 0.0, %v3530
  %3532 = vmatmul.bf16.gmra.mxu0 %v3513
  %v3533 = vpop.f32.mrf.mxu0
  %v3534 = vadd.f32 0.0, %v3533
  %v3535 = vpop.f32.mrf.mxu0
  %v3536 = vadd.f32 0.0, %v3535
  %3537 = vmatmul.bf16.gmra.mxu0 %v3515
  %v3538 = vpop.f32.mrf.mxu0
  %v3539 = vadd.f32 0.0, %v3538
  %v3540 = vpop.f32.mrf.mxu0
  %v3541 = vadd.f32 0.0, %v3540
  %3542 = vmatmul.bf16.gmra.mxu0 %v3517
  %v3543 = vpop.f32.mrf.mxu0
  %v3544 = vadd.f32 0.0, %v3543
  %v3545 = vpop.f32.mrf.mxu0
  %v3546 = vadd.f32 0.0, %v3545
  %3547 = vdwg.mxu0
  %v3548 = vadd.f32 %v3503, %v3529
  %v3549 = vadd.f32 %v3504, %v3531
  %v3550 = vadd.f32 %v3505, %v3534
  %v3551 = vadd.f32 %v3506, %v3536
  %v3552 = vadd.f32 %v3507, %v3539
  %v3553 = vadd.f32 %v3508, %v3541
  %v3554 = vadd.f32 %v3509, %v3544
  %v3555 = vadd.f32 %v3510, %v3546
  %v3556 = vrot.slane %v3432, 1
  %v3557 = vor.u32 %v3429, %v3556
  %v3558 = vrot.slane %v3439, 1
  %v3559 = vsel %vm150, %v3557, %v3558
  %v3560 = vor.u32 %v3436, %v3558
  %v3561 = vrot.slane %v3447, 1
  %v3562 = vor.u32 %v3444, %v3561
  %v3563 = vrot.slane %v3454, 1
  %v3564 = vsel %vm150, %v3562, %v3563
  %v3565 = vor.u32 %v3451, %v3563
  %v3568 = vsel %vm164, %v3560, 0
  %v3569 = vsel %vm164, %v3565, 0
  %v3571 = vsel %vm433, %v3559, 0
  %v3574 = vsel %vm433, %v3568, 0
  %v3577 = vsel %vm433, %v3564, 0
  %v3580 = vsel %vm433, %v3569, 0
  %3582 = vmatpush.bf16.msra.mxu0 0
  %3583 = vmatpush.bf16.msra.mxu0 0
  %3584 = vmatpush.bf16.msra.mxu0 0
  %3585 = vmatpush.bf16.msra.mxu0 0
  %3586 = vmatpush.bf16.msra.mxu0 0
  %3587 = vmatpush.bf16.msra.mxu0 0
  %3588 = vmatpush.bf16.msra.mxu0 0
  %3589 = vmatpush.bf16.msra.mxu0 %v2934
  %3590 = vmatmul.bf16.gmra.mxu0 %v3571
  %v3591 = vpop.f32.mrf.mxu0
  %v3592 = vadd.f32 0.0, %v3591
  %v3593 = vpop.f32.mrf.mxu0
  %v3594 = vadd.f32 0.0, %v3593
  %3595 = vmatmul.bf16.gmra.mxu0 %v3574
  %v3596 = vpop.f32.mrf.mxu0
  %v3597 = vadd.f32 0.0, %v3596
  %v3598 = vpop.f32.mrf.mxu0
  %v3599 = vadd.f32 0.0, %v3598
  %3600 = vmatmul.bf16.gmra.mxu0 %v3577
  %v3601 = vpop.f32.mrf.mxu0
  %v3602 = vadd.f32 0.0, %v3601
  %v3603 = vpop.f32.mrf.mxu0
  %v3604 = vadd.f32 0.0, %v3603
  %3605 = vmatmul.bf16.gmra.mxu0 %v3580
  %v3606 = vpop.f32.mrf.mxu0
  %v3607 = vadd.f32 0.0, %v3606
  %v3608 = vpop.f32.mrf.mxu0
  %v3609 = vadd.f32 0.0, %v3608
  %3610 = vdwg.mxu0
  %v3611 = vadd.f32 %v3548, %v3592
  %v3612 = vadd.f32 %v3549, %v3594
  %v3613 = vadd.f32 %v3550, %v3597
  %v3614 = vadd.f32 %v3551, %v3599
  %v3615 = vadd.f32 %v3552, %v3602
  %v3616 = vadd.f32 %v3553, %v3604
  %v3617 = vadd.f32 %v3554, %v3607
  %v3618 = vadd.f32 %v3555, %v3609
  %vm3619 = vcmask 261120
  %v3620 = vsel %vm3619, %v3185, 0.0
  %v3621 = vsel %vm3619, %v3186, 0.0
  %v3622 = vadd.f32 %v3620, %v3621
  %v3623 = vsel %vm3619, %v3187, 0.0
  %v3624 = vadd.f32 %v3622, %v3623
  %v3625 = vsel %vm3619, %v3188, 0.0
  %v3626 = vadd.f32 %v3624, %v3625
  %v3627 = vsel %vm3619, %v3611, 0.0
  %v3628 = vadd.f32 %v3626, %v3627
  %v3629 = vsel %vm3619, %v3612, 0.0
  %v3630 = vadd.f32 %v3628, %v3629
  %v3631 = vsel %vm3619, %v3613, 0.0
  %v3632 = vadd.f32 %v3630, %v3631
  %v3633 = vsel %vm3619, %v3614, 0.0
  %v3634 = vadd.f32 %v3632, %v3633
  %v3635 = vrot.slane %v3634, 4
  %v3636 = vadd.f32 %v3634, %v3635
  %v3637 = vrot.slane %v3636, 2
  %v3638 = vadd.f32 %v3636, %v3637
  %v3639 = vrot.slane %v3638, 1
  %v3640 = vadd.f32 %v3638, %v3639
  %v3641 = vsel %vm3619, %v3189, 0.0
  %v3642 = vsel %vm3619, %v3190, 0.0
  %v3643 = vadd.f32 %v3641, %v3642
  %v3644 = vsel %vm3619, %v3191, 0.0
  %v3645 = vadd.f32 %v3643, %v3644
  %v3646 = vsel %vm3619, %v3192, 0.0
  %v3647 = vadd.f32 %v3645, %v3646
  %v3648 = vsel %vm3619, %v3615, 0.0
  %v3649 = vadd.f32 %v3647, %v3648
  %v3650 = vsel %vm3619, %v3616, 0.0
  %v3651 = vadd.f32 %v3649, %v3650
  %v3652 = vsel %vm3619, %v3617, 0.0
  %v3653 = vadd.f32 %v3651, %v3652
  %v3654 = vsel %vm3619, %v3618, 0.0
  %v3655 = vadd.f32 %v3653, %v3654
  %v3656 = vrot.slane %v3655, 4
  %v3657 = vadd.f32 %v3655, %v3656
  %v3658 = vrot.slane %v3657, 2
  %v3659 = vadd.f32 %v3657, %v3658
  %v3660 = vrot.slane %v3659, 1
  %v3661 = vadd.f32 %v3659, %v3660
  %v3662 = vrcp.pop 64.0
  %v3663 = vmul.f32 64.0, %v3662
  %v3664 = vsub.f32 1.0, %v3663
  %v3665 = vmul.f32 %v3662, %v3664
  %v3666 = vadd.f32 %v3662, %v3665
  %vm3667 = vweird.f32 %v3662
  %v3668 = vsel %vm3667, %v3662, %v3666
  %v3669 = vmul.f32 %v3640, %v3668
  %v3670 = vmul.f32 %v3661, %v3668
  %v3671 = vsub.f32 %v3185, %v3669
  %v3672 = vsub.f32 %v3186, %v3669
  %v3673 = vsub.f32 %v3187, %v3669
  %v3674 = vsub.f32 %v3188, %v3669
  %v3675 = vsub.f32 %v3611, %v3669
  %v3676 = vsub.f32 %v3612, %v3669
  %v3677 = vsub.f32 %v3613, %v3669
  %v3678 = vsub.f32 %v3614, %v3669
  %v3679 = vsub.f32 %v3189, %v3670
  %v3680 = vsub.f32 %v3190, %v3670
  %v3681 = vsub.f32 %v3191, %v3670
  %v3682 = vsub.f32 %v3192, %v3670
  %v3683 = vsub.f32 %v3615, %v3670
  %v3684 = vsub.f32 %v3616, %v3670
  %v3685 = vsub.f32 %v3617, %v3670
  %v3686 = vsub.f32 %v3618, %v3670
  %v3687 = vmul.f32 %v3671, %v3671
  %v3688 = vmul.f32 %v3672, %v3672
  %v3689 = vmul.f32 %v3673, %v3673
  %v3690 = vmul.f32 %v3674, %v3674
  %v3691 = vmul.f32 %v3675, %v3675
  %v3692 = vmul.f32 %v3676, %v3676
  %v3693 = vmul.f32 %v3677, %v3677
  %v3694 = vmul.f32 %v3678, %v3678
  %v3695 = vmul.f32 %v3679, %v3679
  %v3696 = vmul.f32 %v3680, %v3680
  %v3697 = vmul.f32 %v3681, %v3681
  %v3698 = vmul.f32 %v3682, %v3682
  %v3699 = vmul.f32 %v3683, %v3683
  %v3700 = vmul.f32 %v3684, %v3684
  %v3701 = vmul.f32 %v3685, %v3685
  %v3702 = vmul.f32 %v3686, %v3686
  %v3703 = vsel %vm3619, %v3687, 0.0
  %v3704 = vsel %vm3619, %v3688, 0.0
  %v3705 = vadd.f32 %v3703, %v3704
  %v3706 = vsel %vm3619, %v3689, 0.0
  %v3707 = vadd.f32 %v3705, %v3706
  %v3708 = vsel %vm3619, %v3690, 0.0
  %v3709 = vadd.f32 %v3707, %v3708
  %v3710 = vsel %vm3619, %v3691, 0.0
  %v3711 = vadd.f32 %v3709, %v3710
  %v3712 = vsel %vm3619, %v3692, 0.0
  %v3713 = vadd.f32 %v3711, %v3712
  %v3714 = vsel %vm3619, %v3693, 0.0
  %v3715 = vadd.f32 %v3713, %v3714
  %v3716 = vsel %vm3619, %v3694, 0.0
  %v3717 = vadd.f32 %v3715, %v3716
  %v3718 = vrot.slane %v3717, 4
  %v3719 = vadd.f32 %v3717, %v3718
  %v3720 = vrot.slane %v3719, 2
  %v3721 = vadd.f32 %v3719, %v3720
  %v3722 = vrot.slane %v3721, 1
  %v3723 = vadd.f32 %v3721, %v3722
  %v3724 = vsel %vm3619, %v3695, 0.0
  %v3725 = vsel %vm3619, %v3696, 0.0
  %v3726 = vadd.f32 %v3724, %v3725
  %v3727 = vsel %vm3619, %v3697, 0.0
  %v3728 = vadd.f32 %v3726, %v3727
  %v3729 = vsel %vm3619, %v3698, 0.0
  %v3730 = vadd.f32 %v3728, %v3729
  %v3731 = vsel %vm3619, %v3699, 0.0
  %v3732 = vadd.f32 %v3730, %v3731
  %v3733 = vsel %vm3619, %v3700, 0.0
  %v3734 = vadd.f32 %v3732, %v3733
  %v3735 = vsel %vm3619, %v3701, 0.0
  %v3736 = vadd.f32 %v3734, %v3735
  %v3737 = vsel %vm3619, %v3702, 0.0
  %v3738 = vadd.f32 %v3736, %v3737
  %v3739 = vrot.slane %v3738, 4
  %v3740 = vadd.f32 %v3738, %v3739
  %v3741 = vrot.slane %v3740, 2
  %v3742 = vadd.f32 %v3740, %v3741
  %v3743 = vrot.slane %v3742, 1
  %v3744 = vadd.f32 %v3742, %v3743
  %v3745 = vmul.f32 %v3723, %v3668
  %v3746 = vmul.f32 %v3744, %v3668
  %v3747 = vadd.f32 %v3745, 1e-05
  %v3748 = vadd.f32 %v3746, 1e-05
  %v3749 = vrsqrt.pop %v3747
  %v3750 = vmul.f32 %v3749, %v3747
  %v3751 = vmul.f32 %v3750, %v3749
  %v3752 = vmul.f32 0.5, %v3751
  %v3753 = vsub.f32 1.5, %v3752
  %v3754 = vmul.f32 %v3749, %v3753
  %vm3755 = vweird.f32 %v3747
  %vm3756 = vweird.f32 %v3749
  %vm3757 = vmor %vm3755, %vm3756
  %v3758 = vsel %vm3757, %v3749, %v3754
  %v3759 = vrsqrt.pop %v3748
  %v3760 = vmul.f32 %v3759, %v3748
  %v3761 = vmul.f32 %v3760, %v3759
  %v3762 = vmul.f32 0.5, %v3761
  %v3763 = vsub.f32 1.5, %v3762
  %v3764 = vmul.f32 %v3759, %v3763
  %vm3765 = vweird.f32 %v3748
  %vm3766 = vweird.f32 %v3759
  %vm3767 = vmor %vm3765, %vm3766
  %v3768 = vsel %vm3767, %v3759, %v3764
  %v3769 = vmul.f32 %v3671, %v3758
  %v3770 = vmul.f32 %v3672, %v3758
  %v3771 = vmul.f32 %v3673, %v3758
  %v3772 = vmul.f32 %v3674, %v3758
  %v3773 = vmul.f32 %v3675, %v3758
  %v3774 = vmul.f32 %v3676, %v3758
  %v3775 = vmul.f32 %v3677, %v3758
  %v3776 = vmul.f32 %v3678, %v3758
  %v3777 = vmul.f32 %v3679, %v3768
  %v3778 = vmul.f32 %v3680, %v3768
  %v3779 = vmul.f32 %v3681, %v3768
  %v3780 = vmul.f32 %v3682, %v3768
  %v3781 = vmul.f32 %v3683, %v3768
  %v3782 = vmul.f32 %v3684, %v3768
  %v3783 = vmul.f32 %v3685, %v3768
  %v3784 = vmul.f32 %v3686, %v3768
  %v3785 = vxor.u32 %v3769, 2147483648
  %v3786 = vxor.u32 %v3770, 2147483648
  %v3787 = vxor.u32 %v3771, 2147483648
  %v3788 = vxor.u32 %v3772, 2147483648
  %v3789 = vxor.u32 %v3773, 2147483648
  %v3790 = vxor.u32 %v3774, 2147483648
  %v3791 = vxor.u32 %v3775, 2147483648
  %v3792 = vxor.u32 %v3776, 2147483648
  %v3793 = vxor.u32 %v3777, 2147483648
  %v3794 = vxor.u32 %v3778, 2147483648
  %v3795 = vxor.u32 %v3779, 2147483648
  %v3796 = vxor.u32 %v3780, 2147483648
  %v3797 = vxor.u32 %v3781, 2147483648
  %v3798 = vxor.u32 %v3782, 2147483648
  %v3799 = vxor.u32 %v3783, 2147483648
  %v3800 = vxor.u32 %v3784, 2147483648
  %v3801 = vmul.f32 %v3785, 1.442695
  %v3802 = vpow.pop %v3801
  %v3803 = vmul.f32 %v3786, 1.442695
  %v3804 = vpow.pop %v3803
  %v3805 = vmul.f32 %v3787, 1.442695
  %v3806 = vpow.pop %v3805
  %v3807 = vmul.f32 %v3788, 1.442695
  %v3808 = vpow.pop %v3807
  %v3809 = vmul.f32 %v3789, 1.442695
  %v3810 = vpow.pop %v3809
  %v3811 = vmul.f32 %v3790, 1.442695
  %v3812 = vpow.pop %v3811
  %v3813 = vmul.f32 %v3791, 1.442695
  %v3814 = vpow.pop %v3813
  %v3815 = vmul.f32 %v3792, 1.442695
  %v3816 = vpow.pop %v3815
  %v3817 = vmul.f32 %v3793, 1.442695
  %v3818 = vpow.pop %v3817
  %v3819 = vmul.f32 %v3794, 1.442695
  %v3820 = vpow.pop %v3819
  %v3821 = vmul.f32 %v3795, 1.442695
  %v3822 = vpow.pop %v3821
  %v3823 = vmul.f32 %v3796, 1.442695
  %v3824 = vpow.pop %v3823
  %v3825 = vmul.f32 %v3797, 1.442695
  %v3826 = vpow.pop %v3825
  %v3827 = vmul.f32 %v3798, 1.442695
  %v3828 = vpow.pop %v3827
  %v3829 = vmul.f32 %v3799, 1.442695
  %v3830 = vpow.pop %v3829
  %v3831 = vmul.f32 %v3800, 1.442695
  %v3832 = vpow.pop %v3831
  %v3833 = vadd.f32 %v3802, 1.0
  %v3834 = vadd.f32 %v3804, 1.0
  %v3835 = vadd.f32 %v3806, 1.0
  %v3836 = vadd.f32 %v3808, 1.0
  %v3837 = vadd.f32 %v3810, 1.0
  %v3838 = vadd.f32 %v3812, 1.0
  %v3839 = vadd.f32 %v3814, 1.0
  %v3840 = vadd.f32 %v3816, 1.0
  %v3841 = vadd.f32 %v3818, 1.0
  %v3842 = vadd.f32 %v3820, 1.0
  %v3843 = vadd.f32 %v3822, 1.0
  %v3844 = vadd.f32 %v3824, 1.0
  %v3845 = vadd.f32 %v3826, 1.0
  %v3846 = vadd.f32 %v3828, 1.0
  %v3847 = vadd.f32 %v3830, 1.0
  %v3848 = vadd.f32 %v3832, 1.0
  %v3849 = vrcp.pop %v3833
  %v3850 = vmul.f32 %v3833, %v3849
  %v3851 = vsub.f32 1.0, %v3850
  %v3852 = vmul.f32 %v3849, %v3851
  %v3853 = vadd.f32 %v3849, %v3852
  %vm3854 = vweird.f32 %v3833
  %vm3855 = vweird.f32 %v3849
  %vm3856 = vmor %vm3854, %vm3855
  %v3857 = vsel %vm3856, %v3849, %v3853
  %v3858 = vand.u32 2147483647, %v3833
  %vm3859 = vcmp.eq.f32.partialorder %v3858, 8.507059e+37
  %v3860 = vand.u32 %v3833, 2147483648
  %v3861 = vor.u32 1.1754944e-38, %v3860
  %v3862 = vsel %vm3859, %v3861, %v3857
  %v3863 = vmul.f32 1.0, %v3862
  %v3864 = vrcp.pop %v3834
  %v3865 = vmul.f32 %v3834, %v3864
  %v3866 = vsub.f32 1.0, %v3865
  %v3867 = vmul.f32 %v3864, %v3866
  %v3868 = vadd.f32 %v3864, %v3867
  %vm3869 = vweird.f32 %v3834
  %vm3870 = vweird.f32 %v3864
  %vm3871 = vmor %vm3869, %vm3870
  %v3872 = vsel %vm3871, %v3864, %v3868
  %v3873 = vand.u32 2147483647, %v3834
  %vm3874 = vcmp.eq.f32.partialorder %v3873, 8.507059e+37
  %v3875 = vand.u32 %v3834, 2147483648
  %v3876 = vor.u32 1.1754944e-38, %v3875
  %v3877 = vsel %vm3874, %v3876, %v3872
  %v3878 = vmul.f32 1.0, %v3877
  %v3879 = vrcp.pop %v3835
  %v3880 = vmul.f32 %v3835, %v3879
  %v3881 = vsub.f32 1.0, %v3880
  %v3882 = vmul.f32 %v3879, %v3881
  %v3883 = vadd.f32 %v3879, %v3882
  %vm3884 = vweird.f32 %v3835
  %vm3885 = vweird.f32 %v3879
  %vm3886 = vmor %vm3884, %vm3885
  %v3887 = vsel %vm3886, %v3879, %v3883
  %v3888 = vand.u32 2147483647, %v3835
  %vm3889 = vcmp.eq.f32.partialorder %v3888, 8.507059e+37
  %v3890 = vand.u32 %v3835, 2147483648
  %v3891 = vor.u32 1.1754944e-38, %v3890
  %v3892 = vsel %vm3889, %v3891, %v3887
  %v3893 = vmul.f32 1.0, %v3892
  %v3894 = vrcp.pop %v3836
  %v3895 = vmul.f32 %v3836, %v3894
  %v3896 = vsub.f32 1.0, %v3895
  %v3897 = vmul.f32 %v3894, %v3896
  %v3898 = vadd.f32 %v3894, %v3897
  %vm3899 = vweird.f32 %v3836
  %vm3900 = vweird.f32 %v3894
  %vm3901 = vmor %vm3899, %vm3900
  %v3902 = vsel %vm3901, %v3894, %v3898
  %v3903 = vand.u32 2147483647, %v3836
  %vm3904 = vcmp.eq.f32.partialorder %v3903, 8.507059e+37
  %v3905 = vand.u32 %v3836, 2147483648
  %v3906 = vor.u32 1.1754944e-38, %v3905
  %v3907 = vsel %vm3904, %v3906, %v3902
  %v3908 = vmul.f32 1.0, %v3907
  %v3909 = vrcp.pop %v3837
  %v3910 = vmul.f32 %v3837, %v3909
  %v3911 = vsub.f32 1.0, %v3910
  %v3912 = vmul.f32 %v3909, %v3911
  %v3913 = vadd.f32 %v3909, %v3912
  %vm3914 = vweird.f32 %v3837
  %vm3915 = vweird.f32 %v3909
  %vm3916 = vmor %vm3914, %vm3915
  %v3917 = vsel %vm3916, %v3909, %v3913
  %v3918 = vand.u32 2147483647, %v3837
  %vm3919 = vcmp.eq.f32.partialorder %v3918, 8.507059e+37
  %v3920 = vand.u32 %v3837, 2147483648
  %v3921 = vor.u32 1.1754944e-38, %v3920
  %v3922 = vsel %vm3919, %v3921, %v3917
  %v3923 = vmul.f32 1.0, %v3922
  %v3924 = vrcp.pop %v3838
  %v3925 = vmul.f32 %v3838, %v3924
  %v3926 = vsub.f32 1.0, %v3925
  %v3927 = vmul.f32 %v3924, %v3926
  %v3928 = vadd.f32 %v3924, %v3927
  %vm3929 = vweird.f32 %v3838
  %vm3930 = vweird.f32 %v3924
  %vm3931 = vmor %vm3929, %vm3930
  %v3932 = vsel %vm3931, %v3924, %v3928
  %v3933 = vand.u32 2147483647, %v3838
  %vm3934 = vcmp.eq.f32.partialorder %v3933, 8.507059e+37
  %v3935 = vand.u32 %v3838, 2147483648
  %v3936 = vor.u32 1.1754944e-38, %v3935
  %v3937 = vsel %vm3934, %v3936, %v3932
  %v3938 = vmul.f32 1.0, %v3937
  %v3939 = vrcp.pop %v3839
  %v3940 = vmul.f32 %v3839, %v3939
  %v3941 = vsub.f32 1.0, %v3940
  %v3942 = vmul.f32 %v3939, %v3941
  %v3943 = vadd.f32 %v3939, %v3942
  %vm3944 = vweird.f32 %v3839
  %vm3945 = vweird.f32 %v3939
  %vm3946 = vmor %vm3944, %vm3945
  %v3947 = vsel %vm3946, %v3939, %v3943
  %v3948 = vand.u32 2147483647, %v3839
  %vm3949 = vcmp.eq.f32.partialorder %v3948, 8.507059e+37
  %v3950 = vand.u32 %v3839, 2147483648
  %v3951 = vor.u32 1.1754944e-38, %v3950
  %v3952 = vsel %vm3949, %v3951, %v3947
  %v3953 = vmul.f32 1.0, %v3952
  %v3954 = vrcp.pop %v3840
  %v3955 = vmul.f32 %v3840, %v3954
  %v3956 = vsub.f32 1.0, %v3955
  %v3957 = vmul.f32 %v3954, %v3956
  %v3958 = vadd.f32 %v3954, %v3957
  %vm3959 = vweird.f32 %v3840
  %vm3960 = vweird.f32 %v3954
  %vm3961 = vmor %vm3959, %vm3960
  %v3962 = vsel %vm3961, %v3954, %v3958
  %v3963 = vand.u32 2147483647, %v3840
  %vm3964 = vcmp.eq.f32.partialorder %v3963, 8.507059e+37
  %v3965 = vand.u32 %v3840, 2147483648
  %v3966 = vor.u32 1.1754944e-38, %v3965
  %v3967 = vsel %vm3964, %v3966, %v3962
  %v3968 = vmul.f32 1.0, %v3967
  %v3969 = vrcp.pop %v3841
  %v3970 = vmul.f32 %v3841, %v3969
  %v3971 = vsub.f32 1.0, %v3970
  %v3972 = vmul.f32 %v3969, %v3971
  %v3973 = vadd.f32 %v3969, %v3972
  %vm3974 = vweird.f32 %v3841
  %vm3975 = vweird.f32 %v3969
  %vm3976 = vmor %vm3974, %vm3975
  %v3977 = vsel %vm3976, %v3969, %v3973
  %v3978 = vand.u32 2147483647, %v3841
  %vm3979 = vcmp.eq.f32.partialorder %v3978, 8.507059e+37
  %v3980 = vand.u32 %v3841, 2147483648
  %v3981 = vor.u32 1.1754944e-38, %v3980
  %v3982 = vsel %vm3979, %v3981, %v3977
  %v3983 = vmul.f32 1.0, %v3982
  %v3984 = vrcp.pop %v3842
  %v3985 = vmul.f32 %v3842, %v3984
  %v3986 = vsub.f32 1.0, %v3985
  %v3987 = vmul.f32 %v3984, %v3986
  %v3988 = vadd.f32 %v3984, %v3987
  %vm3989 = vweird.f32 %v3842
  %vm3990 = vweird.f32 %v3984
  %vm3991 = vmor %vm3989, %vm3990
  %v3992 = vsel %vm3991, %v3984, %v3988
  %v3993 = vand.u32 2147483647, %v3842
  %vm3994 = vcmp.eq.f32.partialorder %v3993, 8.507059e+37
  %v3995 = vand.u32 %v3842, 2147483648
  %v3996 = vor.u32 1.1754944e-38, %v3995
  %v3997 = vsel %vm3994, %v3996, %v3992
  %v3998 = vmul.f32 1.0, %v3997
  %v3999 = vrcp.pop %v3843
  %v4000 = vmul.f32 %v3843, %v3999
  %v4001 = vsub.f32 1.0, %v4000
  %v4002 = vmul.f32 %v3999, %v4001
  %v4003 = vadd.f32 %v3999, %v4002
  %vm4004 = vweird.f32 %v3843
  %vm4005 = vweird.f32 %v3999
  %vm4006 = vmor %vm4004, %vm4005
  %v4007 = vsel %vm4006, %v3999, %v4003
  %v4008 = vand.u32 2147483647, %v3843
  %vm4009 = vcmp.eq.f32.partialorder %v4008, 8.507059e+37
  %v4010 = vand.u32 %v3843, 2147483648
  %v4011 = vor.u32 1.1754944e-38, %v4010
  %v4012 = vsel %vm4009, %v4011, %v4007
  %v4013 = vmul.f32 1.0, %v4012
  %v4014 = vrcp.pop %v3844
  %v4015 = vmul.f32 %v3844, %v4014
  %v4016 = vsub.f32 1.0, %v4015
  %v4017 = vmul.f32 %v4014, %v4016
  %v4018 = vadd.f32 %v4014, %v4017
  %vm4019 = vweird.f32 %v3844
  %vm4020 = vweird.f32 %v4014
  %vm4021 = vmor %vm4019, %vm4020
  %v4022 = vsel %vm4021, %v4014, %v4018
  %v4023 = vand.u32 2147483647, %v3844
  %vm4024 = vcmp.eq.f32.partialorder %v4023, 8.507059e+37
  %v4025 = vand.u32 %v3844, 2147483648
  %v4026 = vor.u32 1.1754944e-38, %v4025
  %v4027 = vsel %vm4024, %v4026, %v4022
  %v4028 = vmul.f32 1.0, %v4027
  %v4029 = vrcp.pop %v3845
  %v4030 = vmul.f32 %v3845, %v4029
  %v4031 = vsub.f32 1.0, %v4030
  %v4032 = vmul.f32 %v4029, %v4031
  %v4033 = vadd.f32 %v4029, %v4032
  %vm4034 = vweird.f32 %v3845
  %vm4035 = vweird.f32 %v4029
  %vm4036 = vmor %vm4034, %vm4035
  %v4037 = vsel %vm4036, %v4029, %v4033
  %v4038 = vand.u32 2147483647, %v3845
  %vm4039 = vcmp.eq.f32.partialorder %v4038, 8.507059e+37
  %v4040 = vand.u32 %v3845, 2147483648
  %v4041 = vor.u32 1.1754944e-38, %v4040
  %v4042 = vsel %vm4039, %v4041, %v4037
  %v4043 = vmul.f32 1.0, %v4042
  %v4044 = vrcp.pop %v3846
  %v4045 = vmul.f32 %v3846, %v4044
  %v4046 = vsub.f32 1.0, %v4045
  %v4047 = vmul.f32 %v4044, %v4046
  %v4048 = vadd.f32 %v4044, %v4047
  %vm4049 = vweird.f32 %v3846
  %vm4050 = vweird.f32 %v4044
  %vm4051 = vmor %vm4049, %vm4050
  %v4052 = vsel %vm4051, %v4044, %v4048
  %v4053 = vand.u32 2147483647, %v3846
  %vm4054 = vcmp.eq.f32.partialorder %v4053, 8.507059e+37
  %v4055 = vand.u32 %v3846, 2147483648
  %v4056 = vor.u32 1.1754944e-38, %v4055
  %v4057 = vsel %vm4054, %v4056, %v4052
  %v4058 = vmul.f32 1.0, %v4057
  %v4059 = vrcp.pop %v3847
  %v4060 = vmul.f32 %v3847, %v4059
  %v4061 = vsub.f32 1.0, %v4060
  %v4062 = vmul.f32 %v4059, %v4061
  %v4063 = vadd.f32 %v4059, %v4062
  %vm4064 = vweird.f32 %v3847
  %vm4065 = vweird.f32 %v4059
  %vm4066 = vmor %vm4064, %vm4065
  %v4067 = vsel %vm4066, %v4059, %v4063
  %v4068 = vand.u32 2147483647, %v3847
  %vm4069 = vcmp.eq.f32.partialorder %v4068, 8.507059e+37
  %v4070 = vand.u32 %v3847, 2147483648
  %v4071 = vor.u32 1.1754944e-38, %v4070
  %v4072 = vsel %vm4069, %v4071, %v4067
  %v4073 = vmul.f32 1.0, %v4072
  %v4074 = vrcp.pop %v3848
  %v4075 = vmul.f32 %v3848, %v4074
  %v4076 = vsub.f32 1.0, %v4075
  %v4077 = vmul.f32 %v4074, %v4076
  %v4078 = vadd.f32 %v4074, %v4077
  %vm4079 = vweird.f32 %v3848
  %vm4080 = vweird.f32 %v4074
  %vm4081 = vmor %vm4079, %vm4080
  %v4082 = vsel %vm4081, %v4074, %v4078
  %v4083 = vand.u32 2147483647, %v3848
  %vm4084 = vcmp.eq.f32.partialorder %v4083, 8.507059e+37
  %v4085 = vand.u32 %v3848, 2147483648
  %v4086 = vor.u32 1.1754944e-38, %v4085
  %v4087 = vsel %vm4084, %v4086, %v4082
  %v4088 = vmul.f32 1.0, %v4087
  %4105 = vrot.lane.b32.xlu0 %v3863, 112
  %v4106 = vpop.permute.xlu0 %4105
  %4107 = vrot.lane.b32.xlu0 %v3878, 112
  %v4108 = vpop.permute.xlu0 %4107
  %4109 = vrot.lane.b32.xlu0 %v3893, 112
  %v4110 = vpop.permute.xlu0 %4109
  %4111 = vrot.lane.b32.xlu0 %v3908, 112
  %v4112 = vpop.permute.xlu0 %4111
  %4113 = vrot.lane.b32.xlu0 %v3923, 112
  %v4114 = vpop.permute.xlu0 %4113
  %4115 = vrot.lane.b32.xlu0 %v3938, 112
  %v4116 = vpop.permute.xlu0 %4115
  %4117 = vrot.lane.b32.xlu0 %v3953, 112
  %v4118 = vpop.permute.xlu0 %4117
  %4119 = vrot.lane.b32.xlu0 %v3968, 112
  %v4120 = vpop.permute.xlu0 %4119
  %4121 = vrot.lane.b32.xlu0 %v3983, 112
  %v4122 = vpop.permute.xlu0 %4121
  %4123 = vrot.lane.b32.xlu0 %v3998, 112
  %v4124 = vpop.permute.xlu0 %4123
  %4125 = vrot.lane.b32.xlu0 %v4013, 112
  %v4126 = vpop.permute.xlu0 %4125
  %4127 = vrot.lane.b32.xlu0 %v4028, 112
  %v4128 = vpop.permute.xlu0 %4127
  %4129 = vrot.lane.b32.xlu0 %v4043, 112
  %v4130 = vpop.permute.xlu0 %4129
  %4131 = vrot.lane.b32.xlu0 %v4058, 112
  %v4132 = vpop.permute.xlu0 %4131
  %4133 = vrot.lane.b32.xlu0 %v4073, 112
  %v4134 = vpop.permute.xlu0 %4133
  %4135 = vrot.lane.b32.xlu0 %v4088, 112
  %v4136 = vpop.permute.xlu0 %4135
  %v4153 = vmul.f32 %v3769, %v4106
  %v4154 = vmul.f32 %v3770, %v4108
  %v4155 = vmul.f32 %v3771, %v4110
  %v4156 = vmul.f32 %v3772, %v4112
  %v4157 = vmul.f32 %v3773, %v4114
  %v4158 = vmul.f32 %v3774, %v4116
  %v4159 = vmul.f32 %v3775, %v4118
  %v4160 = vmul.f32 %v3776, %v4120
  %v4161 = vmul.f32 %v3777, %v4122
  %v4162 = vmul.f32 %v3778, %v4124
  %v4163 = vmul.f32 %v3779, %v4126
  %v4164 = vmul.f32 %v3780, %v4128
  %v4165 = vmul.f32 %v3781, %v4130
  %v4166 = vmul.f32 %v3782, %v4132
  %v4167 = vmul.f32 %v3783, %v4134
  %v4168 = vmul.f32 %v3784, %v4136
  %v4169 = vpack.c.bf16 %v4153, %v4153
  %v4170 = vpack.c.bf16 %v4154, %v4154
  %v4171 = vpack.c.bf16 %v4155, %v4155
  %v4172 = vpack.c.bf16 %v4156, %v4156
  %v4173 = vpack.c.bf16 %v4157, %v4157
  %v4174 = vpack.c.bf16 %v4158, %v4158
  %v4175 = vpack.c.bf16 %v4159, %v4159
  %v4176 = vpack.c.bf16 %v4160, %v4160
  %v4177 = vpack.c.bf16 %v4161, %v4161
  %v4178 = vpack.c.bf16 %v4162, %v4162
  %v4179 = vpack.c.bf16 %v4163, %v4163
  %v4180 = vpack.c.bf16 %v4164, %v4164
  %v4181 = vpack.c.bf16 %v4165, %v4165
  %v4182 = vpack.c.bf16 %v4166, %v4166
  %v4183 = vpack.c.bf16 %v4167, %v4167
  %v4184 = vpack.c.bf16 %v4168, %v4168
  %v4185 = vld [vmem:[%s3] sm:$0xf]
  %v4186 = vld [vmem:[%s3 + $0x4] sm:$0xf]
  %v4187 = vld [vmem:[%s3 + $0x8] sm:$0xf]
  %v4188 = vld [vmem:[%s3 + $0xc] sm:$0xf]
  %v4189 = vld [vmem:[%s3 + $0x10] sm:$0xf]
  %v4190 = vld [vmem:[%s3 + $0x14] sm:$0xf]
  %v4191 = vld [vmem:[%s3 + $0x18] sm:$0xf]
  %v4192 = vld [vmem:[%s3 + $0x1c] sm:$0xf]
  %v4193 = vld [vmem:[%s3 + $0x20] sm:$0xf]
  %v4194 = vld [vmem:[%s3 + $0x24] sm:$0xf]
  %v4195 = vld [vmem:[%s3 + $0x28] sm:$0xf]
  %v4196 = vld [vmem:[%s3 + $0x2c] sm:$0xf]
  %v4197 = vld [vmem:[%s3 + $0x30] sm:$0xf]
  %v4198 = vld [vmem:[%s3 + $0x34] sm:$0xf]
  %v4199 = vld [vmem:[%s3 + $0x38] sm:$0xf]
  %v4200 = vld [vmem:[%s3 + $0x3c] sm:$0xf]
  %v4201 = vld [vmem:[%s3 + $0x40] sm:$0xf]
  %v4202 = vld [vmem:[%s3 + $0x44] sm:$0xf]
  %v4211 = vunpack.c.l.b16 %v4169
  %v4212 = vunpack.c.l.b16 %v4170
  %v4213 = vunpack.c.l.b16 %v4171
  %v4214 = vunpack.c.l.b16 %v4172
  %v4215 = vunpack.c.l.b16 %v4177
  %v4216 = vunpack.c.l.b16 %v4178
  %v4217 = vunpack.c.l.b16 %v4179
  %v4218 = vunpack.c.l.b16 %v4180
  %v4219 = vpack.c.b16 %v4212, %v4211
  %v4220 = vpack.c.b16 %v4214, %v4213
  %v4221 = vpack.c.b16 %v4216, %v4215
  %v4222 = vpack.c.b16 %v4218, %v4217
  %v4224 = vshrl.u32 %v4219, 16
  %v4226 = vrot.slane %v4224, 7
  %v4227 = vshll.u32 %v4219, 16
  %v4229 = vor.u32 %v4226, %v4227
  %v4231 = vshrl.u32 %v4220, 16
  %v4233 = vrot.slane %v4231, 7
  %v4234 = vshll.u32 %v4220, 16
  %v4236 = vor.u32 %v4233, %v4234
  %v4237 = vsel %vm113, %v4226, %v4236
  %v4239 = vshrl.u32 %v4221, 16
  %v4241 = vrot.slane %v4239, 7
  %v4242 = vshll.u32 %v4221, 16
  %v4244 = vor.u32 %v4241, %v4242
  %v4246 = vshrl.u32 %v4222, 16
  %v4248 = vrot.slane %v4246, 7
  %v4249 = vshll.u32 %v4222, 16
  %v4251 = vor.u32 %v4248, %v4249
  %v4252 = vsel %vm113, %v4241, %v4251
  %v4255 = vsel %vm147, 0, %v4229
  %v4256 = vsel %vm147, 0, %v4244
  %v4259 = vunpack.c.l.b16 %v4193
  %v4260 = vunpack.c.l.b16 %v4194
  %v4261 = vpack.c.b16 %v4260, %v4259
  %v4263 = vsel %vm1458, %v4219, 0
  %v4265 = vsel %vm1458, %v4220, 0
  %v4267 = vsel %vm1458, %v4221, 0
  %v4269 = vsel %vm1458, %v4222, 0
  %4271 = vmatpush.bf16.msra.mxu0 0
  %4272 = vmatpush.bf16.msra.mxu0 0
  %4273 = vmatpush.bf16.msra.mxu0 0
  %4274 = vmatpush.bf16.msra.mxu0 0
  %4275 = vmatpush.bf16.msra.mxu0 0
  %4276 = vmatpush.bf16.msra.mxu0 0
  %4277 = vmatpush.bf16.msra.mxu0 0
  %4278 = vmatpush.bf16.msra.mxu0 %v4261
  %4279 = vmatmul.bf16.gmra.mxu0 %v4263
  %v4280 = vpop.f32.mrf.mxu0
  %v4281 = vadd.f32 0.0, %v4280
  %v4282 = vpop.f32.mrf.mxu0
  %v4283 = vadd.f32 0.0, %v4282
  %4284 = vmatmul.bf16.gmra.mxu0 %v4265
  %v4285 = vpop.f32.mrf.mxu0
  %v4286 = vadd.f32 0.0, %v4285
  %v4287 = vpop.f32.mrf.mxu0
  %v4288 = vadd.f32 0.0, %v4287
  %4289 = vmatmul.bf16.gmra.mxu0 %v4267
  %v4290 = vpop.f32.mrf.mxu0
  %v4291 = vadd.f32 0.0, %v4290
  %v4292 = vpop.f32.mrf.mxu0
  %v4293 = vadd.f32 0.0, %v4292
  %4294 = vmatmul.bf16.gmra.mxu0 %v4269
  %v4295 = vpop.f32.mrf.mxu0
  %v4296 = vadd.f32 0.0, %v4295
  %v4297 = vpop.f32.mrf.mxu0
  %v4298 = vadd.f32 0.0, %v4297
  %4299 = vdwg.mxu0
  %v4302 = vunpack.c.l.b16 %v4191
  %v4303 = vunpack.c.l.b16 %v4192
  %v4304 = vpack.c.b16 %v4303, %v4302
  %v4307 = vsel %vm1458, %v4255, 0
  %v4310 = vsel %vm1458, %v4237, 0
  %v4313 = vsel %vm1458, %v4256, 0
  %v4316 = vsel %vm1458, %v4252, 0
  %4318 = vmatpush.bf16.msra.mxu0 0
  %4319 = vmatpush.bf16.msra.mxu0 0
  %4320 = vmatpush.bf16.msra.mxu0 0
  %4321 = vmatpush.bf16.msra.mxu0 0
  %4322 = vmatpush.bf16.msra.mxu0 0
  %4323 = vmatpush.bf16.msra.mxu0 0
  %4324 = vmatpush.bf16.msra.mxu0 0
  %4325 = vmatpush.bf16.msra.mxu0 %v4304
  %4326 = vmatmul.bf16.gmra.mxu0 %v4307
  %v4327 = vpop.f32.mrf.mxu0
  %v4328 = vadd.f32 %v4281, %v4327
  %v4329 = vpop.f32.mrf.mxu0
  %v4330 = vadd.f32 %v4283, %v4329
  %4331 = vmatmul.bf16.gmra.mxu0 %v4310
  %v4332 = vpop.f32.mrf.mxu0
  %v4333 = vadd.f32 %v4286, %v4332
  %v4334 = vpop.f32.mrf.mxu0
  %v4335 = vadd.f32 %v4288, %v4334
  %4336 = vmatmul.bf16.gmra.mxu0 %v4313
  %v4337 = vpop.f32.mrf.mxu0
  %v4338 = vadd.f32 %v4291, %v4337
  %v4339 = vpop.f32.mrf.mxu0
  %v4340 = vadd.f32 %v4293, %v4339
  %4341 = vmatmul.bf16.gmra.mxu0 %v4316
  %v4342 = vpop.f32.mrf.mxu0
  %v4343 = vadd.f32 %v4296, %v4342
  %v4344 = vpop.f32.mrf.mxu0
  %v4345 = vadd.f32 %v4298, %v4344
  %4346 = vdwg.mxu0
  %v4347 = vrot.slane %v4227, 1
  %v4348 = vor.u32 %v4224, %v4347
  %v4349 = vrot.slane %v4234, 1
  %v4350 = vsel %vm150, %v4348, %v4349
  %v4351 = vor.u32 %v4231, %v4349
  %v4352 = vrot.slane %v4242, 1
  %v4353 = vor.u32 %v4239, %v4352
  %v4354 = vrot.slane %v4249, 1
  %v4355 = vsel %vm150, %v4353, %v4354
  %v4356 = vor.u32 %v4246, %v4354
  %v4359 = vsel %vm164, %v4351, 0
  %v4360 = vsel %vm164, %v4356, 0
  %v4363 = vunpack.c.l.b16 %v4195
  %v4364 = vunpack.c.l.b16 %v4196
  %v4365 = vpack.c.b16 %v4364, %v4363
  %v4368 = vsel %vm1458, %v4350, 0
  %v4371 = vsel %vm1458, %v4359, 0
  %v4374 = vsel %vm1458, %v4355, 0
  %v4377 = vsel %vm1458, %v4360, 0
  %4379 = vmatpush.bf16.msra.mxu0 0
  %4380 = vmatpush.bf16.msra.mxu0 0
  %4381 = vmatpush.bf16.msra.mxu0 0
  %4382 = vmatpush.bf16.msra.mxu0 0
  %4383 = vmatpush.bf16.msra.mxu0 0
  %4384 = vmatpush.bf16.msra.mxu0 0
  %4385 = vmatpush.bf16.msra.mxu0 0
  %4386 = vmatpush.bf16.msra.mxu0 %v4365
  %4387 = vmatmul.bf16.gmra.mxu0 %v4368
  %v4388 = vpop.f32.mrf.mxu0
  %v4389 = vadd.f32 0.0, %v4388
  %v4390 = vpop.f32.mrf.mxu0
  %v4391 = vadd.f32 0.0, %v4390
  %4392 = vmatmul.bf16.gmra.mxu0 %v4371
  %v4393 = vpop.f32.mrf.mxu0
  %v4394 = vadd.f32 0.0, %v4393
  %v4395 = vpop.f32.mrf.mxu0
  %v4396 = vadd.f32 0.0, %v4395
  %4397 = vmatmul.bf16.gmra.mxu0 %v4374
  %v4398 = vpop.f32.mrf.mxu0
  %v4399 = vadd.f32 0.0, %v4398
  %v4400 = vpop.f32.mrf.mxu0
  %v4401 = vadd.f32 0.0, %v4400
  %4402 = vmatmul.bf16.gmra.mxu0 %v4377
  %v4403 = vpop.f32.mrf.mxu0
  %v4404 = vadd.f32 0.0, %v4403
  %v4405 = vpop.f32.mrf.mxu0
  %v4406 = vadd.f32 0.0, %v4405
  %4407 = vdwg.mxu0
  %v4408 = vadd.f32 %v4328, %v4389
  %v4409 = vadd.f32 %v4330, %v4391
  %v4410 = vadd.f32 %v4333, %v4394
  %v4411 = vadd.f32 %v4335, %v4396
  %v4412 = vadd.f32 %v4338, %v4399
  %v4413 = vadd.f32 %v4340, %v4401
  %v4414 = vadd.f32 %v4343, %v4404
  %v4415 = vadd.f32 %v4345, %v4406
  %v4424 = vunpack.c.l.b16 %v4173
  %v4425 = vunpack.c.l.b16 %v4174
  %v4426 = vunpack.c.l.b16 %v4175
  %v4427 = vunpack.c.l.b16 %v4176
  %v4428 = vunpack.c.l.b16 %v4181
  %v4429 = vunpack.c.l.b16 %v4182
  %v4430 = vunpack.c.l.b16 %v4183
  %v4431 = vunpack.c.l.b16 %v4184
  %v4432 = vpack.c.b16 %v4425, %v4424
  %v4433 = vpack.c.b16 %v4427, %v4426
  %v4434 = vpack.c.b16 %v4429, %v4428
  %v4435 = vpack.c.b16 %v4431, %v4430
  %v4437 = vshrl.u32 %v4432, 16
  %v4439 = vrot.slane %v4437, 7
  %v4440 = vshll.u32 %v4432, 16
  %v4442 = vor.u32 %v4439, %v4440
  %v4444 = vshrl.u32 %v4433, 16
  %v4446 = vrot.slane %v4444, 7
  %v4447 = vshll.u32 %v4433, 16
  %v4449 = vor.u32 %v4446, %v4447
  %v4450 = vsel %vm113, %v4439, %v4449
  %v4452 = vshrl.u32 %v4434, 16
  %v4454 = vrot.slane %v4452, 7
  %v4455 = vshll.u32 %v4434, 16
  %v4457 = vor.u32 %v4454, %v4455
  %v4459 = vshrl.u32 %v4435, 16
  %v4461 = vrot.slane %v4459, 7
  %v4462 = vshll.u32 %v4435, 16
  %v4464 = vor.u32 %v4461, %v4462
  %v4465 = vsel %vm113, %v4454, %v4464
  %v4468 = vsel %vm147, 0, %v4442
  %v4469 = vsel %vm147, 0, %v4457
  %v4472 = vunpack.c.l.b16 %v4197
  %v4473 = vunpack.c.l.b16 %v4198
  %v4474 = vpack.c.b16 %v4473, %v4472
  %v4477 = vsel %vm1458, %v4468, 0
  %v4480 = vsel %vm1458, %v4450, 0
  %v4483 = vsel %vm1458, %v4469, 0
  %v4486 = vsel %vm1458, %v4465, 0
  %4488 = vmatpush.bf16.msra.mxu0 0
  %4489 = vmatpush.bf16.msra.mxu0 0
  %4490 = vmatpush.bf16.msra.mxu0 0
  %4491 = vmatpush.bf16.msra.mxu0 0
  %4492 = vmatpush.bf16.msra.mxu0 0
  %4493 = vmatpush.bf16.msra.mxu0 0
  %4494 = vmatpush.bf16.msra.mxu0 0
  %4495 = vmatpush.bf16.msra.mxu0 %v4474
  %4496 = vmatmul.bf16.gmra.mxu0 %v4477
  %v4497 = vpop.f32.mrf.mxu0
  %v4498 = vadd.f32 0.0, %v4497
  %v4499 = vpop.f32.mrf.mxu0
  %v4500 = vadd.f32 0.0, %v4499
  %4501 = vmatmul.bf16.gmra.mxu0 %v4480
  %v4502 = vpop.f32.mrf.mxu0
  %v4503 = vadd.f32 0.0, %v4502
  %v4504 = vpop.f32.mrf.mxu0
  %v4505 = vadd.f32 0.0, %v4504
  %4506 = vmatmul.bf16.gmra.mxu0 %v4483
  %v4507 = vpop.f32.mrf.mxu0
  %v4508 = vadd.f32 0.0, %v4507
  %v4509 = vpop.f32.mrf.mxu0
  %v4510 = vadd.f32 0.0, %v4509
  %4511 = vmatmul.bf16.gmra.mxu0 %v4486
  %v4512 = vpop.f32.mrf.mxu0
  %v4513 = vadd.f32 0.0, %v4512
  %v4514 = vpop.f32.mrf.mxu0
  %v4515 = vadd.f32 0.0, %v4514
  %4516 = vdwg.mxu0
  %v4517 = vadd.f32 %v4408, %v4498
  %v4518 = vadd.f32 %v4409, %v4500
  %v4519 = vadd.f32 %v4410, %v4503
  %v4520 = vadd.f32 %v4411, %v4505
  %v4521 = vadd.f32 %v4412, %v4508
  %v4522 = vadd.f32 %v4413, %v4510
  %v4523 = vadd.f32 %v4414, %v4513
  %v4524 = vadd.f32 %v4415, %v4515
  %v4527 = vunpack.c.l.b16 %v4199
  %v4528 = vunpack.c.l.b16 %v4200
  %v4529 = vpack.c.b16 %v4528, %v4527
  %v4531 = vsel %vm1458, %v4432, 0
  %v4533 = vsel %vm1458, %v4433, 0
  %v4535 = vsel %vm1458, %v4434, 0
  %v4537 = vsel %vm1458, %v4435, 0
  %4539 = vmatpush.bf16.msra.mxu0 0
  %4540 = vmatpush.bf16.msra.mxu0 0
  %4541 = vmatpush.bf16.msra.mxu0 0
  %4542 = vmatpush.bf16.msra.mxu0 0
  %4543 = vmatpush.bf16.msra.mxu0 0
  %4544 = vmatpush.bf16.msra.mxu0 0
  %4545 = vmatpush.bf16.msra.mxu0 0
  %4546 = vmatpush.bf16.msra.mxu0 %v4529
  %4547 = vmatmul.bf16.gmra.mxu0 %v4531
  %v4548 = vpop.f32.mrf.mxu0
  %v4549 = vadd.f32 0.0, %v4548
  %v4550 = vpop.f32.mrf.mxu0
  %v4551 = vadd.f32 0.0, %v4550
  %4552 = vmatmul.bf16.gmra.mxu0 %v4533
  %v4553 = vpop.f32.mrf.mxu0
  %v4554 = vadd.f32 0.0, %v4553
  %v4555 = vpop.f32.mrf.mxu0
  %v4556 = vadd.f32 0.0, %v4555
  %4557 = vmatmul.bf16.gmra.mxu0 %v4535
  %v4558 = vpop.f32.mrf.mxu0
  %v4559 = vadd.f32 0.0, %v4558
  %v4560 = vpop.f32.mrf.mxu0
  %v4561 = vadd.f32 0.0, %v4560
  %4562 = vmatmul.bf16.gmra.mxu0 %v4537
  %v4563 = vpop.f32.mrf.mxu0
  %v4564 = vadd.f32 0.0, %v4563
  %v4565 = vpop.f32.mrf.mxu0
  %v4566 = vadd.f32 0.0, %v4565
  %4567 = vdwg.mxu0
  %v4568 = vadd.f32 %v4517, %v4549
  %v4569 = vadd.f32 %v4518, %v4551
  %v4570 = vadd.f32 %v4519, %v4554
  %v4571 = vadd.f32 %v4520, %v4556
  %v4572 = vadd.f32 %v4521, %v4559
  %v4573 = vadd.f32 %v4522, %v4561
  %v4574 = vadd.f32 %v4523, %v4564
  %v4575 = vadd.f32 %v4524, %v4566
  %v4576 = vrot.slane %v4440, 1
  %v4577 = vor.u32 %v4437, %v4576
  %v4578 = vrot.slane %v4447, 1
  %v4579 = vsel %vm150, %v4577, %v4578
  %v4580 = vor.u32 %v4444, %v4578
  %v4581 = vrot.slane %v4455, 1
  %v4582 = vor.u32 %v4452, %v4581
  %v4583 = vrot.slane %v4462, 1
  %v4584 = vsel %vm150, %v4582, %v4583
  %v4585 = vor.u32 %v4459, %v4583
  %v4588 = vsel %vm164, %v4580, 0
  %v4589 = vsel %vm164, %v4585, 0
  %v4592 = vunpack.c.l.b16 %v4201
  %v4593 = vunpack.c.l.b16 %v4202
  %v4594 = vpack.c.b16 %v4593, %v4592
  %v4597 = vsel %vm1458, %v4579, 0
  %v4600 = vsel %vm1458, %v4588, 0
  %v4603 = vsel %vm1458, %v4584, 0
  %v4606 = vsel %vm1458, %v4589, 0
  %4608 = vmatpush.bf16.msra.mxu0 0
  %4609 = vmatpush.bf16.msra.mxu0 0
  %4610 = vmatpush.bf16.msra.mxu0 0
  %4611 = vmatpush.bf16.msra.mxu0 0
  %4612 = vmatpush.bf16.msra.mxu0 0
  %4613 = vmatpush.bf16.msra.mxu0 0
  %4614 = vmatpush.bf16.msra.mxu0 0
  %4615 = vmatpush.bf16.msra.mxu0 %v4594
  %4616 = vmatmul.bf16.gmra.mxu0 %v4597
  %v4617 = vpop.f32.mrf.mxu0
  %v4618 = vadd.f32 0.0, %v4617
  %v4619 = vpop.f32.mrf.mxu0
  %v4620 = vadd.f32 0.0, %v4619
  %4621 = vmatmul.bf16.gmra.mxu0 %v4600
  %v4622 = vpop.f32.mrf.mxu0
  %v4623 = vadd.f32 0.0, %v4622
  %v4624 = vpop.f32.mrf.mxu0
  %v4625 = vadd.f32 0.0, %v4624
  %4626 = vmatmul.bf16.gmra.mxu0 %v4603
  %v4627 = vpop.f32.mrf.mxu0
  %v4628 = vadd.f32 0.0, %v4627
  %v4629 = vpop.f32.mrf.mxu0
  %v4630 = vadd.f32 0.0, %v4629
  %4631 = vmatmul.bf16.gmra.mxu0 %v4606
  %v4632 = vpop.f32.mrf.mxu0
  %v4633 = vadd.f32 0.0, %v4632
  %v4634 = vpop.f32.mrf.mxu0
  %v4635 = vadd.f32 0.0, %v4634
  %4636 = vdwg.mxu0
  %v4637 = vadd.f32 %v4568, %v4618
  %v4638 = vadd.f32 %v4569, %v4620
  %v4639 = vadd.f32 %v4570, %v4623
  %v4640 = vadd.f32 %v4571, %v4625
  %v4641 = vadd.f32 %v4572, %v4628
  %v4642 = vadd.f32 %v4573, %v4630
  %v4643 = vadd.f32 %v4574, %v4633
  %v4644 = vadd.f32 %v4575, %v4635
  %v4647 = vunpack.c.l.b16 %v4187
  %v4648 = vunpack.c.l.b16 %v4188
  %v4649 = vpack.c.b16 %v4648, %v4647
  %4651 = vmatpush.bf16.msra.mxu0 0
  %4652 = vmatpush.bf16.msra.mxu0 0
  %4653 = vmatpush.bf16.msra.mxu0 0
  %4654 = vmatpush.bf16.msra.mxu0 0
  %4655 = vmatpush.bf16.msra.mxu0 0
  %4656 = vmatpush.bf16.msra.mxu0 0
  %4657 = vmatpush.bf16.msra.mxu0 0
  %4658 = vmatpush.bf16.msra.mxu0 %v4649
  %4659 = vmatmul.bf16.gmra.mxu0 %v4263
  %v4660 = vpop.f32.mrf.mxu0
  %v4661 = vadd.f32 0.0, %v4660
  %v4662 = vpop.f32.mrf.mxu0
  %v4663 = vadd.f32 0.0, %v4662
  %4664 = vmatmul.bf16.gmra.mxu0 %v4265
  %v4665 = vpop.f32.mrf.mxu0
  %v4666 = vadd.f32 0.0, %v4665
  %v4667 = vpop.f32.mrf.mxu0
  %v4668 = vadd.f32 0.0, %v4667
  %4669 = vmatmul.bf16.gmra.mxu0 %v4267
  %v4670 = vpop.f32.mrf.mxu0
  %v4671 = vadd.f32 0.0, %v4670
  %v4672 = vpop.f32.mrf.mxu0
  %v4673 = vadd.f32 0.0, %v4672
  %4674 = vmatmul.bf16.gmra.mxu0 %v4269
  %v4675 = vpop.f32.mrf.mxu0
  %v4676 = vadd.f32 0.0, %v4675
  %v4677 = vpop.f32.mrf.mxu0
  %v4678 = vadd.f32 0.0, %v4677
  %4679 = vdwg.mxu0
  %v4682 = vunpack.c.l.b16 %v4185
  %v4683 = vunpack.c.l.b16 %v4186
  %v4684 = vpack.c.b16 %v4683, %v4682
  %4686 = vmatpush.bf16.msra.mxu0 0
  %4687 = vmatpush.bf16.msra.mxu0 0
  %4688 = vmatpush.bf16.msra.mxu0 0
  %4689 = vmatpush.bf16.msra.mxu0 0
  %4690 = vmatpush.bf16.msra.mxu0 0
  %4691 = vmatpush.bf16.msra.mxu0 0
  %4692 = vmatpush.bf16.msra.mxu0 0
  %4693 = vmatpush.bf16.msra.mxu0 %v4684
  %4694 = vmatmul.bf16.gmra.mxu0 %v4307
  %v4695 = vpop.f32.mrf.mxu0
  %v4696 = vadd.f32 %v4661, %v4695
  %v4697 = vpop.f32.mrf.mxu0
  %v4698 = vadd.f32 %v4663, %v4697
  %4699 = vmatmul.bf16.gmra.mxu0 %v4310
  %v4700 = vpop.f32.mrf.mxu0
  %v4701 = vadd.f32 %v4666, %v4700
  %v4702 = vpop.f32.mrf.mxu0
  %v4703 = vadd.f32 %v4668, %v4702
  %4704 = vmatmul.bf16.gmra.mxu0 %v4313
  %v4705 = vpop.f32.mrf.mxu0
  %v4706 = vadd.f32 %v4671, %v4705
  %v4707 = vpop.f32.mrf.mxu0
  %v4708 = vadd.f32 %v4673, %v4707
  %4709 = vmatmul.bf16.gmra.mxu0 %v4316
  %v4710 = vpop.f32.mrf.mxu0
  %v4711 = vadd.f32 %v4676, %v4710
  %v4712 = vpop.f32.mrf.mxu0
  %v4713 = vadd.f32 %v4678, %v4712
  %4714 = vdwg.mxu0
  %v4717 = vunpack.c.l.b16 %v4189
  %v4718 = vunpack.c.l.b16 %v4190
  %v4719 = vpack.c.b16 %v4718, %v4717
  %4721 = vmatpush.bf16.msra.mxu0 0
  %4722 = vmatpush.bf16.msra.mxu0 0
  %4723 = vmatpush.bf16.msra.mxu0 0
  %4724 = vmatpush.bf16.msra.mxu0 0
  %4725 = vmatpush.bf16.msra.mxu0 0
  %4726 = vmatpush.bf16.msra.mxu0 0
  %4727 = vmatpush.bf16.msra.mxu0 0
  %4728 = vmatpush.bf16.msra.mxu0 %v4719
  %4729 = vmatmul.bf16.gmra.mxu0 %v4368
  %v4730 = vpop.f32.mrf.mxu0
  %v4731 = vadd.f32 0.0, %v4730
  %v4732 = vpop.f32.mrf.mxu0
  %v4733 = vadd.f32 0.0, %v4732
  %4734 = vmatmul.bf16.gmra.mxu0 %v4371
  %v4735 = vpop.f32.mrf.mxu0
  %v4736 = vadd.f32 0.0, %v4735
  %v4737 = vpop.f32.mrf.mxu0
  %v4738 = vadd.f32 0.0, %v4737
  %4739 = vmatmul.bf16.gmra.mxu0 %v4374
  %v4740 = vpop.f32.mrf.mxu0
  %v4741 = vadd.f32 0.0, %v4740
  %v4742 = vpop.f32.mrf.mxu0
  %v4743 = vadd.f32 0.0, %v4742
  %4744 = vmatmul.bf16.gmra.mxu0 %v4377
  %v4745 = vpop.f32.mrf.mxu0
  %v4746 = vadd.f32 0.0, %v4745
  %v4747 = vpop.f32.mrf.mxu0
  %v4748 = vadd.f32 0.0, %v4747
  %4749 = vdwg.mxu0
  %v4750 = vadd.f32 %v4696, %v4731
  %v4751 = vadd.f32 %v4698, %v4733
  %v4752 = vadd.f32 %v4701, %v4736
  %v4753 = vadd.f32 %v4703, %v4738
  %v4754 = vadd.f32 %v4706, %v4741
  %v4755 = vadd.f32 %v4708, %v4743
  %v4756 = vadd.f32 %v4711, %v4746
  %v4757 = vadd.f32 %v4713, %v4748
  %4758 = vmatpush.bf16.msra.mxu0 0
  %4759 = vmatpush.bf16.msra.mxu0 0
  %4760 = vmatpush.bf16.msra.mxu0 0
  %4761 = vmatpush.bf16.msra.mxu0 0
  %4762 = vmatpush.bf16.msra.mxu0 0
  %4763 = vmatpush.bf16.msra.mxu0 0
  %4764 = vmatpush.bf16.msra.mxu0 0
  %4765 = vmatpush.bf16.msra.mxu0 %v4304
  %4766 = vmatmul.bf16.gmra.mxu0 %v4477
  %v4767 = vpop.f32.mrf.mxu0
  %v4768 = vadd.f32 0.0, %v4767
  %v4769 = vpop.f32.mrf.mxu0
  %v4770 = vadd.f32 0.0, %v4769
  %4771 = vmatmul.bf16.gmra.mxu0 %v4480
  %v4772 = vpop.f32.mrf.mxu0
  %v4773 = vadd.f32 0.0, %v4772
  %v4774 = vpop.f32.mrf.mxu0
  %v4775 = vadd.f32 0.0, %v4774
  %4776 = vmatmul.bf16.gmra.mxu0 %v4483
  %v4777 = vpop.f32.mrf.mxu0
  %v4778 = vadd.f32 0.0, %v4777
  %v4779 = vpop.f32.mrf.mxu0
  %v4780 = vadd.f32 0.0, %v4779
  %4781 = vmatmul.bf16.gmra.mxu0 %v4486
  %v4782 = vpop.f32.mrf.mxu0
  %v4783 = vadd.f32 0.0, %v4782
  %v4784 = vpop.f32.mrf.mxu0
  %v4785 = vadd.f32 0.0, %v4784
  %4786 = vdwg.mxu0
  %v4787 = vadd.f32 %v4750, %v4768
  %v4788 = vadd.f32 %v4751, %v4770
  %v4789 = vadd.f32 %v4752, %v4773
  %v4790 = vadd.f32 %v4753, %v4775
  %v4791 = vadd.f32 %v4754, %v4778
  %v4792 = vadd.f32 %v4755, %v4780
  %v4793 = vadd.f32 %v4756, %v4783
  %v4794 = vadd.f32 %v4757, %v4785
  %4795 = vmatpush.bf16.msra.mxu0 0
  %4796 = vmatpush.bf16.msra.mxu0 0
  %4797 = vmatpush.bf16.msra.mxu0 0
  %4798 = vmatpush.bf16.msra.mxu0 0
  %4799 = vmatpush.bf16.msra.mxu0 0
  %4800 = vmatpush.bf16.msra.mxu0 0
  %4801 = vmatpush.bf16.msra.mxu0 0
  %4802 = vmatpush.bf16.msra.mxu0 %v4261
  %4803 = vmatmul.bf16.gmra.mxu0 %v4531
  %v4804 = vpop.f32.mrf.mxu0
  %v4805 = vadd.f32 0.0, %v4804
  %v4806 = vpop.f32.mrf.mxu0
  %v4807 = vadd.f32 0.0, %v4806
  %4808 = vmatmul.bf16.gmra.mxu0 %v4533
  %v4809 = vpop.f32.mrf.mxu0
  %v4810 = vadd.f32 0.0, %v4809
  %v4811 = vpop.f32.mrf.mxu0
  %v4812 = vadd.f32 0.0, %v4811
  %4813 = vmatmul.bf16.gmra.mxu0 %v4535
  %v4814 = vpop.f32.mrf.mxu0
  %v4815 = vadd.f32 0.0, %v4814
  %v4816 = vpop.f32.mrf.mxu0
  %v4817 = vadd.f32 0.0, %v4816
  %4818 = vmatmul.bf16.gmra.mxu0 %v4537
  %v4819 = vpop.f32.mrf.mxu0
  %v4820 = vadd.f32 0.0, %v4819
  %v4821 = vpop.f32.mrf.mxu0
  %v4822 = vadd.f32 0.0, %v4821
  %4823 = vdwg.mxu0
  %v4824 = vadd.f32 %v4787, %v4805
  %v4825 = vadd.f32 %v4788, %v4807
  %v4826 = vadd.f32 %v4789, %v4810
  %v4827 = vadd.f32 %v4790, %v4812
  %v4828 = vadd.f32 %v4791, %v4815
  %v4829 = vadd.f32 %v4792, %v4817
  %v4830 = vadd.f32 %v4793, %v4820
  %v4831 = vadd.f32 %v4794, %v4822
  %4832 = vmatpush.bf16.msra.mxu0 0
  %4833 = vmatpush.bf16.msra.mxu0 0
  %4834 = vmatpush.bf16.msra.mxu0 0
  %4835 = vmatpush.bf16.msra.mxu0 0
  %4836 = vmatpush.bf16.msra.mxu0 0
  %4837 = vmatpush.bf16.msra.mxu0 0
  %4838 = vmatpush.bf16.msra.mxu0 0
  %4839 = vmatpush.bf16.msra.mxu0 %v4365
  %4840 = vmatmul.bf16.gmra.mxu0 %v4597
  %v4841 = vpop.f32.mrf.mxu0
  %v4842 = vadd.f32 0.0, %v4841
  %v4843 = vpop.f32.mrf.mxu0
  %v4844 = vadd.f32 0.0, %v4843
  %4845 = vmatmul.bf16.gmra.mxu0 %v4600
  %v4846 = vpop.f32.mrf.mxu0
  %v4847 = vadd.f32 0.0, %v4846
  %v4848 = vpop.f32.mrf.mxu0
  %v4849 = vadd.f32 0.0, %v4848
  %4850 = vmatmul.bf16.gmra.mxu0 %v4603
  %v4851 = vpop.f32.mrf.mxu0
  %v4852 = vadd.f32 0.0, %v4851
  %v4853 = vpop.f32.mrf.mxu0
  %v4854 = vadd.f32 0.0, %v4853
  %4855 = vmatmul.bf16.gmra.mxu0 %v4606
  %v4856 = vpop.f32.mrf.mxu0
  %v4857 = vadd.f32 0.0, %v4856
  %v4858 = vpop.f32.mrf.mxu0
  %v4859 = vadd.f32 0.0, %v4858
  %4860 = vdwg.mxu0
  %v4861 = vadd.f32 %v4824, %v4842
  %v4862 = vadd.f32 %v4825, %v4844
  %v4863 = vadd.f32 %v4826, %v4847
  %v4864 = vadd.f32 %v4827, %v4849
  %v4865 = vadd.f32 %v4828, %v4852
  %v4866 = vadd.f32 %v4829, %v4854
  %v4867 = vadd.f32 %v4830, %v4857
  %v4868 = vadd.f32 %v4831, %v4859
  %vm4869 = vcmask 523264
  %v4870 = vsel %vm4869, %v4637, 0.0
  %v4871 = vsel %vm4869, %v4638, 0.0
  %v4872 = vadd.f32 %v4870, %v4871
  %v4873 = vsel %vm4869, %v4639, 0.0
  %v4874 = vadd.f32 %v4872, %v4873
  %v4875 = vsel %vm4869, %v4640, 0.0
  %v4876 = vadd.f32 %v4874, %v4875
  %v4877 = vsel %vm4869, %v4861, 0.0
  %v4878 = vadd.f32 %v4876, %v4877
  %v4879 = vsel %vm4869, %v4862, 0.0
  %v4880 = vadd.f32 %v4878, %v4879
  %v4881 = vsel %vm4869, %v4863, 0.0
  %v4882 = vadd.f32 %v4880, %v4881
  %v4883 = vsel %vm4869, %v4864, 0.0
  %v4884 = vadd.f32 %v4882, %v4883
  %v4885 = vrot.slane %v4884, 4
  %v4886 = vadd.f32 %v4884, %v4885
  %v4887 = vrot.slane %v4886, 2
  %v4888 = vadd.f32 %v4886, %v4887
  %v4889 = vrot.slane %v4888, 1
  %v4890 = vadd.f32 %v4888, %v4889
  %v4891 = vsel %vm4869, %v4641, 0.0
  %v4892 = vsel %vm4869, %v4642, 0.0
  %v4893 = vadd.f32 %v4891, %v4892
  %v4894 = vsel %vm4869, %v4643, 0.0
  %v4895 = vadd.f32 %v4893, %v4894
  %v4896 = vsel %vm4869, %v4644, 0.0
  %v4897 = vadd.f32 %v4895, %v4896
  %v4898 = vsel %vm4869, %v4865, 0.0
  %v4899 = vadd.f32 %v4897, %v4898
  %v4900 = vsel %vm4869, %v4866, 0.0
  %v4901 = vadd.f32 %v4899, %v4900
  %v4902 = vsel %vm4869, %v4867, 0.0
  %v4903 = vadd.f32 %v4901, %v4902
  %v4904 = vsel %vm4869, %v4868, 0.0
  %v4905 = vadd.f32 %v4903, %v4904
  %v4906 = vrot.slane %v4905, 4
  %v4907 = vadd.f32 %v4905, %v4906
  %v4908 = vrot.slane %v4907, 2
  %v4909 = vadd.f32 %v4907, %v4908
  %v4910 = vrot.slane %v4909, 1
  %v4911 = vadd.f32 %v4909, %v4910
  %v4912 = vmul.f32 %v4890, %v3668
  %v4913 = vmul.f32 %v4911, %v3668
  %v4914 = vsub.f32 %v4637, %v4912
  %v4915 = vsub.f32 %v4638, %v4912
  %v4916 = vsub.f32 %v4639, %v4912
  %v4917 = vsub.f32 %v4640, %v4912
  %v4918 = vsub.f32 %v4861, %v4912
  %v4919 = vsub.f32 %v4862, %v4912
  %v4920 = vsub.f32 %v4863, %v4912
  %v4921 = vsub.f32 %v4864, %v4912
  %v4922 = vsub.f32 %v4641, %v4913
  %v4923 = vsub.f32 %v4642, %v4913
  %v4924 = vsub.f32 %v4643, %v4913
  %v4925 = vsub.f32 %v4644, %v4913
  %v4926 = vsub.f32 %v4865, %v4913
  %v4927 = vsub.f32 %v4866, %v4913
  %v4928 = vsub.f32 %v4867, %v4913
  %v4929 = vsub.f32 %v4868, %v4913
  %v4930 = vmul.f32 %v4914, %v4914
  %v4931 = vmul.f32 %v4915, %v4915
  %v4932 = vmul.f32 %v4916, %v4916
  %v4933 = vmul.f32 %v4917, %v4917
  %v4934 = vmul.f32 %v4918, %v4918
  %v4935 = vmul.f32 %v4919, %v4919
  %v4936 = vmul.f32 %v4920, %v4920
  %v4937 = vmul.f32 %v4921, %v4921
  %v4938 = vmul.f32 %v4922, %v4922
  %v4939 = vmul.f32 %v4923, %v4923
  %v4940 = vmul.f32 %v4924, %v4924
  %v4941 = vmul.f32 %v4925, %v4925
  %v4942 = vmul.f32 %v4926, %v4926
  %v4943 = vmul.f32 %v4927, %v4927
  %v4944 = vmul.f32 %v4928, %v4928
  %v4945 = vmul.f32 %v4929, %v4929
  %v4946 = vsel %vm4869, %v4930, 0.0
  %v4947 = vsel %vm4869, %v4931, 0.0
  %v4948 = vadd.f32 %v4946, %v4947
  %v4949 = vsel %vm4869, %v4932, 0.0
  %v4950 = vadd.f32 %v4948, %v4949
  %v4951 = vsel %vm4869, %v4933, 0.0
  %v4952 = vadd.f32 %v4950, %v4951
  %v4953 = vsel %vm4869, %v4934, 0.0
  %v4954 = vadd.f32 %v4952, %v4953
  %v4955 = vsel %vm4869, %v4935, 0.0
  %v4956 = vadd.f32 %v4954, %v4955
  %v4957 = vsel %vm4869, %v4936, 0.0
  %v4958 = vadd.f32 %v4956, %v4957
  %v4959 = vsel %vm4869, %v4937, 0.0
  %v4960 = vadd.f32 %v4958, %v4959
  %v4961 = vrot.slane %v4960, 4
  %v4962 = vadd.f32 %v4960, %v4961
  %v4963 = vrot.slane %v4962, 2
  %v4964 = vadd.f32 %v4962, %v4963
  %v4965 = vrot.slane %v4964, 1
  %v4966 = vadd.f32 %v4964, %v4965
  %v4967 = vsel %vm4869, %v4938, 0.0
  %v4968 = vsel %vm4869, %v4939, 0.0
  %v4969 = vadd.f32 %v4967, %v4968
  %v4970 = vsel %vm4869, %v4940, 0.0
  %v4971 = vadd.f32 %v4969, %v4970
  %v4972 = vsel %vm4869, %v4941, 0.0
  %v4973 = vadd.f32 %v4971, %v4972
  %v4974 = vsel %vm4869, %v4942, 0.0
  %v4975 = vadd.f32 %v4973, %v4974
  %v4976 = vsel %vm4869, %v4943, 0.0
  %v4977 = vadd.f32 %v4975, %v4976
  %v4978 = vsel %vm4869, %v4944, 0.0
  %v4979 = vadd.f32 %v4977, %v4978
  %v4980 = vsel %vm4869, %v4945, 0.0
  %v4981 = vadd.f32 %v4979, %v4980
  %v4982 = vrot.slane %v4981, 4
  %v4983 = vadd.f32 %v4981, %v4982
  %v4984 = vrot.slane %v4983, 2
  %v4985 = vadd.f32 %v4983, %v4984
  %v4986 = vrot.slane %v4985, 1
  %v4987 = vadd.f32 %v4985, %v4986
  %v4988 = vmul.f32 %v4966, %v3668
  %v4989 = vmul.f32 %v4987, %v3668
  %v4990 = vadd.f32 %v4988, 1e-05
  %v4991 = vadd.f32 %v4989, 1e-05
  %v4992 = vrsqrt.pop %v4990
  %v4993 = vmul.f32 %v4992, %v4990
  %v4994 = vmul.f32 %v4993, %v4992
  %v4995 = vmul.f32 0.5, %v4994
  %v4996 = vsub.f32 1.5, %v4995
  %v4997 = vmul.f32 %v4992, %v4996
  %vm4998 = vweird.f32 %v4990
  %vm4999 = vweird.f32 %v4992
  %vm5000 = vmor %vm4998, %vm4999
  %v5001 = vsel %vm5000, %v4992, %v4997
  %v5002 = vrsqrt.pop %v4991
  %v5003 = vmul.f32 %v5002, %v4991
  %v5004 = vmul.f32 %v5003, %v5002
  %v5005 = vmul.f32 0.5, %v5004
  %v5006 = vsub.f32 1.5, %v5005
  %v5007 = vmul.f32 %v5002, %v5006
  %vm5008 = vweird.f32 %v4991
  %vm5009 = vweird.f32 %v5002
  %vm5010 = vmor %vm5008, %vm5009
  %v5011 = vsel %vm5010, %v5002, %v5007
  %v5012 = vmul.f32 %v4914, %v5001
  %v5013 = vmul.f32 %v4915, %v5001
  %v5014 = vmul.f32 %v4916, %v5001
  %v5015 = vmul.f32 %v4917, %v5001
  %v5016 = vmul.f32 %v4918, %v5001
  %v5017 = vmul.f32 %v4919, %v5001
  %v5018 = vmul.f32 %v4920, %v5001
  %v5019 = vmul.f32 %v4921, %v5001
  %v5020 = vmul.f32 %v4922, %v5011
  %v5021 = vmul.f32 %v4923, %v5011
  %v5022 = vmul.f32 %v4924, %v5011
  %v5023 = vmul.f32 %v4925, %v5011
  %v5024 = vmul.f32 %v4926, %v5011
  %v5025 = vmul.f32 %v4927, %v5011
  %v5026 = vmul.f32 %v4928, %v5011
  %v5027 = vmul.f32 %v4929, %v5011
  %v5028 = vxor.u32 %v5012, 2147483648
  %v5029 = vxor.u32 %v5013, 2147483648
  %v5030 = vxor.u32 %v5014, 2147483648
  %v5031 = vxor.u32 %v5015, 2147483648
  %v5032 = vxor.u32 %v5016, 2147483648
  %v5033 = vxor.u32 %v5017, 2147483648
  %v5034 = vxor.u32 %v5018, 2147483648
  %v5035 = vxor.u32 %v5019, 2147483648
  %v5036 = vxor.u32 %v5020, 2147483648
  %v5037 = vxor.u32 %v5021, 2147483648
  %v5038 = vxor.u32 %v5022, 2147483648
  %v5039 = vxor.u32 %v5023, 2147483648
  %v5040 = vxor.u32 %v5024, 2147483648
  %v5041 = vxor.u32 %v5025, 2147483648
  %v5042 = vxor.u32 %v5026, 2147483648
  %v5043 = vxor.u32 %v5027, 2147483648
  %v5044 = vmul.f32 %v5028, 1.442695
  %v5045 = vpow.pop %v5044
  %v5046 = vmul.f32 %v5029, 1.442695
  %v5047 = vpow.pop %v5046
  %v5048 = vmul.f32 %v5030, 1.442695
  %v5049 = vpow.pop %v5048
  %v5050 = vmul.f32 %v5031, 1.442695
  %v5051 = vpow.pop %v5050
  %v5052 = vmul.f32 %v5032, 1.442695
  %v5053 = vpow.pop %v5052
  %v5054 = vmul.f32 %v5033, 1.442695
  %v5055 = vpow.pop %v5054
  %v5056 = vmul.f32 %v5034, 1.442695
  %v5057 = vpow.pop %v5056
  %v5058 = vmul.f32 %v5035, 1.442695
  %v5059 = vpow.pop %v5058
  %v5060 = vmul.f32 %v5036, 1.442695
  %v5061 = vpow.pop %v5060
  %v5062 = vmul.f32 %v5037, 1.442695
  %v5063 = vpow.pop %v5062
  %v5064 = vmul.f32 %v5038, 1.442695
  %v5065 = vpow.pop %v5064
  %v5066 = vmul.f32 %v5039, 1.442695
  %v5067 = vpow.pop %v5066
  %v5068 = vmul.f32 %v5040, 1.442695
  %v5069 = vpow.pop %v5068
  %v5070 = vmul.f32 %v5041, 1.442695
  %v5071 = vpow.pop %v5070
  %v5072 = vmul.f32 %v5042, 1.442695
  %v5073 = vpow.pop %v5072
  %v5074 = vmul.f32 %v5043, 1.442695
  %v5075 = vpow.pop %v5074
  %v5076 = vadd.f32 %v5045, 1.0
  %v5077 = vadd.f32 %v5047, 1.0
  %v5078 = vadd.f32 %v5049, 1.0
  %v5079 = vadd.f32 %v5051, 1.0
  %v5080 = vadd.f32 %v5053, 1.0
  %v5081 = vadd.f32 %v5055, 1.0
  %v5082 = vadd.f32 %v5057, 1.0
  %v5083 = vadd.f32 %v5059, 1.0
  %v5084 = vadd.f32 %v5061, 1.0
  %v5085 = vadd.f32 %v5063, 1.0
  %v5086 = vadd.f32 %v5065, 1.0
  %v5087 = vadd.f32 %v5067, 1.0
  %v5088 = vadd.f32 %v5069, 1.0
  %v5089 = vadd.f32 %v5071, 1.0
  %v5090 = vadd.f32 %v5073, 1.0
  %v5091 = vadd.f32 %v5075, 1.0
  %v5092 = vrcp.pop %v5076
  %v5093 = vmul.f32 %v5076, %v5092
  %v5094 = vsub.f32 1.0, %v5093
  %v5095 = vmul.f32 %v5092, %v5094
  %v5096 = vadd.f32 %v5092, %v5095
  %vm5097 = vweird.f32 %v5076
  %vm5098 = vweird.f32 %v5092
  %vm5099 = vmor %vm5097, %vm5098
  %v5100 = vsel %vm5099, %v5092, %v5096
  %v5101 = vand.u32 2147483647, %v5076
  %vm5102 = vcmp.eq.f32.partialorder %v5101, 8.507059e+37
  %v5103 = vand.u32 %v5076, 2147483648
  %v5104 = vor.u32 1.1754944e-38, %v5103
  %v5105 = vsel %vm5102, %v5104, %v5100
  %v5106 = vmul.f32 1.0, %v5105
  %v5107 = vrcp.pop %v5077
  %v5108 = vmul.f32 %v5077, %v5107
  %v5109 = vsub.f32 1.0, %v5108
  %v5110 = vmul.f32 %v5107, %v5109
  %v5111 = vadd.f32 %v5107, %v5110
  %vm5112 = vweird.f32 %v5077
  %vm5113 = vweird.f32 %v5107
  %vm5114 = vmor %vm5112, %vm5113
  %v5115 = vsel %vm5114, %v5107, %v5111
  %v5116 = vand.u32 2147483647, %v5077
  %vm5117 = vcmp.eq.f32.partialorder %v5116, 8.507059e+37
  %v5118 = vand.u32 %v5077, 2147483648
  %v5119 = vor.u32 1.1754944e-38, %v5118
  %v5120 = vsel %vm5117, %v5119, %v5115
  %v5121 = vmul.f32 1.0, %v5120
  %v5122 = vrcp.pop %v5078
  %v5123 = vmul.f32 %v5078, %v5122
  %v5124 = vsub.f32 1.0, %v5123
  %v5125 = vmul.f32 %v5122, %v5124
  %v5126 = vadd.f32 %v5122, %v5125
  %vm5127 = vweird.f32 %v5078
  %vm5128 = vweird.f32 %v5122
  %vm5129 = vmor %vm5127, %vm5128
  %v5130 = vsel %vm5129, %v5122, %v5126
  %v5131 = vand.u32 2147483647, %v5078
  %vm5132 = vcmp.eq.f32.partialorder %v5131, 8.507059e+37
  %v5133 = vand.u32 %v5078, 2147483648
  %v5134 = vor.u32 1.1754944e-38, %v5133
  %v5135 = vsel %vm5132, %v5134, %v5130
  %v5136 = vmul.f32 1.0, %v5135
  %v5137 = vrcp.pop %v5079
  %v5138 = vmul.f32 %v5079, %v5137
  %v5139 = vsub.f32 1.0, %v5138
  %v5140 = vmul.f32 %v5137, %v5139
  %v5141 = vadd.f32 %v5137, %v5140
  %vm5142 = vweird.f32 %v5079
  %vm5143 = vweird.f32 %v5137
  %vm5144 = vmor %vm5142, %vm5143
  %v5145 = vsel %vm5144, %v5137, %v5141
  %v5146 = vand.u32 2147483647, %v5079
  %vm5147 = vcmp.eq.f32.partialorder %v5146, 8.507059e+37
  %v5148 = vand.u32 %v5079, 2147483648
  %v5149 = vor.u32 1.1754944e-38, %v5148
  %v5150 = vsel %vm5147, %v5149, %v5145
  %v5151 = vmul.f32 1.0, %v5150
  %v5152 = vrcp.pop %v5080
  %v5153 = vmul.f32 %v5080, %v5152
  %v5154 = vsub.f32 1.0, %v5153
  %v5155 = vmul.f32 %v5152, %v5154
  %v5156 = vadd.f32 %v5152, %v5155
  %vm5157 = vweird.f32 %v5080
  %vm5158 = vweird.f32 %v5152
  %vm5159 = vmor %vm5157, %vm5158
  %v5160 = vsel %vm5159, %v5152, %v5156
  %v5161 = vand.u32 2147483647, %v5080
  %vm5162 = vcmp.eq.f32.partialorder %v5161, 8.507059e+37
  %v5163 = vand.u32 %v5080, 2147483648
  %v5164 = vor.u32 1.1754944e-38, %v5163
  %v5165 = vsel %vm5162, %v5164, %v5160
  %v5166 = vmul.f32 1.0, %v5165
  %v5167 = vrcp.pop %v5081
  %v5168 = vmul.f32 %v5081, %v5167
  %v5169 = vsub.f32 1.0, %v5168
  %v5170 = vmul.f32 %v5167, %v5169
  %v5171 = vadd.f32 %v5167, %v5170
  %vm5172 = vweird.f32 %v5081
  %vm5173 = vweird.f32 %v5167
  %vm5174 = vmor %vm5172, %vm5173
  %v5175 = vsel %vm5174, %v5167, %v5171
  %v5176 = vand.u32 2147483647, %v5081
  %vm5177 = vcmp.eq.f32.partialorder %v5176, 8.507059e+37
  %v5178 = vand.u32 %v5081, 2147483648
  %v5179 = vor.u32 1.1754944e-38, %v5178
  %v5180 = vsel %vm5177, %v5179, %v5175
  %v5181 = vmul.f32 1.0, %v5180
  %v5182 = vrcp.pop %v5082
  %v5183 = vmul.f32 %v5082, %v5182
  %v5184 = vsub.f32 1.0, %v5183
  %v5185 = vmul.f32 %v5182, %v5184
  %v5186 = vadd.f32 %v5182, %v5185
  %vm5187 = vweird.f32 %v5082
  %vm5188 = vweird.f32 %v5182
  %vm5189 = vmor %vm5187, %vm5188
  %v5190 = vsel %vm5189, %v5182, %v5186
  %v5191 = vand.u32 2147483647, %v5082
  %vm5192 = vcmp.eq.f32.partialorder %v5191, 8.507059e+37
  %v5193 = vand.u32 %v5082, 2147483648
  %v5194 = vor.u32 1.1754944e-38, %v5193
  %v5195 = vsel %vm5192, %v5194, %v5190
  %v5196 = vmul.f32 1.0, %v5195
  %v5197 = vrcp.pop %v5083
  %v5198 = vmul.f32 %v5083, %v5197
  %v5199 = vsub.f32 1.0, %v5198
  %v5200 = vmul.f32 %v5197, %v5199
  %v5201 = vadd.f32 %v5197, %v5200
  %vm5202 = vweird.f32 %v5083
  %vm5203 = vweird.f32 %v5197
  %vm5204 = vmor %vm5202, %vm5203
  %v5205 = vsel %vm5204, %v5197, %v5201
  %v5206 = vand.u32 2147483647, %v5083
  %vm5207 = vcmp.eq.f32.partialorder %v5206, 8.507059e+37
  %v5208 = vand.u32 %v5083, 2147483648
  %v5209 = vor.u32 1.1754944e-38, %v5208
  %v5210 = vsel %vm5207, %v5209, %v5205
  %v5211 = vmul.f32 1.0, %v5210
  %v5212 = vrcp.pop %v5084
  %v5213 = vmul.f32 %v5084, %v5212
  %v5214 = vsub.f32 1.0, %v5213
  %v5215 = vmul.f32 %v5212, %v5214
  %v5216 = vadd.f32 %v5212, %v5215
  %vm5217 = vweird.f32 %v5084
  %vm5218 = vweird.f32 %v5212
  %vm5219 = vmor %vm5217, %vm5218
  %v5220 = vsel %vm5219, %v5212, %v5216
  %v5221 = vand.u32 2147483647, %v5084
  %vm5222 = vcmp.eq.f32.partialorder %v5221, 8.507059e+37
  %v5223 = vand.u32 %v5084, 2147483648
  %v5224 = vor.u32 1.1754944e-38, %v5223
  %v5225 = vsel %vm5222, %v5224, %v5220
  %v5226 = vmul.f32 1.0, %v5225
  %v5227 = vrcp.pop %v5085
  %v5228 = vmul.f32 %v5085, %v5227
  %v5229 = vsub.f32 1.0, %v5228
  %v5230 = vmul.f32 %v5227, %v5229
  %v5231 = vadd.f32 %v5227, %v5230
  %vm5232 = vweird.f32 %v5085
  %vm5233 = vweird.f32 %v5227
  %vm5234 = vmor %vm5232, %vm5233
  %v5235 = vsel %vm5234, %v5227, %v5231
  %v5236 = vand.u32 2147483647, %v5085
  %vm5237 = vcmp.eq.f32.partialorder %v5236, 8.507059e+37
  %v5238 = vand.u32 %v5085, 2147483648
  %v5239 = vor.u32 1.1754944e-38, %v5238
  %v5240 = vsel %vm5237, %v5239, %v5235
  %v5241 = vmul.f32 1.0, %v5240
  %v5242 = vrcp.pop %v5086
  %v5243 = vmul.f32 %v5086, %v5242
  %v5244 = vsub.f32 1.0, %v5243
  %v5245 = vmul.f32 %v5242, %v5244
  %v5246 = vadd.f32 %v5242, %v5245
  %vm5247 = vweird.f32 %v5086
  %vm5248 = vweird.f32 %v5242
  %vm5249 = vmor %vm5247, %vm5248
  %v5250 = vsel %vm5249, %v5242, %v5246
  %v5251 = vand.u32 2147483647, %v5086
  %vm5252 = vcmp.eq.f32.partialorder %v5251, 8.507059e+37
  %v5253 = vand.u32 %v5086, 2147483648
  %v5254 = vor.u32 1.1754944e-38, %v5253
  %v5255 = vsel %vm5252, %v5254, %v5250
  %v5256 = vmul.f32 1.0, %v5255
  %v5257 = vrcp.pop %v5087
  %v5258 = vmul.f32 %v5087, %v5257
  %v5259 = vsub.f32 1.0, %v5258
  %v5260 = vmul.f32 %v5257, %v5259
  %v5261 = vadd.f32 %v5257, %v5260
  %vm5262 = vweird.f32 %v5087
  %vm5263 = vweird.f32 %v5257
  %vm5264 = vmor %vm5262, %vm5263
  %v5265 = vsel %vm5264, %v5257, %v5261
  %v5266 = vand.u32 2147483647, %v5087
  %vm5267 = vcmp.eq.f32.partialorder %v5266, 8.507059e+37
  %v5268 = vand.u32 %v5087, 2147483648
  %v5269 = vor.u32 1.1754944e-38, %v5268
  %v5270 = vsel %vm5267, %v5269, %v5265
  %v5271 = vmul.f32 1.0, %v5270
  %v5272 = vrcp.pop %v5088
  %v5273 = vmul.f32 %v5088, %v5272
  %v5274 = vsub.f32 1.0, %v5273
  %v5275 = vmul.f32 %v5272, %v5274
  %v5276 = vadd.f32 %v5272, %v5275
  %vm5277 = vweird.f32 %v5088
  %vm5278 = vweird.f32 %v5272
  %vm5279 = vmor %vm5277, %vm5278
  %v5280 = vsel %vm5279, %v5272, %v5276
  %v5281 = vand.u32 2147483647, %v5088
  %vm5282 = vcmp.eq.f32.partialorder %v5281, 8.507059e+37
  %v5283 = vand.u32 %v5088, 2147483648
  %v5284 = vor.u32 1.1754944e-38, %v5283
  %v5285 = vsel %vm5282, %v5284, %v5280
  %v5286 = vmul.f32 1.0, %v5285
  %v5287 = vrcp.pop %v5089
  %v5288 = vmul.f32 %v5089, %v5287
  %v5289 = vsub.f32 1.0, %v5288
  %v5290 = vmul.f32 %v5287, %v5289
  %v5291 = vadd.f32 %v5287, %v5290
  %vm5292 = vweird.f32 %v5089
  %vm5293 = vweird.f32 %v5287
  %vm5294 = vmor %vm5292, %vm5293
  %v5295 = vsel %vm5294, %v5287, %v5291
  %v5296 = vand.u32 2147483647, %v5089
  %vm5297 = vcmp.eq.f32.partialorder %v5296, 8.507059e+37
  %v5298 = vand.u32 %v5089, 2147483648
  %v5299 = vor.u32 1.1754944e-38, %v5298
  %v5300 = vsel %vm5297, %v5299, %v5295
  %v5301 = vmul.f32 1.0, %v5300
  %v5302 = vrcp.pop %v5090
  %v5303 = vmul.f32 %v5090, %v5302
  %v5304 = vsub.f32 1.0, %v5303
  %v5305 = vmul.f32 %v5302, %v5304
  %v5306 = vadd.f32 %v5302, %v5305
  %vm5307 = vweird.f32 %v5090
  %vm5308 = vweird.f32 %v5302
  %vm5309 = vmor %vm5307, %vm5308
  %v5310 = vsel %vm5309, %v5302, %v5306
  %v5311 = vand.u32 2147483647, %v5090
  %vm5312 = vcmp.eq.f32.partialorder %v5311, 8.507059e+37
  %v5313 = vand.u32 %v5090, 2147483648
  %v5314 = vor.u32 1.1754944e-38, %v5313
  %v5315 = vsel %vm5312, %v5314, %v5310
  %v5316 = vmul.f32 1.0, %v5315
  %v5317 = vrcp.pop %v5091
  %v5318 = vmul.f32 %v5091, %v5317
  %v5319 = vsub.f32 1.0, %v5318
  %v5320 = vmul.f32 %v5317, %v5319
  %v5321 = vadd.f32 %v5317, %v5320
  %vm5322 = vweird.f32 %v5091
  %vm5323 = vweird.f32 %v5317
  %vm5324 = vmor %vm5322, %vm5323
  %v5325 = vsel %vm5324, %v5317, %v5321
  %v5326 = vand.u32 2147483647, %v5091
  %vm5327 = vcmp.eq.f32.partialorder %v5326, 8.507059e+37
  %v5328 = vand.u32 %v5091, 2147483648
  %v5329 = vor.u32 1.1754944e-38, %v5328
  %v5330 = vsel %vm5327, %v5329, %v5325
  %v5331 = vmul.f32 1.0, %v5330
  %5348 = vrot.lane.b32.xlu0 %v5106, 96
  %v5349 = vpop.permute.xlu0 %5348
  %5350 = vrot.lane.b32.xlu0 %v5121, 96
  %v5351 = vpop.permute.xlu0 %5350
  %5352 = vrot.lane.b32.xlu0 %v5136, 96
  %v5353 = vpop.permute.xlu0 %5352
  %5354 = vrot.lane.b32.xlu0 %v5151, 96
  %v5355 = vpop.permute.xlu0 %5354
  %5356 = vrot.lane.b32.xlu0 %v5166, 96
  %v5357 = vpop.permute.xlu0 %5356
  %5358 = vrot.lane.b32.xlu0 %v5181, 96
  %v5359 = vpop.permute.xlu0 %5358
  %5360 = vrot.lane.b32.xlu0 %v5196, 96
  %v5361 = vpop.permute.xlu0 %5360
  %5362 = vrot.lane.b32.xlu0 %v5211, 96
  %v5363 = vpop.permute.xlu0 %5362
  %5364 = vrot.lane.b32.xlu0 %v5226, 96
  %v5365 = vpop.permute.xlu0 %5364
  %5366 = vrot.lane.b32.xlu0 %v5241, 96
  %v5367 = vpop.permute.xlu0 %5366
  %5368 = vrot.lane.b32.xlu0 %v5256, 96
  %v5369 = vpop.permute.xlu0 %5368
  %5370 = vrot.lane.b32.xlu0 %v5271, 96
  %v5371 = vpop.permute.xlu0 %5370
  %5372 = vrot.lane.b32.xlu0 %v5286, 96
  %v5373 = vpop.permute.xlu0 %5372
  %5374 = vrot.lane.b32.xlu0 %v5301, 96
  %v5375 = vpop.permute.xlu0 %5374
  %5376 = vrot.lane.b32.xlu0 %v5316, 96
  %v5377 = vpop.permute.xlu0 %5376
  %5378 = vrot.lane.b32.xlu0 %v5331, 96
  %v5379 = vpop.permute.xlu0 %5378
  %v5396 = vmul.f32 %v5012, %v5349
  %v5397 = vmul.f32 %v5013, %v5351
  %v5398 = vmul.f32 %v5014, %v5353
  %v5399 = vmul.f32 %v5015, %v5355
  %v5400 = vmul.f32 %v5016, %v5357
  %v5401 = vmul.f32 %v5017, %v5359
  %v5402 = vmul.f32 %v5018, %v5361
  %v5403 = vmul.f32 %v5019, %v5363
  %v5404 = vmul.f32 %v5020, %v5365
  %v5405 = vmul.f32 %v5021, %v5367
  %v5406 = vmul.f32 %v5022, %v5369
  %v5407 = vmul.f32 %v5023, %v5371
  %v5408 = vmul.f32 %v5024, %v5373
  %v5409 = vmul.f32 %v5025, %v5375
  %v5410 = vmul.f32 %v5026, %v5377
  %v5411 = vmul.f32 %v5027, %v5379
  %v5412 = vpack.c.bf16 %v5396, %v5396
  %v5413 = vpack.c.bf16 %v5397, %v5397
  %v5414 = vpack.c.bf16 %v5398, %v5398
  %v5415 = vpack.c.bf16 %v5399, %v5399
  %v5416 = vpack.c.bf16 %v5400, %v5400
  %v5417 = vpack.c.bf16 %v5401, %v5401
  %v5418 = vpack.c.bf16 %v5402, %v5402
  %v5419 = vpack.c.bf16 %v5403, %v5403
  %v5420 = vpack.c.bf16 %v5404, %v5404
  %v5421 = vpack.c.bf16 %v5405, %v5405
  %v5422 = vpack.c.bf16 %v5406, %v5406
  %v5423 = vpack.c.bf16 %v5407, %v5407
  %v5424 = vpack.c.bf16 %v5408, %v5408
  %v5425 = vpack.c.bf16 %v5409, %v5409
  %v5426 = vpack.c.bf16 %v5410, %v5410
  %v5427 = vpack.c.bf16 %v5411, %v5411
  %v5428 = vld [vmem:[%s4] sm:$0xf]
  %v5429 = vld [vmem:[%s4 + $0x4] sm:$0xf]
  %v5430 = vld [vmem:[%s4 + $0x8] sm:$0xf]
  %v5431 = vld [vmem:[%s4 + $0xc] sm:$0xf]
  %v5432 = vld [vmem:[%s4 + $0x10] sm:$0xf]
  %v5433 = vld [vmem:[%s4 + $0x14] sm:$0xf]
  %v5434 = vld [vmem:[%s4 + $0x18] sm:$0xf]
  %v5435 = vld [vmem:[%s4 + $0x1c] sm:$0xf]
  %v5436 = vld [vmem:[%s4 + $0x20] sm:$0xf]
  %v5437 = vld [vmem:[%s4 + $0x24] sm:$0xf]
  %v5438 = vld [vmem:[%s4 + $0x28] sm:$0xf]
  %v5439 = vld [vmem:[%s4 + $0x2c] sm:$0xf]
  %v5440 = vld [vmem:[%s4 + $0x30] sm:$0xf]
  %v5441 = vld [vmem:[%s4 + $0x34] sm:$0xf]
  %v5442 = vld [vmem:[%s4 + $0x38] sm:$0xf]
  %v5443 = vld [vmem:[%s4 + $0x3c] sm:$0xf]
  %v5444 = vld [vmem:[%s4 + $0x40] sm:$0xf]
  %v5445 = vld [vmem:[%s4 + $0x44] sm:$0xf]
  %v5446 = vld [vmem:[%s4 + $0x48] sm:$0xf]
  %v5447 = vld [vmem:[%s4 + $0x4c] sm:$0xf]
  %v5448 = vld [vmem:[%s4 + $0x50] sm:$0xf]
  %v5449 = vld [vmem:[%s4 + $0x54] sm:$0xf]
  %v5450 = vld [vmem:[%s4 + $0x58] sm:$0xf]
  %v5451 = vld [vmem:[%s4 + $0x5c] sm:$0xf]
  %v5452 = vld [vmem:[%s4 + $0x60] sm:$0xf]
  %v5453 = vld [vmem:[%s4 + $0x64] sm:$0xf]
  %v5454 = vld [vmem:[%s4 + $0x68] sm:$0xf]
  %v5455 = vld [vmem:[%s4 + $0x6c] sm:$0xf]
  %v5456 = vld [vmem:[%s4 + $0x70] sm:$0xf]
  %v5457 = vld [vmem:[%s4 + $0x74] sm:$0xf]
  %v5458 = vld [vmem:[%s4 + $0x78] sm:$0xf]
  %v5459 = vld [vmem:[%s4 + $0x7c] sm:$0xf]
  %v5460 = vld [vmem:[%s4 + $0x80] sm:$0xf]
  %v5461 = vld [vmem:[%s4 + $0x84] sm:$0xf]
  %v5462 = vld [vmem:[%s4 + $0x88] sm:$0xf]
  %v5463 = vld [vmem:[%s4 + $0x8c] sm:$0xf]
  %v5472 = vunpack.c.l.b16 %v5412
  %v5473 = vunpack.c.l.b16 %v5413
  %v5474 = vunpack.c.l.b16 %v5414
  %v5475 = vunpack.c.l.b16 %v5415
  %v5476 = vunpack.c.l.b16 %v5420
  %v5477 = vunpack.c.l.b16 %v5421
  %v5478 = vunpack.c.l.b16 %v5422
  %v5479 = vunpack.c.l.b16 %v5423
  %v5480 = vpack.c.b16 %v5473, %v5472
  %v5481 = vpack.c.b16 %v5475, %v5474
  %v5482 = vpack.c.b16 %v5477, %v5476
  %v5483 = vpack.c.b16 %v5479, %v5478
  %v5485 = vshrl.u32 %v5480, 16
  %v5487 = vrot.slane %v5485, 7
  %v5488 = vshll.u32 %v5480, 16
  %v5490 = vor.u32 %v5487, %v5488
  %v5492 = vshrl.u32 %v5481, 16
  %v5494 = vrot.slane %v5492, 7
  %v5495 = vshll.u32 %v5481, 16
  %v5497 = vor.u32 %v5494, %v5495
  %v5498 = vsel %vm113, %v5487, %v5497
  %v5500 = vshrl.u32 %v5482, 16
  %v5502 = vrot.slane %v5500, 7
  %v5503 = vshll.u32 %v5482, 16
  %v5505 = vor.u32 %v5502, %v5503
  %v5507 = vshrl.u32 %v5483, 16
  %v5509 = vrot.slane %v5507, 7
  %v5510 = vshll.u32 %v5483, 16
  %v5512 = vor.u32 %v5509, %v5510
  %v5513 = vsel %vm113, %v5502, %v5512
  %v5516 = vsel %vm147, 0, %v5490
  %v5517 = vsel %vm147, 0, %v5505
  %v5522 = vunpack.c.l.b16 %v5444
  %v5523 = vunpack.c.l.b16 %v5445
  %v5524 = vunpack.c.l.b16 %v5446
  %v5525 = vunpack.c.l.b16 %v5447
  %v5526 = vpack.c.b16 %v5523, %v5522
  %v5527 = vpack.c.b16 %v5525, %v5524
  %v5530 = vsel %vm3619, %v5480, 0
  %v5532 = vsel %vm3619, %v5481, 0
  %v5534 = vsel %vm3619, %v5482, 0
  %v5536 = vsel %vm3619, %v5483, 0
  %5538 = vmatpush.bf16.msra.mxu0 0
  %5539 = vmatpush.bf16.msra.mxu0 0
  %5540 = vmatpush.bf16.msra.mxu0 0
  %5541 = vmatpush.bf16.msra.mxu0 0
  %5542 = vmatpush.bf16.msra.mxu0 0
  %5543 = vmatpush.bf16.msra.mxu0 0
  %5544 = vmatpush.bf16.msra.mxu0 %v5527
  %5545 = vmatpush.bf16.msra.mxu0 %v5526
  %5546 = vmatmul.bf16.gmra.mxu0 %v5530
  %v5547 = vpop.f32.mrf.mxu0
  %v5548 = vadd.f32 0.0, %v5547
  %v5549 = vpop.f32.mrf.mxu0
  %v5550 = vadd.f32 0.0, %v5549
  %5551 = vmatmul.bf16.gmra.mxu0 %v5532
  %v5552 = vpop.f32.mrf.mxu0
  %v5553 = vadd.f32 0.0, %v5552
  %v5554 = vpop.f32.mrf.mxu0
  %v5555 = vadd.f32 0.0, %v5554
  %5556 = vmatmul.bf16.gmra.mxu0 %v5534
  %v5557 = vpop.f32.mrf.mxu0
  %v5558 = vadd.f32 0.0, %v5557
  %v5559 = vpop.f32.mrf.mxu0
  %v5560 = vadd.f32 0.0, %v5559
  %5561 = vmatmul.bf16.gmra.mxu0 %v5536
  %v5562 = vpop.f32.mrf.mxu0
  %v5563 = vadd.f32 0.0, %v5562
  %v5564 = vpop.f32.mrf.mxu0
  %v5565 = vadd.f32 0.0, %v5564
  %5566 = vdwg.mxu0
  %v5571 = vunpack.c.l.b16 %v5440
  %v5572 = vunpack.c.l.b16 %v5441
  %v5573 = vunpack.c.l.b16 %v5442
  %v5574 = vunpack.c.l.b16 %v5443
  %v5575 = vpack.c.b16 %v5572, %v5571
  %v5576 = vpack.c.b16 %v5574, %v5573
  %v5580 = vsel %vm3619, %v5516, 0
  %v5583 = vsel %vm3619, %v5498, 0
  %v5586 = vsel %vm3619, %v5517, 0
  %v5589 = vsel %vm3619, %v5513, 0
  %5591 = vmatpush.bf16.msra.mxu0 0
  %5592 = vmatpush.bf16.msra.mxu0 0
  %5593 = vmatpush.bf16.msra.mxu0 0
  %5594 = vmatpush.bf16.msra.mxu0 0
  %5595 = vmatpush.bf16.msra.mxu0 0
  %5596 = vmatpush.bf16.msra.mxu0 0
  %5597 = vmatpush.bf16.msra.mxu0 %v5576
  %5598 = vmatpush.bf16.msra.mxu0 %v5575
  %5599 = vmatmul.bf16.gmra.mxu0 %v5580
  %v5600 = vpop.f32.mrf.mxu0
  %v5601 = vadd.f32 %v5548, %v5600
  %v5602 = vpop.f32.mrf.mxu0
  %v5603 = vadd.f32 %v5550, %v5602
  %5604 = vmatmul.bf16.gmra.mxu0 %v5583
  %v5605 = vpop.f32.mrf.mxu0
  %v5606 = vadd.f32 %v5553, %v5605
  %v5607 = vpop.f32.mrf.mxu0
  %v5608 = vadd.f32 %v5555, %v5607
  %5609 = vmatmul.bf16.gmra.mxu0 %v5586
  %v5610 = vpop.f32.mrf.mxu0
  %v5611 = vadd.f32 %v5558, %v5610
  %v5612 = vpop.f32.mrf.mxu0
  %v5613 = vadd.f32 %v5560, %v5612
  %5614 = vmatmul.bf16.gmra.mxu0 %v5589
  %v5615 = vpop.f32.mrf.mxu0
  %v5616 = vadd.f32 %v5563, %v5615
  %v5617 = vpop.f32.mrf.mxu0
  %v5618 = vadd.f32 %v5565, %v5617
  %5619 = vdwg.mxu0
  %v5620 = vrot.slane %v5488, 1
  %v5621 = vor.u32 %v5485, %v5620
  %v5622 = vrot.slane %v5495, 1
  %v5623 = vsel %vm150, %v5621, %v5622
  %v5624 = vor.u32 %v5492, %v5622
  %v5625 = vrot.slane %v5503, 1
  %v5626 = vor.u32 %v5500, %v5625
  %v5627 = vrot.slane %v5510, 1
  %v5628 = vsel %vm150, %v5626, %v5627
  %v5629 = vor.u32 %v5507, %v5627
  %v5632 = vsel %vm164, %v5624, 0
  %v5633 = vsel %vm164, %v5629, 0
  %v5638 = vunpack.c.l.b16 %v5448
  %v5639 = vunpack.c.l.b16 %v5449
  %v5640 = vunpack.c.l.b16 %v5450
  %v5641 = vunpack.c.l.b16 %v5451
  %v5642 = vpack.c.b16 %v5639, %v5638
  %v5643 = vpack.c.b16 %v5641, %v5640
  %v5647 = vsel %vm3619, %v5623, 0
  %v5650 = vsel %vm3619, %v5632, 0
  %v5653 = vsel %vm3619, %v5628, 0
  %v5656 = vsel %vm3619, %v5633, 0
  %5658 = vmatpush.bf16.msra.mxu0 0
  %5659 = vmatpush.bf16.msra.mxu0 0
  %5660 = vmatpush.bf16.msra.mxu0 0
  %5661 = vmatpush.bf16.msra.mxu0 0
  %5662 = vmatpush.bf16.msra.mxu0 0
  %5663 = vmatpush.bf16.msra.mxu0 0
  %5664 = vmatpush.bf16.msra.mxu0 %v5643
  %5665 = vmatpush.bf16.msra.mxu0 %v5642
  %5666 = vmatmul.bf16.gmra.mxu0 %v5647
  %v5667 = vpop.f32.mrf.mxu0
  %v5668 = vadd.f32 0.0, %v5667
  %v5669 = vpop.f32.mrf.mxu0
  %v5670 = vadd.f32 0.0, %v5669
  %5671 = vmatmul.bf16.gmra.mxu0 %v5650
  %v5672 = vpop.f32.mrf.mxu0
  %v5673 = vadd.f32 0.0, %v5672
  %v5674 = vpop.f32.mrf.mxu0
  %v5675 = vadd.f32 0.0, %v5674
  %5676 = vmatmul.bf16.gmra.mxu0 %v5653
  %v5677 = vpop.f32.mrf.mxu0
  %v5678 = vadd.f32 0.0, %v5677
  %v5679 = vpop.f32.mrf.mxu0
  %v5680 = vadd.f32 0.0, %v5679
  %5681 = vmatmul.bf16.gmra.mxu0 %v5656
  %v5682 = vpop.f32.mrf.mxu0
  %v5683 = vadd.f32 0.0, %v5682
  %v5684 = vpop.f32.mrf.mxu0
  %v5685 = vadd.f32 0.0, %v5684
  %5686 = vdwg.mxu0
  %v5687 = vadd.f32 %v5601, %v5668
  %v5688 = vadd.f32 %v5603, %v5670
  %v5689 = vadd.f32 %v5606, %v5673
  %v5690 = vadd.f32 %v5608, %v5675
  %v5691 = vadd.f32 %v5611, %v5678
  %v5692 = vadd.f32 %v5613, %v5680
  %v5693 = vadd.f32 %v5616, %v5683
  %v5694 = vadd.f32 %v5618, %v5685
  %v5703 = vunpack.c.l.b16 %v5416
  %v5704 = vunpack.c.l.b16 %v5417
  %v5705 = vunpack.c.l.b16 %v5418
  %v5706 = vunpack.c.l.b16 %v5419
  %v5707 = vunpack.c.l.b16 %v5424
  %v5708 = vunpack.c.l.b16 %v5425
  %v5709 = vunpack.c.l.b16 %v5426
  %v5710 = vunpack.c.l.b16 %v5427
  %v5711 = vpack.c.b16 %v5704, %v5703
  %v5712 = vpack.c.b16 %v5706, %v5705
  %v5713 = vpack.c.b16 %v5708, %v5707
  %v5714 = vpack.c.b16 %v5710, %v5709
  %v5716 = vshrl.u32 %v5711, 16
  %v5718 = vrot.slane %v5716, 7
  %v5719 = vshll.u32 %v5711, 16
  %v5721 = vor.u32 %v5718, %v5719
  %v5723 = vshrl.u32 %v5712, 16
  %v5725 = vrot.slane %v5723, 7
  %v5726 = vshll.u32 %v5712, 16
  %v5728 = vor.u32 %v5725, %v5726
  %v5729 = vsel %vm113, %v5718, %v5728
  %v5731 = vshrl.u32 %v5713, 16
  %v5733 = vrot.slane %v5731, 7
  %v5734 = vshll.u32 %v5713, 16
  %v5736 = vor.u32 %v5733, %v5734
  %v5738 = vshrl.u32 %v5714, 16
  %v5740 = vrot.slane %v5738, 7
  %v5741 = vshll.u32 %v5714, 16
  %v5743 = vor.u32 %v5740, %v5741
  %v5744 = vsel %vm113, %v5733, %v5743
  %v5747 = vsel %vm147, 0, %v5721
  %v5748 = vsel %vm147, 0, %v5736
  %v5753 = vunpack.c.l.b16 %v5452
  %v5754 = vunpack.c.l.b16 %v5453
  %v5755 = vunpack.c.l.b16 %v5454
  %v5756 = vunpack.c.l.b16 %v5455
  %v5757 = vpack.c.b16 %v5754, %v5753
  %v5758 = vpack.c.b16 %v5756, %v5755
  %v5762 = vsel %vm3619, %v5747, 0
  %v5765 = vsel %vm3619, %v5729, 0
  %v5768 = vsel %vm3619, %v5748, 0
  %v5771 = vsel %vm3619, %v5744, 0
  %5773 = vmatpush.bf16.msra.mxu0 0
  %5774 = vmatpush.bf16.msra.mxu0 0
  %5775 = vmatpush.bf16.msra.mxu0 0
  %5776 = vmatpush.bf16.msra.mxu0 0
  %5777 = vmatpush.bf16.msra.mxu0 0
  %5778 = vmatpush.bf16.msra.mxu0 0
  %5779 = vmatpush.bf16.msra.mxu0 %v5758
  %5780 = vmatpush.bf16.msra.mxu0 %v5757
  %5781 = vmatmul.bf16.gmra.mxu0 %v5762
  %v5782 = vpop.f32.mrf.mxu0
  %v5783 = vadd.f32 0.0, %v5782
  %v5784 = vpop.f32.mrf.mxu0
  %v5785 = vadd.f32 0.0, %v5784
  %5786 = vmatmul.bf16.gmra.mxu0 %v5765
  %v5787 = vpop.f32.mrf.mxu0
  %v5788 = vadd.f32 0.0, %v5787
  %v5789 = vpop.f32.mrf.mxu0
  %v5790 = vadd.f32 0.0, %v5789
  %5791 = vmatmul.bf16.gmra.mxu0 %v5768
  %v5792 = vpop.f32.mrf.mxu0
  %v5793 = vadd.f32 0.0, %v5792
  %v5794 = vpop.f32.mrf.mxu0
  %v5795 = vadd.f32 0.0, %v5794
  %5796 = vmatmul.bf16.gmra.mxu0 %v5771
  %v5797 = vpop.f32.mrf.mxu0
  %v5798 = vadd.f32 0.0, %v5797
  %v5799 = vpop.f32.mrf.mxu0
  %v5800 = vadd.f32 0.0, %v5799
  %5801 = vdwg.mxu0
  %v5802 = vadd.f32 %v5687, %v5783
  %v5803 = vadd.f32 %v5688, %v5785
  %v5804 = vadd.f32 %v5689, %v5788
  %v5805 = vadd.f32 %v5690, %v5790
  %v5806 = vadd.f32 %v5691, %v5793
  %v5807 = vadd.f32 %v5692, %v5795
  %v5808 = vadd.f32 %v5693, %v5798
  %v5809 = vadd.f32 %v5694, %v5800
  %v5814 = vunpack.c.l.b16 %v5456
  %v5815 = vunpack.c.l.b16 %v5457
  %v5816 = vunpack.c.l.b16 %v5458
  %v5817 = vunpack.c.l.b16 %v5459
  %v5818 = vpack.c.b16 %v5815, %v5814
  %v5819 = vpack.c.b16 %v5817, %v5816
  %v5822 = vsel %vm3619, %v5711, 0
  %v5824 = vsel %vm3619, %v5712, 0
  %v5826 = vsel %vm3619, %v5713, 0
  %v5828 = vsel %vm3619, %v5714, 0
  %5830 = vmatpush.bf16.msra.mxu0 0
  %5831 = vmatpush.bf16.msra.mxu0 0
  %5832 = vmatpush.bf16.msra.mxu0 0
  %5833 = vmatpush.bf16.msra.mxu0 0
  %5834 = vmatpush.bf16.msra.mxu0 0
  %5835 = vmatpush.bf16.msra.mxu0 0
  %5836 = vmatpush.bf16.msra.mxu0 %v5819
  %5837 = vmatpush.bf16.msra.mxu0 %v5818
  %5838 = vmatmul.bf16.gmra.mxu0 %v5822
  %v5839 = vpop.f32.mrf.mxu0
  %v5840 = vadd.f32 0.0, %v5839
  %v5841 = vpop.f32.mrf.mxu0
  %v5842 = vadd.f32 0.0, %v5841
  %5843 = vmatmul.bf16.gmra.mxu0 %v5824
  %v5844 = vpop.f32.mrf.mxu0
  %v5845 = vadd.f32 0.0, %v5844
  %v5846 = vpop.f32.mrf.mxu0
  %v5847 = vadd.f32 0.0, %v5846
  %5848 = vmatmul.bf16.gmra.mxu0 %v5826
  %v5849 = vpop.f32.mrf.mxu0
  %v5850 = vadd.f32 0.0, %v5849
  %v5851 = vpop.f32.mrf.mxu0
  %v5852 = vadd.f32 0.0, %v5851
  %5853 = vmatmul.bf16.gmra.mxu0 %v5828
  %v5854 = vpop.f32.mrf.mxu0
  %v5855 = vadd.f32 0.0, %v5854
  %v5856 = vpop.f32.mrf.mxu0
  %v5857 = vadd.f32 0.0, %v5856
  %5858 = vdwg.mxu0
  %v5859 = vadd.f32 %v5802, %v5840
  %v5860 = vadd.f32 %v5803, %v5842
  %v5861 = vadd.f32 %v5804, %v5845
  %v5862 = vadd.f32 %v5805, %v5847
  %v5863 = vadd.f32 %v5806, %v5850
  %v5864 = vadd.f32 %v5807, %v5852
  %v5865 = vadd.f32 %v5808, %v5855
  %v5866 = vadd.f32 %v5809, %v5857
  %v5867 = vrot.slane %v5719, 1
  %v5868 = vor.u32 %v5716, %v5867
  %v5869 = vrot.slane %v5726, 1
  %v5870 = vsel %vm150, %v5868, %v5869
  %v5871 = vor.u32 %v5723, %v5869
  %v5872 = vrot.slane %v5734, 1
  %v5873 = vor.u32 %v5731, %v5872
  %v5874 = vrot.slane %v5741, 1
  %v5875 = vsel %vm150, %v5873, %v5874
  %v5876 = vor.u32 %v5738, %v5874
  %v5879 = vsel %vm164, %v5871, 0
  %v5880 = vsel %vm164, %v5876, 0
  %v5885 = vunpack.c.l.b16 %v5460
  %v5886 = vunpack.c.l.b16 %v5461
  %v5887 = vunpack.c.l.b16 %v5462
  %v5888 = vunpack.c.l.b16 %v5463
  %v5889 = vpack.c.b16 %v5886, %v5885
  %v5890 = vpack.c.b16 %v5888, %v5887
  %v5894 = vsel %vm3619, %v5870, 0
  %v5897 = vsel %vm3619, %v5879, 0
  %v5900 = vsel %vm3619, %v5875, 0
  %v5903 = vsel %vm3619, %v5880, 0
  %5905 = vmatpush.bf16.msra.mxu0 0
  %5906 = vmatpush.bf16.msra.mxu0 0
  %5907 = vmatpush.bf16.msra.mxu0 0
  %5908 = vmatpush.bf16.msra.mxu0 0
  %5909 = vmatpush.bf16.msra.mxu0 0
  %5910 = vmatpush.bf16.msra.mxu0 0
  %5911 = vmatpush.bf16.msra.mxu0 %v5890
  %5912 = vmatpush.bf16.msra.mxu0 %v5889
  %5913 = vmatmul.bf16.gmra.mxu0 %v5894
  %v5914 = vpop.f32.mrf.mxu0
  %v5915 = vadd.f32 0.0, %v5914
  %v5916 = vpop.f32.mrf.mxu0
  %v5917 = vadd.f32 0.0, %v5916
  %5918 = vmatmul.bf16.gmra.mxu0 %v5897
  %v5919 = vpop.f32.mrf.mxu0
  %v5920 = vadd.f32 0.0, %v5919
  %v5921 = vpop.f32.mrf.mxu0
  %v5922 = vadd.f32 0.0, %v5921
  %5923 = vmatmul.bf16.gmra.mxu0 %v5900
  %v5924 = vpop.f32.mrf.mxu0
  %v5925 = vadd.f32 0.0, %v5924
  %v5926 = vpop.f32.mrf.mxu0
  %v5927 = vadd.f32 0.0, %v5926
  %5928 = vmatmul.bf16.gmra.mxu0 %v5903
  %v5929 = vpop.f32.mrf.mxu0
  %v5930 = vadd.f32 0.0, %v5929
  %v5931 = vpop.f32.mrf.mxu0
  %v5932 = vadd.f32 0.0, %v5931
  %5933 = vdwg.mxu0
  %v5934 = vadd.f32 %v5859, %v5915
  %v5935 = vadd.f32 %v5860, %v5917
  %v5936 = vadd.f32 %v5861, %v5920
  %v5937 = vadd.f32 %v5862, %v5922
  %v5938 = vadd.f32 %v5863, %v5925
  %v5939 = vadd.f32 %v5864, %v5927
  %v5940 = vadd.f32 %v5865, %v5930
  %v5941 = vadd.f32 %v5866, %v5932
  %v5946 = vunpack.c.l.b16 %v5432
  %v5947 = vunpack.c.l.b16 %v5433
  %v5948 = vunpack.c.l.b16 %v5434
  %v5949 = vunpack.c.l.b16 %v5435
  %v5950 = vpack.c.b16 %v5947, %v5946
  %v5951 = vpack.c.b16 %v5949, %v5948
  %5954 = vmatpush.bf16.msra.mxu0 0
  %5955 = vmatpush.bf16.msra.mxu0 0
  %5956 = vmatpush.bf16.msra.mxu0 0
  %5957 = vmatpush.bf16.msra.mxu0 0
  %5958 = vmatpush.bf16.msra.mxu0 0
  %5959 = vmatpush.bf16.msra.mxu0 0
  %5960 = vmatpush.bf16.msra.mxu0 %v5951
  %5961 = vmatpush.bf16.msra.mxu0 %v5950
  %5962 = vmatmul.bf16.gmra.mxu0 %v5530
  %v5963 = vpop.f32.mrf.mxu0
  %v5964 = vadd.f32 0.0, %v5963
  %v5965 = vpop.f32.mrf.mxu0
  %v5966 = vadd.f32 0.0, %v5965
  %5967 = vmatmul.bf16.gmra.mxu0 %v5532
  %v5968 = vpop.f32.mrf.mxu0
  %v5969 = vadd.f32 0.0, %v5968
  %v5970 = vpop.f32.mrf.mxu0
  %v5971 = vadd.f32 0.0, %v5970
  %5972 = vmatmul.bf16.gmra.mxu0 %v5534
  %v5973 = vpop.f32.mrf.mxu0
  %v5974 = vadd.f32 0.0, %v5973
  %v5975 = vpop.f32.mrf.mxu0
  %v5976 = vadd.f32 0.0, %v5975
  %5977 = vmatmul.bf16.gmra.mxu0 %v5536
  %v5978 = vpop.f32.mrf.mxu0
  %v5979 = vadd.f32 0.0, %v5978
  %v5980 = vpop.f32.mrf.mxu0
  %v5981 = vadd.f32 0.0, %v5980
  %5982 = vdwg.mxu0
  %v5987 = vunpack.c.l.b16 %v5428
  %v5988 = vunpack.c.l.b16 %v5429
  %v5989 = vunpack.c.l.b16 %v5430
  %v5990 = vunpack.c.l.b16 %v5431
  %v5991 = vpack.c.b16 %v5988, %v5987
  %v5992 = vpack.c.b16 %v5990, %v5989
  %5995 = vmatpush.bf16.msra.mxu0 0
  %5996 = vmatpush.bf16.msra.mxu0 0
  %5997 = vmatpush.bf16.msra.mxu0 0
  %5998 = vmatpush.bf16.msra.mxu0 0
  %5999 = vmatpush.bf16.msra.mxu0 0
  %6000 = vmatpush.bf16.msra.mxu0 0
  %6001 = vmatpush.bf16.msra.mxu0 %v5992
  %6002 = vmatpush.bf16.msra.mxu0 %v5991
  %6003 = vmatmul.bf16.gmra.mxu0 %v5580
  %v6004 = vpop.f32.mrf.mxu0
  %v6005 = vadd.f32 %v5964, %v6004
  %v6006 = vpop.f32.mrf.mxu0
  %v6007 = vadd.f32 %v5966, %v6006
  %6008 = vmatmul.bf16.gmra.mxu0 %v5583
  %v6009 = vpop.f32.mrf.mxu0
  %v6010 = vadd.f32 %v5969, %v6009
  %v6011 = vpop.f32.mrf.mxu0
  %v6012 = vadd.f32 %v5971, %v6011
  %6013 = vmatmul.bf16.gmra.mxu0 %v5586
  %v6014 = vpop.f32.mrf.mxu0
  %v6015 = vadd.f32 %v5974, %v6014
  %v6016 = vpop.f32.mrf.mxu0
  %v6017 = vadd.f32 %v5976, %v6016
  %6018 = vmatmul.bf16.gmra.mxu0 %v5589
  %v6019 = vpop.f32.mrf.mxu0
  %v6020 = vadd.f32 %v5979, %v6019
  %v6021 = vpop.f32.mrf.mxu0
  %v6022 = vadd.f32 %v5981, %v6021
  %6023 = vdwg.mxu0
  %v6028 = vunpack.c.l.b16 %v5436
  %v6029 = vunpack.c.l.b16 %v5437
  %v6030 = vunpack.c.l.b16 %v5438
  %v6031 = vunpack.c.l.b16 %v5439
  %v6032 = vpack.c.b16 %v6029, %v6028
  %v6033 = vpack.c.b16 %v6031, %v6030
  %6036 = vmatpush.bf16.msra.mxu0 0
  %6037 = vmatpush.bf16.msra.mxu0 0
  %6038 = vmatpush.bf16.msra.mxu0 0
  %6039 = vmatpush.bf16.msra.mxu0 0
  %6040 = vmatpush.bf16.msra.mxu0 0
  %6041 = vmatpush.bf16.msra.mxu0 0
  %6042 = vmatpush.bf16.msra.mxu0 %v6033
  %6043 = vmatpush.bf16.msra.mxu0 %v6032
  %6044 = vmatmul.bf16.gmra.mxu0 %v5647
  %v6045 = vpop.f32.mrf.mxu0
  %v6046 = vadd.f32 0.0, %v6045
  %v6047 = vpop.f32.mrf.mxu0
  %v6048 = vadd.f32 0.0, %v6047
  %6049 = vmatmul.bf16.gmra.mxu0 %v5650
  %v6050 = vpop.f32.mrf.mxu0
  %v6051 = vadd.f32 0.0, %v6050
  %v6052 = vpop.f32.mrf.mxu0
  %v6053 = vadd.f32 0.0, %v6052
  %6054 = vmatmul.bf16.gmra.mxu0 %v5653
  %v6055 = vpop.f32.mrf.mxu0
  %v6056 = vadd.f32 0.0, %v6055
  %v6057 = vpop.f32.mrf.mxu0
  %v6058 = vadd.f32 0.0, %v6057
  %6059 = vmatmul.bf16.gmra.mxu0 %v5656
  %v6060 = vpop.f32.mrf.mxu0
  %v6061 = vadd.f32 0.0, %v6060
  %v6062 = vpop.f32.mrf.mxu0
  %v6063 = vadd.f32 0.0, %v6062
  %6064 = vdwg.mxu0
  %v6065 = vadd.f32 %v6005, %v6046
  %v6066 = vadd.f32 %v6007, %v6048
  %v6067 = vadd.f32 %v6010, %v6051
  %v6068 = vadd.f32 %v6012, %v6053
  %v6069 = vadd.f32 %v6015, %v6056
  %v6070 = vadd.f32 %v6017, %v6058
  %v6071 = vadd.f32 %v6020, %v6061
  %v6072 = vadd.f32 %v6022, %v6063
  %6073 = vmatpush.bf16.msra.mxu0 0
  %6074 = vmatpush.bf16.msra.mxu0 0
  %6075 = vmatpush.bf16.msra.mxu0 0
  %6076 = vmatpush.bf16.msra.mxu0 0
  %6077 = vmatpush.bf16.msra.mxu0 0
  %6078 = vmatpush.bf16.msra.mxu0 0
  %6079 = vmatpush.bf16.msra.mxu0 %v5576
  %6080 = vmatpush.bf16.msra.mxu0 %v5575
  %6081 = vmatmul.bf16.gmra.mxu0 %v5762
  %v6082 = vpop.f32.mrf.mxu0
  %v6083 = vadd.f32 0.0, %v6082
  %v6084 = vpop.f32.mrf.mxu0
  %v6085 = vadd.f32 0.0, %v6084
  %6086 = vmatmul.bf16.gmra.mxu0 %v5765
  %v6087 = vpop.f32.mrf.mxu0
  %v6088 = vadd.f32 0.0, %v6087
  %v6089 = vpop.f32.mrf.mxu0
  %v6090 = vadd.f32 0.0, %v6089
  %6091 = vmatmul.bf16.gmra.mxu0 %v5768
  %v6092 = vpop.f32.mrf.mxu0
  %v6093 = vadd.f32 0.0, %v6092
  %v6094 = vpop.f32.mrf.mxu0
  %v6095 = vadd.f32 0.0, %v6094
  %6096 = vmatmul.bf16.gmra.mxu0 %v5771
  %v6097 = vpop.f32.mrf.mxu0
  %v6098 = vadd.f32 0.0, %v6097
  %v6099 = vpop.f32.mrf.mxu0
  %v6100 = vadd.f32 0.0, %v6099
  %6101 = vdwg.mxu0
  %v6102 = vadd.f32 %v6065, %v6083
  %v6103 = vadd.f32 %v6066, %v6085
  %v6104 = vadd.f32 %v6067, %v6088
  %v6105 = vadd.f32 %v6068, %v6090
  %v6106 = vadd.f32 %v6069, %v6093
  %v6107 = vadd.f32 %v6070, %v6095
  %v6108 = vadd.f32 %v6071, %v6098
  %v6109 = vadd.f32 %v6072, %v6100
  %6110 = vmatpush.bf16.msra.mxu0 0
  %6111 = vmatpush.bf16.msra.mxu0 0
  %6112 = vmatpush.bf16.msra.mxu0 0
  %6113 = vmatpush.bf16.msra.mxu0 0
  %6114 = vmatpush.bf16.msra.mxu0 0
  %6115 = vmatpush.bf16.msra.mxu0 0
  %6116 = vmatpush.bf16.msra.mxu0 %v5527
  %6117 = vmatpush.bf16.msra.mxu0 %v5526
  %6118 = vmatmul.bf16.gmra.mxu0 %v5822
  %v6119 = vpop.f32.mrf.mxu0
  %v6120 = vadd.f32 0.0, %v6119
  %v6121 = vpop.f32.mrf.mxu0
  %v6122 = vadd.f32 0.0, %v6121
  %6123 = vmatmul.bf16.gmra.mxu0 %v5824
  %v6124 = vpop.f32.mrf.mxu0
  %v6125 = vadd.f32 0.0, %v6124
  %v6126 = vpop.f32.mrf.mxu0
  %v6127 = vadd.f32 0.0, %v6126
  %6128 = vmatmul.bf16.gmra.mxu0 %v5826
  %v6129 = vpop.f32.mrf.mxu0
  %v6130 = vadd.f32 0.0, %v6129
  %v6131 = vpop.f32.mrf.mxu0
  %v6132 = vadd.f32 0.0, %v6131
  %6133 = vmatmul.bf16.gmra.mxu0 %v5828
  %v6134 = vpop.f32.mrf.mxu0
  %v6135 = vadd.f32 0.0, %v6134
  %v6136 = vpop.f32.mrf.mxu0
  %v6137 = vadd.f32 0.0, %v6136
  %6138 = vdwg.mxu0
  %v6139 = vadd.f32 %v6102, %v6120
  %v6140 = vadd.f32 %v6103, %v6122
  %v6141 = vadd.f32 %v6104, %v6125
  %v6142 = vadd.f32 %v6105, %v6127
  %v6143 = vadd.f32 %v6106, %v6130
  %v6144 = vadd.f32 %v6107, %v6132
  %v6145 = vadd.f32 %v6108, %v6135
  %v6146 = vadd.f32 %v6109, %v6137
  %6147 = vmatpush.bf16.msra.mxu0 0
  %6148 = vmatpush.bf16.msra.mxu0 0
  %6149 = vmatpush.bf16.msra.mxu0 0
  %6150 = vmatpush.bf16.msra.mxu0 0
  %6151 = vmatpush.bf16.msra.mxu0 0
  %6152 = vmatpush.bf16.msra.mxu0 0
  %6153 = vmatpush.bf16.msra.mxu0 %v5643
  %6154 = vmatpush.bf16.msra.mxu0 %v5642
  %6155 = vmatmul.bf16.gmra.mxu0 %v5894
  %v6156 = vpop.f32.mrf.mxu0
  %v6157 = vadd.f32 0.0, %v6156
  %v6158 = vpop.f32.mrf.mxu0
  %v6159 = vadd.f32 0.0, %v6158
  %6160 = vmatmul.bf16.gmra.mxu0 %v5897
  %v6161 = vpop.f32.mrf.mxu0
  %v6162 = vadd.f32 0.0, %v6161
  %v6163 = vpop.f32.mrf.mxu0
  %v6164 = vadd.f32 0.0, %v6163
  %6165 = vmatmul.bf16.gmra.mxu0 %v5900
  %v6166 = vpop.f32.mrf.mxu0
  %v6167 = vadd.f32 0.0, %v6166
  %v6168 = vpop.f32.mrf.mxu0
  %v6169 = vadd.f32 0.0, %v6168
  %6170 = vmatmul.bf16.gmra.mxu0 %v5903
  %v6171 = vpop.f32.mrf.mxu0
  %v6172 = vadd.f32 0.0, %v6171
  %v6173 = vpop.f32.mrf.mxu0
  %v6174 = vadd.f32 0.0, %v6173
  %6175 = vdwg.mxu0
  %v6176 = vadd.f32 %v6139, %v6157
  %v6177 = vadd.f32 %v6140, %v6159
  %v6178 = vadd.f32 %v6141, %v6162
  %v6179 = vadd.f32 %v6142, %v6164
  %v6180 = vadd.f32 %v6143, %v6167
  %v6181 = vadd.f32 %v6144, %v6169
  %v6182 = vadd.f32 %v6145, %v6172
  %v6183 = vadd.f32 %v6146, %v6174
  %v6184 = vsel %vm3619, %v5934, 0.0
  %v6185 = vsel %vm3619, %v5935, 0.0
  %v6186 = vadd.f32 %v6184, %v6185
  %v6187 = vsel %vm3619, %v5936, 0.0
  %v6188 = vadd.f32 %v6186, %v6187
  %v6189 = vsel %vm3619, %v5937, 0.0
  %v6190 = vadd.f32 %v6188, %v6189
  %v6191 = vsel %vm3619, %v6176, 0.0
  %v6192 = vadd.f32 %v6190, %v6191
  %v6193 = vsel %vm3619, %v6177, 0.0
  %v6194 = vadd.f32 %v6192, %v6193
  %v6195 = vsel %vm3619, %v6178, 0.0
  %v6196 = vadd.f32 %v6194, %v6195
  %v6197 = vsel %vm3619, %v6179, 0.0
  %v6198 = vadd.f32 %v6196, %v6197
  %v6199 = vrot.slane %v6198, 4
  %v6200 = vadd.f32 %v6198, %v6199
  %v6201 = vrot.slane %v6200, 2
  %v6202 = vadd.f32 %v6200, %v6201
  %v6203 = vrot.slane %v6202, 1
  %v6204 = vadd.f32 %v6202, %v6203
  %v6205 = vsel %vm3619, %v5938, 0.0
  %v6206 = vsel %vm3619, %v5939, 0.0
  %v6207 = vadd.f32 %v6205, %v6206
  %v6208 = vsel %vm3619, %v5940, 0.0
  %v6209 = vadd.f32 %v6207, %v6208
  %v6210 = vsel %vm3619, %v5941, 0.0
  %v6211 = vadd.f32 %v6209, %v6210
  %v6212 = vsel %vm3619, %v6180, 0.0
  %v6213 = vadd.f32 %v6211, %v6212
  %v6214 = vsel %vm3619, %v6181, 0.0
  %v6215 = vadd.f32 %v6213, %v6214
  %v6216 = vsel %vm3619, %v6182, 0.0
  %v6217 = vadd.f32 %v6215, %v6216
  %v6218 = vsel %vm3619, %v6183, 0.0
  %v6219 = vadd.f32 %v6217, %v6218
  %v6220 = vrot.slane %v6219, 4
  %v6221 = vadd.f32 %v6219, %v6220
  %v6222 = vrot.slane %v6221, 2
  %v6223 = vadd.f32 %v6221, %v6222
  %v6224 = vrot.slane %v6223, 1
  %v6225 = vadd.f32 %v6223, %v6224
  %v6226 = vmul.f32 %v6204, %v3668
  %v6227 = vmul.f32 %v6225, %v3668
  %v6228 = vsub.f32 %v5934, %v6226
  %v6229 = vsub.f32 %v5935, %v6226
  %v6230 = vsub.f32 %v5936, %v6226
  %v6231 = vsub.f32 %v5937, %v6226
  %v6232 = vsub.f32 %v6176, %v6226
  %v6233 = vsub.f32 %v6177, %v6226
  %v6234 = vsub.f32 %v6178, %v6226
  %v6235 = vsub.f32 %v6179, %v6226
  %v6236 = vsub.f32 %v5938, %v6227
  %v6237 = vsub.f32 %v5939, %v6227
  %v6238 = vsub.f32 %v5940, %v6227
  %v6239 = vsub.f32 %v5941, %v6227
  %v6240 = vsub.f32 %v6180, %v6227
  %v6241 = vsub.f32 %v6181, %v6227
  %v6242 = vsub.f32 %v6182, %v6227
  %v6243 = vsub.f32 %v6183, %v6227
  %v6244 = vmul.f32 %v6228, %v6228
  %v6245 = vmul.f32 %v6229, %v6229
  %v6246 = vmul.f32 %v6230, %v6230
  %v6247 = vmul.f32 %v6231, %v6231
  %v6248 = vmul.f32 %v6232, %v6232
  %v6249 = vmul.f32 %v6233, %v6233
  %v6250 = vmul.f32 %v6234, %v6234
  %v6251 = vmul.f32 %v6235, %v6235
  %v6252 = vmul.f32 %v6236, %v6236
  %v6253 = vmul.f32 %v6237, %v6237
  %v6254 = vmul.f32 %v6238, %v6238
  %v6255 = vmul.f32 %v6239, %v6239
  %v6256 = vmul.f32 %v6240, %v6240
  %v6257 = vmul.f32 %v6241, %v6241
  %v6258 = vmul.f32 %v6242, %v6242
  %v6259 = vmul.f32 %v6243, %v6243
  %v6260 = vsel %vm3619, %v6244, 0.0
  %v6261 = vsel %vm3619, %v6245, 0.0
  %v6262 = vadd.f32 %v6260, %v6261
  %v6263 = vsel %vm3619, %v6246, 0.0
  %v6264 = vadd.f32 %v6262, %v6263
  %v6265 = vsel %vm3619, %v6247, 0.0
  %v6266 = vadd.f32 %v6264, %v6265
  %v6267 = vsel %vm3619, %v6248, 0.0
  %v6268 = vadd.f32 %v6266, %v6267
  %v6269 = vsel %vm3619, %v6249, 0.0
  %v6270 = vadd.f32 %v6268, %v6269
  %v6271 = vsel %vm3619, %v6250, 0.0
  %v6272 = vadd.f32 %v6270, %v6271
  %v6273 = vsel %vm3619, %v6251, 0.0
  %v6274 = vadd.f32 %v6272, %v6273
  %v6275 = vrot.slane %v6274, 4
  %v6276 = vadd.f32 %v6274, %v6275
  %v6277 = vrot.slane %v6276, 2
  %v6278 = vadd.f32 %v6276, %v6277
  %v6279 = vrot.slane %v6278, 1
  %v6280 = vadd.f32 %v6278, %v6279
  %v6281 = vsel %vm3619, %v6252, 0.0
  %v6282 = vsel %vm3619, %v6253, 0.0
  %v6283 = vadd.f32 %v6281, %v6282
  %v6284 = vsel %vm3619, %v6254, 0.0
  %v6285 = vadd.f32 %v6283, %v6284
  %v6286 = vsel %vm3619, %v6255, 0.0
  %v6287 = vadd.f32 %v6285, %v6286
  %v6288 = vsel %vm3619, %v6256, 0.0
  %v6289 = vadd.f32 %v6287, %v6288
  %v6290 = vsel %vm3619, %v6257, 0.0
  %v6291 = vadd.f32 %v6289, %v6290
  %v6292 = vsel %vm3619, %v6258, 0.0
  %v6293 = vadd.f32 %v6291, %v6292
  %v6294 = vsel %vm3619, %v6259, 0.0
  %v6295 = vadd.f32 %v6293, %v6294
  %v6296 = vrot.slane %v6295, 4
  %v6297 = vadd.f32 %v6295, %v6296
  %v6298 = vrot.slane %v6297, 2
  %v6299 = vadd.f32 %v6297, %v6298
  %v6300 = vrot.slane %v6299, 1
  %v6301 = vadd.f32 %v6299, %v6300
  %v6302 = vmul.f32 %v6280, %v3668
  %v6303 = vmul.f32 %v6301, %v3668
  %v6304 = vadd.f32 %v6302, 1e-05
  %v6305 = vadd.f32 %v6303, 1e-05
  %v6306 = vrsqrt.pop %v6304
  %v6307 = vmul.f32 %v6306, %v6304
  %v6308 = vmul.f32 %v6307, %v6306
  %v6309 = vmul.f32 0.5, %v6308
  %v6310 = vsub.f32 1.5, %v6309
  %v6311 = vmul.f32 %v6306, %v6310
  %vm6312 = vweird.f32 %v6304
  %vm6313 = vweird.f32 %v6306
  %vm6314 = vmor %vm6312, %vm6313
  %v6315 = vsel %vm6314, %v6306, %v6311
  %v6316 = vrsqrt.pop %v6305
  %v6317 = vmul.f32 %v6316, %v6305
  %v6318 = vmul.f32 %v6317, %v6316
  %v6319 = vmul.f32 0.5, %v6318
  %v6320 = vsub.f32 1.5, %v6319
  %v6321 = vmul.f32 %v6316, %v6320
  %vm6322 = vweird.f32 %v6305
  %vm6323 = vweird.f32 %v6316
  %vm6324 = vmor %vm6322, %vm6323
  %v6325 = vsel %vm6324, %v6316, %v6321
  %v6326 = vmul.f32 %v6228, %v6315
  %v6327 = vmul.f32 %v6229, %v6315
  %v6328 = vmul.f32 %v6230, %v6315
  %v6329 = vmul.f32 %v6231, %v6315
  %v6330 = vmul.f32 %v6232, %v6315
  %v6331 = vmul.f32 %v6233, %v6315
  %v6332 = vmul.f32 %v6234, %v6315
  %v6333 = vmul.f32 %v6235, %v6315
  %v6334 = vmul.f32 %v6236, %v6325
  %v6335 = vmul.f32 %v6237, %v6325
  %v6336 = vmul.f32 %v6238, %v6325
  %v6337 = vmul.f32 %v6239, %v6325
  %v6338 = vmul.f32 %v6240, %v6325
  %v6339 = vmul.f32 %v6241, %v6325
  %v6340 = vmul.f32 %v6242, %v6325
  %v6341 = vmul.f32 %v6243, %v6325
  %v6342 = vxor.u32 %v6326, 2147483648
  %v6343 = vxor.u32 %v6327, 2147483648
  %v6344 = vxor.u32 %v6328, 2147483648
  %v6345 = vxor.u32 %v6329, 2147483648
  %v6346 = vxor.u32 %v6330, 2147483648
  %v6347 = vxor.u32 %v6331, 2147483648
  %v6348 = vxor.u32 %v6332, 2147483648
  %v6349 = vxor.u32 %v6333, 2147483648
  %v6350 = vxor.u32 %v6334, 2147483648
  %v6351 = vxor.u32 %v6335, 2147483648
  %v6352 = vxor.u32 %v6336, 2147483648
  %v6353 = vxor.u32 %v6337, 2147483648
  %v6354 = vxor.u32 %v6338, 2147483648
  %v6355 = vxor.u32 %v6339, 2147483648
  %v6356 = vxor.u32 %v6340, 2147483648
  %v6357 = vxor.u32 %v6341, 2147483648
  %v6358 = vmul.f32 %v6342, 1.442695
  %v6359 = vpow.pop %v6358
  %v6360 = vmul.f32 %v6343, 1.442695
  %v6361 = vpow.pop %v6360
  %v6362 = vmul.f32 %v6344, 1.442695
  %v6363 = vpow.pop %v6362
  %v6364 = vmul.f32 %v6345, 1.442695
  %v6365 = vpow.pop %v6364
  %v6366 = vmul.f32 %v6346, 1.442695
  %v6367 = vpow.pop %v6366
  %v6368 = vmul.f32 %v6347, 1.442695
  %v6369 = vpow.pop %v6368
  %v6370 = vmul.f32 %v6348, 1.442695
  %v6371 = vpow.pop %v6370
  %v6372 = vmul.f32 %v6349, 1.442695
  %v6373 = vpow.pop %v6372
  %v6374 = vmul.f32 %v6350, 1.442695
  %v6375 = vpow.pop %v6374
  %v6376 = vmul.f32 %v6351, 1.442695
  %v6377 = vpow.pop %v6376
  %v6378 = vmul.f32 %v6352, 1.442695
  %v6379 = vpow.pop %v6378
  %v6380 = vmul.f32 %v6353, 1.442695
  %v6381 = vpow.pop %v6380
  %v6382 = vmul.f32 %v6354, 1.442695
  %v6383 = vpow.pop %v6382
  %v6384 = vmul.f32 %v6355, 1.442695
  %v6385 = vpow.pop %v6384
  %v6386 = vmul.f32 %v6356, 1.442695
  %v6387 = vpow.pop %v6386
  %v6388 = vmul.f32 %v6357, 1.442695
  %v6389 = vpow.pop %v6388
  %v6390 = vadd.f32 %v6359, 1.0
  %v6391 = vadd.f32 %v6361, 1.0
  %v6392 = vadd.f32 %v6363, 1.0
  %v6393 = vadd.f32 %v6365, 1.0
  %v6394 = vadd.f32 %v6367, 1.0
  %v6395 = vadd.f32 %v6369, 1.0
  %v6396 = vadd.f32 %v6371, 1.0
  %v6397 = vadd.f32 %v6373, 1.0
  %v6398 = vadd.f32 %v6375, 1.0
  %v6399 = vadd.f32 %v6377, 1.0
  %v6400 = vadd.f32 %v6379, 1.0
  %v6401 = vadd.f32 %v6381, 1.0
  %v6402 = vadd.f32 %v6383, 1.0
  %v6403 = vadd.f32 %v6385, 1.0
  %v6404 = vadd.f32 %v6387, 1.0
  %v6405 = vadd.f32 %v6389, 1.0
  %v6406 = vrcp.pop %v6390
  %v6407 = vmul.f32 %v6390, %v6406
  %v6408 = vsub.f32 1.0, %v6407
  %v6409 = vmul.f32 %v6406, %v6408
  %v6410 = vadd.f32 %v6406, %v6409
  %vm6411 = vweird.f32 %v6390
  %vm6412 = vweird.f32 %v6406
  %vm6413 = vmor %vm6411, %vm6412
  %v6414 = vsel %vm6413, %v6406, %v6410
  %v6415 = vand.u32 2147483647, %v6390
  %vm6416 = vcmp.eq.f32.partialorder %v6415, 8.507059e+37
  %v6417 = vand.u32 %v6390, 2147483648
  %v6418 = vor.u32 1.1754944e-38, %v6417
  %v6419 = vsel %vm6416, %v6418, %v6414
  %v6420 = vmul.f32 1.0, %v6419
  %v6421 = vrcp.pop %v6391
  %v6422 = vmul.f32 %v6391, %v6421
  %v6423 = vsub.f32 1.0, %v6422
  %v6424 = vmul.f32 %v6421, %v6423
  %v6425 = vadd.f32 %v6421, %v6424
  %vm6426 = vweird.f32 %v6391
  %vm6427 = vweird.f32 %v6421
  %vm6428 = vmor %vm6426, %vm6427
  %v6429 = vsel %vm6428, %v6421, %v6425
  %v6430 = vand.u32 2147483647, %v6391
  %vm6431 = vcmp.eq.f32.partialorder %v6430, 8.507059e+37
  %v6432 = vand.u32 %v6391, 2147483648
  %v6433 = vor.u32 1.1754944e-38, %v6432
  %v6434 = vsel %vm6431, %v6433, %v6429
  %v6435 = vmul.f32 1.0, %v6434
  %v6436 = vrcp.pop %v6392
  %v6437 = vmul.f32 %v6392, %v6436
  %v6438 = vsub.f32 1.0, %v6437
  %v6439 = vmul.f32 %v6436, %v6438
  %v6440 = vadd.f32 %v6436, %v6439
  %vm6441 = vweird.f32 %v6392
  %vm6442 = vweird.f32 %v6436
  %vm6443 = vmor %vm6441, %vm6442
  %v6444 = vsel %vm6443, %v6436, %v6440
  %v6445 = vand.u32 2147483647, %v6392
  %vm6446 = vcmp.eq.f32.partialorder %v6445, 8.507059e+37
  %v6447 = vand.u32 %v6392, 2147483648
  %v6448 = vor.u32 1.1754944e-38, %v6447
  %v6449 = vsel %vm6446, %v6448, %v6444
  %v6450 = vmul.f32 1.0, %v6449
  %v6451 = vrcp.pop %v6393
  %v6452 = vmul.f32 %v6393, %v6451
  %v6453 = vsub.f32 1.0, %v6452
  %v6454 = vmul.f32 %v6451, %v6453
  %v6455 = vadd.f32 %v6451, %v6454
  %vm6456 = vweird.f32 %v6393
  %vm6457 = vweird.f32 %v6451
  %vm6458 = vmor %vm6456, %vm6457
  %v6459 = vsel %vm6458, %v6451, %v6455
  %v6460 = vand.u32 2147483647, %v6393
  %vm6461 = vcmp.eq.f32.partialorder %v6460, 8.507059e+37
  %v6462 = vand.u32 %v6393, 2147483648
  %v6463 = vor.u32 1.1754944e-38, %v6462
  %v6464 = vsel %vm6461, %v6463, %v6459
  %v6465 = vmul.f32 1.0, %v6464
  %v6466 = vrcp.pop %v6394
  %v6467 = vmul.f32 %v6394, %v6466
  %v6468 = vsub.f32 1.0, %v6467
  %v6469 = vmul.f32 %v6466, %v6468
  %v6470 = vadd.f32 %v6466, %v6469
  %vm6471 = vweird.f32 %v6394
  %vm6472 = vweird.f32 %v6466
  %vm6473 = vmor %vm6471, %vm6472
  %v6474 = vsel %vm6473, %v6466, %v6470
  %v6475 = vand.u32 2147483647, %v6394
  %vm6476 = vcmp.eq.f32.partialorder %v6475, 8.507059e+37
  %v6477 = vand.u32 %v6394, 2147483648
  %v6478 = vor.u32 1.1754944e-38, %v6477
  %v6479 = vsel %vm6476, %v6478, %v6474
  %v6480 = vmul.f32 1.0, %v6479
  %v6481 = vrcp.pop %v6395
  %v6482 = vmul.f32 %v6395, %v6481
  %v6483 = vsub.f32 1.0, %v6482
  %v6484 = vmul.f32 %v6481, %v6483
  %v6485 = vadd.f32 %v6481, %v6484
  %vm6486 = vweird.f32 %v6395
  %vm6487 = vweird.f32 %v6481
  %vm6488 = vmor %vm6486, %vm6487
  %v6489 = vsel %vm6488, %v6481, %v6485
  %v6490 = vand.u32 2147483647, %v6395
  %vm6491 = vcmp.eq.f32.partialorder %v6490, 8.507059e+37
  %v6492 = vand.u32 %v6395, 2147483648
  %v6493 = vor.u32 1.1754944e-38, %v6492
  %v6494 = vsel %vm6491, %v6493, %v6489
  %v6495 = vmul.f32 1.0, %v6494
  %v6496 = vrcp.pop %v6396
  %v6497 = vmul.f32 %v6396, %v6496
  %v6498 = vsub.f32 1.0, %v6497
  %v6499 = vmul.f32 %v6496, %v6498
  %v6500 = vadd.f32 %v6496, %v6499
  %vm6501 = vweird.f32 %v6396
  %vm6502 = vweird.f32 %v6496
  %vm6503 = vmor %vm6501, %vm6502
  %v6504 = vsel %vm6503, %v6496, %v6500
  %v6505 = vand.u32 2147483647, %v6396
  %vm6506 = vcmp.eq.f32.partialorder %v6505, 8.507059e+37
  %v6507 = vand.u32 %v6396, 2147483648
  %v6508 = vor.u32 1.1754944e-38, %v6507
  %v6509 = vsel %vm6506, %v6508, %v6504
  %v6510 = vmul.f32 1.0, %v6509
  %v6511 = vrcp.pop %v6397
  %v6512 = vmul.f32 %v6397, %v6511
  %v6513 = vsub.f32 1.0, %v6512
  %v6514 = vmul.f32 %v6511, %v6513
  %v6515 = vadd.f32 %v6511, %v6514
  %vm6516 = vweird.f32 %v6397
  %vm6517 = vweird.f32 %v6511
  %vm6518 = vmor %vm6516, %vm6517
  %v6519 = vsel %vm6518, %v6511, %v6515
  %v6520 = vand.u32 2147483647, %v6397
  %vm6521 = vcmp.eq.f32.partialorder %v6520, 8.507059e+37
  %v6522 = vand.u32 %v6397, 2147483648
  %v6523 = vor.u32 1.1754944e-38, %v6522
  %v6524 = vsel %vm6521, %v6523, %v6519
  %v6525 = vmul.f32 1.0, %v6524
  %v6526 = vrcp.pop %v6398
  %v6527 = vmul.f32 %v6398, %v6526
  %v6528 = vsub.f32 1.0, %v6527
  %v6529 = vmul.f32 %v6526, %v6528
  %v6530 = vadd.f32 %v6526, %v6529
  %vm6531 = vweird.f32 %v6398
  %vm6532 = vweird.f32 %v6526
  %vm6533 = vmor %vm6531, %vm6532
  %v6534 = vsel %vm6533, %v6526, %v6530
  %v6535 = vand.u32 2147483647, %v6398
  %vm6536 = vcmp.eq.f32.partialorder %v6535, 8.507059e+37
  %v6537 = vand.u32 %v6398, 2147483648
  %v6538 = vor.u32 1.1754944e-38, %v6537
  %v6539 = vsel %vm6536, %v6538, %v6534
  %v6540 = vmul.f32 1.0, %v6539
  %v6541 = vrcp.pop %v6399
  %v6542 = vmul.f32 %v6399, %v6541
  %v6543 = vsub.f32 1.0, %v6542
  %v6544 = vmul.f32 %v6541, %v6543
  %v6545 = vadd.f32 %v6541, %v6544
  %vm6546 = vweird.f32 %v6399
  %vm6547 = vweird.f32 %v6541
  %vm6548 = vmor %vm6546, %vm6547
  %v6549 = vsel %vm6548, %v6541, %v6545
  %v6550 = vand.u32 2147483647, %v6399
  %vm6551 = vcmp.eq.f32.partialorder %v6550, 8.507059e+37
  %v6552 = vand.u32 %v6399, 2147483648
  %v6553 = vor.u32 1.1754944e-38, %v6552
  %v6554 = vsel %vm6551, %v6553, %v6549
  %v6555 = vmul.f32 1.0, %v6554
  %v6556 = vrcp.pop %v6400
  %v6557 = vmul.f32 %v6400, %v6556
  %v6558 = vsub.f32 1.0, %v6557
  %v6559 = vmul.f32 %v6556, %v6558
  %v6560 = vadd.f32 %v6556, %v6559
  %vm6561 = vweird.f32 %v6400
  %vm6562 = vweird.f32 %v6556
  %vm6563 = vmor %vm6561, %vm6562
  %v6564 = vsel %vm6563, %v6556, %v6560
  %v6565 = vand.u32 2147483647, %v6400
  %vm6566 = vcmp.eq.f32.partialorder %v6565, 8.507059e+37
  %v6567 = vand.u32 %v6400, 2147483648
  %v6568 = vor.u32 1.1754944e-38, %v6567
  %v6569 = vsel %vm6566, %v6568, %v6564
  %v6570 = vmul.f32 1.0, %v6569
  %v6571 = vrcp.pop %v6401
  %v6572 = vmul.f32 %v6401, %v6571
  %v6573 = vsub.f32 1.0, %v6572
  %v6574 = vmul.f32 %v6571, %v6573
  %v6575 = vadd.f32 %v6571, %v6574
  %vm6576 = vweird.f32 %v6401
  %vm6577 = vweird.f32 %v6571
  %vm6578 = vmor %vm6576, %vm6577
  %v6579 = vsel %vm6578, %v6571, %v6575
  %v6580 = vand.u32 2147483647, %v6401
  %vm6581 = vcmp.eq.f32.partialorder %v6580, 8.507059e+37
  %v6582 = vand.u32 %v6401, 2147483648
  %v6583 = vor.u32 1.1754944e-38, %v6582
  %v6584 = vsel %vm6581, %v6583, %v6579
  %v6585 = vmul.f32 1.0, %v6584
  %v6586 = vrcp.pop %v6402
  %v6587 = vmul.f32 %v6402, %v6586
  %v6588 = vsub.f32 1.0, %v6587
  %v6589 = vmul.f32 %v6586, %v6588
  %v6590 = vadd.f32 %v6586, %v6589
  %vm6591 = vweird.f32 %v6402
  %vm6592 = vweird.f32 %v6586
  %vm6593 = vmor %vm6591, %vm6592
  %v6594 = vsel %vm6593, %v6586, %v6590
  %v6595 = vand.u32 2147483647, %v6402
  %vm6596 = vcmp.eq.f32.partialorder %v6595, 8.507059e+37
  %v6597 = vand.u32 %v6402, 2147483648
  %v6598 = vor.u32 1.1754944e-38, %v6597
  %v6599 = vsel %vm6596, %v6598, %v6594
  %v6600 = vmul.f32 1.0, %v6599
  %v6601 = vrcp.pop %v6403
  %v6602 = vmul.f32 %v6403, %v6601
  %v6603 = vsub.f32 1.0, %v6602
  %v6604 = vmul.f32 %v6601, %v6603
  %v6605 = vadd.f32 %v6601, %v6604
  %vm6606 = vweird.f32 %v6403
  %vm6607 = vweird.f32 %v6601
  %vm6608 = vmor %vm6606, %vm6607
  %v6609 = vsel %vm6608, %v6601, %v6605
  %v6610 = vand.u32 2147483647, %v6403
  %vm6611 = vcmp.eq.f32.partialorder %v6610, 8.507059e+37
  %v6612 = vand.u32 %v6403, 2147483648
  %v6613 = vor.u32 1.1754944e-38, %v6612
  %v6614 = vsel %vm6611, %v6613, %v6609
  %v6615 = vmul.f32 1.0, %v6614
  %v6616 = vrcp.pop %v6404
  %v6617 = vmul.f32 %v6404, %v6616
  %v6618 = vsub.f32 1.0, %v6617
  %v6619 = vmul.f32 %v6616, %v6618
  %v6620 = vadd.f32 %v6616, %v6619
  %vm6621 = vweird.f32 %v6404
  %vm6622 = vweird.f32 %v6616
  %vm6623 = vmor %vm6621, %vm6622
  %v6624 = vsel %vm6623, %v6616, %v6620
  %v6625 = vand.u32 2147483647, %v6404
  %vm6626 = vcmp.eq.f32.partialorder %v6625, 8.507059e+37
  %v6627 = vand.u32 %v6404, 2147483648
  %v6628 = vor.u32 1.1754944e-38, %v6627
  %v6629 = vsel %vm6626, %v6628, %v6624
  %v6630 = vmul.f32 1.0, %v6629
  %v6631 = vrcp.pop %v6405
  %v6632 = vmul.f32 %v6405, %v6631
  %v6633 = vsub.f32 1.0, %v6632
  %v6634 = vmul.f32 %v6631, %v6633
  %v6635 = vadd.f32 %v6631, %v6634
  %vm6636 = vweird.f32 %v6405
  %vm6637 = vweird.f32 %v6631
  %vm6638 = vmor %vm6636, %vm6637
  %v6639 = vsel %vm6638, %v6631, %v6635
  %v6640 = vand.u32 2147483647, %v6405
  %vm6641 = vcmp.eq.f32.partialorder %v6640, 8.507059e+37
  %v6642 = vand.u32 %v6405, 2147483648
  %v6643 = vor.u32 1.1754944e-38, %v6642
  %v6644 = vsel %vm6641, %v6643, %v6639
  %v6645 = vmul.f32 1.0, %v6644
  %6662 = vrot.lane.b32.xlu0 %v6420, 112
  %v6663 = vpop.permute.xlu0 %6662
  %6664 = vrot.lane.b32.xlu0 %v6435, 112
  %v6665 = vpop.permute.xlu0 %6664
  %6666 = vrot.lane.b32.xlu0 %v6450, 112
  %v6667 = vpop.permute.xlu0 %6666
  %6668 = vrot.lane.b32.xlu0 %v6465, 112
  %v6669 = vpop.permute.xlu0 %6668
  %6670 = vrot.lane.b32.xlu0 %v6480, 112
  %v6671 = vpop.permute.xlu0 %6670
  %6672 = vrot.lane.b32.xlu0 %v6495, 112
  %v6673 = vpop.permute.xlu0 %6672
  %6674 = vrot.lane.b32.xlu0 %v6510, 112
  %v6675 = vpop.permute.xlu0 %6674
  %6676 = vrot.lane.b32.xlu0 %v6525, 112
  %v6677 = vpop.permute.xlu0 %6676
  %6678 = vrot.lane.b32.xlu0 %v6540, 112
  %v6679 = vpop.permute.xlu0 %6678
  %6680 = vrot.lane.b32.xlu0 %v6555, 112
  %v6681 = vpop.permute.xlu0 %6680
  %6682 = vrot.lane.b32.xlu0 %v6570, 112
  %v6683 = vpop.permute.xlu0 %6682
  %6684 = vrot.lane.b32.xlu0 %v6585, 112
  %v6685 = vpop.permute.xlu0 %6684
  %6686 = vrot.lane.b32.xlu0 %v6600, 112
  %v6687 = vpop.permute.xlu0 %6686
  %6688 = vrot.lane.b32.xlu0 %v6615, 112
  %v6689 = vpop.permute.xlu0 %6688
  %6690 = vrot.lane.b32.xlu0 %v6630, 112
  %v6691 = vpop.permute.xlu0 %6690
  %6692 = vrot.lane.b32.xlu0 %v6645, 112
  %v6693 = vpop.permute.xlu0 %6692
  %v6710 = vmul.f32 %v6326, %v6663
  %v6711 = vmul.f32 %v6327, %v6665
  %v6712 = vmul.f32 %v6328, %v6667
  %v6713 = vmul.f32 %v6329, %v6669
  %v6714 = vmul.f32 %v6330, %v6671
  %v6715 = vmul.f32 %v6331, %v6673
  %v6716 = vmul.f32 %v6332, %v6675
  %v6717 = vmul.f32 %v6333, %v6677
  %v6718 = vmul.f32 %v6334, %v6679
  %v6719 = vmul.f32 %v6335, %v6681
  %v6720 = vmul.f32 %v6336, %v6683
  %v6721 = vmul.f32 %v6337, %v6685
  %v6722 = vmul.f32 %v6338, %v6687
  %v6723 = vmul.f32 %v6339, %v6689
  %v6724 = vmul.f32 %v6340, %v6691
  %v6725 = vmul.f32 %v6341, %v6693
  %v6726 = vpack.c.bf16 %v6710, %v6710
  %v6727 = vpack.c.bf16 %v6711, %v6711
  %v6728 = vpack.c.bf16 %v6712, %v6712
  %v6729 = vpack.c.bf16 %v6713, %v6713
  %v6730 = vpack.c.bf16 %v6714, %v6714
  %v6731 = vpack.c.bf16 %v6715, %v6715
  %v6732 = vpack.c.bf16 %v6716, %v6716
  %v6733 = vpack.c.bf16 %v6717, %v6717
  %v6734 = vpack.c.bf16 %v6718, %v6718
  %v6735 = vpack.c.bf16 %v6719, %v6719
  %v6736 = vpack.c.bf16 %v6720, %v6720
  %v6737 = vpack.c.bf16 %v6721, %v6721
  %v6738 = vpack.c.bf16 %v6722, %v6722
  %v6739 = vpack.c.bf16 %v6723, %v6723
  %v6740 = vpack.c.bf16 %v6724, %v6724
  %v6741 = vpack.c.bf16 %v6725, %v6725
  %v6742 = vld [vmem:[%s5] sm:$0xf]
  %v6743 = vld [vmem:[%s5 + $0x4] sm:$0xf]
  %v6744 = vld [vmem:[%s5 + $0x8] sm:$0xf]
  %v6745 = vld [vmem:[%s5 + $0xc] sm:$0xf]
  %v6754 = vunpack.c.l.b16 %v6730
  %v6755 = vunpack.c.l.b16 %v6731
  %v6756 = vunpack.c.l.b16 %v6732
  %v6757 = vunpack.c.l.b16 %v6733
  %v6758 = vunpack.c.l.b16 %v6738
  %v6759 = vunpack.c.l.b16 %v6739
  %v6760 = vunpack.c.l.b16 %v6740
  %v6761 = vunpack.c.l.b16 %v6741
  %v6762 = vpack.c.b16 %v6755, %v6754
  %v6763 = vpack.c.b16 %v6757, %v6756
  %v6764 = vpack.c.b16 %v6759, %v6758
  %v6765 = vpack.c.b16 %v6761, %v6760
  %v6768 = vunpack.c.l.b16 %v6744
  %v6769 = vunpack.c.l.b16 %v6745
  %v6770 = vpack.c.b16 %v6769, %v6768
  %v6773 = vsel %vm1458, %v6762, 0
  %v6776 = vsel %vm1458, %v6763, 0
  %v6779 = vsel %vm1458, %v6764, 0
  %v6782 = vsel %vm1458, %v6765, 0
  %6784 = vmatpush.bf16.msra.mxu0 0
  %6785 = vmatpush.bf16.msra.mxu0 0
  %6786 = vmatpush.bf16.msra.mxu0 0
  %6787 = vmatpush.bf16.msra.mxu0 0
  %6788 = vmatpush.bf16.msra.mxu0 0
  %6789 = vmatpush.bf16.msra.mxu0 0
  %6790 = vmatpush.bf16.msra.mxu0 0
  %6791 = vmatpush.bf16.msra.mxu0 %v6770
  %6792 = vmatmul.bf16.gmra.mxu0 %v6773
  %v6793 = vpop.f32.mrf.mxu0
  %v6794 = vadd.f32 0.0, %v6793
  %v6795 = vpop.f32.mrf.mxu0
  %v6796 = vadd.f32 0.0, %v6795
  %6797 = vmatmul.bf16.gmra.mxu0 %v6776
  %v6798 = vpop.f32.mrf.mxu0
  %v6799 = vadd.f32 0.0, %v6798
  %v6800 = vpop.f32.mrf.mxu0
  %v6801 = vadd.f32 0.0, %v6800
  %6802 = vmatmul.bf16.gmra.mxu0 %v6779
  %v6803 = vpop.f32.mrf.mxu0
  %v6804 = vadd.f32 0.0, %v6803
  %v6805 = vpop.f32.mrf.mxu0
  %v6806 = vadd.f32 0.0, %v6805
  %6807 = vmatmul.bf16.gmra.mxu0 %v6782
  %v6808 = vpop.f32.mrf.mxu0
  %v6809 = vadd.f32 0.0, %v6808
  %v6810 = vpop.f32.mrf.mxu0
  %v6811 = vadd.f32 0.0, %v6810
  %6812 = vdwg.mxu0
  %v6821 = vunpack.c.l.b16 %v6726
  %v6822 = vunpack.c.l.b16 %v6727
  %v6823 = vunpack.c.l.b16 %v6728
  %v6824 = vunpack.c.l.b16 %v6729
  %v6825 = vunpack.c.l.b16 %v6734
  %v6826 = vunpack.c.l.b16 %v6735
  %v6827 = vunpack.c.l.b16 %v6736
  %v6828 = vunpack.c.l.b16 %v6737
  %v6829 = vpack.c.b16 %v6822, %v6821
  %v6830 = vpack.c.b16 %v6824, %v6823
  %v6831 = vpack.c.b16 %v6826, %v6825
  %v6832 = vpack.c.b16 %v6828, %v6827
  %v6835 = vunpack.c.l.b16 %v6742
  %v6836 = vunpack.c.l.b16 %v6743
  %v6837 = vpack.c.b16 %v6836, %v6835
  %v6840 = vsel %vm1458, %v6829, 0
  %v6843 = vsel %vm1458, %v6830, 0
  %v6846 = vsel %vm1458, %v6831, 0
  %v6849 = vsel %vm1458, %v6832, 0
  %6851 = vmatpush.bf16.msra.mxu0 0
  %6852 = vmatpush.bf16.msra.mxu0 0
  %6853 = vmatpush.bf16.msra.mxu0 0
  %6854 = vmatpush.bf16.msra.mxu0 0
  %6855 = vmatpush.bf16.msra.mxu0 0
  %6856 = vmatpush.bf16.msra.mxu0 0
  %6857 = vmatpush.bf16.msra.mxu0 0
  %6858 = vmatpush.bf16.msra.mxu0 %v6837
  %6859 = vmatmul.bf16.gmra.mxu0 %v6840
  %v6860 = vpop.f32.mrf.mxu0
  %v6861 = vadd.f32 %v6794, %v6860
  %v6862 = vpop.f32.mrf.mxu0
  %v6863 = vadd.f32 %v6796, %v6862
  %6864 = vmatmul.bf16.gmra.mxu0 %v6843
  %v6865 = vpop.f32.mrf.mxu0
  %v6866 = vadd.f32 %v6799, %v6865
  %v6867 = vpop.f32.mrf.mxu0
  %v6868 = vadd.f32 %v6801, %v6867
  %6869 = vmatmul.bf16.gmra.mxu0 %v6846
  %v6870 = vpop.f32.mrf.mxu0
  %v6871 = vadd.f32 %v6804, %v6870
  %v6872 = vpop.f32.mrf.mxu0
  %v6873 = vadd.f32 %v6806, %v6872
  %6874 = vmatmul.bf16.gmra.mxu0 %v6849
  %v6875 = vpop.f32.mrf.mxu0
  %v6876 = vadd.f32 %v6809, %v6875
  %v6877 = vpop.f32.mrf.mxu0
  %v6878 = vadd.f32 %v6811, %v6877
  %6879 = vdwg.mxu0
  %v6880 = vld [vmem:[%s6] sm:$0x1]
  %v6882 = vperm.slane %v6880, 0
  %v6884 = vadd.f32 %v6861, %v6882
  %v6885 = vadd.f32 %v6863, %v6882
  %v6886 = vadd.f32 %v6866, %v6882
  %v6887 = vadd.f32 %v6868, %v6882
  %v6888 = vadd.f32 %v6871, %v6882
  %v6889 = vadd.f32 %v6873, %v6882
  %v6890 = vadd.f32 %v6876, %v6882
  %v6891 = vadd.f32 %v6878, %v6882
  %v6892 = vsel %vm397, %v6884, -inf
  %6893 = vmax.xlane.f32.xlu0 %v6892
  %v6894 = vpop.xlane.xlu0 %6893
  %v6895 = vsel %vm397, %v6885, -inf
  %6896 = vmax.xlane.f32.xlu0 %v6895
  %v6897 = vpop.xlane.xlu0 %6896
  %v6898 = vsel %vm397, %v6886, -inf
  %6899 = vmax.xlane.f32.xlu0 %v6898
  %v6900 = vpop.xlane.xlu0 %6899
  %v6901 = vsel %vm397, %v6887, -inf
  %6902 = vmax.xlane.f32.xlu0 %v6901
  %v6903 = vpop.xlane.xlu0 %6902
  %v6904 = vsel %vm397, %v6888, -inf
  %6905 = vmax.xlane.f32.xlu0 %v6904
  %v6906 = vpop.xlane.xlu0 %6905
  %v6907 = vsel %vm397, %v6889, -inf
  %6908 = vmax.xlane.f32.xlu0 %v6907
  %v6909 = vpop.xlane.xlu0 %6908
  %v6910 = vsel %vm397, %v6890, -inf
  %6911 = vmax.xlane.f32.xlu0 %v6910
  %v6912 = vpop.xlane.xlu0 %6911
  %v6913 = vsel %vm397, %v6891, -inf
  %6914 = vmax.xlane.f32.xlu0 %v6913
  %v6915 = vpop.xlane.xlu0 %6914
  %v6916 = vsub.f32 %v6884, %v6894
  %v6917 = vsub.f32 %v6885, %v6897
  %v6918 = vsub.f32 %v6886, %v6900
  %v6919 = vsub.f32 %v6887, %v6903
  %v6920 = vsub.f32 %v6888, %v6906
  %v6921 = vsub.f32 %v6889, %v6909
  %v6922 = vsub.f32 %v6890, %v6912
  %v6923 = vsub.f32 %v6891, %v6915
  %v6924 = vmul.f32 %v6916, 1.442695
  %v6925 = vpow.pop %v6924
  %v6926 = vmul.f32 %v6917, 1.442695
  %v6927 = vpow.pop %v6926
  %v6928 = vmul.f32 %v6918, 1.442695
  %v6929 = vpow.pop %v6928
  %v6930 = vmul.f32 %v6919, 1.442695
  %v6931 = vpow.pop %v6930
  %v6932 = vmul.f32 %v6920, 1.442695
  %v6933 = vpow.pop %v6932
  %v6934 = vmul.f32 %v6921, 1.442695
  %v6935 = vpow.pop %v6934
  %v6936 = vmul.f32 %v6922, 1.442695
  %v6937 = vpow.pop %v6936
  %v6938 = vmul.f32 %v6923, 1.442695
  %v6939 = vpow.pop %v6938
  %v6940 = vsel %vm397, %v6925, 0.0
  %6941 = vadd.xlane.f32.xlu0 %v6940
  %v6942 = vpop.xlane.xlu0 %6941
  %v6943 = vsel %vm397, %v6927, 0.0
  %6944 = vadd.xlane.f32.xlu0 %v6943
  %v6945 = vpop.xlane.xlu0 %6944
  %v6946 = vsel %vm397, %v6929, 0.0
  %6947 = vadd.xlane.f32.xlu0 %v6946
  %v6948 = vpop.xlane.xlu0 %6947
  %v6949 = vsel %vm397, %v6931, 0.0
  %6950 = vadd.xlane.f32.xlu0 %v6949
  %v6951 = vpop.xlane.xlu0 %6950
  %v6952 = vsel %vm397, %v6933, 0.0
  %6953 = vadd.xlane.f32.xlu0 %v6952
  %v6954 = vpop.xlane.xlu0 %6953
  %v6955 = vsel %vm397, %v6935, 0.0
  %6956 = vadd.xlane.f32.xlu0 %v6955
  %v6957 = vpop.xlane.xlu0 %6956
  %v6958 = vsel %vm397, %v6937, 0.0
  %6959 = vadd.xlane.f32.xlu0 %v6958
  %v6960 = vpop.xlane.xlu0 %6959
  %v6961 = vsel %vm397, %v6939, 0.0
  %6962 = vadd.xlane.f32.xlu0 %v6961
  %v6963 = vpop.xlane.xlu0 %6962
  %v6964 = vlog2.pop %v6942
  %v6965 = vmul.f32 %v6964, 0.6931472
  %v6966 = vlog2.pop %v6945
  %v6967 = vmul.f32 %v6966, 0.6931472
  %v6968 = vlog2.pop %v6948
  %v6969 = vmul.f32 %v6968, 0.6931472
  %v6970 = vlog2.pop %v6951
  %v6971 = vmul.f32 %v6970, 0.6931472
  %v6972 = vlog2.pop %v6954
  %v6973 = vmul.f32 %v6972, 0.6931472
  %v6974 = vlog2.pop %v6957
  %v6975 = vmul.f32 %v6974, 0.6931472
  %v6976 = vlog2.pop %v6960
  %v6977 = vmul.f32 %v6976, 0.6931472
  %v6978 = vlog2.pop %v6963
  %v6979 = vmul.f32 %v6978, 0.6931472
  %v6980 = vadd.f32 %v6894, %v6965
  %v6981 = vadd.f32 %v6897, %v6967
  %v6982 = vadd.f32 %v6900, %v6969
  %v6983 = vadd.f32 %v6903, %v6971
  %v6984 = vadd.f32 %v6906, %v6973
  %v6985 = vadd.f32 %v6909, %v6975
  %v6986 = vadd.f32 %v6912, %v6977
  %v6987 = vadd.f32 %v6915, %v6979
  %v6988 = vsub.f32 %v6884, %v6980
  %v6989 = vsub.f32 %v6885, %v6981
  %v6990 = vsub.f32 %v6886, %v6982
  %v6991 = vsub.f32 %v6887, %v6983
  %v6992 = vsub.f32 %v6888, %v6984
  %v6993 = vsub.f32 %v6889, %v6985
  %v6994 = vsub.f32 %v6890, %v6986
  %v6995 = vsub.f32 %v6891, %v6987
  %6996 = vst.msk [vmem:[%s7] sm:$0xff] %vm397, %v6988
  %6997 = vst.msk [vmem:[%s7 + $0x8] sm:$0xff] %vm397, %v6989
  %6998 = vst.msk [vmem:[%s7 + $0x10] sm:$0xff] %vm397, %v6990
  %6999 = vst.msk [vmem:[%s7 + $0x18] sm:$0xff] %vm397, %v6991
  %7000 = vst.msk [vmem:[%s7 + $0x20] sm:$0xff] %vm397, %v6992
  %7001 = vst.msk [vmem:[%s7 + $0x28] sm:$0xff] %vm397, %v6993
  %7002 = vst.msk [vmem:[%s7 + $0x30] sm:$0xff] %vm397, %v6994
  %7003 = vst.msk [vmem:[%s7 + $0x38] sm:$0xff] %vm397, %v6995
  // Predicated region
  $region30: #{lang_classifier_forward.1} parent=0 // pred_check
    _
  $region31: #{lang_classifier_forward.1} parent=0 // pred_check_branch
    %7005 = sbr.rel (0) target = $region33
  $region32: #{lang_classifier_forward.1} parent=0 // pred_region
    _
  $region33: #{lang_classifier_forward.1} parent=0 // pred_fallthru
    _
  // Predicated region
  $region34: #{lang_classifier_forward.1} parent=0 // pred_check
    _
  $region35: #{lang_classifier_forward.1} parent=0 // pred_check_branch
    %7007 = sbr.rel (0) target = $region37
  $region36: #{lang_classifier_forward.1} parent=0 // pred_region
    _
  $region37: #{lang_classifier_forward.1} parent=0 // pred_fallthru
    _

</llo_original>
